<compile_context>
chip_gen: v5e
topology: v5e:2x2
jax: 0.10.0
libtpu: 0.0.40
codegen_flags: <defaults>
</compile_context>

<pallas_src>
import numpy as np
import jax
import jax.numpy as jnp
from jax import lax
from jax.experimental import pallas as pl
from jax.experimental.pallas import tpu as pltpu

batch_size = 2  # module-level constant (PyTorch file used 5); FC sizes depend on it

_VMEM = pl.BlockSpec(memory_space=pltpu.MemorySpace.VMEM)
_VMEM_LIMIT_BYTES = 8 * 1024 * 1024  # conservative; actual footprint < 2 MiB


# ----------------------------------------------------------------------------
# Static geometry
# ----------------------------------------------------------------------------
def _enc_geom(cin, cout, k, stride, pad, hin, win, n):
    hp, wp = hin + 2 * pad, win + 2 * pad
    ho = (hin + 2 * pad - k) // stride + 1
    wo = (win + 2 * pad - k) // stride + 1
    l = n * hp * wp
    dmax = (k - 1) * wp + (k - 1)
    return dict(cin=cin, cout=cout, k=k, stride=stride, pad=pad, hp=hp, wp=wp,
                ho=ho, wo=wo, l=l, dmax=dmax, ncols=l - dmax, a_cols=l)


def _dec_geom(cin, cout, k, stride, pad, out_pad, hin, win, n, last=False):
    ph = k - 1 - pad                       # equivalent stride-1 correlation pad
    hd, wd = (hin - 1) * stride + 1, (win - 1) * stride + 1
    hp, wp = hd + 2 * ph + out_pad, wd + 2 * ph + out_pad
    ho, wo = hp - k + 1, wp - k + 1
    l = n * hp * wp
    dmax = (k - 1) * wp + (k - 1)
    ncols = l if last else l - dmax        # last layer: full width for easy unflatten
    a_cols = l + dmax if last else l       # last layer: extra zero tail for tap shifts
    return dict(cin=cin, cout=cout, k=k, stride=stride, pad=pad, out_pad=out_pad,
                ph=ph, hp=hp, wp=wp, ho=ho, wo=wo, l=l, dmax=dmax,
                ncols=ncols, a_cols=a_cols)


def make_geometry(height, width, num_channels, f, bneck):
    n = batch_size
    h8, w8 = height // 8, width // 8
    m = n * h8 * w8
    c3 = 4 * f
    flat_dim = c3 * m
    e1 = _enc_geom(num_channels, f, 3, 2, 1, height, width, n)
    e2 = _enc_geom(f, 2 * f, 5, 2, 2, e1["ho"], e1["wo"], n)
    e3 = _enc_geom(2 * f, 4 * f, 3, 2, 1, e2["ho"], e2["wo"], n)
    d3 = _dec_geom(4 * f, 2 * f, 3, 2, 1, 1, e3["ho"], e3["wo"], n)
    d2 = _dec_geom(2 * f, f, 5, 2, 2, 1, d3["ho"], d3["wo"], n)
    d1 = _dec_geom(f, num_channels, 3, 2, 1, 1, d2["ho"], d2["wo"], n, last=True)
    assert e3["ho"] == h8 and e3["wo"] == w8
    assert d1["ho"] == height and d1["wo"] == width
    return dict(n=n, height=height, width=width, num_channels=num_channels,
                f=f, bneck=bneck, h8=h8, w8=w8, m=m, c3=c3, flat_dim=flat_dim,
                e1=e1, e2=e2, e3=e3, d3=d3, d2=d2, d1=d1)


# ----------------------------------------------------------------------------
# Precomputed one-hot scatter matrices (built once at init with numpy)
# ----------------------------------------------------------------------------
def _scatter(rows, cols, n, src_hp, src_wp, src_stride, ho, wo,
             dst_hp, dst_wp, dst_off, dst_stride):
    u = np.zeros((rows, cols), np.float32)
    for b in range(n):
        for i in range(ho):
            for j in range(wo):
                ps = b * src_hp * src_wp + i * src_stride * src_wp + j * src_stride
                pd = (b * dst_hp * dst_wp + (dst_off + i * dst_stride) * dst_wp
                      + (dst_off + j * dst_stride))
                u[ps, pd] = 1.0
    return u


def _build_constants(geo):
    n, h8, w8 = geo["n"], geo["h8"], geo["w8"]
    m, c3, flat = geo["m"], geo["c3"], geo["flat_dim"]
    e1, e2, e3 = geo["e1"], geo["e2"], geo["e3"]
    d3, d2, d1 = geo["d3"], geo["d2"], geo["d1"]

    u12 = _scatter(e1["ncols"], e2["a_cols"], n, e1["hp"], e1["wp"], e1["stride"],
                   e1["ho"], e1["wo"], e2["hp"], e2["wp"], e2["pad"], 1)
    u23 = _scatter(e2["ncols"], e3["a_cols"], n, e2["hp"], e2["wp"], e2["stride"],
                   e2["ho"], e2["wo"], e3["hp"], e3["wp"], e3["pad"], 1)

    # select valid ec3 outputs, tiled over channels -> feeds the flatten
    sel = np.zeros((e3["ncols"], m), np.float32)
    for b in range(n):
        for i in range(e3["ho"]):
            for j in range(e3["wo"]):
                ps = b * e3["hp"] * e3["wp"] + i * e3["stride"] * e3["wp"] + j * e3["stride"]
                sel[ps, (b * h8 + i) * w8 + j] = 1.0
    sel_tile = np.tile(sel, (1, c3))                                   # (ncols3, flat)

    block_mask = (np.arange(flat)[None, :] // m
                  == np.arange(c3)[:, None]).astype(np.float32)        # (c3, flat)

    # un-flatten + dilation/padding scatter for the first transposed conv
    scat = np.zeros((m, d3["a_cols"]), np.float32)
    for b in range(n):
        for i in range(h8):
            for j in range(w8):
                pd = (b * d3["hp"] * d3["wp"]
                      + (d3["ph"] + i * d3["stride"]) * d3["wp"]
                      + (d3["ph"] + j * d3["stride"]))
                scat[(b * h8 + i) * w8 + j, pd] = 1.0
    udec = np.tile(scat, (c3, 1))                                      # (flat, L_d3)

    u45 = _scatter(d3["ncols"], d2["a_cols"], n, d3["hp"], d3["wp"], 1,
                   d3["ho"], d3["wo"], d2["hp"], d2["wp"], d2["ph"], d2["stride"])
    u56 = _scatter(d2["ncols"], d1["a_cols"], n, d2["hp"], d2["wp"], 1,
                   d2["ho"], d2["wo"], d1["hp"], d1["wp"], d1["ph"], d1["stride"])

    # permutation: our (c, n, h, w) flat order -> PyTorch NCHW flatten order
    perm = np.empty(flat, np.int64)
    for c in range(c3):
        for b in range(n):
            for i in range(h8):
                for j in range(w8):
                    perm[c * m + (b * h8 + i) * w8 + j] = ((b * c3 + c) * h8 + i) * w8 + j

    consts = dict(u12=jnp.asarray(u12), u23=jnp.asarray(u23),
                  sel_tile=jnp.asarray(sel_tile), block_mask=jnp.asarray(block_mask),
                  udec=jnp.asarray(udec), u45=jnp.asarray(u45), u56=jnp.asarray(u56))
    return consts, perm


# ----------------------------------------------------------------------------
# Parameter init (PyTorch-style uniform bounds) + hoisted GEMM-ready transforms
# ----------------------------------------------------------------------------
def init_raw_params(key, geo):
    keys = iter(jax.random.split(key, 20))

    def uni(shape, bound):
        return jax.random.uniform(next(keys), shape, jnp.float32, -bound, bound)

    def conv(cout, cin, k):
        b = 1.0 / (cin * k * k) ** 0.5
        return uni((cout, cin, k, k), b), uni((cout,), b)

    def tconv(cin, cout, k):
        b = 1.0 / (cout * k * k) ** 0.5
        return uni((cin, cout, k, k), b), uni((cout,), b)

    def fc(fin, fout):
        b = 1.0 / fin ** 0.5
        return uni((fout, fin), b), uni((fout,), b)

    g = geo
    p = {}
    p["ec1_w"], p["ec1_b"] = conv(g["e1"]["cout"], g["e1"]["cin"], g["e1"]["k"])
    p["ec2_w"], p["ec2_b"] = conv(g["e2"]["cout"], g["e2"]["cin"], g["e2"]["k"])
    p["ec3_w"], p["ec3_b"] = conv(g["e3"]["cout"], g["e3"]["cin"], g["e3"]["k"])
    p["efc1_w"], p["efc1_b"] = fc(g["flat_dim"], 2 * g["bneck"])
    p["efc2_w"], p["efc2_b"] = fc(2 * g["bneck"], g["bneck"])
    p["dfc2_w"], p["dfc2_b"] = fc(g["bneck"], 2 * g["bneck"])
    p["dfc1_w"], p["dfc1_b"] = fc(2 * g["bneck"], g["flat_dim"])
    p["dt3_w"], p["dt3_b"] = tconv(g["d3"]["cin"], g["d3"]["cout"], g["d3"]["k"])
    p["dt2_w"], p["dt2_b"] = tconv(g["d2"]["cin"], g["d2"]["cout"], g["d2"]["k"])
    p["dt1_w"], p["dt1_b"] = tconv(g["d1"]["cin"], g["d1"]["cout"], g["d1"]["k"])
    return p


def prepare_kernel_params(raw, geo):
    """One-time (hoisted) weight preprocessing into kernel-ready layouts."""
    consts, perm_np = _build_constants(geo)
    perm = jnp.asarray(perm_np)

    def conv_mat(w):                       # (Cout,Cin,kh,kw) -> (Cout, kh*kw*Cin)
        cout, cin, kh, kw = w.shape
        return jnp.transpose(w, (0, 2, 3, 1)).reshape(cout, kh * kw * cin)

    def tconv_mat(w):                      # flip + swap channels -> correlation weight
        cin, cout, kh, kw = w.shape
        weq = jnp.flip(w, axis=(2, 3))
        return jnp.transpose(weq, (1, 2, 3, 0)).reshape(cout, kh * kw * cin)

    p = dict(consts)
    p["ec1_w"] = conv_mat(raw["ec1_w"]); p["ec1_b"] = raw["ec1_b"].reshape(-1, 1)
    p["ec2_w"] = conv_mat(raw["ec2_w"]); p["ec2_b"] = raw["ec2_b"].reshape(-1, 1)
    p["ec3_w"] = conv_mat(raw["ec3_w"]); p["ec3_b"] = raw["ec3_b"].reshape(-1, 1)
    p["efc1_w"] = jnp.take(raw["efc1_w"], perm, axis=1).T    # (flat, 2b), perm'd cols
    p["efc1_b"] = raw["efc1_b"].reshape(1, -1)
    p["efc2_w"] = raw["efc2_w"].T;  p["efc2_b"] = raw["efc2_b"].reshape(1, -1)
    p["dfc2_w"] = raw["dfc2_w"].T;  p["dfc2_b"] = raw["dfc2_b"].reshape(1, -1)
    p["dfc1_w"] = jnp.take(raw["dfc1_w"], perm, axis=0).T    # (2b, flat), perm'd rows
    p["dfc1_b"] = jnp.take(raw["dfc1_b"], perm, axis=0).reshape(1, -1)
    p["dt3_w"] = tconv_mat(raw["dt3_w"]); p["dt3_b"] = raw["dt3_b"].reshape(-1, 1)
    p["dt2_w"] = tconv_mat(raw["dt2_w"]); p["dt2_b"] = raw["dt2_b"].reshape(-1, 1)
    p["dt1_w"] = tconv_mat(raw["dt1_w"]); p["dt1_b"] = raw["dt1_b"].reshape(-1, 1)
    return p


# ----------------------------------------------------------------------------
# The single fused Pallas kernel
# ----------------------------------------------------------------------------
_ARG_ORDER = ("ec1_w", "ec1_b", "u12", "ec2_w", "ec2_b", "u23", "ec3_w", "ec3_b",
              "sel_tile", "block_mask", "efc1_w", "efc1_b", "efc2_w", "efc2_b",
              "dfc2_w", "dfc2_b", "dfc1_w", "dfc1_b", "udec", "dt3_w", "dt3_b",
              "u45", "dt2_w", "dt2_b", "u56", "dt1_w", "dt1_b")


def _make_fused_kernel(geo):
    e1, e2, e3 = geo["e1"], geo["e2"], geo["e3"]
    d3, d2, d1 = geo["d3"], geo["d2"], geo["d1"]

    def conv_block(a, w_ref, b_ref, g):
        # Implicit GEMM: sum over kernel taps of (Cout,Cin) @ (Cin, M) on
        # lane-shifted slices of the padded, flattened activation.
        cin, k, wp, ncols = g["cin"], g["k"], g["wp"], g["ncols"]
        acc = None
        for i in range(k):
            for j in range(k):
                t = i * k + j
                d = i * wp + j
                part = jnp.dot(w_ref[:, t * cin:(t + 1) * cin], a[:, d:d + ncols],
                               preferred_element_type=jnp.float32)
                acc = part if acc is None else acc + part
        return jnp.maximum(acc + b_ref[...], 0.0)

    def kernel(x_ref, ec1w, ec1b, u12, ec2w, ec2b, u23, ec3w, ec3b,
               selt, bmask, f1w, f1b, f2w, f2b, f3w, f3b, f4w, f4b,
               udec, dt3w, dt3b, u45, dt2w, dt2b, u56, dt1w, dt1b, o_ref):
        dot = lambda a, b: jnp.dot(a, b, preferred_element_type=jnp.float32)
        relu = lambda v: jnp.maximum(v, 0.0)

        # ---- encoder convolutions ----
        y = conv_block(x_ref[...], ec1w, ec1b, e1)            # (f,   610)
        y = conv_block(dot(y, u12[...]), ec2w, ec2b, e2)      # (2f,  236)
        y = conv_block(dot(y, u23[...]), ec3w, ec3b, e3)      # (4f,   58)

        # ---- flatten (PyTorch NCHW order is folded into the FC weight perm) ----
        flat = jnp.sum(dot(y, selt[...]) * bmask[...], axis=0, keepdims=True)  # (1, flat)

        # ---- fused FC chain (efc1 -> efc2 -> dfc2 -> dfc1, ReLU after each) ----
        h = relu(dot(flat, f1w[...]) + f1b[...])
        h = relu(dot(h, f2w[...]) + f2b[...])
        h = relu(dot(h, f3w[...]) + f3b[...])
        h = relu(dot(h, f4w[...]) + f4b[...])                 # (1, flat)

        # ---- un-flatten + dilation/padding scatter for the first tconv ----
        a = dot(h * bmask[...], udec[...])                    # (4f, L_d3)

        # ---- decoder transposed convolutions (as stride-1 correlations) ----
        y = conv_block(a, dt3w, dt3b, d3)                     # (2f,   58)
        y = conv_block(dot(y, u45[...]), dt2w, dt2b, d2)      # (f,   236)
        y = conv_block(dot(y, u56[...]), dt1w, dt1b, d1)      # (C0,  648)
        o_ref[...] = y

    return kernel


def make_ae_forward(geo):
    kernel = _make_fused_kernel(geo)
    c0, e1, d1 = geo["num_channels"], geo["e1"], geo["d1"]

    call = pl.pallas_call(
        kernel,
        out_shape=jax.ShapeDtypeStruct((c0, d1["ncols"]), jnp.float32),
        in_specs=[_VMEM] * (1 + len(_ARG_ORDER)),
        out_specs=_VMEM,
        compiler_params=pltpu.CompilerParams(vmem_limit_bytes=_VMEM_LIMIT_BYTES),
    )

    def forward(params, x):
        # FC sizes are baked to the module-level batch_size (mirrors PyTorch).
        assert x.shape == (geo["n"], c0, geo["height"], geo["width"]), x.shape
        pad = e1["pad"]
        # external boundary only: NCHW -> (C, N*Hp*Wp) padded flat
        xp = jnp.pad(jnp.transpose(x, (1, 0, 2, 3)),
                     ((0, 0), (0, 0), (pad, pad), (pad, pad)))
        a0 = xp.reshape(c0, geo["n"] * e1["hp"] * e1["wp"])
        y = call(a0, *[params[k] for k in _ARG_ORDER])
        # external boundary only: crop valid window and back to NCHW
        y = y.reshape(c0, geo["n"], d1["hp"], d1["wp"])[:, :, :d1["ho"], :d1["wo"]]
        return jnp.transpose(y, (1, 0, 2, 3))

    return forward


# ----------------------------------------------------------------------------
# Pure-JAX reference (for correctness validation only)
# ----------------------------------------------------------------------------
def ae_reference(raw, x):
    def conv(x, w, b, stride, pad):
        y = lax.conv_general_dilated(x, w, (stride, stride),
                                     ((pad, pad), (pad, pad)),
                                     dimension_numbers=("NCHW", "OIHW", "NCHW"))
        return jax.nn.relu(y + b[None, :, None, None])

    def tconv(x, w, b, stride, pad, out_pad):
        cin, cout, kh, kw = w.shape
        weq = jnp.transpose(jnp.flip(w, (2, 3)), (1, 0, 2, 3))
        ph, pw = kh - 1 - pad, kw - 1 - pad
        y = lax.conv_general_dilated(x, weq, (1, 1),
                                     ((ph, ph + out_pad), (pw, pw + out_pad)),
                                     lhs_dilation=(stride, stride),
                                     dimension_numbers=("NCHW", "OIHW", "NCHW"))
        return jax.nn.relu(y + b[None, :, None, None])

    y = conv(x, raw["ec1_w"], raw["ec1_b"], 2, 1)
    y = conv(y, raw["ec2_w"], raw["ec2_b"], 2, 2)
    y = conv(y, raw["ec3_w"], raw["ec3_b"], 2, 1)
    shape = y.shape
    v = y.reshape(-1)
    v = jax.nn.relu(raw["efc1_w"] @ v + raw["efc1_b"])
    v = jax.nn.relu(raw["efc2_w"] @ v + raw["efc2_b"])
    v = jax.nn.relu(raw["dfc2_w"] @ v + raw["dfc2_b"])
    v = jax.nn.relu(raw["dfc1_w"] @ v + raw["dfc1_b"])
    y = v.reshape(shape)
    y = tconv(y, raw["dt3_w"], raw["dt3_b"], 2, 1, 1)
    y = tconv(y, raw["dt2_w"], raw["dt2_b"], 2, 2, 1)
    y = tconv(y, raw["dt1_w"], raw["dt1_b"], 2, 1, 1)
    return y


if __name__ == "__main__":
    height, width = 16, 16
    num_channels = 4
    filters_first_conv = 4
    bottle_neck_dim = 8

    geo = make_geometry(height, width, num_channels, filters_first_conv, bottle_neck_dim)

    key = jax.random.PRNGKey(0)
    kp, kx = jax.random.split(key)
    raw = init_raw_params(kp, geo)
    params = prepare_kernel_params(raw, geo)          # hoisted: done once at init
    x = jax.random.normal(kx, (batch_size, num_channels, height, width),
                          dtype=jnp.float32)

    fwd = jax.jit(make_ae_forward(geo))
    out = jax.block_until_ready(fwd(params, x))

    assert out.shape == x.shape, (out.shape, x.shape)
    assert bool(jnp.all(jnp.isfinite(out)))
    assert bool(jnp.all(out >= 0.0))                  # final ReLU

    ref = ae_reference(raw, x)
    err = float(jnp.max(jnp.abs(out - ref)))
    assert err < 1e-3, f"max abs err vs reference = {err}"
    print("KERNEL_OK")
</pallas_src>

<mosaic_0001>
module attributes {stable_mosaic.version = 11 : i64} {
  func.func @kernel(%arg0: memref<4x648xf32, #tpu.memory_space<vmem>>, %arg1: memref<4x36xf32, #tpu.memory_space<vmem>>, %arg2: memref<4x1xf32, #tpu.memory_space<vmem>>, %arg3: memref<610x288xf32, #tpu.memory_space<vmem>>, %arg4: memref<8x100xf32, #tpu.memory_space<vmem>>, %arg5: memref<8x1xf32, #tpu.memory_space<vmem>>, %arg6: memref<236x72xf32, #tpu.memory_space<vmem>>, %arg7: memref<16x72xf32, #tpu.memory_space<vmem>>, %arg8: memref<16x1xf32, #tpu.memory_space<vmem>>, %arg9: memref<58x128xf32, #tpu.memory_space<vmem>>, %arg10: memref<16x128xf32, #tpu.memory_space<vmem>>, %arg11: memref<128x16xf32, #tpu.memory_space<vmem>>, %arg12: memref<1x16xf32, #tpu.memory_space<vmem>>, %arg13: memref<16x8xf32, #tpu.memory_space<vmem>>, %arg14: memref<1x8xf32, #tpu.memory_space<vmem>>, %arg15: memref<8x16xf32, #tpu.memory_space<vmem>>, %arg16: memref<1x16xf32, #tpu.memory_space<vmem>>, %arg17: memref<16x128xf32, #tpu.memory_space<vmem>>, %arg18: memref<1x128xf32, #tpu.memory_space<vmem>>, %arg19: memref<128x72xf32, #tpu.memory_space<vmem>>, %arg20: memref<8x144xf32, #tpu.memory_space<vmem>>, %arg21: memref<8x1xf32, #tpu.memory_space<vmem>>, %arg22: memref<58x288xf32, #tpu.memory_space<vmem>>, %arg23: memref<4x200xf32, #tpu.memory_space<vmem>>, %arg24: memref<4x1xf32, #tpu.memory_space<vmem>>, %arg25: memref<236x686xf32, #tpu.memory_space<vmem>>, %arg26: memref<4x36xf32, #tpu.memory_space<vmem>>, %arg27: memref<4x1xf32, #tpu.memory_space<vmem>>, %arg28: memref<4x648xf32, #tpu.memory_space<vmem>>) attributes {dimension_semantics = [], scalar_prefetch = 0 : i64, scratch_operands = 0 : i64, tpu.core_type = #tpu.core_type<tc>} {
    %c0 = arith.constant 0 : index
    %c0_0 = arith.constant 0 : index
    %0 = vector.load %arg0[%c0, %c0_0] : memref<4x648xf32, #tpu.memory_space<vmem>>, vector<4x648xf32>
    %c0_1 = arith.constant 0 : index
    %c0_2 = arith.constant 0 : index
    %1 = vector.load %arg1[%c0_1, %c0_2] : memref<4x36xf32, #tpu.memory_space<vmem>>, vector<4x4xf32>
    %2 = vector.extract_strided_slice %0 {offsets = [0, 0], sizes = [4, 610], strides = [1, 1]} : vector<4x648xf32> to vector<4x610xf32>
    %cst = arith.constant dense<0.000000e+00> : vector<4x610xf32>
    %3 = tpu.matmul %1, %2, %cst {dimension_numbers = #tpu.dot_dimension_numbers<[1], [0], [0], [1], [0, 0, 1, 1], [], []>} : vector<4x4xf32>, vector<4x610xf32>, vector<4x610xf32> -> vector<4x610xf32>
    %c0_3 = arith.constant 0 : index
    %c4 = arith.constant 4 : index
    %4 = vector.load %arg1[%c0_3, %c4] : memref<4x36xf32, #tpu.memory_space<vmem>>, vector<4x4xf32>
    %5 = vector.extract_strided_slice %0 {offsets = [0, 1], sizes = [4, 610], strides = [1, 1]} : vector<4x648xf32> to vector<4x610xf32>
    %cst_4 = arith.constant dense<0.000000e+00> : vector<4x610xf32>
    %6 = tpu.matmul %4, %5, %cst_4 {dimension_numbers = #tpu.dot_dimension_numbers<[1], [0], [0], [1], [0, 0, 1, 1], [], []>} : vector<4x4xf32>, vector<4x610xf32>, vector<4x610xf32> -> vector<4x610xf32>
    %7 = arith.addf %3, %6 : vector<4x610xf32>
    %c0_5 = arith.constant 0 : index
    %c8 = arith.constant 8 : index
    %8 = vector.load %arg1[%c0_5, %c8] : memref<4x36xf32, #tpu.memory_space<vmem>>, vector<4x4xf32>
    %9 = vector.extract_strided_slice %0 {offsets = [0, 2], sizes = [4, 610], strides = [1, 1]} : vector<4x648xf32> to vector<4x610xf32>
    %cst_6 = arith.constant dense<0.000000e+00> : vector<4x610xf32>
    %10 = tpu.matmul %8, %9, %cst_6 {dimension_numbers = #tpu.dot_dimension_numbers<[1], [0], [0], [1], [0, 0, 1, 1], [], []>} : vector<4x4xf32>, vector<4x610xf32>, vector<4x610xf32> -> vector<4x610xf32>
    %11 = arith.addf %7, %10 : vector<4x610xf32>
    %c0_7 = arith.constant 0 : index
    %c12 = arith.constant 12 : index
    %12 = vector.load %arg1[%c0_7, %c12] : memref<4x36xf32, #tpu.memory_space<vmem>>, vector<4x4xf32>
    %13 = vector.extract_strided_slice %0 {offsets = [0, 18], sizes = [4, 610], strides = [1, 1]} : vector<4x648xf32> to vector<4x610xf32>
    %cst_8 = arith.constant dense<0.000000e+00> : vector<4x610xf32>
    %14 = tpu.matmul %12, %13, %cst_8 {dimension_numbers = #tpu.dot_dimension_numbers<[1], [0], [0], [1], [0, 0, 1, 1], [], []>} : vector<4x4xf32>, vector<4x610xf32>, vector<4x610xf32> -> vector<4x610xf32>
    %15 = arith.addf %11, %14 : vector<4x610xf32>
    %c0_9 = arith.constant 0 : index
    %c16 = arith.constant 16 : index
    %16 = vector.load %arg1[%c0_9, %c16] : memref<4x36xf32, #tpu.memory_space<vmem>>, vector<4x4xf32>
    %17 = vector.extract_strided_slice %0 {offsets = [0, 19], sizes = [4, 610], strides = [1, 1]} : vector<4x648xf32> to vector<4x610xf32>
    %cst_10 = arith.constant dense<0.000000e+00> : vector<4x610xf32>
    %18 = tpu.matmul %16, %17, %cst_10 {dimension_numbers = #tpu.dot_dimension_numbers<[1], [0], [0], [1], [0, 0, 1, 1], [], []>} : vector<4x4xf32>, vector<4x610xf32>, vector<4x610xf32> -> vector<4x610xf32>
    %19 = arith.addf %15, %18 : vector<4x610xf32>
    %c0_11 = arith.constant 0 : index
    %c20 = arith.constant 20 : index
    %20 = vector.load %arg1[%c0_11, %c20] : memref<4x36xf32, #tpu.memory_space<vmem>>, vector<4x4xf32>
    %21 = vector.extract_strided_slice %0 {offsets = [0, 20], sizes = [4, 610], strides = [1, 1]} : vector<4x648xf32> to vector<4x610xf32>
    %cst_12 = arith.constant dense<0.000000e+00> : vector<4x610xf32>
    %22 = tpu.matmul %20, %21, %cst_12 {dimension_numbers = #tpu.dot_dimension_numbers<[1], [0], [0], [1], [0, 0, 1, 1], [], []>} : vector<4x4xf32>, vector<4x610xf32>, vector<4x610xf32> -> vector<4x610xf32>
    %23 = arith.addf %19, %22 : vector<4x610xf32>
    %c0_13 = arith.constant 0 : index
    %c24 = arith.constant 24 : index
    %24 = vector.load %arg1[%c0_13, %c24] : memref<4x36xf32, #tpu.memory_space<vmem>>, vector<4x4xf32>
    %25 = vector.extract_strided_slice %0 {offsets = [0, 36], sizes = [4, 610], strides = [1, 1]} : vector<4x648xf32> to vector<4x610xf32>
    %cst_14 = arith.constant dense<0.000000e+00> : vector<4x610xf32>
    %26 = tpu.matmul %24, %25, %cst_14 {dimension_numbers = #tpu.dot_dimension_numbers<[1], [0], [0], [1], [0, 0, 1, 1], [], []>} : vector<4x4xf32>, vector<4x610xf32>, vector<4x610xf32> -> vector<4x610xf32>
    %27 = arith.addf %23, %26 : vector<4x610xf32>
    %c0_15 = arith.constant 0 : index
    %c28 = arith.constant 28 : index
    %28 = vector.load %arg1[%c0_15, %c28] : memref<4x36xf32, #tpu.memory_space<vmem>>, vector<4x4xf32>
    %29 = vector.extract_strided_slice %0 {offsets = [0, 37], sizes = [4, 610], strides = [1, 1]} : vector<4x648xf32> to vector<4x610xf32>
    %cst_16 = arith.constant dense<0.000000e+00> : vector<4x610xf32>
    %30 = tpu.matmul %28, %29, %cst_16 {dimension_numbers = #tpu.dot_dimension_numbers<[1], [0], [0], [1], [0, 0, 1, 1], [], []>} : vector<4x4xf32>, vector<4x610xf32>, vector<4x610xf32> -> vector<4x610xf32>
    %31 = arith.addf %27, %30 : vector<4x610xf32>
    %c0_17 = arith.constant 0 : index
    %c32 = arith.constant 32 : index
    %32 = vector.load %arg1[%c0_17, %c32] : memref<4x36xf32, #tpu.memory_space<vmem>>, vector<4x4xf32>
    %33 = vector.extract_strided_slice %0 {offsets = [0, 38], sizes = [4, 610], strides = [1, 1]} : vector<4x648xf32> to vector<4x610xf32>
    %cst_18 = arith.constant dense<0.000000e+00> : vector<4x610xf32>
    %34 = tpu.matmul %32, %33, %cst_18 {dimension_numbers = #tpu.dot_dimension_numbers<[1], [0], [0], [1], [0, 0, 1, 1], [], []>} : vector<4x4xf32>, vector<4x610xf32>, vector<4x610xf32> -> vector<4x610xf32>
    %35 = arith.addf %31, %34 : vector<4x610xf32>
    %c0_19 = arith.constant 0 : index
    %c0_20 = arith.constant 0 : index
    %36 = vector.load %arg2[%c0_19, %c0_20] : memref<4x1xf32, #tpu.memory_space<vmem>>, vector<4x1xf32>
    %37 = vector.broadcast %36 : vector<4x1xf32> to vector<4x610xf32>
    %38 = arith.addf %35, %37 : vector<4x610xf32>
    %cst_21 = arith.constant 0.000000e+00 : f32
    %39 = vector.broadcast %cst_21 : f32 to vector<4x610xf32>
    %40 = arith.maximumf %38, %39 : vector<4x610xf32>
    %c0_22 = arith.constant 0 : index
    %c0_23 = arith.constant 0 : index
    %41 = vector.load %arg3[%c0_22, %c0_23] : memref<610x288xf32, #tpu.memory_space<vmem>>, vector<610x288xf32>
    %cst_24 = arith.constant dense<0.000000e+00> : vector<4x288xf32>
    %42 = tpu.matmul %40, %41, %cst_24 {dimension_numbers = #tpu.dot_dimension_numbers<[1], [0], [0], [1], [0, 0, 1, 1], [], []>} : vector<4x610xf32>, vector<610x288xf32>, vector<4x288xf32> -> vector<4x288xf32>
    %c0_25 = arith.constant 0 : index
    %c0_26 = arith.constant 0 : index
    %43 = vector.load %arg4[%c0_25, %c0_26] : memref<8x100xf32, #tpu.memory_space<vmem>>, vector<8x4xf32>
    %44 = vector.extract_strided_slice %42 {offsets = [0, 0], sizes = [4, 236], strides = [1, 1]} : vector<4x288xf32> to vector<4x236xf32>
    %cst_27 = arith.constant dense<0.000000e+00> : vector<8x236xf32>
    %45 = tpu.matmul %43, %44, %cst_27 {dimension_numbers = #tpu.dot_dimension_numbers<[1], [0], [0], [1], [0, 0, 1, 1], [], []>} : vector<8x4xf32>, vector<4x236xf32>, vector<8x236xf32> -> vector<8x236xf32>
    %c0_28 = arith.constant 0 : index
    %c4_29 = arith.constant 4 : index
    %46 = vector.load %arg4[%c0_28, %c4_29] : memref<8x100xf32, #tpu.memory_space<vmem>>, vector<8x4xf32>
    %47 = vector.extract_strided_slice %42 {offsets = [0, 1], sizes = [4, 236], strides = [1, 1]} : vector<4x288xf32> to vector<4x236xf32>
    %cst_30 = arith.constant dense<0.000000e+00> : vector<8x236xf32>
    %48 = tpu.matmul %46, %47, %cst_30 {dimension_numbers = #tpu.dot_dimension_numbers<[1], [0], [0], [1], [0, 0, 1, 1], [], []>} : vector<8x4xf32>, vector<4x236xf32>, vector<8x236xf32> -> vector<8x236xf32>
    %49 = arith.addf %45, %48 : vector<8x236xf32>
    %c0_31 = arith.constant 0 : index
    %c8_32 = arith.constant 8 : index
    %50 = vector.load %arg4[%c0_31, %c8_32] : memref<8x100xf32, #tpu.memory_space<vmem>>, vector<8x4xf32>
    %51 = vector.extract_strided_slice %42 {offsets = [0, 2], sizes = [4, 236], strides = [1, 1]} : vector<4x288xf32> to vector<4x236xf32>
    %cst_33 = arith.constant dense<0.000000e+00> : vector<8x236xf32>
    %52 = tpu.matmul %50, %51, %cst_33 {dimension_numbers = #tpu.dot_dimension_numbers<[1], [0], [0], [1], [0, 0, 1, 1], [], []>} : vector<8x4xf32>, vector<4x236xf32>, vector<8x236xf32> -> vector<8x236xf32>
    %53 = arith.addf %49, %52 : vector<8x236xf32>
    %c0_34 = arith.constant 0 : index
    %c12_35 = arith.constant 12 : index
    %54 = vector.load %arg4[%c0_34, %c12_35] : memref<8x100xf32, #tpu.memory_space<vmem>>, vector<8x4xf32>
    %55 = vector.extract_strided_slice %42 {offsets = [0, 3], sizes = [4, 236], strides = [1, 1]} : vector<4x288xf32> to vector<4x236xf32>
    %cst_36 = arith.constant dense<0.000000e+00> : vector<8x236xf32>
    %56 = tpu.matmul %54, %55, %cst_36 {dimension_numbers = #tpu.dot_dimension_numbers<[1], [0], [0], [1], [0, 0, 1, 1], [], []>} : vector<8x4xf32>, vector<4x236xf32>, vector<8x236xf32> -> vector<8x236xf32>
    %57 = arith.addf %53, %56 : vector<8x236xf32>
    %c0_37 = arith.constant 0 : index
    %c16_38 = arith.constant 16 : index
    %58 = vector.load %arg4[%c0_37, %c16_38] : memref<8x100xf32, #tpu.memory_space<vmem>>, vector<8x4xf32>
    %59 = vector.extract_strided_slice %42 {offsets = [0, 4], sizes = [4, 236], strides = [1, 1]} : vector<4x288xf32> to vector<4x236xf32>
    %cst_39 = arith.constant dense<0.000000e+00> : vector<8x236xf32>
    %60 = tpu.matmul %58, %59, %cst_39 {dimension_numbers = #tpu.dot_dimension_numbers<[1], [0], [0], [1], [0, 0, 1, 1], [], []>} : vector<8x4xf32>, vector<4x236xf32>, vector<8x236xf32> -> vector<8x236xf32>
    %61 = arith.addf %57, %60 : vector<8x236xf32>
    %c0_40 = arith.constant 0 : index
    %c20_41 = arith.constant 20 : index
    %62 = vector.load %arg4[%c0_40, %c20_41] : memref<8x100xf32, #tpu.memory_space<vmem>>, vector<8x4xf32>
    %63 = vector.extract_strided_slice %42 {offsets = [0, 12], sizes = [4, 236], strides = [1, 1]} : vector<4x288xf32> to vector<4x236xf32>
    %cst_42 = arith.constant dense<0.000000e+00> : vector<8x236xf32>
    %64 = tpu.matmul %62, %63, %cst_42 {dimension_numbers = #tpu.dot_dimension_numbers<[1], [0], [0], [1], [0, 0, 1, 1], [], []>} : vector<8x4xf32>, vector<4x236xf32>, vector<8x236xf32> -> vector<8x236xf32>
    %65 = arith.addf %61, %64 : vector<8x236xf32>
    %c0_43 = arith.constant 0 : index
    %c24_44 = arith.constant 24 : index
    %66 = vector.load %arg4[%c0_43, %c24_44] : memref<8x100xf32, #tpu.memory_space<vmem>>, vector<8x4xf32>
    %67 = vector.extract_strided_slice %42 {offsets = [0, 13], sizes = [4, 236], strides = [1, 1]} : vector<4x288xf32> to vector<4x236xf32>
    %cst_45 = arith.constant dense<0.000000e+00> : vector<8x236xf32>
    %68 = tpu.matmul %66, %67, %cst_45 {dimension_numbers = #tpu.dot_dimension_numbers<[1], [0], [0], [1], [0, 0, 1, 1], [], []>} : vector<8x4xf32>, vector<4x236xf32>, vector<8x236xf32> -> vector<8x236xf32>
    %69 = arith.addf %65, %68 : vector<8x236xf32>
    %c0_46 = arith.constant 0 : index
    %c28_47 = arith.constant 28 : index
    %70 = vector.load %arg4[%c0_46, %c28_47] : memref<8x100xf32, #tpu.memory_space<vmem>>, vector<8x4xf32>
    %71 = vector.extract_strided_slice %42 {offsets = [0, 14], sizes = [4, 236], strides = [1, 1]} : vector<4x288xf32> to vector<4x236xf32>
    %cst_48 = arith.constant dense<0.000000e+00> : vector<8x236xf32>
    %72 = tpu.matmul %70, %71, %cst_48 {dimension_numbers = #tpu.dot_dimension_numbers<[1], [0], [0], [1], [0, 0, 1, 1], [], []>} : vector<8x4xf32>, vector<4x236xf32>, vector<8x236xf32> -> vector<8x236xf32>
    %73 = arith.addf %69, %72 : vector<8x236xf32>
    %c0_49 = arith.constant 0 : index
    %c32_50 = arith.constant 32 : index
    %74 = vector.load %arg4[%c0_49, %c32_50] : memref<8x100xf32, #tpu.memory_space<vmem>>, vector<8x4xf32>
    %75 = vector.extract_strided_slice %42 {offsets = [0, 15], sizes = [4, 236], strides = [1, 1]} : vector<4x288xf32> to vector<4x236xf32>
    %cst_51 = arith.constant dense<0.000000e+00> : vector<8x236xf32>
    %76 = tpu.matmul %74, %75, %cst_51 {dimension_numbers = #tpu.dot_dimension_numbers<[1], [0], [0], [1], [0, 0, 1, 1], [], []>} : vector<8x4xf32>, vector<4x236xf32>, vector<8x236xf32> -> vector<8x236xf32>
    %77 = arith.addf %73, %76 : vector<8x236xf32>
    %c0_52 = arith.constant 0 : index
    %c36 = arith.constant 36 : index
    %78 = vector.load %arg4[%c0_52, %c36] : memref<8x100xf32, #tpu.memory_space<vmem>>, vector<8x4xf32>
    %79 = vector.extract_strided_slice %42 {offsets = [0, 16], sizes = [4, 236], strides = [1, 1]} : vector<4x288xf32> to vector<4x236xf32>
    %cst_53 = arith.constant dense<0.000000e+00> : vector<8x236xf32>
    %80 = tpu.matmul %78, %79, %cst_53 {dimension_numbers = #tpu.dot_dimension_numbers<[1], [0], [0], [1], [0, 0, 1, 1], [], []>} : vector<8x4xf32>, vector<4x236xf32>, vector<8x236xf32> -> vector<8x236xf32>
    %81 = arith.addf %77, %80 : vector<8x236xf32>
    %c0_54 = arith.constant 0 : index
    %c40 = arith.constant 40 : index
    %82 = vector.load %arg4[%c0_54, %c40] : memref<8x100xf32, #tpu.memory_space<vmem>>, vector<8x4xf32>
    %83 = vector.extract_strided_slice %42 {offsets = [0, 24], sizes = [4, 236], strides = [1, 1]} : vector<4x288xf32> to vector<4x236xf32>
    %cst_55 = arith.constant dense<0.000000e+00> : vector<8x236xf32>
    %84 = tpu.matmul %82, %83, %cst_55 {dimension_numbers = #tpu.dot_dimension_numbers<[1], [0], [0], [1], [0, 0, 1, 1], [], []>} : vector<8x4xf32>, vector<4x236xf32>, vector<8x236xf32> -> vector<8x236xf32>
    %85 = arith.addf %81, %84 : vector<8x236xf32>
    %c0_56 = arith.constant 0 : index
    %c44 = arith.constant 44 : index
    %86 = vector.load %arg4[%c0_56, %c44] : memref<8x100xf32, #tpu.memory_space<vmem>>, vector<8x4xf32>
    %87 = vector.extract_strided_slice %42 {offsets = [0, 25], sizes = [4, 236], strides = [1, 1]} : vector<4x288xf32> to vector<4x236xf32>
    %cst_57 = arith.constant dense<0.000000e+00> : vector<8x236xf32>
    %88 = tpu.matmul %86, %87, %cst_57 {dimension_numbers = #tpu.dot_dimension_numbers<[1], [0], [0], [1], [0, 0, 1, 1], [], []>} : vector<8x4xf32>, vector<4x236xf32>, vector<8x236xf32> -> vector<8x236xf32>
    %89 = arith.addf %85, %88 : vector<8x236xf32>
    %c0_58 = arith.constant 0 : index
    %c48 = arith.constant 48 : index
    %90 = vector.load %arg4[%c0_58, %c48] : memref<8x100xf32, #tpu.memory_space<vmem>>, vector<8x4xf32>
    %91 = vector.extract_strided_slice %42 {offsets = [0, 26], sizes = [4, 236], strides = [1, 1]} : vector<4x288xf32> to vector<4x236xf32>
    %cst_59 = arith.constant dense<0.000000e+00> : vector<8x236xf32>
    %92 = tpu.matmul %90, %91, %cst_59 {dimension_numbers = #tpu.dot_dimension_numbers<[1], [0], [0], [1], [0, 0, 1, 1], [], []>} : vector<8x4xf32>, vector<4x236xf32>, vector<8x236xf32> -> vector<8x236xf32>
    %93 = arith.addf %89, %92 : vector<8x236xf32>
    %c0_60 = arith.constant 0 : index
    %c52 = arith.constant 52 : index
    %94 = vector.load %arg4[%c0_60, %c52] : memref<8x100xf32, #tpu.memory_space<vmem>>, vector<8x4xf32>
    %95 = vector.extract_strided_slice %42 {offsets = [0, 27], sizes = [4, 236], strides = [1, 1]} : vector<4x288xf32> to vector<4x236xf32>
    %cst_61 = arith.constant dense<0.000000e+00> : vector<8x236xf32>
    %96 = tpu.matmul %94, %95, %cst_61 {dimension_numbers = #tpu.dot_dimension_numbers<[1], [0], [0], [1], [0, 0, 1, 1], [], []>} : vector<8x4xf32>, vector<4x236xf32>, vector<8x236xf32> -> vector<8x236xf32>
    %97 = arith.addf %93, %96 : vector<8x236xf32>
    %c0_62 = arith.constant 0 : index
    %c56 = arith.constant 56 : index
    %98 = vector.load %arg4[%c0_62, %c56] : memref<8x100xf32, #tpu.memory_space<vmem>>, vector<8x4xf32>
    %99 = vector.extract_strided_slice %42 {offsets = [0, 28], sizes = [4, 236], strides = [1, 1]} : vector<4x288xf32> to vector<4x236xf32>
    %cst_63 = arith.constant dense<0.000000e+00> : vector<8x236xf32>
    %100 = tpu.matmul %98, %99, %cst_63 {dimension_numbers = #tpu.dot_dimension_numbers<[1], [0], [0], [1], [0, 0, 1, 1], [], []>} : vector<8x4xf32>, vector<4x236xf32>, vector<8x236xf32> -> vector<8x236xf32>
    %101 = arith.addf %97, %100 : vector<8x236xf32>
    %c0_64 = arith.constant 0 : index
    %c60 = arith.constant 60 : index
    %102 = vector.load %arg4[%c0_64, %c60] : memref<8x100xf32, #tpu.memory_space<vmem>>, vector<8x4xf32>
    %103 = vector.extract_strided_slice %42 {offsets = [0, 36], sizes = [4, 236], strides = [1, 1]} : vector<4x288xf32> to vector<4x236xf32>
    %cst_65 = arith.constant dense<0.000000e+00> : vector<8x236xf32>
    %104 = tpu.matmul %102, %103, %cst_65 {dimension_numbers = #tpu.dot_dimension_numbers<[1], [0], [0], [1], [0, 0, 1, 1], [], []>} : vector<8x4xf32>, vector<4x236xf32>, vector<8x236xf32> -> vector<8x236xf32>
    %105 = arith.addf %101, %104 : vector<8x236xf32>
    %c0_66 = arith.constant 0 : index
    %c64 = arith.constant 64 : index
    %106 = vector.load %arg4[%c0_66, %c64] : memref<8x100xf32, #tpu.memory_space<vmem>>, vector<8x4xf32>
    %107 = vector.extract_strided_slice %42 {offsets = [0, 37], sizes = [4, 236], strides = [1, 1]} : vector<4x288xf32> to vector<4x236xf32>
    %cst_67 = arith.constant dense<0.000000e+00> : vector<8x236xf32>
    %108 = tpu.matmul %106, %107, %cst_67 {dimension_numbers = #tpu.dot_dimension_numbers<[1], [0], [0], [1], [0, 0, 1, 1], [], []>} : vector<8x4xf32>, vector<4x236xf32>, vector<8x236xf32> -> vector<8x236xf32>
    %109 = arith.addf %105, %108 : vector<8x236xf32>
    %c0_68 = arith.constant 0 : index
    %c68 = arith.constant 68 : index
    %110 = vector.load %arg4[%c0_68, %c68] : memref<8x100xf32, #tpu.memory_space<vmem>>, vector<8x4xf32>
    %111 = vector.extract_strided_slice %42 {offsets = [0, 38], sizes = [4, 236], strides = [1, 1]} : vector<4x288xf32> to vector<4x236xf32>
    %cst_69 = arith.constant dense<0.000000e+00> : vector<8x236xf32>
    %112 = tpu.matmul %110, %111, %cst_69 {dimension_numbers = #tpu.dot_dimension_numbers<[1], [0], [0], [1], [0, 0, 1, 1], [], []>} : vector<8x4xf32>, vector<4x236xf32>, vector<8x236xf32> -> vector<8x236xf32>
    %113 = arith.addf %109, %112 : vector<8x236xf32>
    %c0_70 = arith.constant 0 : index
    %c72 = arith.constant 72 : index
    %114 = vector.load %arg4[%c0_70, %c72] : memref<8x100xf32, #tpu.memory_space<vmem>>, vector<8x4xf32>
    %115 = vector.extract_strided_slice %42 {offsets = [0, 39], sizes = [4, 236], strides = [1, 1]} : vector<4x288xf32> to vector<4x236xf32>
    %cst_71 = arith.constant dense<0.000000e+00> : vector<8x236xf32>
    %116 = tpu.matmul %114, %115, %cst_71 {dimension_numbers = #tpu.dot_dimension_numbers<[1], [0], [0], [1], [0, 0, 1, 1], [], []>} : vector<8x4xf32>, vector<4x236xf32>, vector<8x236xf32> -> vector<8x236xf32>
    %117 = arith.addf %113, %116 : vector<8x236xf32>
    %c0_72 = arith.constant 0 : index
    %c76 = arith.constant 76 : index
    %118 = vector.load %arg4[%c0_72, %c76] : memref<8x100xf32, #tpu.memory_space<vmem>>, vector<8x4xf32>
    %119 = vector.extract_strided_slice %42 {offsets = [0, 40], sizes = [4, 236], strides = [1, 1]} : vector<4x288xf32> to vector<4x236xf32>
    %cst_73 = arith.constant dense<0.000000e+00> : vector<8x236xf32>
    %120 = tpu.matmul %118, %119, %cst_73 {dimension_numbers = #tpu.dot_dimension_numbers<[1], [0], [0], [1], [0, 0, 1, 1], [], []>} : vector<8x4xf32>, vector<4x236xf32>, vector<8x236xf32> -> vector<8x236xf32>
    %121 = arith.addf %117, %120 : vector<8x236xf32>
    %c0_74 = arith.constant 0 : index
    %c80 = arith.constant 80 : index
    %122 = vector.load %arg4[%c0_74, %c80] : memref<8x100xf32, #tpu.memory_space<vmem>>, vector<8x4xf32>
    %123 = vector.extract_strided_slice %42 {offsets = [0, 48], sizes = [4, 236], strides = [1, 1]} : vector<4x288xf32> to vector<4x236xf32>
    %cst_75 = arith.constant dense<0.000000e+00> : vector<8x236xf32>
    %124 = tpu.matmul %122, %123, %cst_75 {dimension_numbers = #tpu.dot_dimension_numbers<[1], [0], [0], [1], [0, 0, 1, 1], [], []>} : vector<8x4xf32>, vector<4x236xf32>, vector<8x236xf32> -> vector<8x236xf32>
    %125 = arith.addf %121, %124 : vector<8x236xf32>
    %c0_76 = arith.constant 0 : index
    %c84 = arith.constant 84 : index
    %126 = vector.load %arg4[%c0_76, %c84] : memref<8x100xf32, #tpu.memory_space<vmem>>, vector<8x4xf32>
    %127 = vector.extract_strided_slice %42 {offsets = [0, 49], sizes = [4, 236], strides = [1, 1]} : vector<4x288xf32> to vector<4x236xf32>
    %cst_77 = arith.constant dense<0.000000e+00> : vector<8x236xf32>
    %128 = tpu.matmul %126, %127, %cst_77 {dimension_numbers = #tpu.dot_dimension_numbers<[1], [0], [0], [1], [0, 0, 1, 1], [], []>} : vector<8x4xf32>, vector<4x236xf32>, vector<8x236xf32> -> vector<8x236xf32>
    %129 = arith.addf %125, %128 : vector<8x236xf32>
    %c0_78 = arith.constant 0 : index
    %c88 = arith.constant 88 : index
    %130 = vector.load %arg4[%c0_78, %c88] : memref<8x100xf32, #tpu.memory_space<vmem>>, vector<8x4xf32>
    %131 = vector.extract_strided_slice %42 {offsets = [0, 50], sizes = [4, 236], strides = [1, 1]} : vector<4x288xf32> to vector<4x236xf32>
    %cst_79 = arith.constant dense<0.000000e+00> : vector<8x236xf32>
    %132 = tpu.matmul %130, %131, %cst_79 {dimension_numbers = #tpu.dot_dimension_numbers<[1], [0], [0], [1], [0, 0, 1, 1], [], []>} : vector<8x4xf32>, vector<4x236xf32>, vector<8x236xf32> -> vector<8x236xf32>
    %133 = arith.addf %129, %132 : vector<8x236xf32>
    %c0_80 = arith.constant 0 : index
    %c92 = arith.constant 92 : index
    %134 = vector.load %arg4[%c0_80, %c92] : memref<8x100xf32, #tpu.memory_space<vmem>>, vector<8x4xf32>
    %135 = vector.extract_strided_slice %42 {offsets = [0, 51], sizes = [4, 236], strides = [1, 1]} : vector<4x288xf32> to vector<4x236xf32>
    %cst_81 = arith.constant dense<0.000000e+00> : vector<8x236xf32>
    %136 = tpu.matmul %134, %135, %cst_81 {dimension_numbers = #tpu.dot_dimension_numbers<[1], [0], [0], [1], [0, 0, 1, 1], [], []>} : vector<8x4xf32>, vector<4x236xf32>, vector<8x236xf32> -> vector<8x236xf32>
    %137 = arith.addf %133, %136 : vector<8x236xf32>
    %c0_82 = arith.constant 0 : index
    %c96 = arith.constant 96 : index
    %138 = vector.load %arg4[%c0_82, %c96] : memref<8x100xf32, #tpu.memory_space<vmem>>, vector<8x4xf32>
    %139 = vector.extract_strided_slice %42 {offsets = [0, 52], sizes = [4, 236], strides = [1, 1]} : vector<4x288xf32> to vector<4x236xf32>
    %cst_83 = arith.constant dense<0.000000e+00> : vector<8x236xf32>
    %140 = tpu.matmul %138, %139, %cst_83 {dimension_numbers = #tpu.dot_dimension_numbers<[1], [0], [0], [1], [0, 0, 1, 1], [], []>} : vector<8x4xf32>, vector<4x236xf32>, vector<8x236xf32> -> vector<8x236xf32>
    %141 = arith.addf %137, %140 : vector<8x236xf32>
    %c0_84 = arith.constant 0 : index
    %c0_85 = arith.constant 0 : index
    %142 = vector.load %arg5[%c0_84, %c0_85] : memref<8x1xf32, #tpu.memory_space<vmem>>, vector<8x1xf32>
    %143 = vector.broadcast %142 : vector<8x1xf32> to vector<8x236xf32>
    %144 = arith.addf %141, %143 : vector<8x236xf32>
    %cst_86 = arith.constant 0.000000e+00 : f32
    %145 = vector.broadcast %cst_86 : f32 to vector<8x236xf32>
    %146 = arith.maximumf %144, %145 : vector<8x236xf32>
    %c0_87 = arith.constant 0 : index
    %c0_88 = arith.constant 0 : index
    %147 = vector.load %arg6[%c0_87, %c0_88] : memref<236x72xf32, #tpu.memory_space<vmem>>, vector<236x72xf32>
    %cst_89 = arith.constant dense<0.000000e+00> : vector<8x72xf32>
    %148 = tpu.matmul %146, %147, %cst_89 {dimension_numbers = #tpu.dot_dimension_numbers<[1], [0], [0], [1], [0, 0, 1, 1], [], []>} : vector<8x236xf32>, vector<236x72xf32>, vector<8x72xf32> -> vector<8x72xf32>
    %c0_90 = arith.constant 0 : index
    %c0_91 = arith.constant 0 : index
    %149 = vector.load %arg7[%c0_90, %c0_91] : memref<16x72xf32, #tpu.memory_space<vmem>>, vector<16x8xf32>
    %150 = vector.extract_strided_slice %148 {offsets = [0, 0], sizes = [8, 58], strides = [1, 1]} : vector<8x72xf32> to vector<8x58xf32>
    %cst_92 = arith.constant dense<0.000000e+00> : vector<16x58xf32>
    %151 = tpu.matmul %149, %150, %cst_92 {dimension_numbers = #tpu.dot_dimension_numbers<[1], [0], [0], [1], [0, 0, 1, 1], [], []>} : vector<16x8xf32>, vector<8x58xf32>, vector<16x58xf32> -> vector<16x58xf32>
    %c0_93 = arith.constant 0 : index
    %c8_94 = arith.constant 8 : index
    %152 = vector.load %arg7[%c0_93, %c8_94] : memref<16x72xf32, #tpu.memory_space<vmem>>, vector<16x8xf32>
    %153 = vector.extract_strided_slice %148 {offsets = [0, 1], sizes = [8, 58], strides = [1, 1]} : vector<8x72xf32> to vector<8x58xf32>
    %cst_95 = arith.constant dense<0.000000e+00> : vector<16x58xf32>
    %154 = tpu.matmul %152, %153, %cst_95 {dimension_numbers = #tpu.dot_dimension_numbers<[1], [0], [0], [1], [0, 0, 1, 1], [], []>} : vector<16x8xf32>, vector<8x58xf32>, vector<16x58xf32> -> vector<16x58xf32>
    %155 = arith.addf %151, %154 : vector<16x58xf32>
    %c0_96 = arith.constant 0 : index
    %c16_97 = arith.constant 16 : index
    %156 = vector.load %arg7[%c0_96, %c16_97] : memref<16x72xf32, #tpu.memory_space<vmem>>, vector<16x8xf32>
    %157 = vector.extract_strided_slice %148 {offsets = [0, 2], sizes = [8, 58], strides = [1, 1]} : vector<8x72xf32> to vector<8x58xf32>
    %cst_98 = arith.constant dense<0.000000e+00> : vector<16x58xf32>
    %158 = tpu.matmul %156, %157, %cst_98 {dimension_numbers = #tpu.dot_dimension_numbers<[1], [0], [0], [1], [0, 0, 1, 1], [], []>} : vector<16x8xf32>, vector<8x58xf32>, vector<16x58xf32> -> vector<16x58xf32>
    %159 = arith.addf %155, %158 : vector<16x58xf32>
    %c0_99 = arith.constant 0 : index
    %c24_100 = arith.constant 24 : index
    %160 = vector.load %arg7[%c0_99, %c24_100] : memref<16x72xf32, #tpu.memory_space<vmem>>, vector<16x8xf32>
    %161 = vector.extract_strided_slice %148 {offsets = [0, 6], sizes = [8, 58], strides = [1, 1]} : vector<8x72xf32> to vector<8x58xf32>
    %cst_101 = arith.constant dense<0.000000e+00> : vector<16x58xf32>
    %162 = tpu.matmul %160, %161, %cst_101 {dimension_numbers = #tpu.dot_dimension_numbers<[1], [0], [0], [1], [0, 0, 1, 1], [], []>} : vector<16x8xf32>, vector<8x58xf32>, vector<16x58xf32> -> vector<16x58xf32>
    %163 = arith.addf %159, %162 : vector<16x58xf32>
    %c0_102 = arith.constant 0 : index
    %c32_103 = arith.constant 32 : index
    %164 = vector.load %arg7[%c0_102, %c32_103] : memref<16x72xf32, #tpu.memory_space<vmem>>, vector<16x8xf32>
    %165 = vector.extract_strided_slice %148 {offsets = [0, 7], sizes = [8, 58], strides = [1, 1]} : vector<8x72xf32> to vector<8x58xf32>
    %cst_104 = arith.constant dense<0.000000e+00> : vector<16x58xf32>
    %166 = tpu.matmul %164, %165, %cst_104 {dimension_numbers = #tpu.dot_dimension_numbers<[1], [0], [0], [1], [0, 0, 1, 1], [], []>} : vector<16x8xf32>, vector<8x58xf32>, vector<16x58xf32> -> vector<16x58xf32>
    %167 = arith.addf %163, %166 : vector<16x58xf32>
    %c0_105 = arith.constant 0 : index
    %c40_106 = arith.constant 40 : index
    %168 = vector.load %arg7[%c0_105, %c40_106] : memref<16x72xf32, #tpu.memory_space<vmem>>, vector<16x8xf32>
    %169 = vector.extract_strided_slice %148 {offsets = [0, 8], sizes = [8, 58], strides = [1, 1]} : vector<8x72xf32> to vector<8x58xf32>
    %cst_107 = arith.constant dense<0.000000e+00> : vector<16x58xf32>
    %170 = tpu.matmul %168, %169, %cst_107 {dimension_numbers = #tpu.dot_dimension_numbers<[1], [0], [0], [1], [0, 0, 1, 1], [], []>} : vector<16x8xf32>, vector<8x58xf32>, vector<16x58xf32> -> vector<16x58xf32>
    %171 = arith.addf %167, %170 : vector<16x58xf32>
    %c0_108 = arith.constant 0 : index
    %c48_109 = arith.constant 48 : index
    %172 = vector.load %arg7[%c0_108, %c48_109] : memref<16x72xf32, #tpu.memory_space<vmem>>, vector<16x8xf32>
    %173 = vector.extract_strided_slice %148 {offsets = [0, 12], sizes = [8, 58], strides = [1, 1]} : vector<8x72xf32> to vector<8x58xf32>
    %cst_110 = arith.constant dense<0.000000e+00> : vector<16x58xf32>
    %174 = tpu.matmul %172, %173, %cst_110 {dimension_numbers = #tpu.dot_dimension_numbers<[1], [0], [0], [1], [0, 0, 1, 1], [], []>} : vector<16x8xf32>, vector<8x58xf32>, vector<16x58xf32> -> vector<16x58xf32>
    %175 = arith.addf %171, %174 : vector<16x58xf32>
    %c0_111 = arith.constant 0 : index
    %c56_112 = arith.constant 56 : index
    %176 = vector.load %arg7[%c0_111, %c56_112] : memref<16x72xf32, #tpu.memory_space<vmem>>, vector<16x8xf32>
    %177 = vector.extract_strided_slice %148 {offsets = [0, 13], sizes = [8, 58], strides = [1, 1]} : vector<8x72xf32> to vector<8x58xf32>
    %cst_113 = arith.constant dense<0.000000e+00> : vector<16x58xf32>
    %178 = tpu.matmul %176, %177, %cst_113 {dimension_numbers = #tpu.dot_dimension_numbers<[1], [0], [0], [1], [0, 0, 1, 1], [], []>} : vector<16x8xf32>, vector<8x58xf32>, vector<16x58xf32> -> vector<16x58xf32>
    %179 = arith.addf %175, %178 : vector<16x58xf32>
    %c0_114 = arith.constant 0 : index
    %c64_115 = arith.constant 64 : index
    %180 = vector.load %arg7[%c0_114, %c64_115] : memref<16x72xf32, #tpu.memory_space<vmem>>, vector<16x8xf32>
    %181 = vector.extract_strided_slice %148 {offsets = [0, 14], sizes = [8, 58], strides = [1, 1]} : vector<8x72xf32> to vector<8x58xf32>
    %cst_116 = arith.constant dense<0.000000e+00> : vector<16x58xf32>
    %182 = tpu.matmul %180, %181, %cst_116 {dimension_numbers = #tpu.dot_dimension_numbers<[1], [0], [0], [1], [0, 0, 1, 1], [], []>} : vector<16x8xf32>, vector<8x58xf32>, vector<16x58xf32> -> vector<16x58xf32>
    %183 = arith.addf %179, %182 : vector<16x58xf32>
    %c0_117 = arith.constant 0 : index
    %c0_118 = arith.constant 0 : index
    %184 = vector.load %arg8[%c0_117, %c0_118] : memref<16x1xf32, #tpu.memory_space<vmem>>, vector<16x1xf32>
    %185 = vector.broadcast %184 : vector<16x1xf32> to vector<16x58xf32>
    %186 = arith.addf %183, %185 : vector<16x58xf32>
    %cst_119 = arith.constant 0.000000e+00 : f32
    %187 = vector.broadcast %cst_119 : f32 to vector<16x58xf32>
    %188 = arith.maximumf %186, %187 : vector<16x58xf32>
    %c0_120 = arith.constant 0 : index
    %c0_121 = arith.constant 0 : index
    %189 = vector.load %arg9[%c0_120, %c0_121] : memref<58x128xf32, #tpu.memory_space<vmem>>, vector<58x128xf32>
    %cst_122 = arith.constant dense<0.000000e+00> : vector<16x128xf32>
    %190 = tpu.matmul %188, %189, %cst_122 {dimension_numbers = #tpu.dot_dimension_numbers<[1], [0], [0], [1], [0, 0, 1, 1], [], []>} : vector<16x58xf32>, vector<58x128xf32>, vector<16x128xf32> -> vector<16x128xf32>
    %c0_123 = arith.constant 0 : index
    %c0_124 = arith.constant 0 : index
    %191 = vector.load %arg10[%c0_123, %c0_124] : memref<16x128xf32, #tpu.memory_space<vmem>>, vector<16x128xf32>
    %192 = arith.mulf %190, %191 : vector<16x128xf32>
    %cst_125 = arith.constant dense<0.000000e+00> : vector<128xf32>
    %193 = vector.multi_reduction <add>, %192, %cst_125 [0] : vector<16x128xf32> to vector<128xf32>
    %194 = vector.shape_cast %193 : vector<128xf32> to vector<1x128xf32>
    %c0_126 = arith.constant 0 : index
    %c0_127 = arith.constant 0 : index
    %195 = vector.load %arg11[%c0_126, %c0_127] : memref<128x16xf32, #tpu.memory_space<vmem>>, vector<128x16xf32>
    %cst_128 = arith.constant dense<0.000000e+00> : vector<1x16xf32>
    %196 = tpu.matmul %194, %195, %cst_128 {dimension_numbers = #tpu.dot_dimension_numbers<[1], [0], [0], [1], [0, 0, 1, 1], [], []>} : vector<1x128xf32>, vector<128x16xf32>, vector<1x16xf32> -> vector<1x16xf32>
    %c0_129 = arith.constant 0 : index
    %c0_130 = arith.constant 0 : index
    %197 = vector.load %arg12[%c0_129, %c0_130] : memref<1x16xf32, #tpu.memory_space<vmem>>, vector<1x16xf32>
    %198 = arith.addf %196, %197 : vector<1x16xf32>
    %cst_131 = arith.constant 0.000000e+00 : f32
    %199 = vector.broadcast %cst_131 : f32 to vector<1x16xf32>
    %200 = arith.maximumf %198, %199 : vector<1x16xf32>
    %c0_132 = arith.constant 0 : index
    %c0_133 = arith.constant 0 : index
    %201 = vector.load %arg13[%c0_132, %c0_133] : memref<16x8xf32, #tpu.memory_space<vmem>>, vector<16x8xf32>
    %cst_134 = arith.constant dense<0.000000e+00> : vector<1x8xf32>
    %202 = tpu.matmul %200, %201, %cst_134 {dimension_numbers = #tpu.dot_dimension_numbers<[1], [0], [0], [1], [0, 0, 1, 1], [], []>} : vector<1x16xf32>, vector<16x8xf32>, vector<1x8xf32> -> vector<1x8xf32>
    %c0_135 = arith.constant 0 : index
    %c0_136 = arith.constant 0 : index
    %203 = vector.load %arg14[%c0_135, %c0_136] : memref<1x8xf32, #tpu.memory_space<vmem>>, vector<1x8xf32>
    %204 = arith.addf %202, %203 : vector<1x8xf32>
    %cst_137 = arith.constant 0.000000e+00 : f32
    %205 = vector.broadcast %cst_137 : f32 to vector<1x8xf32>
    %206 = arith.maximumf %204, %205 : vector<1x8xf32>
    %c0_138 = arith.constant 0 : index
    %c0_139 = arith.constant 0 : index
    %207 = vector.load %arg15[%c0_138, %c0_139] : memref<8x16xf32, #tpu.memory_space<vmem>>, vector<8x16xf32>
    %cst_140 = arith.constant dense<0.000000e+00> : vector<1x16xf32>
    %208 = tpu.matmul %206, %207, %cst_140 {dimension_numbers = #tpu.dot_dimension_numbers<[1], [0], [0], [1], [0, 0, 1, 1], [], []>} : vector<1x8xf32>, vector<8x16xf32>, vector<1x16xf32> -> vector<1x16xf32>
    %c0_141 = arith.constant 0 : index
    %c0_142 = arith.constant 0 : index
    %209 = vector.load %arg16[%c0_141, %c0_142] : memref<1x16xf32, #tpu.memory_space<vmem>>, vector<1x16xf32>
    %210 = arith.addf %208, %209 : vector<1x16xf32>
    %cst_143 = arith.constant 0.000000e+00 : f32
    %211 = vector.broadcast %cst_143 : f32 to vector<1x16xf32>
    %212 = arith.maximumf %210, %211 : vector<1x16xf32>
    %c0_144 = arith.constant 0 : index
    %c0_145 = arith.constant 0 : index
    %213 = vector.load %arg17[%c0_144, %c0_145] : memref<16x128xf32, #tpu.memory_space<vmem>>, vector<16x128xf32>
    %cst_146 = arith.constant dense<0.000000e+00> : vector<1x128xf32>
    %214 = tpu.matmul %212, %213, %cst_146 {dimension_numbers = #tpu.dot_dimension_numbers<[1], [0], [0], [1], [0, 0, 1, 1], [], []>} : vector<1x16xf32>, vector<16x128xf32>, vector<1x128xf32> -> vector<1x128xf32>
    %c0_147 = arith.constant 0 : index
    %c0_148 = arith.constant 0 : index
    %215 = vector.load %arg18[%c0_147, %c0_148] : memref<1x128xf32, #tpu.memory_space<vmem>>, vector<1x128xf32>
    %216 = arith.addf %214, %215 : vector<1x128xf32>
    %cst_149 = arith.constant 0.000000e+00 : f32
    %217 = vector.broadcast %cst_149 : f32 to vector<1x128xf32>
    %218 = arith.maximumf %216, %217 : vector<1x128xf32>
    %c0_150 = arith.constant 0 : index
    %c0_151 = arith.constant 0 : index
    %219 = vector.load %arg10[%c0_150, %c0_151] : memref<16x128xf32, #tpu.memory_space<vmem>>, vector<16x128xf32>
    %220 = vector.broadcast %218 : vector<1x128xf32> to vector<16x128xf32>
    %221 = arith.mulf %220, %219 : vector<16x128xf32>
    %c0_152 = arith.constant 0 : index
    %c0_153 = arith.constant 0 : index
    %222 = vector.load %arg19[%c0_152, %c0_153] : memref<128x72xf32, #tpu.memory_space<vmem>>, vector<128x72xf32>
    %cst_154 = arith.constant dense<0.000000e+00> : vector<16x72xf32>
    %223 = tpu.matmul %221, %222, %cst_154 {dimension_numbers = #tpu.dot_dimension_numbers<[1], [0], [0], [1], [0, 0, 1, 1], [], []>} : vector<16x128xf32>, vector<128x72xf32>, vector<16x72xf32> -> vector<16x72xf32>
    %c0_155 = arith.constant 0 : index
    %c0_156 = arith.constant 0 : index
    %224 = vector.load %arg20[%c0_155, %c0_156] : memref<8x144xf32, #tpu.memory_space<vmem>>, vector<8x16xf32>
    %225 = vector.extract_strided_slice %223 {offsets = [0, 0], sizes = [16, 58], strides = [1, 1]} : vector<16x72xf32> to vector<16x58xf32>
    %cst_157 = arith.constant dense<0.000000e+00> : vector<8x58xf32>
    %226 = tpu.matmul %224, %225, %cst_157 {dimension_numbers = #tpu.dot_dimension_numbers<[1], [0], [0], [1], [0, 0, 1, 1], [], []>} : vector<8x16xf32>, vector<16x58xf32>, vector<8x58xf32> -> vector<8x58xf32>
    %c0_158 = arith.constant 0 : index
    %c16_159 = arith.constant 16 : index
    %227 = vector.load %arg20[%c0_158, %c16_159] : memref<8x144xf32, #tpu.memory_space<vmem>>, vector<8x16xf32>
    %228 = vector.extract_strided_slice %223 {offsets = [0, 1], sizes = [16, 58], strides = [1, 1]} : vector<16x72xf32> to vector<16x58xf32>
    %cst_160 = arith.constant dense<0.000000e+00> : vector<8x58xf32>
    %229 = tpu.matmul %227, %228, %cst_160 {dimension_numbers = #tpu.dot_dimension_numbers<[1], [0], [0], [1], [0, 0, 1, 1], [], []>} : vector<8x16xf32>, vector<16x58xf32>, vector<8x58xf32> -> vector<8x58xf32>
    %230 = arith.addf %226, %229 : vector<8x58xf32>
    %c0_161 = arith.constant 0 : index
    %c32_162 = arith.constant 32 : index
    %231 = vector.load %arg20[%c0_161, %c32_162] : memref<8x144xf32, #tpu.memory_space<vmem>>, vector<8x16xf32>
    %232 = vector.extract_strided_slice %223 {offsets = [0, 2], sizes = [16, 58], strides = [1, 1]} : vector<16x72xf32> to vector<16x58xf32>
    %cst_163 = arith.constant dense<0.000000e+00> : vector<8x58xf32>
    %233 = tpu.matmul %231, %232, %cst_163 {dimension_numbers = #tpu.dot_dimension_numbers<[1], [0], [0], [1], [0, 0, 1, 1], [], []>} : vector<8x16xf32>, vector<16x58xf32>, vector<8x58xf32> -> vector<8x58xf32>
    %234 = arith.addf %230, %233 : vector<8x58xf32>
    %c0_164 = arith.constant 0 : index
    %c48_165 = arith.constant 48 : index
    %235 = vector.load %arg20[%c0_164, %c48_165] : memref<8x144xf32, #tpu.memory_space<vmem>>, vector<8x16xf32>
    %236 = vector.extract_strided_slice %223 {offsets = [0, 6], sizes = [16, 58], strides = [1, 1]} : vector<16x72xf32> to vector<16x58xf32>
    %cst_166 = arith.constant dense<0.000000e+00> : vector<8x58xf32>
    %237 = tpu.matmul %235, %236, %cst_166 {dimension_numbers = #tpu.dot_dimension_numbers<[1], [0], [0], [1], [0, 0, 1, 1], [], []>} : vector<8x16xf32>, vector<16x58xf32>, vector<8x58xf32> -> vector<8x58xf32>
    %238 = arith.addf %234, %237 : vector<8x58xf32>
    %c0_167 = arith.constant 0 : index
    %c64_168 = arith.constant 64 : index
    %239 = vector.load %arg20[%c0_167, %c64_168] : memref<8x144xf32, #tpu.memory_space<vmem>>, vector<8x16xf32>
    %240 = vector.extract_strided_slice %223 {offsets = [0, 7], sizes = [16, 58], strides = [1, 1]} : vector<16x72xf32> to vector<16x58xf32>
    %cst_169 = arith.constant dense<0.000000e+00> : vector<8x58xf32>
    %241 = tpu.matmul %239, %240, %cst_169 {dimension_numbers = #tpu.dot_dimension_numbers<[1], [0], [0], [1], [0, 0, 1, 1], [], []>} : vector<8x16xf32>, vector<16x58xf32>, vector<8x58xf32> -> vector<8x58xf32>
    %242 = arith.addf %238, %241 : vector<8x58xf32>
    %c0_170 = arith.constant 0 : index
    %c80_171 = arith.constant 80 : index
    %243 = vector.load %arg20[%c0_170, %c80_171] : memref<8x144xf32, #tpu.memory_space<vmem>>, vector<8x16xf32>
    %244 = vector.extract_strided_slice %223 {offsets = [0, 8], sizes = [16, 58], strides = [1, 1]} : vector<16x72xf32> to vector<16x58xf32>
    %cst_172 = arith.constant dense<0.000000e+00> : vector<8x58xf32>
    %245 = tpu.matmul %243, %244, %cst_172 {dimension_numbers = #tpu.dot_dimension_numbers<[1], [0], [0], [1], [0, 0, 1, 1], [], []>} : vector<8x16xf32>, vector<16x58xf32>, vector<8x58xf32> -> vector<8x58xf32>
    %246 = arith.addf %242, %245 : vector<8x58xf32>
    %c0_173 = arith.constant 0 : index
    %c96_174 = arith.constant 96 : index
    %247 = vector.load %arg20[%c0_173, %c96_174] : memref<8x144xf32, #tpu.memory_space<vmem>>, vector<8x16xf32>
    %248 = vector.extract_strided_slice %223 {offsets = [0, 12], sizes = [16, 58], strides = [1, 1]} : vector<16x72xf32> to vector<16x58xf32>
    %cst_175 = arith.constant dense<0.000000e+00> : vector<8x58xf32>
    %249 = tpu.matmul %247, %248, %cst_175 {dimension_numbers = #tpu.dot_dimension_numbers<[1], [0], [0], [1], [0, 0, 1, 1], [], []>} : vector<8x16xf32>, vector<16x58xf32>, vector<8x58xf32> -> vector<8x58xf32>
    %250 = arith.addf %246, %249 : vector<8x58xf32>
    %c0_176 = arith.constant 0 : index
    %c112 = arith.constant 112 : index
    %251 = vector.load %arg20[%c0_176, %c112] : memref<8x144xf32, #tpu.memory_space<vmem>>, vector<8x16xf32>
    %252 = vector.extract_strided_slice %223 {offsets = [0, 13], sizes = [16, 58], strides = [1, 1]} : vector<16x72xf32> to vector<16x58xf32>
    %cst_177 = arith.constant dense<0.000000e+00> : vector<8x58xf32>
    %253 = tpu.matmul %251, %252, %cst_177 {dimension_numbers = #tpu.dot_dimension_numbers<[1], [0], [0], [1], [0, 0, 1, 1], [], []>} : vector<8x16xf32>, vector<16x58xf32>, vector<8x58xf32> -> vector<8x58xf32>
    %254 = arith.addf %250, %253 : vector<8x58xf32>
    %c0_178 = arith.constant 0 : index
    %c128 = arith.constant 128 : index
    %255 = vector.load %arg20[%c0_178, %c128] : memref<8x144xf32, #tpu.memory_space<vmem>>, vector<8x16xf32>
    %256 = vector.extract_strided_slice %223 {offsets = [0, 14], sizes = [16, 58], strides = [1, 1]} : vector<16x72xf32> to vector<16x58xf32>
    %cst_179 = arith.constant dense<0.000000e+00> : vector<8x58xf32>
    %257 = tpu.matmul %255, %256, %cst_179 {dimension_numbers = #tpu.dot_dimension_numbers<[1], [0], [0], [1], [0, 0, 1, 1], [], []>} : vector<8x16xf32>, vector<16x58xf32>, vector<8x58xf32> -> vector<8x58xf32>
    %258 = arith.addf %254, %257 : vector<8x58xf32>
    %c0_180 = arith.constant 0 : index
    %c0_181 = arith.constant 0 : index
    %259 = vector.load %arg21[%c0_180, %c0_181] : memref<8x1xf32, #tpu.memory_space<vmem>>, vector<8x1xf32>
    %260 = vector.broadcast %259 : vector<8x1xf32> to vector<8x58xf32>
    %261 = arith.addf %258, %260 : vector<8x58xf32>
    %cst_182 = arith.constant 0.000000e+00 : f32
    %262 = vector.broadcast %cst_182 : f32 to vector<8x58xf32>
    %263 = arith.maximumf %261, %262 : vector<8x58xf32>
    %c0_183 = arith.constant 0 : index
    %c0_184 = arith.constant 0 : index
    %264 = vector.load %arg22[%c0_183, %c0_184] : memref<58x288xf32, #tpu.memory_space<vmem>>, vector<58x288xf32>
    %cst_185 = arith.constant dense<0.000000e+00> : vector<8x288xf32>
    %265 = tpu.matmul %263, %264, %cst_185 {dimension_numbers = #tpu.dot_dimension_numbers<[1], [0], [0], [1], [0, 0, 1, 1], [], []>} : vector<8x58xf32>, vector<58x288xf32>, vector<8x288xf32> -> vector<8x288xf32>
    %c0_186 = arith.constant 0 : index
    %c0_187 = arith.constant 0 : index
    %266 = vector.load %arg23[%c0_186, %c0_187] : memref<4x200xf32, #tpu.memory_space<vmem>>, vector<4x8xf32>
    %267 = vector.extract_strided_slice %265 {offsets = [0, 0], sizes = [8, 236], strides = [1, 1]} : vector<8x288xf32> to vector<8x236xf32>
    %cst_188 = arith.constant dense<0.000000e+00> : vector<4x236xf32>
    %268 = tpu.matmul %266, %267, %cst_188 {dimension_numbers = #tpu.dot_dimension_numbers<[1], [0], [0], [1], [0, 0, 1, 1], [], []>} : vector<4x8xf32>, vector<8x236xf32>, vector<4x236xf32> -> vector<4x236xf32>
    %c0_189 = arith.constant 0 : index
    %c8_190 = arith.constant 8 : index
    %269 = vector.load %arg23[%c0_189, %c8_190] : memref<4x200xf32, #tpu.memory_space<vmem>>, vector<4x8xf32>
    %270 = vector.extract_strided_slice %265 {offsets = [0, 1], sizes = [8, 236], strides = [1, 1]} : vector<8x288xf32> to vector<8x236xf32>
    %cst_191 = arith.constant dense<0.000000e+00> : vector<4x236xf32>
    %271 = tpu.matmul %269, %270, %cst_191 {dimension_numbers = #tpu.dot_dimension_numbers<[1], [0], [0], [1], [0, 0, 1, 1], [], []>} : vector<4x8xf32>, vector<8x236xf32>, vector<4x236xf32> -> vector<4x236xf32>
    %272 = arith.addf %268, %271 : vector<4x236xf32>
    %c0_192 = arith.constant 0 : index
    %c16_193 = arith.constant 16 : index
    %273 = vector.load %arg23[%c0_192, %c16_193] : memref<4x200xf32, #tpu.memory_space<vmem>>, vector<4x8xf32>
    %274 = vector.extract_strided_slice %265 {offsets = [0, 2], sizes = [8, 236], strides = [1, 1]} : vector<8x288xf32> to vector<8x236xf32>
    %cst_194 = arith.constant dense<0.000000e+00> : vector<4x236xf32>
    %275 = tpu.matmul %273, %274, %cst_194 {dimension_numbers = #tpu.dot_dimension_numbers<[1], [0], [0], [1], [0, 0, 1, 1], [], []>} : vector<4x8xf32>, vector<8x236xf32>, vector<4x236xf32> -> vector<4x236xf32>
    %276 = arith.addf %272, %275 : vector<4x236xf32>
    %c0_195 = arith.constant 0 : index
    %c24_196 = arith.constant 24 : index
    %277 = vector.load %arg23[%c0_195, %c24_196] : memref<4x200xf32, #tpu.memory_space<vmem>>, vector<4x8xf32>
    %278 = vector.extract_strided_slice %265 {offsets = [0, 3], sizes = [8, 236], strides = [1, 1]} : vector<8x288xf32> to vector<8x236xf32>
    %cst_197 = arith.constant dense<0.000000e+00> : vector<4x236xf32>
    %279 = tpu.matmul %277, %278, %cst_197 {dimension_numbers = #tpu.dot_dimension_numbers<[1], [0], [0], [1], [0, 0, 1, 1], [], []>} : vector<4x8xf32>, vector<8x236xf32>, vector<4x236xf32> -> vector<4x236xf32>
    %280 = arith.addf %276, %279 : vector<4x236xf32>
    %c0_198 = arith.constant 0 : index
    %c32_199 = arith.constant 32 : index
    %281 = vector.load %arg23[%c0_198, %c32_199] : memref<4x200xf32, #tpu.memory_space<vmem>>, vector<4x8xf32>
    %282 = vector.extract_strided_slice %265 {offsets = [0, 4], sizes = [8, 236], strides = [1, 1]} : vector<8x288xf32> to vector<8x236xf32>
    %cst_200 = arith.constant dense<0.000000e+00> : vector<4x236xf32>
    %283 = tpu.matmul %281, %282, %cst_200 {dimension_numbers = #tpu.dot_dimension_numbers<[1], [0], [0], [1], [0, 0, 1, 1], [], []>} : vector<4x8xf32>, vector<8x236xf32>, vector<4x236xf32> -> vector<4x236xf32>
    %284 = arith.addf %280, %283 : vector<4x236xf32>
    %c0_201 = arith.constant 0 : index
    %c40_202 = arith.constant 40 : index
    %285 = vector.load %arg23[%c0_201, %c40_202] : memref<4x200xf32, #tpu.memory_space<vmem>>, vector<4x8xf32>
    %286 = vector.extract_strided_slice %265 {offsets = [0, 12], sizes = [8, 236], strides = [1, 1]} : vector<8x288xf32> to vector<8x236xf32>
    %cst_203 = arith.constant dense<0.000000e+00> : vector<4x236xf32>
    %287 = tpu.matmul %285, %286, %cst_203 {dimension_numbers = #tpu.dot_dimension_numbers<[1], [0], [0], [1], [0, 0, 1, 1], [], []>} : vector<4x8xf32>, vector<8x236xf32>, vector<4x236xf32> -> vector<4x236xf32>
    %288 = arith.addf %284, %287 : vector<4x236xf32>
    %c0_204 = arith.constant 0 : index
    %c48_205 = arith.constant 48 : index
    %289 = vector.load %arg23[%c0_204, %c48_205] : memref<4x200xf32, #tpu.memory_space<vmem>>, vector<4x8xf32>
    %290 = vector.extract_strided_slice %265 {offsets = [0, 13], sizes = [8, 236], strides = [1, 1]} : vector<8x288xf32> to vector<8x236xf32>
    %cst_206 = arith.constant dense<0.000000e+00> : vector<4x236xf32>
    %291 = tpu.matmul %289, %290, %cst_206 {dimension_numbers = #tpu.dot_dimension_numbers<[1], [0], [0], [1], [0, 0, 1, 1], [], []>} : vector<4x8xf32>, vector<8x236xf32>, vector<4x236xf32> -> vector<4x236xf32>
    %292 = arith.addf %288, %291 : vector<4x236xf32>
    %c0_207 = arith.constant 0 : index
    %c56_208 = arith.constant 56 : index
    %293 = vector.load %arg23[%c0_207, %c56_208] : memref<4x200xf32, #tpu.memory_space<vmem>>, vector<4x8xf32>
    %294 = vector.extract_strided_slice %265 {offsets = [0, 14], sizes = [8, 236], strides = [1, 1]} : vector<8x288xf32> to vector<8x236xf32>
    %cst_209 = arith.constant dense<0.000000e+00> : vector<4x236xf32>
    %295 = tpu.matmul %293, %294, %cst_209 {dimension_numbers = #tpu.dot_dimension_numbers<[1], [0], [0], [1], [0, 0, 1, 1], [], []>} : vector<4x8xf32>, vector<8x236xf32>, vector<4x236xf32> -> vector<4x236xf32>
    %296 = arith.addf %292, %295 : vector<4x236xf32>
    %c0_210 = arith.constant 0 : index
    %c64_211 = arith.constant 64 : index
    %297 = vector.load %arg23[%c0_210, %c64_211] : memref<4x200xf32, #tpu.memory_space<vmem>>, vector<4x8xf32>
    %298 = vector.extract_strided_slice %265 {offsets = [0, 15], sizes = [8, 236], strides = [1, 1]} : vector<8x288xf32> to vector<8x236xf32>
    %cst_212 = arith.constant dense<0.000000e+00> : vector<4x236xf32>
    %299 = tpu.matmul %297, %298, %cst_212 {dimension_numbers = #tpu.dot_dimension_numbers<[1], [0], [0], [1], [0, 0, 1, 1], [], []>} : vector<4x8xf32>, vector<8x236xf32>, vector<4x236xf32> -> vector<4x236xf32>
    %300 = arith.addf %296, %299 : vector<4x236xf32>
    %c0_213 = arith.constant 0 : index
    %c72_214 = arith.constant 72 : index
    %301 = vector.load %arg23[%c0_213, %c72_214] : memref<4x200xf32, #tpu.memory_space<vmem>>, vector<4x8xf32>
    %302 = vector.extract_strided_slice %265 {offsets = [0, 16], sizes = [8, 236], strides = [1, 1]} : vector<8x288xf32> to vector<8x236xf32>
    %cst_215 = arith.constant dense<0.000000e+00> : vector<4x236xf32>
    %303 = tpu.matmul %301, %302, %cst_215 {dimension_numbers = #tpu.dot_dimension_numbers<[1], [0], [0], [1], [0, 0, 1, 1], [], []>} : vector<4x8xf32>, vector<8x236xf32>, vector<4x236xf32> -> vector<4x236xf32>
    %304 = arith.addf %300, %303 : vector<4x236xf32>
    %c0_216 = arith.constant 0 : index
    %c80_217 = arith.constant 80 : index
    %305 = vector.load %arg23[%c0_216, %c80_217] : memref<4x200xf32, #tpu.memory_space<vmem>>, vector<4x8xf32>
    %306 = vector.extract_strided_slice %265 {offsets = [0, 24], sizes = [8, 236], strides = [1, 1]} : vector<8x288xf32> to vector<8x236xf32>
    %cst_218 = arith.constant dense<0.000000e+00> : vector<4x236xf32>
    %307 = tpu.matmul %305, %306, %cst_218 {dimension_numbers = #tpu.dot_dimension_numbers<[1], [0], [0], [1], [0, 0, 1, 1], [], []>} : vector<4x8xf32>, vector<8x236xf32>, vector<4x236xf32> -> vector<4x236xf32>
    %308 = arith.addf %304, %307 : vector<4x236xf32>
    %c0_219 = arith.constant 0 : index
    %c88_220 = arith.constant 88 : index
    %309 = vector.load %arg23[%c0_219, %c88_220] : memref<4x200xf32, #tpu.memory_space<vmem>>, vector<4x8xf32>
    %310 = vector.extract_strided_slice %265 {offsets = [0, 25], sizes = [8, 236], strides = [1, 1]} : vector<8x288xf32> to vector<8x236xf32>
    %cst_221 = arith.constant dense<0.000000e+00> : vector<4x236xf32>
    %311 = tpu.matmul %309, %310, %cst_221 {dimension_numbers = #tpu.dot_dimension_numbers<[1], [0], [0], [1], [0, 0, 1, 1], [], []>} : vector<4x8xf32>, vector<8x236xf32>, vector<4x236xf32> -> vector<4x236xf32>
    %312 = arith.addf %308, %311 : vector<4x236xf32>
    %c0_222 = arith.constant 0 : index
    %c96_223 = arith.constant 96 : index
    %313 = vector.load %arg23[%c0_222, %c96_223] : memref<4x200xf32, #tpu.memory_space<vmem>>, vector<4x8xf32>
    %314 = vector.extract_strided_slice %265 {offsets = [0, 26], sizes = [8, 236], strides = [1, 1]} : vector<8x288xf32> to vector<8x236xf32>
    %cst_224 = arith.constant dense<0.000000e+00> : vector<4x236xf32>
    %315 = tpu.matmul %313, %314, %cst_224 {dimension_numbers = #tpu.dot_dimension_numbers<[1], [0], [0], [1], [0, 0, 1, 1], [], []>} : vector<4x8xf32>, vector<8x236xf32>, vector<4x236xf32> -> vector<4x236xf32>
    %316 = arith.addf %312, %315 : vector<4x236xf32>
    %c0_225 = arith.constant 0 : index
    %c104 = arith.constant 104 : index
    %317 = vector.load %arg23[%c0_225, %c104] : memref<4x200xf32, #tpu.memory_space<vmem>>, vector<4x8xf32>
    %318 = vector.extract_strided_slice %265 {offsets = [0, 27], sizes = [8, 236], strides = [1, 1]} : vector<8x288xf32> to vector<8x236xf32>
    %cst_226 = arith.constant dense<0.000000e+00> : vector<4x236xf32>
    %319 = tpu.matmul %317, %318, %cst_226 {dimension_numbers = #tpu.dot_dimension_numbers<[1], [0], [0], [1], [0, 0, 1, 1], [], []>} : vector<4x8xf32>, vector<8x236xf32>, vector<4x236xf32> -> vector<4x236xf32>
    %320 = arith.addf %316, %319 : vector<4x236xf32>
    %c0_227 = arith.constant 0 : index
    %c112_228 = arith.constant 112 : index
    %321 = vector.load %arg23[%c0_227, %c112_228] : memref<4x200xf32, #tpu.memory_space<vmem>>, vector<4x8xf32>
    %322 = vector.extract_strided_slice %265 {offsets = [0, 28], sizes = [8, 236], strides = [1, 1]} : vector<8x288xf32> to vector<8x236xf32>
    %cst_229 = arith.constant dense<0.000000e+00> : vector<4x236xf32>
    %323 = tpu.matmul %321, %322, %cst_229 {dimension_numbers = #tpu.dot_dimension_numbers<[1], [0], [0], [1], [0, 0, 1, 1], [], []>} : vector<4x8xf32>, vector<8x236xf32>, vector<4x236xf32> -> vector<4x236xf32>
    %324 = arith.addf %320, %323 : vector<4x236xf32>
    %c0_230 = arith.constant 0 : index
    %c120 = arith.constant 120 : index
    %325 = vector.load %arg23[%c0_230, %c120] : memref<4x200xf32, #tpu.memory_space<vmem>>, vector<4x8xf32>
    %326 = vector.extract_strided_slice %265 {offsets = [0, 36], sizes = [8, 236], strides = [1, 1]} : vector<8x288xf32> to vector<8x236xf32>
    %cst_231 = arith.constant dense<0.000000e+00> : vector<4x236xf32>
    %327 = tpu.matmul %325, %326, %cst_231 {dimension_numbers = #tpu.dot_dimension_numbers<[1], [0], [0], [1], [0, 0, 1, 1], [], []>} : vector<4x8xf32>, vector<8x236xf32>, vector<4x236xf32> -> vector<4x236xf32>
    %328 = arith.addf %324, %327 : vector<4x236xf32>
    %c0_232 = arith.constant 0 : index
    %c128_233 = arith.constant 128 : index
    %329 = vector.load %arg23[%c0_232, %c128_233] : memref<4x200xf32, #tpu.memory_space<vmem>>, vector<4x8xf32>
    %330 = vector.extract_strided_slice %265 {offsets = [0, 37], sizes = [8, 236], strides = [1, 1]} : vector<8x288xf32> to vector<8x236xf32>
    %cst_234 = arith.constant dense<0.000000e+00> : vector<4x236xf32>
    %331 = tpu.matmul %329, %330, %cst_234 {dimension_numbers = #tpu.dot_dimension_numbers<[1], [0], [0], [1], [0, 0, 1, 1], [], []>} : vector<4x8xf32>, vector<8x236xf32>, vector<4x236xf32> -> vector<4x236xf32>
    %332 = arith.addf %328, %331 : vector<4x236xf32>
    %c0_235 = arith.constant 0 : index
    %c136 = arith.constant 136 : index
    %333 = vector.load %arg23[%c0_235, %c136] : memref<4x200xf32, #tpu.memory_space<vmem>>, vector<4x8xf32>
    %334 = vector.extract_strided_slice %265 {offsets = [0, 38], sizes = [8, 236], strides = [1, 1]} : vector<8x288xf32> to vector<8x236xf32>
    %cst_236 = arith.constant dense<0.000000e+00> : vector<4x236xf32>
    %335 = tpu.matmul %333, %334, %cst_236 {dimension_numbers = #tpu.dot_dimension_numbers<[1], [0], [0], [1], [0, 0, 1, 1], [], []>} : vector<4x8xf32>, vector<8x236xf32>, vector<4x236xf32> -> vector<4x236xf32>
    %336 = arith.addf %332, %335 : vector<4x236xf32>
    %c0_237 = arith.constant 0 : index
    %c144 = arith.constant 144 : index
    %337 = vector.load %arg23[%c0_237, %c144] : memref<4x200xf32, #tpu.memory_space<vmem>>, vector<4x8xf32>
    %338 = vector.extract_strided_slice %265 {offsets = [0, 39], sizes = [8, 236], strides = [1, 1]} : vector<8x288xf32> to vector<8x236xf32>
    %cst_238 = arith.constant dense<0.000000e+00> : vector<4x236xf32>
    %339 = tpu.matmul %337, %338, %cst_238 {dimension_numbers = #tpu.dot_dimension_numbers<[1], [0], [0], [1], [0, 0, 1, 1], [], []>} : vector<4x8xf32>, vector<8x236xf32>, vector<4x236xf32> -> vector<4x236xf32>
    %340 = arith.addf %336, %339 : vector<4x236xf32>
    %c0_239 = arith.constant 0 : index
    %c152 = arith.constant 152 : index
    %341 = vector.load %arg23[%c0_239, %c152] : memref<4x200xf32, #tpu.memory_space<vmem>>, vector<4x8xf32>
    %342 = vector.extract_strided_slice %265 {offsets = [0, 40], sizes = [8, 236], strides = [1, 1]} : vector<8x288xf32> to vector<8x236xf32>
    %cst_240 = arith.constant dense<0.000000e+00> : vector<4x236xf32>
    %343 = tpu.matmul %341, %342, %cst_240 {dimension_numbers = #tpu.dot_dimension_numbers<[1], [0], [0], [1], [0, 0, 1, 1], [], []>} : vector<4x8xf32>, vector<8x236xf32>, vector<4x236xf32> -> vector<4x236xf32>
    %344 = arith.addf %340, %343 : vector<4x236xf32>
    %c0_241 = arith.constant 0 : index
    %c160 = arith.constant 160 : index
    %345 = vector.load %arg23[%c0_241, %c160] : memref<4x200xf32, #tpu.memory_space<vmem>>, vector<4x8xf32>
    %346 = vector.extract_strided_slice %265 {offsets = [0, 48], sizes = [8, 236], strides = [1, 1]} : vector<8x288xf32> to vector<8x236xf32>
    %cst_242 = arith.constant dense<0.000000e+00> : vector<4x236xf32>
    %347 = tpu.matmul %345, %346, %cst_242 {dimension_numbers = #tpu.dot_dimension_numbers<[1], [0], [0], [1], [0, 0, 1, 1], [], []>} : vector<4x8xf32>, vector<8x236xf32>, vector<4x236xf32> -> vector<4x236xf32>
    %348 = arith.addf %344, %347 : vector<4x236xf32>
    %c0_243 = arith.constant 0 : index
    %c168 = arith.constant 168 : index
    %349 = vector.load %arg23[%c0_243, %c168] : memref<4x200xf32, #tpu.memory_space<vmem>>, vector<4x8xf32>
    %350 = vector.extract_strided_slice %265 {offsets = [0, 49], sizes = [8, 236], strides = [1, 1]} : vector<8x288xf32> to vector<8x236xf32>
    %cst_244 = arith.constant dense<0.000000e+00> : vector<4x236xf32>
    %351 = tpu.matmul %349, %350, %cst_244 {dimension_numbers = #tpu.dot_dimension_numbers<[1], [0], [0], [1], [0, 0, 1, 1], [], []>} : vector<4x8xf32>, vector<8x236xf32>, vector<4x236xf32> -> vector<4x236xf32>
    %352 = arith.addf %348, %351 : vector<4x236xf32>
    %c0_245 = arith.constant 0 : index
    %c176 = arith.constant 176 : index
    %353 = vector.load %arg23[%c0_245, %c176] : memref<4x200xf32, #tpu.memory_space<vmem>>, vector<4x8xf32>
    %354 = vector.extract_strided_slice %265 {offsets = [0, 50], sizes = [8, 236], strides = [1, 1]} : vector<8x288xf32> to vector<8x236xf32>
    %cst_246 = arith.constant dense<0.000000e+00> : vector<4x236xf32>
    %355 = tpu.matmul %353, %354, %cst_246 {dimension_numbers = #tpu.dot_dimension_numbers<[1], [0], [0], [1], [0, 0, 1, 1], [], []>} : vector<4x8xf32>, vector<8x236xf32>, vector<4x236xf32> -> vector<4x236xf32>
    %356 = arith.addf %352, %355 : vector<4x236xf32>
    %c0_247 = arith.constant 0 : index
    %c184 = arith.constant 184 : index
    %357 = vector.load %arg23[%c0_247, %c184] : memref<4x200xf32, #tpu.memory_space<vmem>>, vector<4x8xf32>
    %358 = vector.extract_strided_slice %265 {offsets = [0, 51], sizes = [8, 236], strides = [1, 1]} : vector<8x288xf32> to vector<8x236xf32>
    %cst_248 = arith.constant dense<0.000000e+00> : vector<4x236xf32>
    %359 = tpu.matmul %357, %358, %cst_248 {dimension_numbers = #tpu.dot_dimension_numbers<[1], [0], [0], [1], [0, 0, 1, 1], [], []>} : vector<4x8xf32>, vector<8x236xf32>, vector<4x236xf32> -> vector<4x236xf32>
    %360 = arith.addf %356, %359 : vector<4x236xf32>
    %c0_249 = arith.constant 0 : index
    %c192 = arith.constant 192 : index
    %361 = vector.load %arg23[%c0_249, %c192] : memref<4x200xf32, #tpu.memory_space<vmem>>, vector<4x8xf32>
    %362 = vector.extract_strided_slice %265 {offsets = [0, 52], sizes = [8, 236], strides = [1, 1]} : vector<8x288xf32> to vector<8x236xf32>
    %cst_250 = arith.constant dense<0.000000e+00> : vector<4x236xf32>
    %363 = tpu.matmul %361, %362, %cst_250 {dimension_numbers = #tpu.dot_dimension_numbers<[1], [0], [0], [1], [0, 0, 1, 1], [], []>} : vector<4x8xf32>, vector<8x236xf32>, vector<4x236xf32> -> vector<4x236xf32>
    %364 = arith.addf %360, %363 : vector<4x236xf32>
    %c0_251 = arith.constant 0 : index
    %c0_252 = arith.constant 0 : index
    %365 = vector.load %arg24[%c0_251, %c0_252] : memref<4x1xf32, #tpu.memory_space<vmem>>, vector<4x1xf32>
    %366 = vector.broadcast %365 : vector<4x1xf32> to vector<4x236xf32>
    %367 = arith.addf %364, %366 : vector<4x236xf32>
    %cst_253 = arith.constant 0.000000e+00 : f32
    %368 = vector.broadcast %cst_253 : f32 to vector<4x236xf32>
    %369 = arith.maximumf %367, %368 : vector<4x236xf32>
    %c0_254 = arith.constant 0 : index
    %c0_255 = arith.constant 0 : index
    %370 = vector.load %arg25[%c0_254, %c0_255] : memref<236x686xf32, #tpu.memory_space<vmem>>, vector<236x686xf32>
    %cst_256 = arith.constant dense<0.000000e+00> : vector<4x686xf32>
    %371 = tpu.matmul %369, %370, %cst_256 {dimension_numbers = #tpu.dot_dimension_numbers<[1], [0], [0], [1], [0, 0, 1, 1], [], []>} : vector<4x236xf32>, vector<236x686xf32>, vector<4x686xf32> -> vector<4x686xf32>
    %c0_257 = arith.constant 0 : index
    %c0_258 = arith.constant 0 : index
    %372 = vector.load %arg26[%c0_257, %c0_258] : memref<4x36xf32, #tpu.memory_space<vmem>>, vector<4x4xf32>
    %373 = vector.extract_strided_slice %371 {offsets = [0, 0], sizes = [4, 648], strides = [1, 1]} : vector<4x686xf32> to vector<4x648xf32>
    %cst_259 = arith.constant dense<0.000000e+00> : vector<4x648xf32>
    %374 = tpu.matmul %372, %373, %cst_259 {dimension_numbers = #tpu.dot_dimension_numbers<[1], [0], [0], [1], [0, 0, 1, 1], [], []>} : vector<4x4xf32>, vector<4x648xf32>, vector<4x648xf32> -> vector<4x648xf32>
    %c0_260 = arith.constant 0 : index
    %c4_261 = arith.constant 4 : index
    %375 = vector.load %arg26[%c0_260, %c4_261] : memref<4x36xf32, #tpu.memory_space<vmem>>, vector<4x4xf32>
    %376 = vector.extract_strided_slice %371 {offsets = [0, 1], sizes = [4, 648], strides = [1, 1]} : vector<4x686xf32> to vector<4x648xf32>
    %cst_262 = arith.constant dense<0.000000e+00> : vector<4x648xf32>
    %377 = tpu.matmul %375, %376, %cst_262 {dimension_numbers = #tpu.dot_dimension_numbers<[1], [0], [0], [1], [0, 0, 1, 1], [], []>} : vector<4x4xf32>, vector<4x648xf32>, vector<4x648xf32> -> vector<4x648xf32>
    %378 = arith.addf %374, %377 : vector<4x648xf32>
    %c0_263 = arith.constant 0 : index
    %c8_264 = arith.constant 8 : index
    %379 = vector.load %arg26[%c0_263, %c8_264] : memref<4x36xf32, #tpu.memory_space<vmem>>, vector<4x4xf32>
    %380 = vector.extract_strided_slice %371 {offsets = [0, 2], sizes = [4, 648], strides = [1, 1]} : vector<4x686xf32> to vector<4x648xf32>
    %cst_265 = arith.constant dense<0.000000e+00> : vector<4x648xf32>
    %381 = tpu.matmul %379, %380, %cst_265 {dimension_numbers = #tpu.dot_dimension_numbers<[1], [0], [0], [1], [0, 0, 1, 1], [], []>} : vector<4x4xf32>, vector<4x648xf32>, vector<4x648xf32> -> vector<4x648xf32>
    %382 = arith.addf %378, %381 : vector<4x648xf32>
    %c0_266 = arith.constant 0 : index
    %c12_267 = arith.constant 12 : index
    %383 = vector.load %arg26[%c0_266, %c12_267] : memref<4x36xf32, #tpu.memory_space<vmem>>, vector<4x4xf32>
    %384 = vector.extract_strided_slice %371 {offsets = [0, 18], sizes = [4, 648], strides = [1, 1]} : vector<4x686xf32> to vector<4x648xf32>
    %cst_268 = arith.constant dense<0.000000e+00> : vector<4x648xf32>
    %385 = tpu.matmul %383, %384, %cst_268 {dimension_numbers = #tpu.dot_dimension_numbers<[1], [0], [0], [1], [0, 0, 1, 1], [], []>} : vector<4x4xf32>, vector<4x648xf32>, vector<4x648xf32> -> vector<4x648xf32>
    %386 = arith.addf %382, %385 : vector<4x648xf32>
    %c0_269 = arith.constant 0 : index
    %c16_270 = arith.constant 16 : index
    %387 = vector.load %arg26[%c0_269, %c16_270] : memref<4x36xf32, #tpu.memory_space<vmem>>, vector<4x4xf32>
    %388 = vector.extract_strided_slice %371 {offsets = [0, 19], sizes = [4, 648], strides = [1, 1]} : vector<4x686xf32> to vector<4x648xf32>
    %cst_271 = arith.constant dense<0.000000e+00> : vector<4x648xf32>
    %389 = tpu.matmul %387, %388, %cst_271 {dimension_numbers = #tpu.dot_dimension_numbers<[1], [0], [0], [1], [0, 0, 1, 1], [], []>} : vector<4x4xf32>, vector<4x648xf32>, vector<4x648xf32> -> vector<4x648xf32>
    %390 = arith.addf %386, %389 : vector<4x648xf32>
    %c0_272 = arith.constant 0 : index
    %c20_273 = arith.constant 20 : index
    %391 = vector.load %arg26[%c0_272, %c20_273] : memref<4x36xf32, #tpu.memory_space<vmem>>, vector<4x4xf32>
    %392 = vector.extract_strided_slice %371 {offsets = [0, 20], sizes = [4, 648], strides = [1, 1]} : vector<4x686xf32> to vector<4x648xf32>
    %cst_274 = arith.constant dense<0.000000e+00> : vector<4x648xf32>
    %393 = tpu.matmul %391, %392, %cst_274 {dimension_numbers = #tpu.dot_dimension_numbers<[1], [0], [0], [1], [0, 0, 1, 1], [], []>} : vector<4x4xf32>, vector<4x648xf32>, vector<4x648xf32> -> vector<4x648xf32>
    %394 = arith.addf %390, %393 : vector<4x648xf32>
    %c0_275 = arith.constant 0 : index
    %c24_276 = arith.constant 24 : index
    %395 = vector.load %arg26[%c0_275, %c24_276] : memref<4x36xf32, #tpu.memory_space<vmem>>, vector<4x4xf32>
    %396 = vector.extract_strided_slice %371 {offsets = [0, 36], sizes = [4, 648], strides = [1, 1]} : vector<4x686xf32> to vector<4x648xf32>
    %cst_277 = arith.constant dense<0.000000e+00> : vector<4x648xf32>
    %397 = tpu.matmul %395, %396, %cst_277 {dimension_numbers = #tpu.dot_dimension_numbers<[1], [0], [0], [1], [0, 0, 1, 1], [], []>} : vector<4x4xf32>, vector<4x648xf32>, vector<4x648xf32> -> vector<4x648xf32>
    %398 = arith.addf %394, %397 : vector<4x648xf32>
    %c0_278 = arith.constant 0 : index
    %c28_279 = arith.constant 28 : index
    %399 = vector.load %arg26[%c0_278, %c28_279] : memref<4x36xf32, #tpu.memory_space<vmem>>, vector<4x4xf32>
    %400 = vector.extract_strided_slice %371 {offsets = [0, 37], sizes = [4, 648], strides = [1, 1]} : vector<4x686xf32> to vector<4x648xf32>
    %cst_280 = arith.constant dense<0.000000e+00> : vector<4x648xf32>
    %401 = tpu.matmul %399, %400, %cst_280 {dimension_numbers = #tpu.dot_dimension_numbers<[1], [0], [0], [1], [0, 0, 1, 1], [], []>} : vector<4x4xf32>, vector<4x648xf32>, vector<4x648xf32> -> vector<4x648xf32>
    %402 = arith.addf %398, %401 : vector<4x648xf32>
    %c0_281 = arith.constant 0 : index
    %c32_282 = arith.constant 32 : index
    %403 = vector.load %arg26[%c0_281, %c32_282] : memref<4x36xf32, #tpu.memory_space<vmem>>, vector<4x4xf32>
    %404 = vector.extract_strided_slice %371 {offsets = [0, 38], sizes = [4, 648], strides = [1, 1]} : vector<4x686xf32> to vector<4x648xf32>
    %cst_283 = arith.constant dense<0.000000e+00> : vector<4x648xf32>
    %405 = tpu.matmul %403, %404, %cst_283 {dimension_numbers = #tpu.dot_dimension_numbers<[1], [0], [0], [1], [0, 0, 1, 1], [], []>} : vector<4x4xf32>, vector<4x648xf32>, vector<4x648xf32> -> vector<4x648xf32>
    %406 = arith.addf %402, %405 : vector<4x648xf32>
    %c0_284 = arith.constant 0 : index
    %c0_285 = arith.constant 0 : index
    %407 = vector.load %arg27[%c0_284, %c0_285] : memref<4x1xf32, #tpu.memory_space<vmem>>, vector<4x1xf32>
    %408 = vector.broadcast %407 : vector<4x1xf32> to vector<4x648xf32>
    %409 = arith.addf %406, %408 : vector<4x648xf32>
    %cst_286 = arith.constant 0.000000e+00 : f32
    %410 = vector.broadcast %cst_286 : f32 to vector<4x648xf32>
    %411 = arith.maximumf %409, %410 : vector<4x648xf32>
    %c0_287 = arith.constant 0 : index
    %c0_288 = arith.constant 0 : index
    %412 = vector.load %arg28[%c0_287, %c0_288] : memref<4x648xf32, #tpu.memory_space<vmem>>, vector<4x648xf32>
    tpu.vector_store %arg28[%c0_287, %c0_288], %411 {strides = array<i32>} : memref<4x648xf32, #tpu.memory_space<vmem>>, vector<4x648xf32>,
    return
  }
}

</mosaic_0001>

<llo_original>
// kernel: forward.1
$region0: #{forward.1}
  #allocation0 [shape = 'u32[]', space=smem, size = 0x4, offset = 0x4, fixed_abs, tag = 'smem constant byte address 0x4 - core index']
  #allocation1 [shape = 'u32[72,128]{1,0:T(1,128)}', space=vmem, size = 0x9000, scoped, tag = 'internal scratch']
  %s0 = inlined_call_operand.vmem [shape: f32[4,648], index: 0, kind: input, shape index: {}]
  %s1 = inlined_call_operand.vmem [shape: f32[4,36], index: 1, kind: input, shape index: {}]
  %s2 = inlined_call_operand.vmem [shape: f32[4,1], index: 2, kind: input, shape index: {}]
  %s3 = inlined_call_operand.vmem [shape: f32[610,288], index: 3, kind: input, shape index: {}]
  %s4 = inlined_call_operand.vmem [shape: f32[8,100], index: 4, kind: input, shape index: {}]
  %s5 = inlined_call_operand.vmem [shape: f32[8,1], index: 5, kind: input, shape index: {}]
  %s6 = inlined_call_operand.vmem [shape: f32[236,72], index: 6, kind: input, shape index: {}]
  %s7 = inlined_call_operand.vmem [shape: f32[16,72], index: 7, kind: input, shape index: {}]
  %s8 = inlined_call_operand.vmem [shape: f32[16,1], index: 8, kind: input, shape index: {}]
  %s9 = inlined_call_operand.vmem [shape: f32[58,128], index: 9, kind: input, shape index: {}]
  %s10 = inlined_call_operand.vmem [shape: f32[16,128], index: 10, kind: input, shape index: {}]
  %s11 = inlined_call_operand.vmem [shape: f32[128,16], index: 11, kind: input, shape index: {}]
  %s12 = inlined_call_operand.vmem [shape: f32[1,16], index: 12, kind: input, shape index: {}]
  %s13 = inlined_call_operand.vmem [shape: f32[16,8], index: 13, kind: input, shape index: {}]
  %s14 = inlined_call_operand.vmem [shape: f32[1,8], index: 14, kind: input, shape index: {}]
  %s15 = inlined_call_operand.vmem [shape: f32[8,16], index: 15, kind: input, shape index: {}]
  %s16 = inlined_call_operand.vmem [shape: f32[1,16], index: 16, kind: input, shape index: {}]
  %s17 = inlined_call_operand.vmem [shape: f32[16,128], index: 17, kind: input, shape index: {}]
  %s18 = inlined_call_operand.vmem [shape: f32[1,128], index: 18, kind: input, shape index: {}]
  %s19 = inlined_call_operand.vmem [shape: f32[128,72], index: 19, kind: input, shape index: {}]
  %s20 = inlined_call_operand.vmem [shape: f32[8,144], index: 20, kind: input, shape index: {}]
  %s21 = inlined_call_operand.vmem [shape: f32[8,1], index: 21, kind: input, shape index: {}]
  %s22 = inlined_call_operand.vmem [shape: f32[58,288], index: 22, kind: input, shape index: {}]
  %s23 = inlined_call_operand.vmem [shape: f32[4,200], index: 23, kind: input, shape index: {}]
  %s24 = inlined_call_operand.vmem [shape: f32[4,1], index: 24, kind: input, shape index: {}]
  %s25 = inlined_call_operand.vmem [shape: f32[236,686], index: 25, kind: input, shape index: {}]
  %s26 = inlined_call_operand.vmem [shape: f32[4,36], index: 26, kind: input, shape index: {}]
  %s27 = inlined_call_operand.vmem [shape: f32[4,1], index: 27, kind: input, shape index: {}]
  %s28 = inlined_call_operand.vmem [shape: f32[4,648], index: 28, kind: output, shape index: {}]
  %s29 = sld [smem:[#allocation0]]
  $region122: #{forward.1} parent=0
    _
  %s31 = ssub.s32 1, %s29
  %s32 = scalar_select 0, %s31, %s29
  // Predicated region
  $region2: #{forward.1} parent=0 // pred_check
    _
  $region3: #{forward.1} parent=0 // pred_check_branch
    %34 = sbr.rel (0) target = $region5
  $region4: #{forward.1} parent=0 // pred_region
    _
  $region5: #{forward.1} parent=0 // pred_fallthru
    _
  // Predicated region
  $region6: #{forward.1} parent=0 // pred_check
    _
  $region7: #{forward.1} parent=0 // pred_check_branch
    %36 = sbr.rel (0) target = $region9
  $region8: #{forward.1} parent=0 // pred_region
    _
  $region9: #{forward.1} parent=0 // pred_fallthru
    _
  // Predicated region
  $region10: #{forward.1} parent=0 // pred_check
    _
  $region11: #{forward.1} parent=0 // pred_check_branch
    %38 = sbr.rel (0) target = $region13
  $region12: #{forward.1} parent=0 // pred_region
    _
  $region13: #{forward.1} parent=0 // pred_fallthru
    _
  // Predicated region
  $region14: #{forward.1} parent=0 // pred_check
    _
  $region15: #{forward.1} parent=0 // pred_check_branch
    %40 = sbr.rel (0) target = $region17
  $region16: #{forward.1} parent=0 // pred_region
    _
  $region17: #{forward.1} parent=0 // pred_fallthru
    _
  // Predicated region
  $region18: #{forward.1} parent=0 // pred_check
    _
  $region19: #{forward.1} parent=0 // pred_check_branch
    %42 = sbr.rel (0) target = $region21
  $region20: #{forward.1} parent=0 // pred_region
    _
  $region21: #{forward.1} parent=0 // pred_fallthru
    _
  // Predicated region
  $region22: #{forward.1} parent=0 // pred_check
    _
  $region23: #{forward.1} parent=0 // pred_check_branch
    %44 = sbr.rel (0) target = $region25
  $region24: #{forward.1} parent=0 // pred_region
    _
  $region25: #{forward.1} parent=0 // pred_fallthru
    _
  // Predicated region
  $region26: #{forward.1} parent=0 // pred_check
    _
  $region27: #{forward.1} parent=0 // pred_check_branch
    %46 = sbr.rel (0) target = $region29
  $region28: #{forward.1} parent=0 // pred_region
    _
  $region29: #{forward.1} parent=0 // pred_fallthru
    _
  // Predicated region
  $region30: #{forward.1} parent=0 // pred_check
    _
  $region31: #{forward.1} parent=0 // pred_check_branch
    %48 = sbr.rel (0) target = $region33
  $region32: #{forward.1} parent=0 // pred_region
    _
  $region33: #{forward.1} parent=0 // pred_fallthru
    _
  // Predicated region
  $region34: #{forward.1} parent=0 // pred_check
    _
  $region35: #{forward.1} parent=0 // pred_check_branch
    %50 = sbr.rel (0) target = $region37
  $region36: #{forward.1} parent=0 // pred_region
    _
  $region37: #{forward.1} parent=0 // pred_fallthru
    _
  // Predicated region
  $region38: #{forward.1} parent=0 // pred_check
    _
  $region39: #{forward.1} parent=0 // pred_check_branch
    %52 = sbr.rel (0) target = $region41
  $region40: #{forward.1} parent=0 // pred_region
    _
  $region41: #{forward.1} parent=0 // pred_fallthru
    _
  // Predicated region
  $region42: #{forward.1} parent=0 // pred_check
    _
  $region43: #{forward.1} parent=0 // pred_check_branch
    %54 = sbr.rel (0) target = $region45
  $region44: #{forward.1} parent=0 // pred_region
    _
  $region45: #{forward.1} parent=0 // pred_fallthru
    _
  // Predicated region
  $region46: #{forward.1} parent=0 // pred_check
    _
  $region47: #{forward.1} parent=0 // pred_check_branch
    %56 = sbr.rel (0) target = $region49
  $region48: #{forward.1} parent=0 // pred_region
    _
  $region49: #{forward.1} parent=0 // pred_fallthru
    _
  // Predicated region
  $region50: #{forward.1} parent=0 // pred_check
    _
  $region51: #{forward.1} parent=0 // pred_check_branch
    %58 = sbr.rel (0) target = $region53
  $region52: #{forward.1} parent=0 // pred_region
    _
  $region53: #{forward.1} parent=0 // pred_fallthru
    _
  // Predicated region
  $region54: #{forward.1} parent=0 // pred_check
    _
  $region55: #{forward.1} parent=0 // pred_check_branch
    %60 = sbr.rel (0) target = $region57
  $region56: #{forward.1} parent=0 // pred_region
    _
  $region57: #{forward.1} parent=0 // pred_fallthru
    _
  // Predicated region
  $region58: #{forward.1} parent=0 // pred_check
    _
  $region59: #{forward.1} parent=0 // pred_check_branch
    %62 = sbr.rel (0) target = $region61
  $region60: #{forward.1} parent=0 // pred_region
    _
  $region61: #{forward.1} parent=0 // pred_fallthru
    _
  // Predicated region
  $region62: #{forward.1} parent=0 // pred_check
    _
  $region63: #{forward.1} parent=0 // pred_check_branch
    %64 = sbr.rel (0) target = $region65
  $region64: #{forward.1} parent=0 // pred_region
    _
  $region65: #{forward.1} parent=0 // pred_fallthru
    _
  // Predicated region
  $region66: #{forward.1} parent=0 // pred_check
    _
  $region67: #{forward.1} parent=0 // pred_check_branch
    %66 = sbr.rel (0) target = $region69
  $region68: #{forward.1} parent=0 // pred_region
    _
  $region69: #{forward.1} parent=0 // pred_fallthru
    _
  // Predicated region
  $region70: #{forward.1} parent=0 // pred_check
    _
  $region71: #{forward.1} parent=0 // pred_check_branch
    %68 = sbr.rel (0) target = $region73
  $region72: #{forward.1} parent=0 // pred_region
    _
  $region73: #{forward.1} parent=0 // pred_fallthru
    _
  // Predicated region
  $region74: #{forward.1} parent=0 // pred_check
    _
  $region75: #{forward.1} parent=0 // pred_check_branch
    %70 = sbr.rel (0) target = $region77
  $region76: #{forward.1} parent=0 // pred_region
    _
  $region77: #{forward.1} parent=0 // pred_fallthru
    _
  // Predicated region
  $region78: #{forward.1} parent=0 // pred_check
    _
  $region79: #{forward.1} parent=0 // pred_check_branch
    %72 = sbr.rel (0) target = $region81
  $region80: #{forward.1} parent=0 // pred_region
    _
  $region81: #{forward.1} parent=0 // pred_fallthru
    _
  // Predicated region
  $region82: #{forward.1} parent=0 // pred_check
    _
  $region83: #{forward.1} parent=0 // pred_check_branch
    %74 = sbr.rel (0) target = $region85
  $region84: #{forward.1} parent=0 // pred_region
    _
  $region85: #{forward.1} parent=0 // pred_fallthru
    _
  // Predicated region
  $region86: #{forward.1} parent=0 // pred_check
    _
  $region87: #{forward.1} parent=0 // pred_check_branch
    %76 = sbr.rel (0) target = $region89
  $region88: #{forward.1} parent=0 // pred_region
    _
  $region89: #{forward.1} parent=0 // pred_fallthru
    _
  // Predicated region
  $region90: #{forward.1} parent=0 // pred_check
    _
  $region91: #{forward.1} parent=0 // pred_check_branch
    %78 = sbr.rel (0) target = $region93
  $region92: #{forward.1} parent=0 // pred_region
    _
  $region93: #{forward.1} parent=0 // pred_fallthru
    _
  // Predicated region
  $region94: #{forward.1} parent=0 // pred_check
    _
  $region95: #{forward.1} parent=0 // pred_check_branch
    %80 = sbr.rel (0) target = $region97
  $region96: #{forward.1} parent=0 // pred_region
    _
  $region97: #{forward.1} parent=0 // pred_fallthru
    _
  // Predicated region
  $region98: #{forward.1} parent=0 // pred_check
    _
  $region99: #{forward.1} parent=0 // pred_check_branch
    %82 = sbr.rel (0) target = $region101
  $region100: #{forward.1} parent=0 // pred_region
    _
  $region101: #{forward.1} parent=0 // pred_fallthru
    _
  // Predicated region
  $region102: #{forward.1} parent=0 // pred_check
    _
  $region103: #{forward.1} parent=0 // pred_check_branch
    %84 = sbr.rel (0) target = $region105
  $region104: #{forward.1} parent=0 // pred_region
    _
  $region105: #{forward.1} parent=0 // pred_fallthru
    _
  // Predicated region
  $region106: #{forward.1} parent=0 // pred_check
    _
  $region107: #{forward.1} parent=0 // pred_check_branch
    %86 = sbr.rel (0) target = $region109
  $region108: #{forward.1} parent=0 // pred_region
    _
  $region109: #{forward.1} parent=0 // pred_fallthru
    _
  // Predicated region
  $region110: #{forward.1} parent=0 // pred_check
    _
  $region111: #{forward.1} parent=0 // pred_check_branch
    %88 = sbr.rel (0) target = $region113
  $region112: #{forward.1} parent=0 // pred_region
    _
  $region113: #{forward.1} parent=0 // pred_fallthru
    _
  %v89 = vld [vmem:[%s0] sm:$0xff]
  %v90 = vld [vmem:[%s0 + $0x8] sm:$0xff]
  %v91 = vld [vmem:[%s0 + $0x10] sm:$0xff]
  %v92 = vld [vmem:[%s1] sm:$0xf]
  %94 = vrot.lane.b32.xlu0 %v92, 124
  %v95 = vpop.permute.xlu0 %94
  %99 = vst [vmem:[#allocation1] ss:$2 sm:$0xff] %v89
  %s100 = scalar_lea.vmem [#allocation1], 16
  %101 = vst [vmem:[%s100] ss:$2 sm:$0xff] %v90
  %s102 = scalar_lea.vmem [#allocation1], 32
  %103 = vst [vmem:[%s102] ss:$2 sm:$0xff] %v91
  %v104 = vld.sshfl [vmem:[#allocation1] sm:$0xff pattern:$0x75316420]
  %v105 = vld.sshfl [vmem:[#allocation1 + $0x8] sm:$0xff pattern:$0x75316420]
  %v106 = vld.sshfl [vmem:[#allocation1 + $0x10] sm:$0xff pattern:$0x75316420]
  %v107 = vld.sshfl [vmem:[#allocation1 + $0x18] sm:$0xff pattern:$0x75316420]
  %v108 = vld.sshfl [vmem:[#allocation1 + $0x20] sm:$0xff pattern:$0x75316420]
  %109 = vrot.lane.b32.xlu0 %v104, 127
  %v110 = vpop.permute.xlu0 %109
  %111 = vrot.lane.b32.xlu0 %v105, 127
  %v112 = vpop.permute.xlu0 %111
  %113 = vrot.lane.b32.xlu0 %v106, 127
  %v114 = vpop.permute.xlu0 %113
  %115 = vrot.lane.b32.xlu0 %v107, 127
  %v116 = vpop.permute.xlu0 %115
  %117 = vrot.lane.b32.xlu0 %v108, 127
  %v118 = vpop.permute.xlu0 %117
  %vm119 = vcmask 1039360
  %v120 = vsel %vm119, %v110, %v112
  %v121 = vsel %vm119, %v112, %v114
  %v122 = vsel %vm119, %v114, %v116
  %v123 = vsel %vm119, %v116, %v118
  %vm124 = vcmask 31744
  %v125 = vsel %vm124, %v95, 0
  %vm127 = vcmask 1043456
  %v128 = vsel %vm127, %v120, 0
  %v130 = vsel %vm127, %v121, 0
  %v132 = vsel %vm127, %v122, 0
  %v134 = vsel %vm127, %v123, 0
  %v136 = vsel %vm127, %v118, 0
  %138 = vmatpush.msra.mxu0 0.0
  %139 = vmatpush.msra.mxu0 0.0
  %140 = vmatpush.msra.mxu0 0.0
  %141 = vmatpush.msra.mxu0 0.0
  %142 = vmatpush.msra.mxu0 0.0
  %143 = vmatpush.msra.mxu0 0.0
  %144 = vmatpush.msra.mxu0 0.0
  %145 = vmatpush.msra.mxu0 0.0
  %146 = vmatpush.msra.mxu0 0.0
  %147 = vmatpush.msra.mxu0 0.0
  %148 = vmatpush.msra.mxu0 0.0
  %149 = vmatpush.msra.mxu0 0.0
  %150 = vmatpush.msra.mxu0 0.0
  %151 = vmatpush.msra.mxu0 0.0
  %152 = vmatpush.msra.mxu0 0.0
  %153 = vmatpush.msra.mxu0 %v128
  %154 = vmatmul.f32.gmra.mxu0 %v125
  %v155 = vpop.f32.mrf.mxu0
  %v156 = vadd.f32 0.0, %v155
  %157 = vdwg.mxu0
  %158 = vmatpush.msra.mxu0 0.0
  %159 = vmatpush.msra.mxu0 0.0
  %160 = vmatpush.msra.mxu0 0.0
  %161 = vmatpush.msra.mxu0 0.0
  %162 = vmatpush.msra.mxu0 0.0
  %163 = vmatpush.msra.mxu0 0.0
  %164 = vmatpush.msra.mxu0 0.0
  %165 = vmatpush.msra.mxu0 0.0
  %166 = vmatpush.msra.mxu0 0.0
  %167 = vmatpush.msra.mxu0 0.0
  %168 = vmatpush.msra.mxu0 0.0
  %169 = vmatpush.msra.mxu0 0.0
  %170 = vmatpush.msra.mxu0 0.0
  %171 = vmatpush.msra.mxu0 0.0
  %172 = vmatpush.msra.mxu0 0.0
  %173 = vmatpush.msra.mxu0 %v130
  %174 = vmatmul.f32.gmra.mxu0 %v125
  %v175 = vpop.f32.mrf.mxu0
  %v176 = vadd.f32 0.0, %v175
  %177 = vdwg.mxu0
  %178 = vmatpush.msra.mxu0 0.0
  %179 = vmatpush.msra.mxu0 0.0
  %180 = vmatpush.msra.mxu0 0.0
  %181 = vmatpush.msra.mxu0 0.0
  %182 = vmatpush.msra.mxu0 0.0
  %183 = vmatpush.msra.mxu0 0.0
  %184 = vmatpush.msra.mxu0 0.0
  %185 = vmatpush.msra.mxu0 0.0
  %186 = vmatpush.msra.mxu0 0.0
  %187 = vmatpush.msra.mxu0 0.0
  %188 = vmatpush.msra.mxu0 0.0
  %189 = vmatpush.msra.mxu0 0.0
  %190 = vmatpush.msra.mxu0 0.0
  %191 = vmatpush.msra.mxu0 0.0
  %192 = vmatpush.msra.mxu0 0.0
  %193 = vmatpush.msra.mxu0 %v132
  %194 = vmatmul.f32.gmra.mxu0 %v125
  %v195 = vpop.f32.mrf.mxu0
  %v196 = vadd.f32 0.0, %v195
  %197 = vdwg.mxu0
  %198 = vmatpush.msra.mxu0 0.0
  %199 = vmatpush.msra.mxu0 0.0
  %200 = vmatpush.msra.mxu0 0.0
  %201 = vmatpush.msra.mxu0 0.0
  %202 = vmatpush.msra.mxu0 0.0
  %203 = vmatpush.msra.mxu0 0.0
  %204 = vmatpush.msra.mxu0 0.0
  %205 = vmatpush.msra.mxu0 0.0
  %206 = vmatpush.msra.mxu0 0.0
  %207 = vmatpush.msra.mxu0 0.0
  %208 = vmatpush.msra.mxu0 0.0
  %209 = vmatpush.msra.mxu0 0.0
  %210 = vmatpush.msra.mxu0 0.0
  %211 = vmatpush.msra.mxu0 0.0
  %212 = vmatpush.msra.mxu0 0.0
  %213 = vmatpush.msra.mxu0 %v134
  %214 = vmatmul.f32.gmra.mxu0 %v125
  %v215 = vpop.f32.mrf.mxu0
  %v216 = vadd.f32 0.0, %v215
  %217 = vdwg.mxu0
  %218 = vmatpush.msra.mxu0 0.0
  %219 = vmatpush.msra.mxu0 0.0
  %220 = vmatpush.msra.mxu0 0.0
  %221 = vmatpush.msra.mxu0 0.0
  %222 = vmatpush.msra.mxu0 0.0
  %223 = vmatpush.msra.mxu0 0.0
  %224 = vmatpush.msra.mxu0 0.0
  %225 = vmatpush.msra.mxu0 0.0
  %226 = vmatpush.msra.mxu0 0.0
  %227 = vmatpush.msra.mxu0 0.0
  %228 = vmatpush.msra.mxu0 0.0
  %229 = vmatpush.msra.mxu0 0.0
  %230 = vmatpush.msra.mxu0 0.0
  %231 = vmatpush.msra.mxu0 0.0
  %232 = vmatpush.msra.mxu0 0.0
  %233 = vmatpush.msra.mxu0 %v136
  %234 = vmatmul.f32.gmra.mxu0 %v125
  %v235 = vpop.f32.mrf.mxu0
  %v236 = vadd.f32 0.0, %v235
  %237 = vdwg.mxu0
  %238 = vst [vmem:[#allocation1] ss:$2 sm:$0xff] %v89
  %s239 = scalar_lea.vmem [#allocation1], 16
  %240 = vst [vmem:[%s239] ss:$2 sm:$0xff] %v90
  %s241 = scalar_lea.vmem [#allocation1], 32
  %242 = vst [vmem:[%s241] ss:$2 sm:$0xff] %v91
  %v243 = vld.sshfl [vmem:[#allocation1] sm:$0xff pattern:$0x75316420]
  %v244 = vld.sshfl [vmem:[#allocation1 + $0x8] sm:$0xff pattern:$0x75316420]
  %v245 = vld.sshfl [vmem:[#allocation1 + $0x10] sm:$0xff pattern:$0x75316420]
  %v246 = vld.sshfl [vmem:[#allocation1 + $0x18] sm:$0xff pattern:$0x75316420]
  %v247 = vld.sshfl [vmem:[#allocation1 + $0x20] sm:$0xff pattern:$0x75316420]
  %v248 = vsel %vm124, %v92, 0
  %v250 = vsel %vm127, %v243, 0
  %v252 = vsel %vm127, %v244, 0
  %v254 = vsel %vm127, %v245, 0
  %v256 = vsel %vm127, %v246, 0
  %v258 = vsel %vm127, %v247, 0
  %260 = vmatpush.msra.mxu0 0.0
  %261 = vmatpush.msra.mxu0 0.0
  %262 = vmatpush.msra.mxu0 0.0
  %263 = vmatpush.msra.mxu0 0.0
  %264 = vmatpush.msra.mxu0 0.0
  %265 = vmatpush.msra.mxu0 0.0
  %266 = vmatpush.msra.mxu0 0.0
  %267 = vmatpush.msra.mxu0 0.0
  %268 = vmatpush.msra.mxu0 0.0
  %269 = vmatpush.msra.mxu0 0.0
  %270 = vmatpush.msra.mxu0 0.0
  %271 = vmatpush.msra.mxu0 0.0
  %272 = vmatpush.msra.mxu0 0.0
  %273 = vmatpush.msra.mxu0 0.0
  %274 = vmatpush.msra.mxu0 0.0
  %275 = vmatpush.msra.mxu0 %v250
  %276 = vmatmul.f32.gmra.mxu0 %v248
  %v277 = vpop.f32.mrf.mxu0
  %v278 = vadd.f32 %v156, %v277
  %279 = vdwg.mxu0
  %280 = vmatpush.msra.mxu0 0.0
  %281 = vmatpush.msra.mxu0 0.0
  %282 = vmatpush.msra.mxu0 0.0
  %283 = vmatpush.msra.mxu0 0.0
  %284 = vmatpush.msra.mxu0 0.0
  %285 = vmatpush.msra.mxu0 0.0
  %286 = vmatpush.msra.mxu0 0.0
  %287 = vmatpush.msra.mxu0 0.0
  %288 = vmatpush.msra.mxu0 0.0
  %289 = vmatpush.msra.mxu0 0.0
  %290 = vmatpush.msra.mxu0 0.0
  %291 = vmatpush.msra.mxu0 0.0
  %292 = vmatpush.msra.mxu0 0.0
  %293 = vmatpush.msra.mxu0 0.0
  %294 = vmatpush.msra.mxu0 0.0
  %295 = vmatpush.msra.mxu0 %v252
  %296 = vmatmul.f32.gmra.mxu0 %v248
  %v297 = vpop.f32.mrf.mxu0
  %v298 = vadd.f32 %v176, %v297
  %299 = vdwg.mxu0
  %300 = vmatpush.msra.mxu0 0.0
  %301 = vmatpush.msra.mxu0 0.0
  %302 = vmatpush.msra.mxu0 0.0
  %303 = vmatpush.msra.mxu0 0.0
  %304 = vmatpush.msra.mxu0 0.0
  %305 = vmatpush.msra.mxu0 0.0
  %306 = vmatpush.msra.mxu0 0.0
  %307 = vmatpush.msra.mxu0 0.0
  %308 = vmatpush.msra.mxu0 0.0
  %309 = vmatpush.msra.mxu0 0.0
  %310 = vmatpush.msra.mxu0 0.0
  %311 = vmatpush.msra.mxu0 0.0
  %312 = vmatpush.msra.mxu0 0.0
  %313 = vmatpush.msra.mxu0 0.0
  %314 = vmatpush.msra.mxu0 0.0
  %315 = vmatpush.msra.mxu0 %v254
  %316 = vmatmul.f32.gmra.mxu0 %v248
  %v317 = vpop.f32.mrf.mxu0
  %v318 = vadd.f32 %v196, %v317
  %319 = vdwg.mxu0
  %320 = vmatpush.msra.mxu0 0.0
  %321 = vmatpush.msra.mxu0 0.0
  %322 = vmatpush.msra.mxu0 0.0
  %323 = vmatpush.msra.mxu0 0.0
  %324 = vmatpush.msra.mxu0 0.0
  %325 = vmatpush.msra.mxu0 0.0
  %326 = vmatpush.msra.mxu0 0.0
  %327 = vmatpush.msra.mxu0 0.0
  %328 = vmatpush.msra.mxu0 0.0
  %329 = vmatpush.msra.mxu0 0.0
  %330 = vmatpush.msra.mxu0 0.0
  %331 = vmatpush.msra.mxu0 0.0
  %332 = vmatpush.msra.mxu0 0.0
  %333 = vmatpush.msra.mxu0 0.0
  %334 = vmatpush.msra.mxu0 0.0
  %335 = vmatpush.msra.mxu0 %v256
  %336 = vmatmul.f32.gmra.mxu0 %v248
  %v337 = vpop.f32.mrf.mxu0
  %v338 = vadd.f32 %v216, %v337
  %339 = vdwg.mxu0
  %340 = vmatpush.msra.mxu0 0.0
  %341 = vmatpush.msra.mxu0 0.0
  %342 = vmatpush.msra.mxu0 0.0
  %343 = vmatpush.msra.mxu0 0.0
  %344 = vmatpush.msra.mxu0 0.0
  %345 = vmatpush.msra.mxu0 0.0
  %346 = vmatpush.msra.mxu0 0.0
  %347 = vmatpush.msra.mxu0 0.0
  %348 = vmatpush.msra.mxu0 0.0
  %349 = vmatpush.msra.mxu0 0.0
  %350 = vmatpush.msra.mxu0 0.0
  %351 = vmatpush.msra.mxu0 0.0
  %352 = vmatpush.msra.mxu0 0.0
  %353 = vmatpush.msra.mxu0 0.0
  %354 = vmatpush.msra.mxu0 0.0
  %355 = vmatpush.msra.mxu0 %v258
  %356 = vmatmul.f32.gmra.mxu0 %v248
  %v357 = vpop.f32.mrf.mxu0
  %v358 = vadd.f32 %v236, %v357
  %359 = vdwg.mxu0
  %v360 = vld [vmem:[%s1] sm:$0xf]
  %362 = vrot.lane.b32.xlu0 %v360, 120
  %v363 = vpop.permute.xlu0 %362
  %364 = vst [vmem:[#allocation1] ss:$2 sm:$0xff] %v89
  %s365 = scalar_lea.vmem [#allocation1], 16
  %366 = vst [vmem:[%s365] ss:$2 sm:$0xff] %v90
  %s367 = scalar_lea.vmem [#allocation1], 32
  %368 = vst [vmem:[%s367] ss:$2 sm:$0xff] %v91
  %v369 = vld.sshfl [vmem:[#allocation1] sm:$0xff pattern:$0x75316420]
  %v370 = vld.sshfl [vmem:[#allocation1 + $0x8] sm:$0xff pattern:$0x75316420]
  %v371 = vld.sshfl [vmem:[#allocation1 + $0x10] sm:$0xff pattern:$0x75316420]
  %v372 = vld.sshfl [vmem:[#allocation1 + $0x18] sm:$0xff pattern:$0x75316420]
  %v373 = vld.sshfl [vmem:[#allocation1 + $0x20] sm:$0xff pattern:$0x75316420]
  %374 = vrot.lane.b32.xlu0 %v369, 126
  %v375 = vpop.permute.xlu0 %374
  %376 = vrot.lane.b32.xlu0 %v370, 126
  %v377 = vpop.permute.xlu0 %376
  %378 = vrot.lane.b32.xlu0 %v371, 126
  %v379 = vpop.permute.xlu0 %378
  %380 = vrot.lane.b32.xlu0 %v372, 126
  %v381 = vpop.permute.xlu0 %380
  %382 = vrot.lane.b32.xlu0 %v373, 126
  %v383 = vpop.permute.xlu0 %382
  %vm384 = vcmask 1031168
  %v385 = vsel %vm384, %v375, %v377
  %v386 = vsel %vm384, %v377, %v379
  %v387 = vsel %vm384, %v379, %v381
  %v388 = vsel %vm384, %v381, %v383
  %v389 = vsel %vm124, %v363, 0
  %v391 = vsel %vm127, %v385, 0
  %v393 = vsel %vm127, %v386, 0
  %v395 = vsel %vm127, %v387, 0
  %v397 = vsel %vm127, %v388, 0
  %v399 = vsel %vm127, %v383, 0
  %401 = vmatpush.msra.mxu0 0.0
  %402 = vmatpush.msra.mxu0 0.0
  %403 = vmatpush.msra.mxu0 0.0
  %404 = vmatpush.msra.mxu0 0.0
  %405 = vmatpush.msra.mxu0 0.0
  %406 = vmatpush.msra.mxu0 0.0
  %407 = vmatpush.msra.mxu0 0.0
  %408 = vmatpush.msra.mxu0 0.0
  %409 = vmatpush.msra.mxu0 0.0
  %410 = vmatpush.msra.mxu0 0.0
  %411 = vmatpush.msra.mxu0 0.0
  %412 = vmatpush.msra.mxu0 0.0
  %413 = vmatpush.msra.mxu0 0.0
  %414 = vmatpush.msra.mxu0 0.0
  %415 = vmatpush.msra.mxu0 0.0
  %416 = vmatpush.msra.mxu0 %v391
  %417 = vmatmul.f32.gmra.mxu0 %v389
  %v418 = vpop.f32.mrf.mxu0
  %v419 = vadd.f32 0.0, %v418
  %420 = vdwg.mxu0
  %421 = vmatpush.msra.mxu0 0.0
  %422 = vmatpush.msra.mxu0 0.0
  %423 = vmatpush.msra.mxu0 0.0
  %424 = vmatpush.msra.mxu0 0.0
  %425 = vmatpush.msra.mxu0 0.0
  %426 = vmatpush.msra.mxu0 0.0
  %427 = vmatpush.msra.mxu0 0.0
  %428 = vmatpush.msra.mxu0 0.0
  %429 = vmatpush.msra.mxu0 0.0
  %430 = vmatpush.msra.mxu0 0.0
  %431 = vmatpush.msra.mxu0 0.0
  %432 = vmatpush.msra.mxu0 0.0
  %433 = vmatpush.msra.mxu0 0.0
  %434 = vmatpush.msra.mxu0 0.0
  %435 = vmatpush.msra.mxu0 0.0
  %436 = vmatpush.msra.mxu0 %v393
  %437 = vmatmul.f32.gmra.mxu0 %v389
  %v438 = vpop.f32.mrf.mxu0
  %v439 = vadd.f32 0.0, %v438
  %440 = vdwg.mxu0
  %441 = vmatpush.msra.mxu0 0.0
  %442 = vmatpush.msra.mxu0 0.0
  %443 = vmatpush.msra.mxu0 0.0
  %444 = vmatpush.msra.mxu0 0.0
  %445 = vmatpush.msra.mxu0 0.0
  %446 = vmatpush.msra.mxu0 0.0
  %447 = vmatpush.msra.mxu0 0.0
  %448 = vmatpush.msra.mxu0 0.0
  %449 = vmatpush.msra.mxu0 0.0
  %450 = vmatpush.msra.mxu0 0.0
  %451 = vmatpush.msra.mxu0 0.0
  %452 = vmatpush.msra.mxu0 0.0
  %453 = vmatpush.msra.mxu0 0.0
  %454 = vmatpush.msra.mxu0 0.0
  %455 = vmatpush.msra.mxu0 0.0
  %456 = vmatpush.msra.mxu0 %v395
  %457 = vmatmul.f32.gmra.mxu0 %v389
  %v458 = vpop.f32.mrf.mxu0
  %v459 = vadd.f32 0.0, %v458
  %460 = vdwg.mxu0
  %461 = vmatpush.msra.mxu0 0.0
  %462 = vmatpush.msra.mxu0 0.0
  %463 = vmatpush.msra.mxu0 0.0
  %464 = vmatpush.msra.mxu0 0.0
  %465 = vmatpush.msra.mxu0 0.0
  %466 = vmatpush.msra.mxu0 0.0
  %467 = vmatpush.msra.mxu0 0.0
  %468 = vmatpush.msra.mxu0 0.0
  %469 = vmatpush.msra.mxu0 0.0
  %470 = vmatpush.msra.mxu0 0.0
  %471 = vmatpush.msra.mxu0 0.0
  %472 = vmatpush.msra.mxu0 0.0
  %473 = vmatpush.msra.mxu0 0.0
  %474 = vmatpush.msra.mxu0 0.0
  %475 = vmatpush.msra.mxu0 0.0
  %476 = vmatpush.msra.mxu0 %v397
  %477 = vmatmul.f32.gmra.mxu0 %v389
  %v478 = vpop.f32.mrf.mxu0
  %v479 = vadd.f32 0.0, %v478
  %480 = vdwg.mxu0
  %481 = vmatpush.msra.mxu0 0.0
  %482 = vmatpush.msra.mxu0 0.0
  %483 = vmatpush.msra.mxu0 0.0
  %484 = vmatpush.msra.mxu0 0.0
  %485 = vmatpush.msra.mxu0 0.0
  %486 = vmatpush.msra.mxu0 0.0
  %487 = vmatpush.msra.mxu0 0.0
  %488 = vmatpush.msra.mxu0 0.0
  %489 = vmatpush.msra.mxu0 0.0
  %490 = vmatpush.msra.mxu0 0.0
  %491 = vmatpush.msra.mxu0 0.0
  %492 = vmatpush.msra.mxu0 0.0
  %493 = vmatpush.msra.mxu0 0.0
  %494 = vmatpush.msra.mxu0 0.0
  %495 = vmatpush.msra.mxu0 0.0
  %496 = vmatpush.msra.mxu0 %v399
  %497 = vmatmul.f32.gmra.mxu0 %v389
  %v498 = vpop.f32.mrf.mxu0
  %v499 = vadd.f32 0.0, %v498
  %500 = vdwg.mxu0
  %v501 = vadd.f32 %v278, %v419
  %v502 = vadd.f32 %v298, %v439
  %v503 = vadd.f32 %v318, %v459
  %v504 = vadd.f32 %v338, %v479
  %v505 = vadd.f32 %v358, %v499
  %v506 = vld [vmem:[%s1] sm:$0xf]
  %508 = vrot.lane.b32.xlu0 %v506, 116
  %v509 = vpop.permute.xlu0 %508
  %510 = vst [vmem:[#allocation1] ss:$2 sm:$0xff] %v89
  %s511 = scalar_lea.vmem [#allocation1], 16
  %512 = vst [vmem:[%s511] ss:$2 sm:$0xff] %v90
  %s513 = scalar_lea.vmem [#allocation1], 32
  %514 = vst [vmem:[%s513] ss:$2 sm:$0xff] %v91
  %v515 = vld.sshfl [vmem:[#allocation1] sm:$0xff pattern:$0x75316420]
  %v516 = vld.sshfl [vmem:[#allocation1 + $0x8] sm:$0xff pattern:$0x75316420]
  %v517 = vld.sshfl [vmem:[#allocation1 + $0x10] sm:$0xff pattern:$0x75316420]
  %v518 = vld.sshfl [vmem:[#allocation1 + $0x18] sm:$0xff pattern:$0x75316420]
  %v519 = vld.sshfl [vmem:[#allocation1 + $0x20] sm:$0xff pattern:$0x75316420]
  %520 = vrot.lane.b32.xlu0 %v515, 110
  %v521 = vpop.permute.xlu0 %520
  %522 = vrot.lane.b32.xlu0 %v516, 110
  %v523 = vpop.permute.xlu0 %522
  %524 = vrot.lane.b32.xlu0 %v517, 110
  %v525 = vpop.permute.xlu0 %524
  %526 = vrot.lane.b32.xlu0 %v518, 110
  %v527 = vpop.permute.xlu0 %526
  %528 = vrot.lane.b32.xlu0 %v519, 110
  %v529 = vpop.permute.xlu0 %528
  %vm530 = vcmask 900096
  %v531 = vsel %vm530, %v521, %v523
  %v532 = vsel %vm530, %v523, %v525
  %v533 = vsel %vm530, %v525, %v527
  %v534 = vsel %vm530, %v527, %v529
  %v535 = vsel %vm124, %v509, 0
  %v537 = vsel %vm127, %v531, 0
  %v539 = vsel %vm127, %v532, 0
  %v541 = vsel %vm127, %v533, 0
  %v543 = vsel %vm127, %v534, 0
  %v545 = vsel %vm127, %v529, 0
  %547 = vmatpush.msra.mxu0 0.0
  %548 = vmatpush.msra.mxu0 0.0
  %549 = vmatpush.msra.mxu0 0.0
  %550 = vmatpush.msra.mxu0 0.0
  %551 = vmatpush.msra.mxu0 0.0
  %552 = vmatpush.msra.mxu0 0.0
  %553 = vmatpush.msra.mxu0 0.0
  %554 = vmatpush.msra.mxu0 0.0
  %555 = vmatpush.msra.mxu0 0.0
  %556 = vmatpush.msra.mxu0 0.0
  %557 = vmatpush.msra.mxu0 0.0
  %558 = vmatpush.msra.mxu0 0.0
  %559 = vmatpush.msra.mxu0 0.0
  %560 = vmatpush.msra.mxu0 0.0
  %561 = vmatpush.msra.mxu0 0.0
  %562 = vmatpush.msra.mxu0 %v537
  %563 = vmatmul.f32.gmra.mxu0 %v535
  %v564 = vpop.f32.mrf.mxu0
  %v565 = vadd.f32 0.0, %v564
  %566 = vdwg.mxu0
  %567 = vmatpush.msra.mxu0 0.0
  %568 = vmatpush.msra.mxu0 0.0
  %569 = vmatpush.msra.mxu0 0.0
  %570 = vmatpush.msra.mxu0 0.0
  %571 = vmatpush.msra.mxu0 0.0
  %572 = vmatpush.msra.mxu0 0.0
  %573 = vmatpush.msra.mxu0 0.0
  %574 = vmatpush.msra.mxu0 0.0
  %575 = vmatpush.msra.mxu0 0.0
  %576 = vmatpush.msra.mxu0 0.0
  %577 = vmatpush.msra.mxu0 0.0
  %578 = vmatpush.msra.mxu0 0.0
  %579 = vmatpush.msra.mxu0 0.0
  %580 = vmatpush.msra.mxu0 0.0
  %581 = vmatpush.msra.mxu0 0.0
  %582 = vmatpush.msra.mxu0 %v539
  %583 = vmatmul.f32.gmra.mxu0 %v535
  %v584 = vpop.f32.mrf.mxu0
  %v585 = vadd.f32 0.0, %v584
  %586 = vdwg.mxu0
  %587 = vmatpush.msra.mxu0 0.0
  %588 = vmatpush.msra.mxu0 0.0
  %589 = vmatpush.msra.mxu0 0.0
  %590 = vmatpush.msra.mxu0 0.0
  %591 = vmatpush.msra.mxu0 0.0
  %592 = vmatpush.msra.mxu0 0.0
  %593 = vmatpush.msra.mxu0 0.0
  %594 = vmatpush.msra.mxu0 0.0
  %595 = vmatpush.msra.mxu0 0.0
  %596 = vmatpush.msra.mxu0 0.0
  %597 = vmatpush.msra.mxu0 0.0
  %598 = vmatpush.msra.mxu0 0.0
  %599 = vmatpush.msra.mxu0 0.0
  %600 = vmatpush.msra.mxu0 0.0
  %601 = vmatpush.msra.mxu0 0.0
  %602 = vmatpush.msra.mxu0 %v541
  %603 = vmatmul.f32.gmra.mxu0 %v535
  %v604 = vpop.f32.mrf.mxu0
  %v605 = vadd.f32 0.0, %v604
  %606 = vdwg.mxu0
  %607 = vmatpush.msra.mxu0 0.0
  %608 = vmatpush.msra.mxu0 0.0
  %609 = vmatpush.msra.mxu0 0.0
  %610 = vmatpush.msra.mxu0 0.0
  %611 = vmatpush.msra.mxu0 0.0
  %612 = vmatpush.msra.mxu0 0.0
  %613 = vmatpush.msra.mxu0 0.0
  %614 = vmatpush.msra.mxu0 0.0
  %615 = vmatpush.msra.mxu0 0.0
  %616 = vmatpush.msra.mxu0 0.0
  %617 = vmatpush.msra.mxu0 0.0
  %618 = vmatpush.msra.mxu0 0.0
  %619 = vmatpush.msra.mxu0 0.0
  %620 = vmatpush.msra.mxu0 0.0
  %621 = vmatpush.msra.mxu0 0.0
  %622 = vmatpush.msra.mxu0 %v543
  %623 = vmatmul.f32.gmra.mxu0 %v535
  %v624 = vpop.f32.mrf.mxu0
  %v625 = vadd.f32 0.0, %v624
  %626 = vdwg.mxu0
  %627 = vmatpush.msra.mxu0 0.0
  %628 = vmatpush.msra.mxu0 0.0
  %629 = vmatpush.msra.mxu0 0.0
  %630 = vmatpush.msra.mxu0 0.0
  %631 = vmatpush.msra.mxu0 0.0
  %632 = vmatpush.msra.mxu0 0.0
  %633 = vmatpush.msra.mxu0 0.0
  %634 = vmatpush.msra.mxu0 0.0
  %635 = vmatpush.msra.mxu0 0.0
  %636 = vmatpush.msra.mxu0 0.0
  %637 = vmatpush.msra.mxu0 0.0
  %638 = vmatpush.msra.mxu0 0.0
  %639 = vmatpush.msra.mxu0 0.0
  %640 = vmatpush.msra.mxu0 0.0
  %641 = vmatpush.msra.mxu0 0.0
  %642 = vmatpush.msra.mxu0 %v545
  %643 = vmatmul.f32.gmra.mxu0 %v535
  %v644 = vpop.f32.mrf.mxu0
  %v645 = vadd.f32 0.0, %v644
  %646 = vdwg.mxu0
  %v647 = vadd.f32 %v501, %v565
  %v648 = vadd.f32 %v502, %v585
  %v649 = vadd.f32 %v503, %v605
  %v650 = vadd.f32 %v504, %v625
  %v651 = vadd.f32 %v505, %v645
  %v652 = vld [vmem:[%s1] sm:$0xf]
  %654 = vrot.lane.b32.xlu0 %v652, 112
  %v655 = vpop.permute.xlu0 %654
  %656 = vst [vmem:[#allocation1] ss:$2 sm:$0xff] %v89
  %s657 = scalar_lea.vmem [#allocation1], 16
  %658 = vst [vmem:[%s657] ss:$2 sm:$0xff] %v90
  %s659 = scalar_lea.vmem [#allocation1], 32
  %660 = vst [vmem:[%s659] ss:$2 sm:$0xff] %v91
  %v661 = vld.sshfl [vmem:[#allocation1] sm:$0xff pattern:$0x75316420]
  %v662 = vld.sshfl [vmem:[#allocation1 + $0x8] sm:$0xff pattern:$0x75316420]
  %v663 = vld.sshfl [vmem:[#allocation1 + $0x10] sm:$0xff pattern:$0x75316420]
  %v664 = vld.sshfl [vmem:[#allocation1 + $0x18] sm:$0xff pattern:$0x75316420]
  %v665 = vld.sshfl [vmem:[#allocation1 + $0x20] sm:$0xff pattern:$0x75316420]
  %666 = vrot.lane.b32.xlu0 %v661, 109
  %v667 = vpop.permute.xlu0 %666
  %668 = vrot.lane.b32.xlu0 %v662, 109
  %v669 = vpop.permute.xlu0 %668
  %670 = vrot.lane.b32.xlu0 %v663, 109
  %v671 = vpop.permute.xlu0 %670
  %672 = vrot.lane.b32.xlu0 %v664, 109
  %v673 = vpop.permute.xlu0 %672
  %674 = vrot.lane.b32.xlu0 %v665, 109
  %v675 = vpop.permute.xlu0 %674
  %vm676 = vcmask 891904
  %v677 = vsel %vm676, %v667, %v669
  %v678 = vsel %vm676, %v669, %v671
  %v679 = vsel %vm676, %v671, %v673
  %v680 = vsel %vm676, %v673, %v675
  %v681 = vsel %vm124, %v655, 0
  %v683 = vsel %vm127, %v677, 0
  %v685 = vsel %vm127, %v678, 0
  %v687 = vsel %vm127, %v679, 0
  %v689 = vsel %vm127, %v680, 0
  %v691 = vsel %vm127, %v675, 0
  %693 = vmatpush.msra.mxu0 0.0
  %694 = vmatpush.msra.mxu0 0.0
  %695 = vmatpush.msra.mxu0 0.0
  %696 = vmatpush.msra.mxu0 0.0
  %697 = vmatpush.msra.mxu0 0.0
  %698 = vmatpush.msra.mxu0 0.0
  %699 = vmatpush.msra.mxu0 0.0
  %700 = vmatpush.msra.mxu0 0.0
  %701 = vmatpush.msra.mxu0 0.0
  %702 = vmatpush.msra.mxu0 0.0
  %703 = vmatpush.msra.mxu0 0.0
  %704 = vmatpush.msra.mxu0 0.0
  %705 = vmatpush.msra.mxu0 0.0
  %706 = vmatpush.msra.mxu0 0.0
  %707 = vmatpush.msra.mxu0 0.0
  %708 = vmatpush.msra.mxu0 %v683
  %709 = vmatmul.f32.gmra.mxu0 %v681
  %v710 = vpop.f32.mrf.mxu0
  %v711 = vadd.f32 0.0, %v710
  %712 = vdwg.mxu0
  %713 = vmatpush.msra.mxu0 0.0
  %714 = vmatpush.msra.mxu0 0.0
  %715 = vmatpush.msra.mxu0 0.0
  %716 = vmatpush.msra.mxu0 0.0
  %717 = vmatpush.msra.mxu0 0.0
  %718 = vmatpush.msra.mxu0 0.0
  %719 = vmatpush.msra.mxu0 0.0
  %720 = vmatpush.msra.mxu0 0.0
  %721 = vmatpush.msra.mxu0 0.0
  %722 = vmatpush.msra.mxu0 0.0
  %723 = vmatpush.msra.mxu0 0.0
  %724 = vmatpush.msra.mxu0 0.0
  %725 = vmatpush.msra.mxu0 0.0
  %726 = vmatpush.msra.mxu0 0.0
  %727 = vmatpush.msra.mxu0 0.0
  %728 = vmatpush.msra.mxu0 %v685
  %729 = vmatmul.f32.gmra.mxu0 %v681
  %v730 = vpop.f32.mrf.mxu0
  %v731 = vadd.f32 0.0, %v730
  %732 = vdwg.mxu0
  %733 = vmatpush.msra.mxu0 0.0
  %734 = vmatpush.msra.mxu0 0.0
  %735 = vmatpush.msra.mxu0 0.0
  %736 = vmatpush.msra.mxu0 0.0
  %737 = vmatpush.msra.mxu0 0.0
  %738 = vmatpush.msra.mxu0 0.0
  %739 = vmatpush.msra.mxu0 0.0
  %740 = vmatpush.msra.mxu0 0.0
  %741 = vmatpush.msra.mxu0 0.0
  %742 = vmatpush.msra.mxu0 0.0
  %743 = vmatpush.msra.mxu0 0.0
  %744 = vmatpush.msra.mxu0 0.0
  %745 = vmatpush.msra.mxu0 0.0
  %746 = vmatpush.msra.mxu0 0.0
  %747 = vmatpush.msra.mxu0 0.0
  %748 = vmatpush.msra.mxu0 %v687
  %749 = vmatmul.f32.gmra.mxu0 %v681
  %v750 = vpop.f32.mrf.mxu0
  %v751 = vadd.f32 0.0, %v750
  %752 = vdwg.mxu0
  %753 = vmatpush.msra.mxu0 0.0
  %754 = vmatpush.msra.mxu0 0.0
  %755 = vmatpush.msra.mxu0 0.0
  %756 = vmatpush.msra.mxu0 0.0
  %757 = vmatpush.msra.mxu0 0.0
  %758 = vmatpush.msra.mxu0 0.0
  %759 = vmatpush.msra.mxu0 0.0
  %760 = vmatpush.msra.mxu0 0.0
  %761 = vmatpush.msra.mxu0 0.0
  %762 = vmatpush.msra.mxu0 0.0
  %763 = vmatpush.msra.mxu0 0.0
  %764 = vmatpush.msra.mxu0 0.0
  %765 = vmatpush.msra.mxu0 0.0
  %766 = vmatpush.msra.mxu0 0.0
  %767 = vmatpush.msra.mxu0 0.0
  %768 = vmatpush.msra.mxu0 %v689
  %769 = vmatmul.f32.gmra.mxu0 %v681
  %v770 = vpop.f32.mrf.mxu0
  %v771 = vadd.f32 0.0, %v770
  %772 = vdwg.mxu0
  %773 = vmatpush.msra.mxu0 0.0
  %774 = vmatpush.msra.mxu0 0.0
  %775 = vmatpush.msra.mxu0 0.0
  %776 = vmatpush.msra.mxu0 0.0
  %777 = vmatpush.msra.mxu0 0.0
  %778 = vmatpush.msra.mxu0 0.0
  %779 = vmatpush.msra.mxu0 0.0
  %780 = vmatpush.msra.mxu0 0.0
  %781 = vmatpush.msra.mxu0 0.0
  %782 = vmatpush.msra.mxu0 0.0
  %783 = vmatpush.msra.mxu0 0.0
  %784 = vmatpush.msra.mxu0 0.0
  %785 = vmatpush.msra.mxu0 0.0
  %786 = vmatpush.msra.mxu0 0.0
  %787 = vmatpush.msra.mxu0 0.0
  %788 = vmatpush.msra.mxu0 %v691
  %789 = vmatmul.f32.gmra.mxu0 %v681
  %v790 = vpop.f32.mrf.mxu0
  %v791 = vadd.f32 0.0, %v790
  %792 = vdwg.mxu0
  %v793 = vadd.f32 %v647, %v711
  %v794 = vadd.f32 %v648, %v731
  %v795 = vadd.f32 %v649, %v751
  %v796 = vadd.f32 %v650, %v771
  %v797 = vadd.f32 %v651, %v791
  %v798 = vld [vmem:[%s1] sm:$0xf]
  %800 = vrot.lane.b32.xlu0 %v798, 108
  %v801 = vpop.permute.xlu0 %800
  %802 = vst [vmem:[#allocation1] ss:$2 sm:$0xff] %v89
  %s803 = scalar_lea.vmem [#allocation1], 16
  %804 = vst [vmem:[%s803] ss:$2 sm:$0xff] %v90
  %s805 = scalar_lea.vmem [#allocation1], 32
  %806 = vst [vmem:[%s805] ss:$2 sm:$0xff] %v91
  %v807 = vld.sshfl [vmem:[#allocation1] sm:$0xff pattern:$0x75316420]
  %v808 = vld.sshfl [vmem:[#allocation1 + $0x8] sm:$0xff pattern:$0x75316420]
  %v809 = vld.sshfl [vmem:[#allocation1 + $0x10] sm:$0xff pattern:$0x75316420]
  %v810 = vld.sshfl [vmem:[#allocation1 + $0x18] sm:$0xff pattern:$0x75316420]
  %v811 = vld.sshfl [vmem:[#allocation1 + $0x20] sm:$0xff pattern:$0x75316420]
  %812 = vrot.lane.b32.xlu0 %v807, 108
  %v813 = vpop.permute.xlu0 %812
  %814 = vrot.lane.b32.xlu0 %v808, 108
  %v815 = vpop.permute.xlu0 %814
  %816 = vrot.lane.b32.xlu0 %v809, 108
  %v817 = vpop.permute.xlu0 %816
  %818 = vrot.lane.b32.xlu0 %v810, 108
  %v819 = vpop.permute.xlu0 %818
  %820 = vrot.lane.b32.xlu0 %v811, 108
  %v821 = vpop.permute.xlu0 %820
  %vm822 = vcmask 883712
  %v823 = vsel %vm822, %v813, %v815
  %v824 = vsel %vm822, %v815, %v817
  %v825 = vsel %vm822, %v817, %v819
  %v826 = vsel %vm822, %v819, %v821
  %v827 = vsel %vm124, %v801, 0
  %v829 = vsel %vm127, %v823, 0
  %v831 = vsel %vm127, %v824, 0
  %v833 = vsel %vm127, %v825, 0
  %v835 = vsel %vm127, %v826, 0
  %v837 = vsel %vm127, %v821, 0
  %839 = vmatpush.msra.mxu0 0.0
  %840 = vmatpush.msra.mxu0 0.0
  %841 = vmatpush.msra.mxu0 0.0
  %842 = vmatpush.msra.mxu0 0.0
  %843 = vmatpush.msra.mxu0 0.0
  %844 = vmatpush.msra.mxu0 0.0
  %845 = vmatpush.msra.mxu0 0.0
  %846 = vmatpush.msra.mxu0 0.0
  %847 = vmatpush.msra.mxu0 0.0
  %848 = vmatpush.msra.mxu0 0.0
  %849 = vmatpush.msra.mxu0 0.0
  %850 = vmatpush.msra.mxu0 0.0
  %851 = vmatpush.msra.mxu0 0.0
  %852 = vmatpush.msra.mxu0 0.0
  %853 = vmatpush.msra.mxu0 0.0
  %854 = vmatpush.msra.mxu0 %v829
  %855 = vmatmul.f32.gmra.mxu0 %v827
  %v856 = vpop.f32.mrf.mxu0
  %v857 = vadd.f32 0.0, %v856
  %858 = vdwg.mxu0
  %859 = vmatpush.msra.mxu0 0.0
  %860 = vmatpush.msra.mxu0 0.0
  %861 = vmatpush.msra.mxu0 0.0
  %862 = vmatpush.msra.mxu0 0.0
  %863 = vmatpush.msra.mxu0 0.0
  %864 = vmatpush.msra.mxu0 0.0
  %865 = vmatpush.msra.mxu0 0.0
  %866 = vmatpush.msra.mxu0 0.0
  %867 = vmatpush.msra.mxu0 0.0
  %868 = vmatpush.msra.mxu0 0.0
  %869 = vmatpush.msra.mxu0 0.0
  %870 = vmatpush.msra.mxu0 0.0
  %871 = vmatpush.msra.mxu0 0.0
  %872 = vmatpush.msra.mxu0 0.0
  %873 = vmatpush.msra.mxu0 0.0
  %874 = vmatpush.msra.mxu0 %v831
  %875 = vmatmul.f32.gmra.mxu0 %v827
  %v876 = vpop.f32.mrf.mxu0
  %v877 = vadd.f32 0.0, %v876
  %878 = vdwg.mxu0
  %879 = vmatpush.msra.mxu0 0.0
  %880 = vmatpush.msra.mxu0 0.0
  %881 = vmatpush.msra.mxu0 0.0
  %882 = vmatpush.msra.mxu0 0.0
  %883 = vmatpush.msra.mxu0 0.0
  %884 = vmatpush.msra.mxu0 0.0
  %885 = vmatpush.msra.mxu0 0.0
  %886 = vmatpush.msra.mxu0 0.0
  %887 = vmatpush.msra.mxu0 0.0
  %888 = vmatpush.msra.mxu0 0.0
  %889 = vmatpush.msra.mxu0 0.0
  %890 = vmatpush.msra.mxu0 0.0
  %891 = vmatpush.msra.mxu0 0.0
  %892 = vmatpush.msra.mxu0 0.0
  %893 = vmatpush.msra.mxu0 0.0
  %894 = vmatpush.msra.mxu0 %v833
  %895 = vmatmul.f32.gmra.mxu0 %v827
  %v896 = vpop.f32.mrf.mxu0
  %v897 = vadd.f32 0.0, %v896
  %898 = vdwg.mxu0
  %899 = vmatpush.msra.mxu0 0.0
  %900 = vmatpush.msra.mxu0 0.0
  %901 = vmatpush.msra.mxu0 0.0
  %902 = vmatpush.msra.mxu0 0.0
  %903 = vmatpush.msra.mxu0 0.0
  %904 = vmatpush.msra.mxu0 0.0
  %905 = vmatpush.msra.mxu0 0.0
  %906 = vmatpush.msra.mxu0 0.0
  %907 = vmatpush.msra.mxu0 0.0
  %908 = vmatpush.msra.mxu0 0.0
  %909 = vmatpush.msra.mxu0 0.0
  %910 = vmatpush.msra.mxu0 0.0
  %911 = vmatpush.msra.mxu0 0.0
  %912 = vmatpush.msra.mxu0 0.0
  %913 = vmatpush.msra.mxu0 0.0
  %914 = vmatpush.msra.mxu0 %v835
  %915 = vmatmul.f32.gmra.mxu0 %v827
  %v916 = vpop.f32.mrf.mxu0
  %v917 = vadd.f32 0.0, %v916
  %918 = vdwg.mxu0
  %919 = vmatpush.msra.mxu0 0.0
  %920 = vmatpush.msra.mxu0 0.0
  %921 = vmatpush.msra.mxu0 0.0
  %922 = vmatpush.msra.mxu0 0.0
  %923 = vmatpush.msra.mxu0 0.0
  %924 = vmatpush.msra.mxu0 0.0
  %925 = vmatpush.msra.mxu0 0.0
  %926 = vmatpush.msra.mxu0 0.0
  %927 = vmatpush.msra.mxu0 0.0
  %928 = vmatpush.msra.mxu0 0.0
  %929 = vmatpush.msra.mxu0 0.0
  %930 = vmatpush.msra.mxu0 0.0
  %931 = vmatpush.msra.mxu0 0.0
  %932 = vmatpush.msra.mxu0 0.0
  %933 = vmatpush.msra.mxu0 0.0
  %934 = vmatpush.msra.mxu0 %v837
  %935 = vmatmul.f32.gmra.mxu0 %v827
  %v936 = vpop.f32.mrf.mxu0
  %v937 = vadd.f32 0.0, %v936
  %938 = vdwg.mxu0
  %v939 = vadd.f32 %v793, %v857
  %v940 = vadd.f32 %v794, %v877
  %v941 = vadd.f32 %v795, %v897
  %v942 = vadd.f32 %v796, %v917
  %v943 = vadd.f32 %v797, %v937
  %v944 = vld [vmem:[%s1] sm:$0xf]
  %946 = vrot.lane.b32.xlu0 %v944, 104
  %v947 = vpop.permute.xlu0 %946
  %948 = vst [vmem:[#allocation1] ss:$2 sm:$0xff] %v89
  %s949 = scalar_lea.vmem [#allocation1], 16
  %950 = vst [vmem:[%s949] ss:$2 sm:$0xff] %v90
  %s951 = scalar_lea.vmem [#allocation1], 32
  %952 = vst [vmem:[%s951] ss:$2 sm:$0xff] %v91
  %v953 = vld.sshfl [vmem:[#allocation1] sm:$0xff pattern:$0x75316420]
  %v954 = vld.sshfl [vmem:[#allocation1 + $0x8] sm:$0xff pattern:$0x75316420]
  %v955 = vld.sshfl [vmem:[#allocation1 + $0x10] sm:$0xff pattern:$0x75316420]
  %v956 = vld.sshfl [vmem:[#allocation1 + $0x18] sm:$0xff pattern:$0x75316420]
  %v957 = vld.sshfl [vmem:[#allocation1 + $0x20] sm:$0xff pattern:$0x75316420]
  %v958 = vld.sshfl [vmem:[#allocation1 + $0x28] sm:$0xff pattern:$0x75316420]
  %959 = vrot.lane.b32.xlu0 %v953, 92
  %v960 = vpop.permute.xlu0 %959
  %961 = vrot.lane.b32.xlu0 %v954, 92
  %v962 = vpop.permute.xlu0 %961
  %963 = vrot.lane.b32.xlu0 %v955, 92
  %v964 = vpop.permute.xlu0 %963
  %965 = vrot.lane.b32.xlu0 %v956, 92
  %v966 = vpop.permute.xlu0 %965
  %967 = vrot.lane.b32.xlu0 %v957, 92
  %v968 = vpop.permute.xlu0 %967
  %969 = vrot.lane.b32.xlu0 %v958, 92
  %v970 = vpop.permute.xlu0 %969
  %vm971 = vcmask 752640
  %v972 = vsel %vm971, %v960, %v962
  %v973 = vsel %vm971, %v962, %v964
  %v974 = vsel %vm971, %v964, %v966
  %v975 = vsel %vm971, %v966, %v968
  %v976 = vsel %vm971, %v968, %v970
  %v977 = vsel %vm124, %v947, 0
  %v979 = vsel %vm127, %v972, 0
  %v981 = vsel %vm127, %v973, 0
  %v983 = vsel %vm127, %v974, 0
  %v985 = vsel %vm127, %v975, 0
  %v987 = vsel %vm127, %v976, 0
  %989 = vmatpush.msra.mxu0 0.0
  %990 = vmatpush.msra.mxu0 0.0
  %991 = vmatpush.msra.mxu0 0.0
  %992 = vmatpush.msra.mxu0 0.0
  %993 = vmatpush.msra.mxu0 0.0
  %994 = vmatpush.msra.mxu0 0.0
  %995 = vmatpush.msra.mxu0 0.0
  %996 = vmatpush.msra.mxu0 0.0
  %997 = vmatpush.msra.mxu0 0.0
  %998 = vmatpush.msra.mxu0 0.0
  %999 = vmatpush.msra.mxu0 0.0
  %1000 = vmatpush.msra.mxu0 0.0
  %1001 = vmatpush.msra.mxu0 0.0
  %1002 = vmatpush.msra.mxu0 0.0
  %1003 = vmatpush.msra.mxu0 0.0
  %1004 = vmatpush.msra.mxu0 %v979
  %1005 = vmatmul.f32.gmra.mxu0 %v977
  %v1006 = vpop.f32.mrf.mxu0
  %v1007 = vadd.f32 0.0, %v1006
  %1008 = vdwg.mxu0
  %1009 = vmatpush.msra.mxu0 0.0
  %1010 = vmatpush.msra.mxu0 0.0
  %1011 = vmatpush.msra.mxu0 0.0
  %1012 = vmatpush.msra.mxu0 0.0
  %1013 = vmatpush.msra.mxu0 0.0
  %1014 = vmatpush.msra.mxu0 0.0
  %1015 = vmatpush.msra.mxu0 0.0
  %1016 = vmatpush.msra.mxu0 0.0
  %1017 = vmatpush.msra.mxu0 0.0
  %1018 = vmatpush.msra.mxu0 0.0
  %1019 = vmatpush.msra.mxu0 0.0
  %1020 = vmatpush.msra.mxu0 0.0
  %1021 = vmatpush.msra.mxu0 0.0
  %1022 = vmatpush.msra.mxu0 0.0
  %1023 = vmatpush.msra.mxu0 0.0
  %1024 = vmatpush.msra.mxu0 %v981
  %1025 = vmatmul.f32.gmra.mxu0 %v977
  %v1026 = vpop.f32.mrf.mxu0
  %v1027 = vadd.f32 0.0, %v1026
  %1028 = vdwg.mxu0
  %1029 = vmatpush.msra.mxu0 0.0
  %1030 = vmatpush.msra.mxu0 0.0
  %1031 = vmatpush.msra.mxu0 0.0
  %1032 = vmatpush.msra.mxu0 0.0
  %1033 = vmatpush.msra.mxu0 0.0
  %1034 = vmatpush.msra.mxu0 0.0
  %1035 = vmatpush.msra.mxu0 0.0
  %1036 = vmatpush.msra.mxu0 0.0
  %1037 = vmatpush.msra.mxu0 0.0
  %1038 = vmatpush.msra.mxu0 0.0
  %1039 = vmatpush.msra.mxu0 0.0
  %1040 = vmatpush.msra.mxu0 0.0
  %1041 = vmatpush.msra.mxu0 0.0
  %1042 = vmatpush.msra.mxu0 0.0
  %1043 = vmatpush.msra.mxu0 0.0
  %1044 = vmatpush.msra.mxu0 %v983
  %1045 = vmatmul.f32.gmra.mxu0 %v977
  %v1046 = vpop.f32.mrf.mxu0
  %v1047 = vadd.f32 0.0, %v1046
  %1048 = vdwg.mxu0
  %1049 = vmatpush.msra.mxu0 0.0
  %1050 = vmatpush.msra.mxu0 0.0
  %1051 = vmatpush.msra.mxu0 0.0
  %1052 = vmatpush.msra.mxu0 0.0
  %1053 = vmatpush.msra.mxu0 0.0
  %1054 = vmatpush.msra.mxu0 0.0
  %1055 = vmatpush.msra.mxu0 0.0
  %1056 = vmatpush.msra.mxu0 0.0
  %1057 = vmatpush.msra.mxu0 0.0
  %1058 = vmatpush.msra.mxu0 0.0
  %1059 = vmatpush.msra.mxu0 0.0
  %1060 = vmatpush.msra.mxu0 0.0
  %1061 = vmatpush.msra.mxu0 0.0
  %1062 = vmatpush.msra.mxu0 0.0
  %1063 = vmatpush.msra.mxu0 0.0
  %1064 = vmatpush.msra.mxu0 %v985
  %1065 = vmatmul.f32.gmra.mxu0 %v977
  %v1066 = vpop.f32.mrf.mxu0
  %v1067 = vadd.f32 0.0, %v1066
  %1068 = vdwg.mxu0
  %1069 = vmatpush.msra.mxu0 0.0
  %1070 = vmatpush.msra.mxu0 0.0
  %1071 = vmatpush.msra.mxu0 0.0
  %1072 = vmatpush.msra.mxu0 0.0
  %1073 = vmatpush.msra.mxu0 0.0
  %1074 = vmatpush.msra.mxu0 0.0
  %1075 = vmatpush.msra.mxu0 0.0
  %1076 = vmatpush.msra.mxu0 0.0
  %1077 = vmatpush.msra.mxu0 0.0
  %1078 = vmatpush.msra.mxu0 0.0
  %1079 = vmatpush.msra.mxu0 0.0
  %1080 = vmatpush.msra.mxu0 0.0
  %1081 = vmatpush.msra.mxu0 0.0
  %1082 = vmatpush.msra.mxu0 0.0
  %1083 = vmatpush.msra.mxu0 0.0
  %1084 = vmatpush.msra.mxu0 %v987
  %1085 = vmatmul.f32.gmra.mxu0 %v977
  %v1086 = vpop.f32.mrf.mxu0
  %v1087 = vadd.f32 0.0, %v1086
  %1088 = vdwg.mxu0
  %v1089 = vadd.f32 %v939, %v1007
  %v1090 = vadd.f32 %v940, %v1027
  %v1091 = vadd.f32 %v941, %v1047
  %v1092 = vadd.f32 %v942, %v1067
  %v1093 = vadd.f32 %v943, %v1087
  %v1094 = vld [vmem:[%s1] sm:$0xf]
  %1096 = vrot.lane.b32.xlu0 %v1094, 100
  %v1097 = vpop.permute.xlu0 %1096
  %1098 = vst [vmem:[#allocation1] ss:$2 sm:$0xff] %v89
  %s1099 = scalar_lea.vmem [#allocation1], 16
  %1100 = vst [vmem:[%s1099] ss:$2 sm:$0xff] %v90
  %s1101 = scalar_lea.vmem [#allocation1], 32
  %1102 = vst [vmem:[%s1101] ss:$2 sm:$0xff] %v91
  %v1103 = vld.sshfl [vmem:[#allocation1] sm:$0xff pattern:$0x75316420]
  %v1104 = vld.sshfl [vmem:[#allocation1 + $0x8] sm:$0xff pattern:$0x75316420]
  %v1105 = vld.sshfl [vmem:[#allocation1 + $0x10] sm:$0xff pattern:$0x75316420]
  %v1106 = vld.sshfl [vmem:[#allocation1 + $0x18] sm:$0xff pattern:$0x75316420]
  %v1107 = vld.sshfl [vmem:[#allocation1 + $0x20] sm:$0xff pattern:$0x75316420]
  %v1108 = vld.sshfl [vmem:[#allocation1 + $0x28] sm:$0xff pattern:$0x75316420]
  %1109 = vrot.lane.b32.xlu0 %v1103, 91
  %v1110 = vpop.permute.xlu0 %1109
  %1111 = vrot.lane.b32.xlu0 %v1104, 91
  %v1112 = vpop.permute.xlu0 %1111
  %1113 = vrot.lane.b32.xlu0 %v1105, 91
  %v1114 = vpop.permute.xlu0 %1113
  %1115 = vrot.lane.b32.xlu0 %v1106, 91
  %v1116 = vpop.permute.xlu0 %1115
  %1117 = vrot.lane.b32.xlu0 %v1107, 91
  %v1118 = vpop.permute.xlu0 %1117
  %1119 = vrot.lane.b32.xlu0 %v1108, 91
  %v1120 = vpop.permute.xlu0 %1119
  %vm1121 = vcmask 744448
  %v1122 = vsel %vm1121, %v1110, %v1112
  %v1123 = vsel %vm1121, %v1112, %v1114
  %v1124 = vsel %vm1121, %v1114, %v1116
  %v1125 = vsel %vm1121, %v1116, %v1118
  %v1126 = vsel %vm1121, %v1118, %v1120
  %v1127 = vsel %vm124, %v1097, 0
  %v1129 = vsel %vm127, %v1122, 0
  %v1131 = vsel %vm127, %v1123, 0
  %v1133 = vsel %vm127, %v1124, 0
  %v1135 = vsel %vm127, %v1125, 0
  %v1137 = vsel %vm127, %v1126, 0
  %1139 = vmatpush.msra.mxu0 0.0
  %1140 = vmatpush.msra.mxu0 0.0
  %1141 = vmatpush.msra.mxu0 0.0
  %1142 = vmatpush.msra.mxu0 0.0
  %1143 = vmatpush.msra.mxu0 0.0
  %1144 = vmatpush.msra.mxu0 0.0
  %1145 = vmatpush.msra.mxu0 0.0
  %1146 = vmatpush.msra.mxu0 0.0
  %1147 = vmatpush.msra.mxu0 0.0
  %1148 = vmatpush.msra.mxu0 0.0
  %1149 = vmatpush.msra.mxu0 0.0
  %1150 = vmatpush.msra.mxu0 0.0
  %1151 = vmatpush.msra.mxu0 0.0
  %1152 = vmatpush.msra.mxu0 0.0
  %1153 = vmatpush.msra.mxu0 0.0
  %1154 = vmatpush.msra.mxu0 %v1129
  %1155 = vmatmul.f32.gmra.mxu0 %v1127
  %v1156 = vpop.f32.mrf.mxu0
  %v1157 = vadd.f32 0.0, %v1156
  %1158 = vdwg.mxu0
  %1159 = vmatpush.msra.mxu0 0.0
  %1160 = vmatpush.msra.mxu0 0.0
  %1161 = vmatpush.msra.mxu0 0.0
  %1162 = vmatpush.msra.mxu0 0.0
  %1163 = vmatpush.msra.mxu0 0.0
  %1164 = vmatpush.msra.mxu0 0.0
  %1165 = vmatpush.msra.mxu0 0.0
  %1166 = vmatpush.msra.mxu0 0.0
  %1167 = vmatpush.msra.mxu0 0.0
  %1168 = vmatpush.msra.mxu0 0.0
  %1169 = vmatpush.msra.mxu0 0.0
  %1170 = vmatpush.msra.mxu0 0.0
  %1171 = vmatpush.msra.mxu0 0.0
  %1172 = vmatpush.msra.mxu0 0.0
  %1173 = vmatpush.msra.mxu0 0.0
  %1174 = vmatpush.msra.mxu0 %v1131
  %1175 = vmatmul.f32.gmra.mxu0 %v1127
  %v1176 = vpop.f32.mrf.mxu0
  %v1177 = vadd.f32 0.0, %v1176
  %1178 = vdwg.mxu0
  %1179 = vmatpush.msra.mxu0 0.0
  %1180 = vmatpush.msra.mxu0 0.0
  %1181 = vmatpush.msra.mxu0 0.0
  %1182 = vmatpush.msra.mxu0 0.0
  %1183 = vmatpush.msra.mxu0 0.0
  %1184 = vmatpush.msra.mxu0 0.0
  %1185 = vmatpush.msra.mxu0 0.0
  %1186 = vmatpush.msra.mxu0 0.0
  %1187 = vmatpush.msra.mxu0 0.0
  %1188 = vmatpush.msra.mxu0 0.0
  %1189 = vmatpush.msra.mxu0 0.0
  %1190 = vmatpush.msra.mxu0 0.0
  %1191 = vmatpush.msra.mxu0 0.0
  %1192 = vmatpush.msra.mxu0 0.0
  %1193 = vmatpush.msra.mxu0 0.0
  %1194 = vmatpush.msra.mxu0 %v1133
  %1195 = vmatmul.f32.gmra.mxu0 %v1127
  %v1196 = vpop.f32.mrf.mxu0
  %v1197 = vadd.f32 0.0, %v1196
  %1198 = vdwg.mxu0
  %1199 = vmatpush.msra.mxu0 0.0
  %1200 = vmatpush.msra.mxu0 0.0
  %1201 = vmatpush.msra.mxu0 0.0
  %1202 = vmatpush.msra.mxu0 0.0
  %1203 = vmatpush.msra.mxu0 0.0
  %1204 = vmatpush.msra.mxu0 0.0
  %1205 = vmatpush.msra.mxu0 0.0
  %1206 = vmatpush.msra.mxu0 0.0
  %1207 = vmatpush.msra.mxu0 0.0
  %1208 = vmatpush.msra.mxu0 0.0
  %1209 = vmatpush.msra.mxu0 0.0
  %1210 = vmatpush.msra.mxu0 0.0
  %1211 = vmatpush.msra.mxu0 0.0
  %1212 = vmatpush.msra.mxu0 0.0
  %1213 = vmatpush.msra.mxu0 0.0
  %1214 = vmatpush.msra.mxu0 %v1135
  %1215 = vmatmul.f32.gmra.mxu0 %v1127
  %v1216 = vpop.f32.mrf.mxu0
  %v1217 = vadd.f32 0.0, %v1216
  %1218 = vdwg.mxu0
  %1219 = vmatpush.msra.mxu0 0.0
  %1220 = vmatpush.msra.mxu0 0.0
  %1221 = vmatpush.msra.mxu0 0.0
  %1222 = vmatpush.msra.mxu0 0.0
  %1223 = vmatpush.msra.mxu0 0.0
  %1224 = vmatpush.msra.mxu0 0.0
  %1225 = vmatpush.msra.mxu0 0.0
  %1226 = vmatpush.msra.mxu0 0.0
  %1227 = vmatpush.msra.mxu0 0.0
  %1228 = vmatpush.msra.mxu0 0.0
  %1229 = vmatpush.msra.mxu0 0.0
  %1230 = vmatpush.msra.mxu0 0.0
  %1231 = vmatpush.msra.mxu0 0.0
  %1232 = vmatpush.msra.mxu0 0.0
  %1233 = vmatpush.msra.mxu0 0.0
  %1234 = vmatpush.msra.mxu0 %v1137
  %1235 = vmatmul.f32.gmra.mxu0 %v1127
  %v1236 = vpop.f32.mrf.mxu0
  %v1237 = vadd.f32 0.0, %v1236
  %1238 = vdwg.mxu0
  %v1239 = vadd.f32 %v1089, %v1157
  %v1240 = vadd.f32 %v1090, %v1177
  %v1241 = vadd.f32 %v1091, %v1197
  %v1242 = vadd.f32 %v1092, %v1217
  %v1243 = vadd.f32 %v1093, %v1237
  %v1244 = vld [vmem:[%s1] sm:$0xf]
  %1246 = vrot.lane.b32.xlu0 %v1244, 96
  %v1247 = vpop.permute.xlu0 %1246
  %1248 = vst [vmem:[#allocation1] ss:$2 sm:$0xff] %v89
  %s1249 = scalar_lea.vmem [#allocation1], 16
  %1250 = vst [vmem:[%s1249] ss:$2 sm:$0xff] %v90
  %s1251 = scalar_lea.vmem [#allocation1], 32
  %1252 = vst [vmem:[%s1251] ss:$2 sm:$0xff] %v91
  %v1253 = vld.sshfl [vmem:[#allocation1] sm:$0xff pattern:$0x75316420]
  %v1254 = vld.sshfl [vmem:[#allocation1 + $0x8] sm:$0xff pattern:$0x75316420]
  %v1255 = vld.sshfl [vmem:[#allocation1 + $0x10] sm:$0xff pattern:$0x75316420]
  %v1256 = vld.sshfl [vmem:[#allocation1 + $0x18] sm:$0xff pattern:$0x75316420]
  %v1257 = vld.sshfl [vmem:[#allocation1 + $0x20] sm:$0xff pattern:$0x75316420]
  %v1258 = vld.sshfl [vmem:[#allocation1 + $0x28] sm:$0xff pattern:$0x75316420]
  %1259 = vrot.lane.b32.xlu0 %v1253, 90
  %v1260 = vpop.permute.xlu0 %1259
  %1261 = vrot.lane.b32.xlu0 %v1254, 90
  %v1262 = vpop.permute.xlu0 %1261
  %1263 = vrot.lane.b32.xlu0 %v1255, 90
  %v1264 = vpop.permute.xlu0 %1263
  %1265 = vrot.lane.b32.xlu0 %v1256, 90
  %v1266 = vpop.permute.xlu0 %1265
  %1267 = vrot.lane.b32.xlu0 %v1257, 90
  %v1268 = vpop.permute.xlu0 %1267
  %1269 = vrot.lane.b32.xlu0 %v1258, 90
  %v1270 = vpop.permute.xlu0 %1269
  %vm1271 = vcmask 736256
  %v1272 = vsel %vm1271, %v1260, %v1262
  %v1273 = vsel %vm1271, %v1262, %v1264
  %v1274 = vsel %vm1271, %v1264, %v1266
  %v1275 = vsel %vm1271, %v1266, %v1268
  %v1276 = vsel %vm1271, %v1268, %v1270
  %v1277 = vsel %vm124, %v1247, 0
  %v1279 = vsel %vm127, %v1272, 0
  %v1281 = vsel %vm127, %v1273, 0
  %v1283 = vsel %vm127, %v1274, 0
  %v1285 = vsel %vm127, %v1275, 0
  %v1287 = vsel %vm127, %v1276, 0
  %1289 = vmatpush.msra.mxu0 0.0
  %1290 = vmatpush.msra.mxu0 0.0
  %1291 = vmatpush.msra.mxu0 0.0
  %1292 = vmatpush.msra.mxu0 0.0
  %1293 = vmatpush.msra.mxu0 0.0
  %1294 = vmatpush.msra.mxu0 0.0
  %1295 = vmatpush.msra.mxu0 0.0
  %1296 = vmatpush.msra.mxu0 0.0
  %1297 = vmatpush.msra.mxu0 0.0
  %1298 = vmatpush.msra.mxu0 0.0
  %1299 = vmatpush.msra.mxu0 0.0
  %1300 = vmatpush.msra.mxu0 0.0
  %1301 = vmatpush.msra.mxu0 0.0
  %1302 = vmatpush.msra.mxu0 0.0
  %1303 = vmatpush.msra.mxu0 0.0
  %1304 = vmatpush.msra.mxu0 %v1279
  %1305 = vmatmul.f32.gmra.mxu0 %v1277
  %v1306 = vpop.f32.mrf.mxu0
  %v1307 = vadd.f32 0.0, %v1306
  %1308 = vdwg.mxu0
  %1309 = vmatpush.msra.mxu0 0.0
  %1310 = vmatpush.msra.mxu0 0.0
  %1311 = vmatpush.msra.mxu0 0.0
  %1312 = vmatpush.msra.mxu0 0.0
  %1313 = vmatpush.msra.mxu0 0.0
  %1314 = vmatpush.msra.mxu0 0.0
  %1315 = vmatpush.msra.mxu0 0.0
  %1316 = vmatpush.msra.mxu0 0.0
  %1317 = vmatpush.msra.mxu0 0.0
  %1318 = vmatpush.msra.mxu0 0.0
  %1319 = vmatpush.msra.mxu0 0.0
  %1320 = vmatpush.msra.mxu0 0.0
  %1321 = vmatpush.msra.mxu0 0.0
  %1322 = vmatpush.msra.mxu0 0.0
  %1323 = vmatpush.msra.mxu0 0.0
  %1324 = vmatpush.msra.mxu0 %v1281
  %1325 = vmatmul.f32.gmra.mxu0 %v1277
  %v1326 = vpop.f32.mrf.mxu0
  %v1327 = vadd.f32 0.0, %v1326
  %1328 = vdwg.mxu0
  %1329 = vmatpush.msra.mxu0 0.0
  %1330 = vmatpush.msra.mxu0 0.0
  %1331 = vmatpush.msra.mxu0 0.0
  %1332 = vmatpush.msra.mxu0 0.0
  %1333 = vmatpush.msra.mxu0 0.0
  %1334 = vmatpush.msra.mxu0 0.0
  %1335 = vmatpush.msra.mxu0 0.0
  %1336 = vmatpush.msra.mxu0 0.0
  %1337 = vmatpush.msra.mxu0 0.0
  %1338 = vmatpush.msra.mxu0 0.0
  %1339 = vmatpush.msra.mxu0 0.0
  %1340 = vmatpush.msra.mxu0 0.0
  %1341 = vmatpush.msra.mxu0 0.0
  %1342 = vmatpush.msra.mxu0 0.0
  %1343 = vmatpush.msra.mxu0 0.0
  %1344 = vmatpush.msra.mxu0 %v1283
  %1345 = vmatmul.f32.gmra.mxu0 %v1277
  %v1346 = vpop.f32.mrf.mxu0
  %v1347 = vadd.f32 0.0, %v1346
  %1348 = vdwg.mxu0
  %1349 = vmatpush.msra.mxu0 0.0
  %1350 = vmatpush.msra.mxu0 0.0
  %1351 = vmatpush.msra.mxu0 0.0
  %1352 = vmatpush.msra.mxu0 0.0
  %1353 = vmatpush.msra.mxu0 0.0
  %1354 = vmatpush.msra.mxu0 0.0
  %1355 = vmatpush.msra.mxu0 0.0
  %1356 = vmatpush.msra.mxu0 0.0
  %1357 = vmatpush.msra.mxu0 0.0
  %1358 = vmatpush.msra.mxu0 0.0
  %1359 = vmatpush.msra.mxu0 0.0
  %1360 = vmatpush.msra.mxu0 0.0
  %1361 = vmatpush.msra.mxu0 0.0
  %1362 = vmatpush.msra.mxu0 0.0
  %1363 = vmatpush.msra.mxu0 0.0
  %1364 = vmatpush.msra.mxu0 %v1285
  %1365 = vmatmul.f32.gmra.mxu0 %v1277
  %v1366 = vpop.f32.mrf.mxu0
  %v1367 = vadd.f32 0.0, %v1366
  %1368 = vdwg.mxu0
  %1369 = vmatpush.msra.mxu0 0.0
  %1370 = vmatpush.msra.mxu0 0.0
  %1371 = vmatpush.msra.mxu0 0.0
  %1372 = vmatpush.msra.mxu0 0.0
  %1373 = vmatpush.msra.mxu0 0.0
  %1374 = vmatpush.msra.mxu0 0.0
  %1375 = vmatpush.msra.mxu0 0.0
  %1376 = vmatpush.msra.mxu0 0.0
  %1377 = vmatpush.msra.mxu0 0.0
  %1378 = vmatpush.msra.mxu0 0.0
  %1379 = vmatpush.msra.mxu0 0.0
  %1380 = vmatpush.msra.mxu0 0.0
  %1381 = vmatpush.msra.mxu0 0.0
  %1382 = vmatpush.msra.mxu0 0.0
  %1383 = vmatpush.msra.mxu0 0.0
  %1384 = vmatpush.msra.mxu0 %v1287
  %1385 = vmatmul.f32.gmra.mxu0 %v1277
  %v1386 = vpop.f32.mrf.mxu0
  %v1387 = vadd.f32 0.0, %v1386
  %1388 = vdwg.mxu0
  %v1389 = vadd.f32 %v1239, %v1307
  %v1390 = vadd.f32 %v1240, %v1327
  %v1391 = vadd.f32 %v1241, %v1347
  %v1392 = vadd.f32 %v1242, %v1367
  %v1393 = vadd.f32 %v1243, %v1387
  %v1394 = vld [vmem:[%s2] sm:$0xf]
  %1396 = vset.pattern.permute.xlu0 0
  %1397 = vperm.xlu0 %1396, %v1394
  %v1398 = vpop.permute.xlu0 %1397
  %v1400 = vadd.f32 %v1389, %v1398
  %v1401 = vadd.f32 %v1390, %v1398
  %v1402 = vadd.f32 %v1391, %v1398
  %v1403 = vadd.f32 %v1392, %v1398
  %v1404 = vadd.f32 %v1393, %v1398
  %v1405 = vmax.f32 %v1400, 0.0
  %v1406 = vmax.f32 %v1401, 0.0
  %v1407 = vmax.f32 %v1402, 0.0
  %v1408 = vmax.f32 %v1403, 0.0
  %v1409 = vmax.f32 %v1404, 0.0
  %v1410 = vld [vmem:[%s3] sm:$0xff]
  %v1411 = vld [vmem:[%s3 + $0x8] sm:$0xff]
  %v1412 = vld [vmem:[%s3 + $0x10] sm:$0xff]
  %v1413 = vld [vmem:[%s3 + $0x18] sm:$0xff]
  %v1414 = vld [vmem:[%s3 + $0x20] sm:$0xff]
  %v1415 = vld [vmem:[%s3 + $0x28] sm:$0xff]
  %v1416 = vld [vmem:[%s3 + $0x30] sm:$0xff]
  %v1417 = vld [vmem:[%s3 + $0x38] sm:$0xff]
  %v1418 = vld [vmem:[%s3 + $0x40] sm:$0xff]
  %v1419 = vld [vmem:[%s3 + $0x48] sm:$0xff]
  %v1420 = vld [vmem:[%s3 + $0x50] sm:$0xff]
  %v1421 = vld [vmem:[%s3 + $0x58] sm:$0xff]
  %v1422 = vld [vmem:[%s3 + $0x60] sm:$0xff]
  %v1423 = vld [vmem:[%s3 + $0x68] sm:$0xff]
  %v1424 = vld [vmem:[%s3 + $0x70] sm:$0xff]
  %v1425 = vld [vmem:[%s3 + $0x78] sm:$0xff]
  %v1426 = vld [vmem:[%s3 + $0x80] sm:$0xff]
  %v1427 = vld [vmem:[%s3 + $0x88] sm:$0xff]
  %v1428 = vld [vmem:[%s3 + $0x90] sm:$0xff]
  %v1429 = vld [vmem:[%s3 + $0x98] sm:$0xff]
  %v1430 = vld [vmem:[%s3 + $0xa0] sm:$0xff]
  %v1431 = vld [vmem:[%s3 + $0xa8] sm:$0xff]
  %v1432 = vld [vmem:[%s3 + $0xb0] sm:$0xff]
  %v1433 = vld [vmem:[%s3 + $0xb8] sm:$0xff]
  %v1434 = vld [vmem:[%s3 + $0xc0] sm:$0xff]
  %v1435 = vld [vmem:[%s3 + $0xc8] sm:$0xff]
  %v1436 = vld [vmem:[%s3 + $0xd0] sm:$0xff]
  %v1437 = vld [vmem:[%s3 + $0xd8] sm:$0xff]
  %v1438 = vld [vmem:[%s3 + $0xe0] sm:$0xff]
  %v1439 = vld [vmem:[%s3 + $0xe8] sm:$0xff]
  %v1440 = vld [vmem:[%s3 + $0xf0] sm:$0xff]
  %v1441 = vld [vmem:[%s3 + $0xf8] sm:$0xff]
  %v1442 = vld [vmem:[%s3 + $0x100] sm:$0xff]
  %v1443 = vld [vmem:[%s3 + $0x108] sm:$0xff]
  %v1444 = vld [vmem:[%s3 + $0x110] sm:$0xff]
  %v1445 = vld [vmem:[%s3 + $0x118] sm:$0xff]
  %v1446 = vld [vmem:[%s3 + $0x120] sm:$0xff]
  %v1447 = vld [vmem:[%s3 + $0x128] sm:$0xff]
  %v1448 = vld [vmem:[%s3 + $0x130] sm:$0xff]
  %v1449 = vld [vmem:[%s3 + $0x138] sm:$0xff]
  %v1450 = vld [vmem:[%s3 + $0x140] sm:$0xff]
  %v1451 = vld [vmem:[%s3 + $0x148] sm:$0xff]
  %v1452 = vld [vmem:[%s3 + $0x150] sm:$0xff]
  %v1453 = vld [vmem:[%s3 + $0x158] sm:$0xff]
  %v1454 = vld [vmem:[%s3 + $0x160] sm:$0xff]
  %v1455 = vld [vmem:[%s3 + $0x168] sm:$0xff]
  %v1456 = vld [vmem:[%s3 + $0x170] sm:$0xff]
  %v1457 = vld [vmem:[%s3 + $0x178] sm:$0xff]
  %v1458 = vld [vmem:[%s3 + $0x180] sm:$0xff]
  %v1459 = vld [vmem:[%s3 + $0x188] sm:$0xff]
  %v1460 = vld [vmem:[%s3 + $0x190] sm:$0xff]
  %v1461 = vld [vmem:[%s3 + $0x198] sm:$0xff]
  %v1462 = vld [vmem:[%s3 + $0x1a0] sm:$0xff]
  %v1463 = vld [vmem:[%s3 + $0x1a8] sm:$0xff]
  %v1464 = vld [vmem:[%s3 + $0x1b0] sm:$0xff]
  %v1465 = vld [vmem:[%s3 + $0x1b8] sm:$0xff]
  %v1466 = vld [vmem:[%s3 + $0x1c0] sm:$0xff]
  %v1467 = vld [vmem:[%s3 + $0x1c8] sm:$0xff]
  %v1468 = vld [vmem:[%s3 + $0x1d0] sm:$0xff]
  %v1469 = vld [vmem:[%s3 + $0x1d8] sm:$0xff]
  %v1470 = vld [vmem:[%s3 + $0x1e0] sm:$0xff]
  %v1471 = vld [vmem:[%s3 + $0x1e8] sm:$0xff]
  %v1472 = vld [vmem:[%s3 + $0x1f0] sm:$0xff]
  %v1473 = vld [vmem:[%s3 + $0x1f8] sm:$0xff]
  %v1474 = vld [vmem:[%s3 + $0x200] sm:$0xff]
  %v1475 = vld [vmem:[%s3 + $0x208] sm:$0xff]
  %v1476 = vld [vmem:[%s3 + $0x210] sm:$0xff]
  %v1477 = vld [vmem:[%s3 + $0x218] sm:$0xff]
  %v1478 = vld [vmem:[%s3 + $0x220] sm:$0xff]
  %v1479 = vld [vmem:[%s3 + $0x228] sm:$0xff]
  %v1480 = vld [vmem:[%s3 + $0x230] sm:$0xff]
  %v1481 = vld [vmem:[%s3 + $0x238] sm:$0xff]
  %v1482 = vld [vmem:[%s3 + $0x240] sm:$0xff]
  %v1483 = vld [vmem:[%s3 + $0x248] sm:$0xff]
  %v1484 = vld [vmem:[%s3 + $0x250] sm:$0xff]
  %v1485 = vld [vmem:[%s3 + $0x258] sm:$0xff]
  %v1486 = vld [vmem:[%s3 + $0x260] sm:$0xff]
  %v1487 = vld [vmem:[%s3 + $0x268] sm:$0xff]
  %v1488 = vld [vmem:[%s3 + $0x270] sm:$0xff]
  %v1489 = vld [vmem:[%s3 + $0x278] sm:$0xff]
  %v1490 = vld [vmem:[%s3 + $0x280] sm:$0xff]
  %v1491 = vld [vmem:[%s3 + $0x288] sm:$0xff]
  %v1492 = vld [vmem:[%s3 + $0x290] sm:$0xff]
  %v1493 = vld [vmem:[%s3 + $0x298] sm:$0xff]
  %v1494 = vld [vmem:[%s3 + $0x2a0] sm:$0xff]
  %v1495 = vld [vmem:[%s3 + $0x2a8] sm:$0xff]
  %v1496 = vld [vmem:[%s3 + $0x2b0] sm:$0xff]
  %v1497 = vld [vmem:[%s3 + $0x2b8] sm:$0xff]
  %v1498 = vld [vmem:[%s3 + $0x2c0] sm:$0xff]
  %v1499 = vld [vmem:[%s3 + $0x2c8] sm:$0xff]
  %v1500 = vld [vmem:[%s3 + $0x2d0] sm:$0xff]
  %v1501 = vld [vmem:[%s3 + $0x2d8] sm:$0xff]
  %v1502 = vld [vmem:[%s3 + $0x2e0] sm:$0xff]
  %v1503 = vld [vmem:[%s3 + $0x2e8] sm:$0xff]
  %v1504 = vld [vmem:[%s3 + $0x2f0] sm:$0xff]
  %v1505 = vld [vmem:[%s3 + $0x2f8] sm:$0xff]
  %v1506 = vld [vmem:[%s3 + $0x300] sm:$0xff]
  %v1507 = vld [vmem:[%s3 + $0x308] sm:$0xff]
  %v1508 = vld [vmem:[%s3 + $0x310] sm:$0xff]
  %v1509 = vld [vmem:[%s3 + $0x318] sm:$0xff]
  %v1510 = vld [vmem:[%s3 + $0x320] sm:$0xff]
  %v1511 = vld [vmem:[%s3 + $0x328] sm:$0xff]
  %v1512 = vld [vmem:[%s3 + $0x330] sm:$0xff]
  %v1513 = vld [vmem:[%s3 + $0x338] sm:$0xff]
  %v1514 = vld [vmem:[%s3 + $0x340] sm:$0xff]
  %v1515 = vld [vmem:[%s3 + $0x348] sm:$0xff]
  %v1516 = vld [vmem:[%s3 + $0x350] sm:$0xff]
  %v1517 = vld [vmem:[%s3 + $0x358] sm:$0xff]
  %v1518 = vld [vmem:[%s3 + $0x360] sm:$0xff]
  %v1519 = vld [vmem:[%s3 + $0x368] sm:$0xff]
  %v1520 = vld [vmem:[%s3 + $0x370] sm:$0xff]
  %v1521 = vld [vmem:[%s3 + $0x378] sm:$0xff]
  %v1522 = vld [vmem:[%s3 + $0x380] sm:$0xff]
  %v1523 = vld [vmem:[%s3 + $0x388] sm:$0xff]
  %v1524 = vld [vmem:[%s3 + $0x390] sm:$0xff]
  %v1525 = vld [vmem:[%s3 + $0x398] sm:$0xff]
  %v1526 = vld [vmem:[%s3 + $0x3a0] sm:$0xff]
  %v1527 = vld [vmem:[%s3 + $0x3a8] sm:$0xff]
  %v1528 = vld [vmem:[%s3 + $0x3b0] sm:$0xff]
  %v1529 = vld [vmem:[%s3 + $0x3b8] sm:$0xff]
  %v1530 = vld [vmem:[%s3 + $0x3c0] sm:$0xff]
  %v1531 = vld [vmem:[%s3 + $0x3c8] sm:$0xff]
  %v1532 = vld [vmem:[%s3 + $0x3d0] sm:$0xff]
  %v1533 = vld [vmem:[%s3 + $0x3d8] sm:$0xff]
  %v1534 = vld [vmem:[%s3 + $0x3e0] sm:$0xff]
  %v1535 = vld [vmem:[%s3 + $0x3e8] sm:$0xff]
  %v1536 = vld [vmem:[%s3 + $0x3f0] sm:$0xff]
  %v1537 = vld [vmem:[%s3 + $0x3f8] sm:$0xff]
  %v1538 = vld [vmem:[%s3 + $0x400] sm:$0xff]
  %v1539 = vld [vmem:[%s3 + $0x408] sm:$0xff]
  %v1540 = vld [vmem:[%s3 + $0x410] sm:$0xff]
  %v1541 = vld [vmem:[%s3 + $0x418] sm:$0xff]
  %v1542 = vld [vmem:[%s3 + $0x420] sm:$0xff]
  %v1543 = vld [vmem:[%s3 + $0x428] sm:$0xff]
  %v1544 = vld [vmem:[%s3 + $0x430] sm:$0xff]
  %v1545 = vld [vmem:[%s3 + $0x438] sm:$0xff]
  %v1546 = vld [vmem:[%s3 + $0x440] sm:$0xff]
  %v1547 = vld [vmem:[%s3 + $0x448] sm:$0xff]
  %v1548 = vld [vmem:[%s3 + $0x450] sm:$0xff]
  %v1549 = vld [vmem:[%s3 + $0x458] sm:$0xff]
  %v1550 = vld [vmem:[%s3 + $0x460] sm:$0xff]
  %v1551 = vld [vmem:[%s3 + $0x468] sm:$0xff]
  %v1552 = vld [vmem:[%s3 + $0x470] sm:$0xff]
  %v1553 = vld [vmem:[%s3 + $0x478] sm:$0xff]
  %v1554 = vld [vmem:[%s3 + $0x480] sm:$0xff]
  %v1555 = vld [vmem:[%s3 + $0x488] sm:$0xff]
  %v1556 = vld [vmem:[%s3 + $0x490] sm:$0xff]
  %v1557 = vld [vmem:[%s3 + $0x498] sm:$0xff]
  %v1558 = vld [vmem:[%s3 + $0x4a0] sm:$0xff]
  %v1559 = vld [vmem:[%s3 + $0x4a8] sm:$0xff]
  %v1560 = vld [vmem:[%s3 + $0x4b0] sm:$0xff]
  %v1561 = vld [vmem:[%s3 + $0x4b8] sm:$0xff]
  %v1562 = vld [vmem:[%s3 + $0x4c0] sm:$0xff]
  %v1563 = vld [vmem:[%s3 + $0x4c8] sm:$0xff]
  %v1564 = vld [vmem:[%s3 + $0x4d0] sm:$0xff]
  %v1565 = vld [vmem:[%s3 + $0x4d8] sm:$0xff]
  %v1566 = vld [vmem:[%s3 + $0x4e0] sm:$0xff]
  %v1567 = vld [vmem:[%s3 + $0x4e8] sm:$0xff]
  %v1568 = vld [vmem:[%s3 + $0x4f0] sm:$0xff]
  %v1569 = vld [vmem:[%s3 + $0x4f8] sm:$0xff]
  %v1570 = vld [vmem:[%s3 + $0x500] sm:$0xff]
  %v1571 = vld [vmem:[%s3 + $0x508] sm:$0xff]
  %v1572 = vld [vmem:[%s3 + $0x510] sm:$0xff]
  %v1573 = vld [vmem:[%s3 + $0x518] sm:$0xff]
  %v1574 = vld [vmem:[%s3 + $0x520] sm:$0xff]
  %v1575 = vld [vmem:[%s3 + $0x528] sm:$0xff]
  %v1576 = vld [vmem:[%s3 + $0x530] sm:$0xff]
  %v1577 = vld [vmem:[%s3 + $0x538] sm:$0xff]
  %v1578 = vld [vmem:[%s3 + $0x540] sm:$0xff]
  %v1579 = vld [vmem:[%s3 + $0x548] sm:$0xff]
  %v1580 = vld [vmem:[%s3 + $0x550] sm:$0xff]
  %v1581 = vld [vmem:[%s3 + $0x558] sm:$0xff]
  %v1582 = vld [vmem:[%s3 + $0x560] sm:$0xff]
  %v1583 = vld [vmem:[%s3 + $0x568] sm:$0xff]
  %v1584 = vld [vmem:[%s3 + $0x570] sm:$0xff]
  %v1585 = vld [vmem:[%s3 + $0x578] sm:$0xff]
  %v1586 = vld [vmem:[%s3 + $0x580] sm:$0xff]
  %v1587 = vld [vmem:[%s3 + $0x588] sm:$0xff]
  %v1588 = vld [vmem:[%s3 + $0x590] sm:$0xff]
  %v1589 = vld [vmem:[%s3 + $0x598] sm:$0xff]
  %v1590 = vld [vmem:[%s3 + $0x5a0] sm:$0xff]
  %v1591 = vld [vmem:[%s3 + $0x5a8] sm:$0xff]
  %v1592 = vld [vmem:[%s3 + $0x5b0] sm:$0xff]
  %v1593 = vld [vmem:[%s3 + $0x5b8] sm:$0xff]
  %v1594 = vld [vmem:[%s3 + $0x5c0] sm:$0xff]
  %v1595 = vld [vmem:[%s3 + $0x5c8] sm:$0xff]
  %v1596 = vld [vmem:[%s3 + $0x5d0] sm:$0xff]
  %v1597 = vld [vmem:[%s3 + $0x5d8] sm:$0xff]
  %v1598 = vld [vmem:[%s3 + $0x5e0] sm:$0xff]
  %v1599 = vld [vmem:[%s3 + $0x5e8] sm:$0xff]
  %v1600 = vld [vmem:[%s3 + $0x5f0] sm:$0xff]
  %v1601 = vld [vmem:[%s3 + $0x5f8] sm:$0xff]
  %v1602 = vld [vmem:[%s3 + $0x600] sm:$0xff]
  %v1603 = vld [vmem:[%s3 + $0x608] sm:$0xff]
  %v1604 = vld [vmem:[%s3 + $0x610] sm:$0xff]
  %v1605 = vld [vmem:[%s3 + $0x618] sm:$0xff]
  %v1606 = vld [vmem:[%s3 + $0x620] sm:$0xff]
  %v1607 = vld [vmem:[%s3 + $0x628] sm:$0xff]
  %v1608 = vld [vmem:[%s3 + $0x630] sm:$0xff]
  %v1609 = vld [vmem:[%s3 + $0x638] sm:$0xff]
  %v1610 = vld [vmem:[%s3 + $0x640] sm:$0xff]
  %v1611 = vld [vmem:[%s3 + $0x648] sm:$0xff]
  %v1612 = vld [vmem:[%s3 + $0x650] sm:$0xff]
  %v1613 = vld [vmem:[%s3 + $0x658] sm:$0xff]
  %v1614 = vld [vmem:[%s3 + $0x660] sm:$0xff]
  %v1615 = vld [vmem:[%s3 + $0x668] sm:$0xff]
  %v1616 = vld [vmem:[%s3 + $0x670] sm:$0xff]
  %v1617 = vld [vmem:[%s3 + $0x678] sm:$0xff]
  %v1618 = vld [vmem:[%s3 + $0x680] sm:$0xff]
  %v1619 = vld [vmem:[%s3 + $0x688] sm:$0xff]
  %v1620 = vld [vmem:[%s3 + $0x690] sm:$0xff]
  %v1621 = vld [vmem:[%s3 + $0x698] sm:$0xff]
  %v1622 = vld [vmem:[%s3 + $0x6a0] sm:$0xff]
  %v1623 = vld [vmem:[%s3 + $0x6a8] sm:$0xff]
  %v1624 = vld [vmem:[%s3 + $0x6b0] sm:$0xff]
  %v1625 = vld [vmem:[%s3 + $0x6b8] sm:$0xff]
  %v1626 = vld [vmem:[%s3 + $0x6c0] sm:$0xff]
  %v1627 = vld [vmem:[%s3 + $0x6c8] sm:$0xff]
  %v1628 = vld [vmem:[%s3 + $0x6d0] sm:$0xff]
  %v1629 = vld [vmem:[%s3 + $0x6d8] sm:$0xff]
  %v1630 = vld [vmem:[%s3 + $0x6e0] sm:$0xff]
  %v1631 = vld [vmem:[%s3 + $0x6e8] sm:$0xff]
  %v1632 = vld [vmem:[%s3 + $0x6f0] sm:$0xff]
  %v1633 = vld [vmem:[%s3 + $0x6f8] sm:$0xff]
  %v1634 = vld [vmem:[%s3 + $0x700] sm:$0xff]
  %v1635 = vld [vmem:[%s3 + $0x708] sm:$0xff]
  %v1636 = vld [vmem:[%s3 + $0x710] sm:$0xff]
  %v1637 = vld [vmem:[%s3 + $0x718] sm:$0xff]
  %v1638 = vld [vmem:[%s3 + $0x720] sm:$0x3]
  %v1639 = vld [vmem:[%s3 + $0x728] sm:$0x3]
  %v1640 = vld [vmem:[%s3 + $0x730] sm:$0x3]
  %vm1641 = vcmask 801792
  %v1643 = vsel %vm1641, %v1409, 0
  %vm1645 = vcmask 1041408
  %v1647 = vsel %vm1645, %v1638, 0
  %v1650 = vsel %vm1645, %v1639, 0
  %v1653 = vsel %vm1645, %v1640, 0
  %1655 = vmatpush.msra.mxu0 %v1455
  %1656 = vmatpush.msra.mxu0 %v1452
  %1657 = vmatpush.msra.mxu0 %v1449
  %1658 = vmatpush.msra.mxu0 %v1446
  %1659 = vmatpush.msra.mxu0 %v1443
  %1660 = vmatpush.msra.mxu0 %v1440
  %1661 = vmatpush.msra.mxu0 %v1437
  %1662 = vmatpush.msra.mxu0 %v1434
  %1663 = vmatpush.msra.mxu0 %v1431
  %1664 = vmatpush.msra.mxu0 %v1428
  %1665 = vmatpush.msra.mxu0 %v1425
  %1666 = vmatpush.msra.mxu0 %v1422
  %1667 = vmatpush.msra.mxu0 %v1419
  %1668 = vmatpush.msra.mxu0 %v1416
  %1669 = vmatpush.msra.mxu0 %v1413
  %1670 = vmatpush.msra.mxu0 %v1410
  %1671 = vmatmul.f32.gmra.mxu0 %v1405
  %v1672 = vpop.f32.mrf.mxu0
  %v1673 = vadd.f32 0.0, %v1672
  %1674 = vdwg.mxu0
  %1675 = vmatpush.msra.mxu0 %v1503
  %1676 = vmatpush.msra.mxu0 %v1500
  %1677 = vmatpush.msra.mxu0 %v1497
  %1678 = vmatpush.msra.mxu0 %v1494
  %1679 = vmatpush.msra.mxu0 %v1491
  %1680 = vmatpush.msra.mxu0 %v1488
  %1681 = vmatpush.msra.mxu0 %v1485
  %1682 = vmatpush.msra.mxu0 %v1482
  %1683 = vmatpush.msra.mxu0 %v1479
  %1684 = vmatpush.msra.mxu0 %v1476
  %1685 = vmatpush.msra.mxu0 %v1473
  %1686 = vmatpush.msra.mxu0 %v1470
  %1687 = vmatpush.msra.mxu0 %v1467
  %1688 = vmatpush.msra.mxu0 %v1464
  %1689 = vmatpush.msra.mxu0 %v1461
  %1690 = vmatpush.msra.mxu0 %v1458
  %1691 = vmatmul.f32.gmra.mxu0 %v1406
  %v1692 = vpop.f32.mrf.mxu0
  %v1693 = vadd.f32 %v1673, %v1692
  %1694 = vdwg.mxu0
  %1695 = vmatpush.msra.mxu0 %v1551
  %1696 = vmatpush.msra.mxu0 %v1548
  %1697 = vmatpush.msra.mxu0 %v1545
  %1698 = vmatpush.msra.mxu0 %v1542
  %1699 = vmatpush.msra.mxu0 %v1539
  %1700 = vmatpush.msra.mxu0 %v1536
  %1701 = vmatpush.msra.mxu0 %v1533
  %1702 = vmatpush.msra.mxu0 %v1530
  %1703 = vmatpush.msra.mxu0 %v1527
  %1704 = vmatpush.msra.mxu0 %v1524
  %1705 = vmatpush.msra.mxu0 %v1521
  %1706 = vmatpush.msra.mxu0 %v1518
  %1707 = vmatpush.msra.mxu0 %v1515
  %1708 = vmatpush.msra.mxu0 %v1512
  %1709 = vmatpush.msra.mxu0 %v1509
  %1710 = vmatpush.msra.mxu0 %v1506
  %1711 = vmatmul.f32.gmra.mxu0 %v1407
  %v1712 = vpop.f32.mrf.mxu0
  %v1713 = vadd.f32 %v1693, %v1712
  %1714 = vdwg.mxu0
  %1715 = vmatpush.msra.mxu0 %v1599
  %1716 = vmatpush.msra.mxu0 %v1596
  %1717 = vmatpush.msra.mxu0 %v1593
  %1718 = vmatpush.msra.mxu0 %v1590
  %1719 = vmatpush.msra.mxu0 %v1587
  %1720 = vmatpush.msra.mxu0 %v1584
  %1721 = vmatpush.msra.mxu0 %v1581
  %1722 = vmatpush.msra.mxu0 %v1578
  %1723 = vmatpush.msra.mxu0 %v1575
  %1724 = vmatpush.msra.mxu0 %v1572
  %1725 = vmatpush.msra.mxu0 %v1569
  %1726 = vmatpush.msra.mxu0 %v1566
  %1727 = vmatpush.msra.mxu0 %v1563
  %1728 = vmatpush.msra.mxu0 %v1560
  %1729 = vmatpush.msra.mxu0 %v1557
  %1730 = vmatpush.msra.mxu0 %v1554
  %1731 = vmatmul.f32.gmra.mxu0 %v1408
  %v1732 = vpop.f32.mrf.mxu0
  %v1733 = vadd.f32 %v1713, %v1732
  %1734 = vdwg.mxu0
  %1735 = vmatpush.msra.mxu0 0.0
  %1736 = vmatpush.msra.mxu0 0.0
  %1737 = vmatpush.msra.mxu0 0.0
  %1738 = vmatpush.msra.mxu0 %v1647
  %1739 = vmatpush.msra.mxu0 %v1635
  %1740 = vmatpush.msra.mxu0 %v1632
  %1741 = vmatpush.msra.mxu0 %v1629
  %1742 = vmatpush.msra.mxu0 %v1626
  %1743 = vmatpush.msra.mxu0 %v1623
  %1744 = vmatpush.msra.mxu0 %v1620
  %1745 = vmatpush.msra.mxu0 %v1617
  %1746 = vmatpush.msra.mxu0 %v1614
  %1747 = vmatpush.msra.mxu0 %v1611
  %1748 = vmatpush.msra.mxu0 %v1608
  %1749 = vmatpush.msra.mxu0 %v1605
  %1750 = vmatpush.msra.mxu0 %v1602
  %1751 = vmatmul.f32.gmra.mxu0 %v1643
  %v1752 = vpop.f32.mrf.mxu0
  %v1753 = vadd.f32 %v1733, %v1752
  %1754 = vdwg.mxu0
  %1755 = vmatpush.msra.mxu0 %v1456
  %1756 = vmatpush.msra.mxu0 %v1453
  %1757 = vmatpush.msra.mxu0 %v1450
  %1758 = vmatpush.msra.mxu0 %v1447
  %1759 = vmatpush.msra.mxu0 %v1444
  %1760 = vmatpush.msra.mxu0 %v1441
  %1761 = vmatpush.msra.mxu0 %v1438
  %1762 = vmatpush.msra.mxu0 %v1435
  %1763 = vmatpush.msra.mxu0 %v1432
  %1764 = vmatpush.msra.mxu0 %v1429
  %1765 = vmatpush.msra.mxu0 %v1426
  %1766 = vmatpush.msra.mxu0 %v1423
  %1767 = vmatpush.msra.mxu0 %v1420
  %1768 = vmatpush.msra.mxu0 %v1417
  %1769 = vmatpush.msra.mxu0 %v1414
  %1770 = vmatpush.msra.mxu0 %v1411
  %1771 = vmatmul.f32.gmra.mxu0 %v1405
  %v1772 = vpop.f32.mrf.mxu0
  %v1773 = vadd.f32 0.0, %v1772
  %1774 = vdwg.mxu0
  %1775 = vmatpush.msra.mxu0 %v1504
  %1776 = vmatpush.msra.mxu0 %v1501
  %1777 = vmatpush.msra.mxu0 %v1498
  %1778 = vmatpush.msra.mxu0 %v1495
  %1779 = vmatpush.msra.mxu0 %v1492
  %1780 = vmatpush.msra.mxu0 %v1489
  %1781 = vmatpush.msra.mxu0 %v1486
  %1782 = vmatpush.msra.mxu0 %v1483
  %1783 = vmatpush.msra.mxu0 %v1480
  %1784 = vmatpush.msra.mxu0 %v1477
  %1785 = vmatpush.msra.mxu0 %v1474
  %1786 = vmatpush.msra.mxu0 %v1471
  %1787 = vmatpush.msra.mxu0 %v1468
  %1788 = vmatpush.msra.mxu0 %v1465
  %1789 = vmatpush.msra.mxu0 %v1462
  %1790 = vmatpush.msra.mxu0 %v1459
  %1791 = vmatmul.f32.gmra.mxu0 %v1406
  %v1792 = vpop.f32.mrf.mxu0
  %v1793 = vadd.f32 %v1773, %v1792
  %1794 = vdwg.mxu0
  %1795 = vmatpush.msra.mxu0 %v1552
  %1796 = vmatpush.msra.mxu0 %v1549
  %1797 = vmatpush.msra.mxu0 %v1546
  %1798 = vmatpush.msra.mxu0 %v1543
  %1799 = vmatpush.msra.mxu0 %v1540
  %1800 = vmatpush.msra.mxu0 %v1537
  %1801 = vmatpush.msra.mxu0 %v1534
  %1802 = vmatpush.msra.mxu0 %v1531
  %1803 = vmatpush.msra.mxu0 %v1528
  %1804 = vmatpush.msra.mxu0 %v1525
  %1805 = vmatpush.msra.mxu0 %v1522
  %1806 = vmatpush.msra.mxu0 %v1519
  %1807 = vmatpush.msra.mxu0 %v1516
  %1808 = vmatpush.msra.mxu0 %v1513
  %1809 = vmatpush.msra.mxu0 %v1510
  %1810 = vmatpush.msra.mxu0 %v1507
  %1811 = vmatmul.f32.gmra.mxu0 %v1407
  %v1812 = vpop.f32.mrf.mxu0
  %v1813 = vadd.f32 %v1793, %v1812
  %1814 = vdwg.mxu0
  %1815 = vmatpush.msra.mxu0 %v1600
  %1816 = vmatpush.msra.mxu0 %v1597
  %1817 = vmatpush.msra.mxu0 %v1594
  %1818 = vmatpush.msra.mxu0 %v1591
  %1819 = vmatpush.msra.mxu0 %v1588
  %1820 = vmatpush.msra.mxu0 %v1585
  %1821 = vmatpush.msra.mxu0 %v1582
  %1822 = vmatpush.msra.mxu0 %v1579
  %1823 = vmatpush.msra.mxu0 %v1576
  %1824 = vmatpush.msra.mxu0 %v1573
  %1825 = vmatpush.msra.mxu0 %v1570
  %1826 = vmatpush.msra.mxu0 %v1567
  %1827 = vmatpush.msra.mxu0 %v1564
  %1828 = vmatpush.msra.mxu0 %v1561
  %1829 = vmatpush.msra.mxu0 %v1558
  %1830 = vmatpush.msra.mxu0 %v1555
  %1831 = vmatmul.f32.gmra.mxu0 %v1408
  %v1832 = vpop.f32.mrf.mxu0
  %v1833 = vadd.f32 %v1813, %v1832
  %1834 = vdwg.mxu0
  %1835 = vmatpush.msra.mxu0 0.0
  %1836 = vmatpush.msra.mxu0 0.0
  %1837 = vmatpush.msra.mxu0 0.0
  %1838 = vmatpush.msra.mxu0 %v1650
  %1839 = vmatpush.msra.mxu0 %v1636
  %1840 = vmatpush.msra.mxu0 %v1633
  %1841 = vmatpush.msra.mxu0 %v1630
  %1842 = vmatpush.msra.mxu0 %v1627
  %1843 = vmatpush.msra.mxu0 %v1624
  %1844 = vmatpush.msra.mxu0 %v1621
  %1845 = vmatpush.msra.mxu0 %v1618
  %1846 = vmatpush.msra.mxu0 %v1615
  %1847 = vmatpush.msra.mxu0 %v1612
  %1848 = vmatpush.msra.mxu0 %v1609
  %1849 = vmatpush.msra.mxu0 %v1606
  %1850 = vmatpush.msra.mxu0 %v1603
  %1851 = vmatmul.f32.gmra.mxu0 %v1643
  %v1852 = vpop.f32.mrf.mxu0
  %v1853 = vadd.f32 %v1833, %v1852
  %1854 = vdwg.mxu0
  %1855 = vmatpush.msra.mxu0 %v1457
  %1856 = vmatpush.msra.mxu0 %v1454
  %1857 = vmatpush.msra.mxu0 %v1451
  %1858 = vmatpush.msra.mxu0 %v1448
  %1859 = vmatpush.msra.mxu0 %v1445
  %1860 = vmatpush.msra.mxu0 %v1442
  %1861 = vmatpush.msra.mxu0 %v1439
  %1862 = vmatpush.msra.mxu0 %v1436
  %1863 = vmatpush.msra.mxu0 %v1433
  %1864 = vmatpush.msra.mxu0 %v1430
  %1865 = vmatpush.msra.mxu0 %v1427
  %1866 = vmatpush.msra.mxu0 %v1424
  %1867 = vmatpush.msra.mxu0 %v1421
  %1868 = vmatpush.msra.mxu0 %v1418
  %1869 = vmatpush.msra.mxu0 %v1415
  %1870 = vmatpush.msra.mxu0 %v1412
  %1871 = vmatmul.f32.gmra.mxu0 %v1405
  %v1872 = vpop.f32.mrf.mxu0
  %v1873 = vadd.f32 0.0, %v1872
  %1874 = vdwg.mxu0
  %1875 = vmatpush.msra.mxu0 %v1505
  %1876 = vmatpush.msra.mxu0 %v1502
  %1877 = vmatpush.msra.mxu0 %v1499
  %1878 = vmatpush.msra.mxu0 %v1496
  %1879 = vmatpush.msra.mxu0 %v1493
  %1880 = vmatpush.msra.mxu0 %v1490
  %1881 = vmatpush.msra.mxu0 %v1487
  %1882 = vmatpush.msra.mxu0 %v1484
  %1883 = vmatpush.msra.mxu0 %v1481
  %1884 = vmatpush.msra.mxu0 %v1478
  %1885 = vmatpush.msra.mxu0 %v1475
  %1886 = vmatpush.msra.mxu0 %v1472
  %1887 = vmatpush.msra.mxu0 %v1469
  %1888 = vmatpush.msra.mxu0 %v1466
  %1889 = vmatpush.msra.mxu0 %v1463
  %1890 = vmatpush.msra.mxu0 %v1460
  %1891 = vmatmul.f32.gmra.mxu0 %v1406
  %v1892 = vpop.f32.mrf.mxu0
  %v1893 = vadd.f32 %v1873, %v1892
  %1894 = vdwg.mxu0
  %1895 = vmatpush.msra.mxu0 %v1553
  %1896 = vmatpush.msra.mxu0 %v1550
  %1897 = vmatpush.msra.mxu0 %v1547
  %1898 = vmatpush.msra.mxu0 %v1544
  %1899 = vmatpush.msra.mxu0 %v1541
  %1900 = vmatpush.msra.mxu0 %v1538
  %1901 = vmatpush.msra.mxu0 %v1535
  %1902 = vmatpush.msra.mxu0 %v1532
  %1903 = vmatpush.msra.mxu0 %v1529
  %1904 = vmatpush.msra.mxu0 %v1526
  %1905 = vmatpush.msra.mxu0 %v1523
  %1906 = vmatpush.msra.mxu0 %v1520
  %1907 = vmatpush.msra.mxu0 %v1517
  %1908 = vmatpush.msra.mxu0 %v1514
  %1909 = vmatpush.msra.mxu0 %v1511
  %1910 = vmatpush.msra.mxu0 %v1508
  %1911 = vmatmul.f32.gmra.mxu0 %v1407
  %v1912 = vpop.f32.mrf.mxu0
  %v1913 = vadd.f32 %v1893, %v1912
  %1914 = vdwg.mxu0
  %1915 = vmatpush.msra.mxu0 %v1601
  %1916 = vmatpush.msra.mxu0 %v1598
  %1917 = vmatpush.msra.mxu0 %v1595
  %1918 = vmatpush.msra.mxu0 %v1592
  %1919 = vmatpush.msra.mxu0 %v1589
  %1920 = vmatpush.msra.mxu0 %v1586
  %1921 = vmatpush.msra.mxu0 %v1583
  %1922 = vmatpush.msra.mxu0 %v1580
  %1923 = vmatpush.msra.mxu0 %v1577
  %1924 = vmatpush.msra.mxu0 %v1574
  %1925 = vmatpush.msra.mxu0 %v1571
  %1926 = vmatpush.msra.mxu0 %v1568
  %1927 = vmatpush.msra.mxu0 %v1565
  %1928 = vmatpush.msra.mxu0 %v1562
  %1929 = vmatpush.msra.mxu0 %v1559
  %1930 = vmatpush.msra.mxu0 %v1556
  %1931 = vmatmul.f32.gmra.mxu0 %v1408
  %v1932 = vpop.f32.mrf.mxu0
  %v1933 = vadd.f32 %v1913, %v1932
  %1934 = vdwg.mxu0
  %1935 = vmatpush.msra.mxu0 0.0
  %1936 = vmatpush.msra.mxu0 0.0
  %1937 = vmatpush.msra.mxu0 0.0
  %1938 = vmatpush.msra.mxu0 %v1653
  %1939 = vmatpush.msra.mxu0 %v1637
  %1940 = vmatpush.msra.mxu0 %v1634
  %1941 = vmatpush.msra.mxu0 %v1631
  %1942 = vmatpush.msra.mxu0 %v1628
  %1943 = vmatpush.msra.mxu0 %v1625
  %1944 = vmatpush.msra.mxu0 %v1622
  %1945 = vmatpush.msra.mxu0 %v1619
  %1946 = vmatpush.msra.mxu0 %v1616
  %1947 = vmatpush.msra.mxu0 %v1613
  %1948 = vmatpush.msra.mxu0 %v1610
  %1949 = vmatpush.msra.mxu0 %v1607
  %1950 = vmatpush.msra.mxu0 %v1604
  %1951 = vmatmul.f32.gmra.mxu0 %v1643
  %v1952 = vpop.f32.mrf.mxu0
  %v1953 = vadd.f32 %v1933, %v1952
  %1954 = vdwg.mxu0
  %v1955 = vld [vmem:[%s4] sm:$0xff]
  %1957 = vrot.lane.b32.xlu0 %v1955, 124
  %v1958 = vpop.permute.xlu0 %1957
  %1961 = vrot.lane.b32.xlu0 %v1753, 127
  %v1962 = vpop.permute.xlu0 %1961
  %1963 = vrot.lane.b32.xlu0 %v1853, 127
  %v1964 = vpop.permute.xlu0 %1963
  %v1965 = vsel %vm119, %v1962, %v1964
  %v1966 = vsel %vm124, %v1958, 0
  %v1968 = vsel %vm127, %v1965, 0
  %v1970 = vsel %vm127, %v1964, 0
  %1972 = vmatpush.msra.mxu0 0.0
  %1973 = vmatpush.msra.mxu0 0.0
  %1974 = vmatpush.msra.mxu0 0.0
  %1975 = vmatpush.msra.mxu0 0.0
  %1976 = vmatpush.msra.mxu0 0.0
  %1977 = vmatpush.msra.mxu0 0.0
  %1978 = vmatpush.msra.mxu0 0.0
  %1979 = vmatpush.msra.mxu0 0.0
  %1980 = vmatpush.msra.mxu0 0.0
  %1981 = vmatpush.msra.mxu0 0.0
  %1982 = vmatpush.msra.mxu0 0.0
  %1983 = vmatpush.msra.mxu0 0.0
  %1984 = vmatpush.msra.mxu0 0.0
  %1985 = vmatpush.msra.mxu0 0.0
  %1986 = vmatpush.msra.mxu0 0.0
  %1987 = vmatpush.msra.mxu0 %v1968
  %1988 = vmatmul.f32.gmra.mxu0 %v1966
  %v1989 = vpop.f32.mrf.mxu0
  %v1990 = vadd.f32 0.0, %v1989
  %1991 = vdwg.mxu0
  %1992 = vmatpush.msra.mxu0 0.0
  %1993 = vmatpush.msra.mxu0 0.0
  %1994 = vmatpush.msra.mxu0 0.0
  %1995 = vmatpush.msra.mxu0 0.0
  %1996 = vmatpush.msra.mxu0 0.0
  %1997 = vmatpush.msra.mxu0 0.0
  %1998 = vmatpush.msra.mxu0 0.0
  %1999 = vmatpush.msra.mxu0 0.0
  %2000 = vmatpush.msra.mxu0 0.0
  %2001 = vmatpush.msra.mxu0 0.0
  %2002 = vmatpush.msra.mxu0 0.0
  %2003 = vmatpush.msra.mxu0 0.0
  %2004 = vmatpush.msra.mxu0 0.0
  %2005 = vmatpush.msra.mxu0 0.0
  %2006 = vmatpush.msra.mxu0 0.0
  %2007 = vmatpush.msra.mxu0 %v1970
  %2008 = vmatmul.f32.gmra.mxu0 %v1966
  %v2009 = vpop.f32.mrf.mxu0
  %v2010 = vadd.f32 0.0, %v2009
  %2011 = vdwg.mxu0
  %v2012 = vsel %vm124, %v1955, 0
  %v2014 = vsel %vm127, %v1753, 0
  %v2016 = vsel %vm127, %v1853, 0
  %2018 = vmatpush.msra.mxu0 0.0
  %2019 = vmatpush.msra.mxu0 0.0
  %2020 = vmatpush.msra.mxu0 0.0
  %2021 = vmatpush.msra.mxu0 0.0
  %2022 = vmatpush.msra.mxu0 0.0
  %2023 = vmatpush.msra.mxu0 0.0
  %2024 = vmatpush.msra.mxu0 0.0
  %2025 = vmatpush.msra.mxu0 0.0
  %2026 = vmatpush.msra.mxu0 0.0
  %2027 = vmatpush.msra.mxu0 0.0
  %2028 = vmatpush.msra.mxu0 0.0
  %2029 = vmatpush.msra.mxu0 0.0
  %2030 = vmatpush.msra.mxu0 0.0
  %2031 = vmatpush.msra.mxu0 0.0
  %2032 = vmatpush.msra.mxu0 0.0
  %2033 = vmatpush.msra.mxu0 %v2014
  %2034 = vmatmul.f32.gmra.mxu0 %v2012
  %v2035 = vpop.f32.mrf.mxu0
  %v2036 = vadd.f32 %v1990, %v2035
  %2037 = vdwg.mxu0
  %2038 = vmatpush.msra.mxu0 0.0
  %2039 = vmatpush.msra.mxu0 0.0
  %2040 = vmatpush.msra.mxu0 0.0
  %2041 = vmatpush.msra.mxu0 0.0
  %2042 = vmatpush.msra.mxu0 0.0
  %2043 = vmatpush.msra.mxu0 0.0
  %2044 = vmatpush.msra.mxu0 0.0
  %2045 = vmatpush.msra.mxu0 0.0
  %2046 = vmatpush.msra.mxu0 0.0
  %2047 = vmatpush.msra.mxu0 0.0
  %2048 = vmatpush.msra.mxu0 0.0
  %2049 = vmatpush.msra.mxu0 0.0
  %2050 = vmatpush.msra.mxu0 0.0
  %2051 = vmatpush.msra.mxu0 0.0
  %2052 = vmatpush.msra.mxu0 0.0
  %2053 = vmatpush.msra.mxu0 %v2016
  %2054 = vmatmul.f32.gmra.mxu0 %v2012
  %v2055 = vpop.f32.mrf.mxu0
  %v2056 = vadd.f32 %v2010, %v2055
  %2057 = vdwg.mxu0
  %2058 = vrot.lane.b32.xlu0 %v1955, 120
  %v2059 = vpop.permute.xlu0 %2058
  %2060 = vrot.lane.b32.xlu0 %v1753, 126
  %v2061 = vpop.permute.xlu0 %2060
  %2062 = vrot.lane.b32.xlu0 %v1853, 126
  %v2063 = vpop.permute.xlu0 %2062
  %v2064 = vsel %vm384, %v2061, %v2063
  %v2065 = vsel %vm124, %v2059, 0
  %v2067 = vsel %vm127, %v2064, 0
  %v2069 = vsel %vm127, %v2063, 0
  %2071 = vmatpush.msra.mxu0 0.0
  %2072 = vmatpush.msra.mxu0 0.0
  %2073 = vmatpush.msra.mxu0 0.0
  %2074 = vmatpush.msra.mxu0 0.0
  %2075 = vmatpush.msra.mxu0 0.0
  %2076 = vmatpush.msra.mxu0 0.0
  %2077 = vmatpush.msra.mxu0 0.0
  %2078 = vmatpush.msra.mxu0 0.0
  %2079 = vmatpush.msra.mxu0 0.0
  %2080 = vmatpush.msra.mxu0 0.0
  %2081 = vmatpush.msra.mxu0 0.0
  %2082 = vmatpush.msra.mxu0 0.0
  %2083 = vmatpush.msra.mxu0 0.0
  %2084 = vmatpush.msra.mxu0 0.0
  %2085 = vmatpush.msra.mxu0 0.0
  %2086 = vmatpush.msra.mxu0 %v2067
  %2087 = vmatmul.f32.gmra.mxu0 %v2065
  %v2088 = vpop.f32.mrf.mxu0
  %v2089 = vadd.f32 0.0, %v2088
  %2090 = vdwg.mxu0
  %2091 = vmatpush.msra.mxu0 0.0
  %2092 = vmatpush.msra.mxu0 0.0
  %2093 = vmatpush.msra.mxu0 0.0
  %2094 = vmatpush.msra.mxu0 0.0
  %2095 = vmatpush.msra.mxu0 0.0
  %2096 = vmatpush.msra.mxu0 0.0
  %2097 = vmatpush.msra.mxu0 0.0
  %2098 = vmatpush.msra.mxu0 0.0
  %2099 = vmatpush.msra.mxu0 0.0
  %2100 = vmatpush.msra.mxu0 0.0
  %2101 = vmatpush.msra.mxu0 0.0
  %2102 = vmatpush.msra.mxu0 0.0
  %2103 = vmatpush.msra.mxu0 0.0
  %2104 = vmatpush.msra.mxu0 0.0
  %2105 = vmatpush.msra.mxu0 0.0
  %2106 = vmatpush.msra.mxu0 %v2069
  %2107 = vmatmul.f32.gmra.mxu0 %v2065
  %v2108 = vpop.f32.mrf.mxu0
  %v2109 = vadd.f32 0.0, %v2108
  %2110 = vdwg.mxu0
  %v2111 = vadd.f32 %v2036, %v2089
  %v2112 = vadd.f32 %v2056, %v2109
  %2113 = vrot.lane.b32.xlu0 %v1955, 116
  %v2114 = vpop.permute.xlu0 %2113
  %2115 = vrot.lane.b32.xlu0 %v1753, 125
  %v2116 = vpop.permute.xlu0 %2115
  %2117 = vrot.lane.b32.xlu0 %v1853, 125
  %v2118 = vpop.permute.xlu0 %2117
  %vm2119 = vcmask 1022976
  %v2120 = vsel %vm2119, %v2116, %v2118
  %v2121 = vsel %vm124, %v2114, 0
  %v2123 = vsel %vm127, %v2120, 0
  %v2125 = vsel %vm127, %v2118, 0
  %2127 = vmatpush.msra.mxu0 0.0
  %2128 = vmatpush.msra.mxu0 0.0
  %2129 = vmatpush.msra.mxu0 0.0
  %2130 = vmatpush.msra.mxu0 0.0
  %2131 = vmatpush.msra.mxu0 0.0
  %2132 = vmatpush.msra.mxu0 0.0
  %2133 = vmatpush.msra.mxu0 0.0
  %2134 = vmatpush.msra.mxu0 0.0
  %2135 = vmatpush.msra.mxu0 0.0
  %2136 = vmatpush.msra.mxu0 0.0
  %2137 = vmatpush.msra.mxu0 0.0
  %2138 = vmatpush.msra.mxu0 0.0
  %2139 = vmatpush.msra.mxu0 0.0
  %2140 = vmatpush.msra.mxu0 0.0
  %2141 = vmatpush.msra.mxu0 0.0
  %2142 = vmatpush.msra.mxu0 %v2123
  %2143 = vmatmul.f32.gmra.mxu0 %v2121
  %v2144 = vpop.f32.mrf.mxu0
  %v2145 = vadd.f32 0.0, %v2144
  %2146 = vdwg.mxu0
  %2147 = vmatpush.msra.mxu0 0.0
  %2148 = vmatpush.msra.mxu0 0.0
  %2149 = vmatpush.msra.mxu0 0.0
  %2150 = vmatpush.msra.mxu0 0.0
  %2151 = vmatpush.msra.mxu0 0.0
  %2152 = vmatpush.msra.mxu0 0.0
  %2153 = vmatpush.msra.mxu0 0.0
  %2154 = vmatpush.msra.mxu0 0.0
  %2155 = vmatpush.msra.mxu0 0.0
  %2156 = vmatpush.msra.mxu0 0.0
  %2157 = vmatpush.msra.mxu0 0.0
  %2158 = vmatpush.msra.mxu0 0.0
  %2159 = vmatpush.msra.mxu0 0.0
  %2160 = vmatpush.msra.mxu0 0.0
  %2161 = vmatpush.msra.mxu0 0.0
  %2162 = vmatpush.msra.mxu0 %v2125
  %2163 = vmatmul.f32.gmra.mxu0 %v2121
  %v2164 = vpop.f32.mrf.mxu0
  %v2165 = vadd.f32 0.0, %v2164
  %2166 = vdwg.mxu0
  %v2167 = vadd.f32 %v2111, %v2145
  %v2168 = vadd.f32 %v2112, %v2165
  %2169 = vrot.lane.b32.xlu0 %v1955, 112
  %v2170 = vpop.permute.xlu0 %2169
  %2171 = vrot.lane.b32.xlu0 %v1753, 124
  %v2172 = vpop.permute.xlu0 %2171
  %2173 = vrot.lane.b32.xlu0 %v1853, 124
  %v2174 = vpop.permute.xlu0 %2173
  %vm2175 = vcmask 1014784
  %v2176 = vsel %vm2175, %v2172, %v2174
  %v2177 = vsel %vm124, %v2170, 0
  %v2179 = vsel %vm127, %v2176, 0
  %v2181 = vsel %vm127, %v2174, 0
  %2183 = vmatpush.msra.mxu0 0.0
  %2184 = vmatpush.msra.mxu0 0.0
  %2185 = vmatpush.msra.mxu0 0.0
  %2186 = vmatpush.msra.mxu0 0.0
  %2187 = vmatpush.msra.mxu0 0.0
  %2188 = vmatpush.msra.mxu0 0.0
  %2189 = vmatpush.msra.mxu0 0.0
  %2190 = vmatpush.msra.mxu0 0.0
  %2191 = vmatpush.msra.mxu0 0.0
  %2192 = vmatpush.msra.mxu0 0.0
  %2193 = vmatpush.msra.mxu0 0.0
  %2194 = vmatpush.msra.mxu0 0.0
  %2195 = vmatpush.msra.mxu0 0.0
  %2196 = vmatpush.msra.mxu0 0.0
  %2197 = vmatpush.msra.mxu0 0.0
  %2198 = vmatpush.msra.mxu0 %v2179
  %2199 = vmatmul.f32.gmra.mxu0 %v2177
  %v2200 = vpop.f32.mrf.mxu0
  %v2201 = vadd.f32 0.0, %v2200
  %2202 = vdwg.mxu0
  %2203 = vmatpush.msra.mxu0 0.0
  %2204 = vmatpush.msra.mxu0 0.0
  %2205 = vmatpush.msra.mxu0 0.0
  %2206 = vmatpush.msra.mxu0 0.0
  %2207 = vmatpush.msra.mxu0 0.0
  %2208 = vmatpush.msra.mxu0 0.0
  %2209 = vmatpush.msra.mxu0 0.0
  %2210 = vmatpush.msra.mxu0 0.0
  %2211 = vmatpush.msra.mxu0 0.0
  %2212 = vmatpush.msra.mxu0 0.0
  %2213 = vmatpush.msra.mxu0 0.0
  %2214 = vmatpush.msra.mxu0 0.0
  %2215 = vmatpush.msra.mxu0 0.0
  %2216 = vmatpush.msra.mxu0 0.0
  %2217 = vmatpush.msra.mxu0 0.0
  %2218 = vmatpush.msra.mxu0 %v2181
  %2219 = vmatmul.f32.gmra.mxu0 %v2177
  %v2220 = vpop.f32.mrf.mxu0
  %v2221 = vadd.f32 0.0, %v2220
  %2222 = vdwg.mxu0
  %v2223 = vadd.f32 %v2167, %v2201
  %v2224 = vadd.f32 %v2168, %v2221
  %2225 = vrot.lane.b32.xlu0 %v1955, 108
  %v2226 = vpop.permute.xlu0 %2225
  %2227 = vrot.lane.b32.xlu0 %v1753, 116
  %v2228 = vpop.permute.xlu0 %2227
  %2229 = vrot.lane.b32.xlu0 %v1853, 116
  %v2230 = vpop.permute.xlu0 %2229
  %vm2231 = vcmask 949248
  %v2232 = vsel %vm2231, %v2228, %v2230
  %v2233 = vsel %vm124, %v2226, 0
  %v2235 = vsel %vm127, %v2232, 0
  %v2237 = vsel %vm127, %v2230, 0
  %2239 = vmatpush.msra.mxu0 0.0
  %2240 = vmatpush.msra.mxu0 0.0
  %2241 = vmatpush.msra.mxu0 0.0
  %2242 = vmatpush.msra.mxu0 0.0
  %2243 = vmatpush.msra.mxu0 0.0
  %2244 = vmatpush.msra.mxu0 0.0
  %2245 = vmatpush.msra.mxu0 0.0
  %2246 = vmatpush.msra.mxu0 0.0
  %2247 = vmatpush.msra.mxu0 0.0
  %2248 = vmatpush.msra.mxu0 0.0
  %2249 = vmatpush.msra.mxu0 0.0
  %2250 = vmatpush.msra.mxu0 0.0
  %2251 = vmatpush.msra.mxu0 0.0
  %2252 = vmatpush.msra.mxu0 0.0
  %2253 = vmatpush.msra.mxu0 0.0
  %2254 = vmatpush.msra.mxu0 %v2235
  %2255 = vmatmul.f32.gmra.mxu0 %v2233
  %v2256 = vpop.f32.mrf.mxu0
  %v2257 = vadd.f32 0.0, %v2256
  %2258 = vdwg.mxu0
  %2259 = vmatpush.msra.mxu0 0.0
  %2260 = vmatpush.msra.mxu0 0.0
  %2261 = vmatpush.msra.mxu0 0.0
  %2262 = vmatpush.msra.mxu0 0.0
  %2263 = vmatpush.msra.mxu0 0.0
  %2264 = vmatpush.msra.mxu0 0.0
  %2265 = vmatpush.msra.mxu0 0.0
  %2266 = vmatpush.msra.mxu0 0.0
  %2267 = vmatpush.msra.mxu0 0.0
  %2268 = vmatpush.msra.mxu0 0.0
  %2269 = vmatpush.msra.mxu0 0.0
  %2270 = vmatpush.msra.mxu0 0.0
  %2271 = vmatpush.msra.mxu0 0.0
  %2272 = vmatpush.msra.mxu0 0.0
  %2273 = vmatpush.msra.mxu0 0.0
  %2274 = vmatpush.msra.mxu0 %v2237
  %2275 = vmatmul.f32.gmra.mxu0 %v2233
  %v2276 = vpop.f32.mrf.mxu0
  %v2277 = vadd.f32 0.0, %v2276
  %2278 = vdwg.mxu0
  %v2279 = vadd.f32 %v2223, %v2257
  %v2280 = vadd.f32 %v2224, %v2277
  %2281 = vrot.lane.b32.xlu0 %v1955, 104
  %v2282 = vpop.permute.xlu0 %2281
  %2283 = vrot.lane.b32.xlu0 %v1753, 115
  %v2284 = vpop.permute.xlu0 %2283
  %2285 = vrot.lane.b32.xlu0 %v1853, 115
  %v2286 = vpop.permute.xlu0 %2285
  %vm2287 = vcmask 941056
  %v2288 = vsel %vm2287, %v2284, %v2286
  %v2289 = vsel %vm124, %v2282, 0
  %v2291 = vsel %vm127, %v2288, 0
  %v2293 = vsel %vm127, %v2286, 0
  %2295 = vmatpush.msra.mxu0 0.0
  %2296 = vmatpush.msra.mxu0 0.0
  %2297 = vmatpush.msra.mxu0 0.0
  %2298 = vmatpush.msra.mxu0 0.0
  %2299 = vmatpush.msra.mxu0 0.0
  %2300 = vmatpush.msra.mxu0 0.0
  %2301 = vmatpush.msra.mxu0 0.0
  %2302 = vmatpush.msra.mxu0 0.0
  %2303 = vmatpush.msra.mxu0 0.0
  %2304 = vmatpush.msra.mxu0 0.0
  %2305 = vmatpush.msra.mxu0 0.0
  %2306 = vmatpush.msra.mxu0 0.0
  %2307 = vmatpush.msra.mxu0 0.0
  %2308 = vmatpush.msra.mxu0 0.0
  %2309 = vmatpush.msra.mxu0 0.0
  %2310 = vmatpush.msra.mxu0 %v2291
  %2311 = vmatmul.f32.gmra.mxu0 %v2289
  %v2312 = vpop.f32.mrf.mxu0
  %v2313 = vadd.f32 0.0, %v2312
  %2314 = vdwg.mxu0
  %2315 = vmatpush.msra.mxu0 0.0
  %2316 = vmatpush.msra.mxu0 0.0
  %2317 = vmatpush.msra.mxu0 0.0
  %2318 = vmatpush.msra.mxu0 0.0
  %2319 = vmatpush.msra.mxu0 0.0
  %2320 = vmatpush.msra.mxu0 0.0
  %2321 = vmatpush.msra.mxu0 0.0
  %2322 = vmatpush.msra.mxu0 0.0
  %2323 = vmatpush.msra.mxu0 0.0
  %2324 = vmatpush.msra.mxu0 0.0
  %2325 = vmatpush.msra.mxu0 0.0
  %2326 = vmatpush.msra.mxu0 0.0
  %2327 = vmatpush.msra.mxu0 0.0
  %2328 = vmatpush.msra.mxu0 0.0
  %2329 = vmatpush.msra.mxu0 0.0
  %2330 = vmatpush.msra.mxu0 %v2293
  %2331 = vmatmul.f32.gmra.mxu0 %v2289
  %v2332 = vpop.f32.mrf.mxu0
  %v2333 = vadd.f32 0.0, %v2332
  %2334 = vdwg.mxu0
  %v2335 = vadd.f32 %v2279, %v2313
  %v2336 = vadd.f32 %v2280, %v2333
  %2337 = vrot.lane.b32.xlu0 %v1955, 100
  %v2338 = vpop.permute.xlu0 %2337
  %2339 = vrot.lane.b32.xlu0 %v1753, 114
  %v2340 = vpop.permute.xlu0 %2339
  %2341 = vrot.lane.b32.xlu0 %v1853, 114
  %v2342 = vpop.permute.xlu0 %2341
  %vm2343 = vcmask 932864
  %v2344 = vsel %vm2343, %v2340, %v2342
  %v2345 = vsel %vm124, %v2338, 0
  %v2347 = vsel %vm127, %v2344, 0
  %v2349 = vsel %vm127, %v2342, 0
  %2351 = vmatpush.msra.mxu0 0.0
  %2352 = vmatpush.msra.mxu0 0.0
  %2353 = vmatpush.msra.mxu0 0.0
  %2354 = vmatpush.msra.mxu0 0.0
  %2355 = vmatpush.msra.mxu0 0.0
  %2356 = vmatpush.msra.mxu0 0.0
  %2357 = vmatpush.msra.mxu0 0.0
  %2358 = vmatpush.msra.mxu0 0.0
  %2359 = vmatpush.msra.mxu0 0.0
  %2360 = vmatpush.msra.mxu0 0.0
  %2361 = vmatpush.msra.mxu0 0.0
  %2362 = vmatpush.msra.mxu0 0.0
  %2363 = vmatpush.msra.mxu0 0.0
  %2364 = vmatpush.msra.mxu0 0.0
  %2365 = vmatpush.msra.mxu0 0.0
  %2366 = vmatpush.msra.mxu0 %v2347
  %2367 = vmatmul.f32.gmra.mxu0 %v2345
  %v2368 = vpop.f32.mrf.mxu0
  %v2369 = vadd.f32 0.0, %v2368
  %2370 = vdwg.mxu0
  %2371 = vmatpush.msra.mxu0 0.0
  %2372 = vmatpush.msra.mxu0 0.0
  %2373 = vmatpush.msra.mxu0 0.0
  %2374 = vmatpush.msra.mxu0 0.0
  %2375 = vmatpush.msra.mxu0 0.0
  %2376 = vmatpush.msra.mxu0 0.0
  %2377 = vmatpush.msra.mxu0 0.0
  %2378 = vmatpush.msra.mxu0 0.0
  %2379 = vmatpush.msra.mxu0 0.0
  %2380 = vmatpush.msra.mxu0 0.0
  %2381 = vmatpush.msra.mxu0 0.0
  %2382 = vmatpush.msra.mxu0 0.0
  %2383 = vmatpush.msra.mxu0 0.0
  %2384 = vmatpush.msra.mxu0 0.0
  %2385 = vmatpush.msra.mxu0 0.0
  %2386 = vmatpush.msra.mxu0 %v2349
  %2387 = vmatmul.f32.gmra.mxu0 %v2345
  %v2388 = vpop.f32.mrf.mxu0
  %v2389 = vadd.f32 0.0, %v2388
  %2390 = vdwg.mxu0
  %v2391 = vadd.f32 %v2335, %v2369
  %v2392 = vadd.f32 %v2336, %v2389
  %2393 = vrot.lane.b32.xlu0 %v1955, 96
  %v2394 = vpop.permute.xlu0 %2393
  %2395 = vrot.lane.b32.xlu0 %v1753, 113
  %v2396 = vpop.permute.xlu0 %2395
  %2397 = vrot.lane.b32.xlu0 %v1853, 113
  %v2398 = vpop.permute.xlu0 %2397
  %vm2399 = vcmask 924672
  %v2400 = vsel %vm2399, %v2396, %v2398
  %v2401 = vsel %vm124, %v2394, 0
  %v2403 = vsel %vm127, %v2400, 0
  %v2405 = vsel %vm127, %v2398, 0
  %2407 = vmatpush.msra.mxu0 0.0
  %2408 = vmatpush.msra.mxu0 0.0
  %2409 = vmatpush.msra.mxu0 0.0
  %2410 = vmatpush.msra.mxu0 0.0
  %2411 = vmatpush.msra.mxu0 0.0
  %2412 = vmatpush.msra.mxu0 0.0
  %2413 = vmatpush.msra.mxu0 0.0
  %2414 = vmatpush.msra.mxu0 0.0
  %2415 = vmatpush.msra.mxu0 0.0
  %2416 = vmatpush.msra.mxu0 0.0
  %2417 = vmatpush.msra.mxu0 0.0
  %2418 = vmatpush.msra.mxu0 0.0
  %2419 = vmatpush.msra.mxu0 0.0
  %2420 = vmatpush.msra.mxu0 0.0
  %2421 = vmatpush.msra.mxu0 0.0
  %2422 = vmatpush.msra.mxu0 %v2403
  %2423 = vmatmul.f32.gmra.mxu0 %v2401
  %v2424 = vpop.f32.mrf.mxu0
  %v2425 = vadd.f32 0.0, %v2424
  %2426 = vdwg.mxu0
  %2427 = vmatpush.msra.mxu0 0.0
  %2428 = vmatpush.msra.mxu0 0.0
  %2429 = vmatpush.msra.mxu0 0.0
  %2430 = vmatpush.msra.mxu0 0.0
  %2431 = vmatpush.msra.mxu0 0.0
  %2432 = vmatpush.msra.mxu0 0.0
  %2433 = vmatpush.msra.mxu0 0.0
  %2434 = vmatpush.msra.mxu0 0.0
  %2435 = vmatpush.msra.mxu0 0.0
  %2436 = vmatpush.msra.mxu0 0.0
  %2437 = vmatpush.msra.mxu0 0.0
  %2438 = vmatpush.msra.mxu0 0.0
  %2439 = vmatpush.msra.mxu0 0.0
  %2440 = vmatpush.msra.mxu0 0.0
  %2441 = vmatpush.msra.mxu0 0.0
  %2442 = vmatpush.msra.mxu0 %v2405
  %2443 = vmatmul.f32.gmra.mxu0 %v2401
  %v2444 = vpop.f32.mrf.mxu0
  %v2445 = vadd.f32 0.0, %v2444
  %2446 = vdwg.mxu0
  %v2447 = vadd.f32 %v2391, %v2425
  %v2448 = vadd.f32 %v2392, %v2445
  %2449 = vrot.lane.b32.xlu0 %v1955, 92
  %v2450 = vpop.permute.xlu0 %2449
  %2451 = vrot.lane.b32.xlu0 %v1753, 112
  %v2452 = vpop.permute.xlu0 %2451
  %2453 = vrot.lane.b32.xlu0 %v1853, 112
  %v2454 = vpop.permute.xlu0 %2453
  %vm2455 = vcmask 916480
  %v2456 = vsel %vm2455, %v2452, %v2454
  %v2457 = vsel %vm124, %v2450, 0
  %v2459 = vsel %vm127, %v2456, 0
  %v2461 = vsel %vm127, %v2454, 0
  %2463 = vmatpush.msra.mxu0 0.0
  %2464 = vmatpush.msra.mxu0 0.0
  %2465 = vmatpush.msra.mxu0 0.0
  %2466 = vmatpush.msra.mxu0 0.0
  %2467 = vmatpush.msra.mxu0 0.0
  %2468 = vmatpush.msra.mxu0 0.0
  %2469 = vmatpush.msra.mxu0 0.0
  %2470 = vmatpush.msra.mxu0 0.0
  %2471 = vmatpush.msra.mxu0 0.0
  %2472 = vmatpush.msra.mxu0 0.0
  %2473 = vmatpush.msra.mxu0 0.0
  %2474 = vmatpush.msra.mxu0 0.0
  %2475 = vmatpush.msra.mxu0 0.0
  %2476 = vmatpush.msra.mxu0 0.0
  %2477 = vmatpush.msra.mxu0 0.0
  %2478 = vmatpush.msra.mxu0 %v2459
  %2479 = vmatmul.f32.gmra.mxu0 %v2457
  %v2480 = vpop.f32.mrf.mxu0
  %v2481 = vadd.f32 0.0, %v2480
  %2482 = vdwg.mxu0
  %2483 = vmatpush.msra.mxu0 0.0
  %2484 = vmatpush.msra.mxu0 0.0
  %2485 = vmatpush.msra.mxu0 0.0
  %2486 = vmatpush.msra.mxu0 0.0
  %2487 = vmatpush.msra.mxu0 0.0
  %2488 = vmatpush.msra.mxu0 0.0
  %2489 = vmatpush.msra.mxu0 0.0
  %2490 = vmatpush.msra.mxu0 0.0
  %2491 = vmatpush.msra.mxu0 0.0
  %2492 = vmatpush.msra.mxu0 0.0
  %2493 = vmatpush.msra.mxu0 0.0
  %2494 = vmatpush.msra.mxu0 0.0
  %2495 = vmatpush.msra.mxu0 0.0
  %2496 = vmatpush.msra.mxu0 0.0
  %2497 = vmatpush.msra.mxu0 0.0
  %2498 = vmatpush.msra.mxu0 %v2461
  %2499 = vmatmul.f32.gmra.mxu0 %v2457
  %v2500 = vpop.f32.mrf.mxu0
  %v2501 = vadd.f32 0.0, %v2500
  %2502 = vdwg.mxu0
  %v2503 = vadd.f32 %v2447, %v2481
  %v2504 = vadd.f32 %v2448, %v2501
  %2505 = vrot.lane.b32.xlu0 %v1955, 88
  %v2506 = vpop.permute.xlu0 %2505
  %2508 = vrot.lane.b32.xlu0 %v1753, 104
  %v2509 = vpop.permute.xlu0 %2508
  %2510 = vrot.lane.b32.xlu0 %v1853, 104
  %v2511 = vpop.permute.xlu0 %2510
  %2512 = vrot.lane.b32.xlu0 %v1953, 104
  %v2513 = vpop.permute.xlu0 %2512
  %vm2514 = vcmask 850944
  %v2515 = vsel %vm2514, %v2509, %v2511
  %v2516 = vsel %vm2514, %v2511, %v2513
  %v2517 = vsel %vm124, %v2506, 0
  %v2519 = vsel %vm127, %v2515, 0
  %v2521 = vsel %vm127, %v2516, 0
  %2523 = vmatpush.msra.mxu0 0.0
  %2524 = vmatpush.msra.mxu0 0.0
  %2525 = vmatpush.msra.mxu0 0.0
  %2526 = vmatpush.msra.mxu0 0.0
  %2527 = vmatpush.msra.mxu0 0.0
  %2528 = vmatpush.msra.mxu0 0.0
  %2529 = vmatpush.msra.mxu0 0.0
  %2530 = vmatpush.msra.mxu0 0.0
  %2531 = vmatpush.msra.mxu0 0.0
  %2532 = vmatpush.msra.mxu0 0.0
  %2533 = vmatpush.msra.mxu0 0.0
  %2534 = vmatpush.msra.mxu0 0.0
  %2535 = vmatpush.msra.mxu0 0.0
  %2536 = vmatpush.msra.mxu0 0.0
  %2537 = vmatpush.msra.mxu0 0.0
  %2538 = vmatpush.msra.mxu0 %v2519
  %2539 = vmatmul.f32.gmra.mxu0 %v2517
  %v2540 = vpop.f32.mrf.mxu0
  %v2541 = vadd.f32 0.0, %v2540
  %2542 = vdwg.mxu0
  %2543 = vmatpush.msra.mxu0 0.0
  %2544 = vmatpush.msra.mxu0 0.0
  %2545 = vmatpush.msra.mxu0 0.0
  %2546 = vmatpush.msra.mxu0 0.0
  %2547 = vmatpush.msra.mxu0 0.0
  %2548 = vmatpush.msra.mxu0 0.0
  %2549 = vmatpush.msra.mxu0 0.0
  %2550 = vmatpush.msra.mxu0 0.0
  %2551 = vmatpush.msra.mxu0 0.0
  %2552 = vmatpush.msra.mxu0 0.0
  %2553 = vmatpush.msra.mxu0 0.0
  %2554 = vmatpush.msra.mxu0 0.0
  %2555 = vmatpush.msra.mxu0 0.0
  %2556 = vmatpush.msra.mxu0 0.0
  %2557 = vmatpush.msra.mxu0 0.0
  %2558 = vmatpush.msra.mxu0 %v2521
  %2559 = vmatmul.f32.gmra.mxu0 %v2517
  %v2560 = vpop.f32.mrf.mxu0
  %v2561 = vadd.f32 0.0, %v2560
  %2562 = vdwg.mxu0
  %v2563 = vadd.f32 %v2503, %v2541
  %v2564 = vadd.f32 %v2504, %v2561
  %2565 = vrot.lane.b32.xlu0 %v1955, 84
  %v2566 = vpop.permute.xlu0 %2565
  %2567 = vrot.lane.b32.xlu0 %v1753, 103
  %v2568 = vpop.permute.xlu0 %2567
  %2569 = vrot.lane.b32.xlu0 %v1853, 103
  %v2570 = vpop.permute.xlu0 %2569
  %2571 = vrot.lane.b32.xlu0 %v1953, 103
  %v2572 = vpop.permute.xlu0 %2571
  %vm2573 = vcmask 842752
  %v2574 = vsel %vm2573, %v2568, %v2570
  %v2575 = vsel %vm2573, %v2570, %v2572
  %v2576 = vsel %vm124, %v2566, 0
  %v2578 = vsel %vm127, %v2574, 0
  %v2580 = vsel %vm127, %v2575, 0
  %2582 = vmatpush.msra.mxu0 0.0
  %2583 = vmatpush.msra.mxu0 0.0
  %2584 = vmatpush.msra.mxu0 0.0
  %2585 = vmatpush.msra.mxu0 0.0
  %2586 = vmatpush.msra.mxu0 0.0
  %2587 = vmatpush.msra.mxu0 0.0
  %2588 = vmatpush.msra.mxu0 0.0
  %2589 = vmatpush.msra.mxu0 0.0
  %2590 = vmatpush.msra.mxu0 0.0
  %2591 = vmatpush.msra.mxu0 0.0
  %2592 = vmatpush.msra.mxu0 0.0
  %2593 = vmatpush.msra.mxu0 0.0
  %2594 = vmatpush.msra.mxu0 0.0
  %2595 = vmatpush.msra.mxu0 0.0
  %2596 = vmatpush.msra.mxu0 0.0
  %2597 = vmatpush.msra.mxu0 %v2578
  %2598 = vmatmul.f32.gmra.mxu0 %v2576
  %v2599 = vpop.f32.mrf.mxu0
  %v2600 = vadd.f32 0.0, %v2599
  %2601 = vdwg.mxu0
  %2602 = vmatpush.msra.mxu0 0.0
  %2603 = vmatpush.msra.mxu0 0.0
  %2604 = vmatpush.msra.mxu0 0.0
  %2605 = vmatpush.msra.mxu0 0.0
  %2606 = vmatpush.msra.mxu0 0.0
  %2607 = vmatpush.msra.mxu0 0.0
  %2608 = vmatpush.msra.mxu0 0.0
  %2609 = vmatpush.msra.mxu0 0.0
  %2610 = vmatpush.msra.mxu0 0.0
  %2611 = vmatpush.msra.mxu0 0.0
  %2612 = vmatpush.msra.mxu0 0.0
  %2613 = vmatpush.msra.mxu0 0.0
  %2614 = vmatpush.msra.mxu0 0.0
  %2615 = vmatpush.msra.mxu0 0.0
  %2616 = vmatpush.msra.mxu0 0.0
  %2617 = vmatpush.msra.mxu0 %v2580
  %2618 = vmatmul.f32.gmra.mxu0 %v2576
  %v2619 = vpop.f32.mrf.mxu0
  %v2620 = vadd.f32 0.0, %v2619
  %2621 = vdwg.mxu0
  %v2622 = vadd.f32 %v2563, %v2600
  %v2623 = vadd.f32 %v2564, %v2620
  %2624 = vrot.lane.b32.xlu0 %v1955, 80
  %v2625 = vpop.permute.xlu0 %2624
  %2626 = vrot.lane.b32.xlu0 %v1753, 102
  %v2627 = vpop.permute.xlu0 %2626
  %2628 = vrot.lane.b32.xlu0 %v1853, 102
  %v2629 = vpop.permute.xlu0 %2628
  %2630 = vrot.lane.b32.xlu0 %v1953, 102
  %v2631 = vpop.permute.xlu0 %2630
  %vm2632 = vcmask 834560
  %v2633 = vsel %vm2632, %v2627, %v2629
  %v2634 = vsel %vm2632, %v2629, %v2631
  %v2635 = vsel %vm124, %v2625, 0
  %v2637 = vsel %vm127, %v2633, 0
  %v2639 = vsel %vm127, %v2634, 0
  %2641 = vmatpush.msra.mxu0 0.0
  %2642 = vmatpush.msra.mxu0 0.0
  %2643 = vmatpush.msra.mxu0 0.0
  %2644 = vmatpush.msra.mxu0 0.0
  %2645 = vmatpush.msra.mxu0 0.0
  %2646 = vmatpush.msra.mxu0 0.0
  %2647 = vmatpush.msra.mxu0 0.0
  %2648 = vmatpush.msra.mxu0 0.0
  %2649 = vmatpush.msra.mxu0 0.0
  %2650 = vmatpush.msra.mxu0 0.0
  %2651 = vmatpush.msra.mxu0 0.0
  %2652 = vmatpush.msra.mxu0 0.0
  %2653 = vmatpush.msra.mxu0 0.0
  %2654 = vmatpush.msra.mxu0 0.0
  %2655 = vmatpush.msra.mxu0 0.0
  %2656 = vmatpush.msra.mxu0 %v2637
  %2657 = vmatmul.f32.gmra.mxu0 %v2635
  %v2658 = vpop.f32.mrf.mxu0
  %v2659 = vadd.f32 0.0, %v2658
  %2660 = vdwg.mxu0
  %2661 = vmatpush.msra.mxu0 0.0
  %2662 = vmatpush.msra.mxu0 0.0
  %2663 = vmatpush.msra.mxu0 0.0
  %2664 = vmatpush.msra.mxu0 0.0
  %2665 = vmatpush.msra.mxu0 0.0
  %2666 = vmatpush.msra.mxu0 0.0
  %2667 = vmatpush.msra.mxu0 0.0
  %2668 = vmatpush.msra.mxu0 0.0
  %2669 = vmatpush.msra.mxu0 0.0
  %2670 = vmatpush.msra.mxu0 0.0
  %2671 = vmatpush.msra.mxu0 0.0
  %2672 = vmatpush.msra.mxu0 0.0
  %2673 = vmatpush.msra.mxu0 0.0
  %2674 = vmatpush.msra.mxu0 0.0
  %2675 = vmatpush.msra.mxu0 0.0
  %2676 = vmatpush.msra.mxu0 %v2639
  %2677 = vmatmul.f32.gmra.mxu0 %v2635
  %v2678 = vpop.f32.mrf.mxu0
  %v2679 = vadd.f32 0.0, %v2678
  %2680 = vdwg.mxu0
  %v2681 = vadd.f32 %v2622, %v2659
  %v2682 = vadd.f32 %v2623, %v2679
  %2683 = vrot.lane.b32.xlu0 %v1955, 76
  %v2684 = vpop.permute.xlu0 %2683
  %2685 = vrot.lane.b32.xlu0 %v1753, 101
  %v2686 = vpop.permute.xlu0 %2685
  %2687 = vrot.lane.b32.xlu0 %v1853, 101
  %v2688 = vpop.permute.xlu0 %2687
  %2689 = vrot.lane.b32.xlu0 %v1953, 101
  %v2690 = vpop.permute.xlu0 %2689
  %vm2691 = vcmask 826368
  %v2692 = vsel %vm2691, %v2686, %v2688
  %v2693 = vsel %vm2691, %v2688, %v2690
  %v2694 = vsel %vm124, %v2684, 0
  %v2696 = vsel %vm127, %v2692, 0
  %v2698 = vsel %vm127, %v2693, 0
  %2700 = vmatpush.msra.mxu0 0.0
  %2701 = vmatpush.msra.mxu0 0.0
  %2702 = vmatpush.msra.mxu0 0.0
  %2703 = vmatpush.msra.mxu0 0.0
  %2704 = vmatpush.msra.mxu0 0.0
  %2705 = vmatpush.msra.mxu0 0.0
  %2706 = vmatpush.msra.mxu0 0.0
  %2707 = vmatpush.msra.mxu0 0.0
  %2708 = vmatpush.msra.mxu0 0.0
  %2709 = vmatpush.msra.mxu0 0.0
  %2710 = vmatpush.msra.mxu0 0.0
  %2711 = vmatpush.msra.mxu0 0.0
  %2712 = vmatpush.msra.mxu0 0.0
  %2713 = vmatpush.msra.mxu0 0.0
  %2714 = vmatpush.msra.mxu0 0.0
  %2715 = vmatpush.msra.mxu0 %v2696
  %2716 = vmatmul.f32.gmra.mxu0 %v2694
  %v2717 = vpop.f32.mrf.mxu0
  %v2718 = vadd.f32 0.0, %v2717
  %2719 = vdwg.mxu0
  %2720 = vmatpush.msra.mxu0 0.0
  %2721 = vmatpush.msra.mxu0 0.0
  %2722 = vmatpush.msra.mxu0 0.0
  %2723 = vmatpush.msra.mxu0 0.0
  %2724 = vmatpush.msra.mxu0 0.0
  %2725 = vmatpush.msra.mxu0 0.0
  %2726 = vmatpush.msra.mxu0 0.0
  %2727 = vmatpush.msra.mxu0 0.0
  %2728 = vmatpush.msra.mxu0 0.0
  %2729 = vmatpush.msra.mxu0 0.0
  %2730 = vmatpush.msra.mxu0 0.0
  %2731 = vmatpush.msra.mxu0 0.0
  %2732 = vmatpush.msra.mxu0 0.0
  %2733 = vmatpush.msra.mxu0 0.0
  %2734 = vmatpush.msra.mxu0 0.0
  %2735 = vmatpush.msra.mxu0 %v2698
  %2736 = vmatmul.f32.gmra.mxu0 %v2694
  %v2737 = vpop.f32.mrf.mxu0
  %v2738 = vadd.f32 0.0, %v2737
  %2739 = vdwg.mxu0
  %v2740 = vadd.f32 %v2681, %v2718
  %v2741 = vadd.f32 %v2682, %v2738
  %2742 = vrot.lane.b32.xlu0 %v1955, 72
  %v2743 = vpop.permute.xlu0 %2742
  %2744 = vrot.lane.b32.xlu0 %v1753, 100
  %v2745 = vpop.permute.xlu0 %2744
  %2746 = vrot.lane.b32.xlu0 %v1853, 100
  %v2747 = vpop.permute.xlu0 %2746
  %2748 = vrot.lane.b32.xlu0 %v1953, 100
  %v2749 = vpop.permute.xlu0 %2748
  %vm2750 = vcmask 818176
  %v2751 = vsel %vm2750, %v2745, %v2747
  %v2752 = vsel %vm2750, %v2747, %v2749
  %v2753 = vsel %vm124, %v2743, 0
  %v2755 = vsel %vm127, %v2751, 0
  %v2757 = vsel %vm127, %v2752, 0
  %2759 = vmatpush.msra.mxu0 0.0
  %2760 = vmatpush.msra.mxu0 0.0
  %2761 = vmatpush.msra.mxu0 0.0
  %2762 = vmatpush.msra.mxu0 0.0
  %2763 = vmatpush.msra.mxu0 0.0
  %2764 = vmatpush.msra.mxu0 0.0
  %2765 = vmatpush.msra.mxu0 0.0
  %2766 = vmatpush.msra.mxu0 0.0
  %2767 = vmatpush.msra.mxu0 0.0
  %2768 = vmatpush.msra.mxu0 0.0
  %2769 = vmatpush.msra.mxu0 0.0
  %2770 = vmatpush.msra.mxu0 0.0
  %2771 = vmatpush.msra.mxu0 0.0
  %2772 = vmatpush.msra.mxu0 0.0
  %2773 = vmatpush.msra.mxu0 0.0
  %2774 = vmatpush.msra.mxu0 %v2755
  %2775 = vmatmul.f32.gmra.mxu0 %v2753
  %v2776 = vpop.f32.mrf.mxu0
  %v2777 = vadd.f32 0.0, %v2776
  %2778 = vdwg.mxu0
  %2779 = vmatpush.msra.mxu0 0.0
  %2780 = vmatpush.msra.mxu0 0.0
  %2781 = vmatpush.msra.mxu0 0.0
  %2782 = vmatpush.msra.mxu0 0.0
  %2783 = vmatpush.msra.mxu0 0.0
  %2784 = vmatpush.msra.mxu0 0.0
  %2785 = vmatpush.msra.mxu0 0.0
  %2786 = vmatpush.msra.mxu0 0.0
  %2787 = vmatpush.msra.mxu0 0.0
  %2788 = vmatpush.msra.mxu0 0.0
  %2789 = vmatpush.msra.mxu0 0.0
  %2790 = vmatpush.msra.mxu0 0.0
  %2791 = vmatpush.msra.mxu0 0.0
  %2792 = vmatpush.msra.mxu0 0.0
  %2793 = vmatpush.msra.mxu0 0.0
  %2794 = vmatpush.msra.mxu0 %v2757
  %2795 = vmatmul.f32.gmra.mxu0 %v2753
  %v2796 = vpop.f32.mrf.mxu0
  %v2797 = vadd.f32 0.0, %v2796
  %2798 = vdwg.mxu0
  %v2799 = vadd.f32 %v2740, %v2777
  %v2800 = vadd.f32 %v2741, %v2797
  %2801 = vrot.lane.b32.xlu0 %v1955, 68
  %v2802 = vpop.permute.xlu0 %2801
  %2803 = vrot.lane.b32.xlu0 %v1753, 92
  %v2804 = vpop.permute.xlu0 %2803
  %2805 = vrot.lane.b32.xlu0 %v1853, 92
  %v2806 = vpop.permute.xlu0 %2805
  %2807 = vrot.lane.b32.xlu0 %v1953, 92
  %v2808 = vpop.permute.xlu0 %2807
  %v2809 = vsel %vm971, %v2804, %v2806
  %v2810 = vsel %vm971, %v2806, %v2808
  %v2811 = vsel %vm124, %v2802, 0
  %v2813 = vsel %vm127, %v2809, 0
  %v2815 = vsel %vm127, %v2810, 0
  %2817 = vmatpush.msra.mxu0 0.0
  %2818 = vmatpush.msra.mxu0 0.0
  %2819 = vmatpush.msra.mxu0 0.0
  %2820 = vmatpush.msra.mxu0 0.0
  %2821 = vmatpush.msra.mxu0 0.0
  %2822 = vmatpush.msra.mxu0 0.0
  %2823 = vmatpush.msra.mxu0 0.0
  %2824 = vmatpush.msra.mxu0 0.0
  %2825 = vmatpush.msra.mxu0 0.0
  %2826 = vmatpush.msra.mxu0 0.0
  %2827 = vmatpush.msra.mxu0 0.0
  %2828 = vmatpush.msra.mxu0 0.0
  %2829 = vmatpush.msra.mxu0 0.0
  %2830 = vmatpush.msra.mxu0 0.0
  %2831 = vmatpush.msra.mxu0 0.0
  %2832 = vmatpush.msra.mxu0 %v2813
  %2833 = vmatmul.f32.gmra.mxu0 %v2811
  %v2834 = vpop.f32.mrf.mxu0
  %v2835 = vadd.f32 0.0, %v2834
  %2836 = vdwg.mxu0
  %2837 = vmatpush.msra.mxu0 0.0
  %2838 = vmatpush.msra.mxu0 0.0
  %2839 = vmatpush.msra.mxu0 0.0
  %2840 = vmatpush.msra.mxu0 0.0
  %2841 = vmatpush.msra.mxu0 0.0
  %2842 = vmatpush.msra.mxu0 0.0
  %2843 = vmatpush.msra.mxu0 0.0
  %2844 = vmatpush.msra.mxu0 0.0
  %2845 = vmatpush.msra.mxu0 0.0
  %2846 = vmatpush.msra.mxu0 0.0
  %2847 = vmatpush.msra.mxu0 0.0
  %2848 = vmatpush.msra.mxu0 0.0
  %2849 = vmatpush.msra.mxu0 0.0
  %2850 = vmatpush.msra.mxu0 0.0
  %2851 = vmatpush.msra.mxu0 0.0
  %2852 = vmatpush.msra.mxu0 %v2815
  %2853 = vmatmul.f32.gmra.mxu0 %v2811
  %v2854 = vpop.f32.mrf.mxu0
  %v2855 = vadd.f32 0.0, %v2854
  %2856 = vdwg.mxu0
  %v2857 = vadd.f32 %v2799, %v2835
  %v2858 = vadd.f32 %v2800, %v2855
  %2859 = vrot.lane.b32.xlu0 %v1955, 64
  %v2860 = vpop.permute.xlu0 %2859
  %2861 = vrot.lane.b32.xlu0 %v1753, 91
  %v2862 = vpop.permute.xlu0 %2861
  %2863 = vrot.lane.b32.xlu0 %v1853, 91
  %v2864 = vpop.permute.xlu0 %2863
  %2865 = vrot.lane.b32.xlu0 %v1953, 91
  %v2866 = vpop.permute.xlu0 %2865
  %v2867 = vsel %vm1121, %v2862, %v2864
  %v2868 = vsel %vm1121, %v2864, %v2866
  %v2869 = vsel %vm124, %v2860, 0
  %v2871 = vsel %vm127, %v2867, 0
  %v2873 = vsel %vm127, %v2868, 0
  %2875 = vmatpush.msra.mxu0 0.0
  %2876 = vmatpush.msra.mxu0 0.0
  %2877 = vmatpush.msra.mxu0 0.0
  %2878 = vmatpush.msra.mxu0 0.0
  %2879 = vmatpush.msra.mxu0 0.0
  %2880 = vmatpush.msra.mxu0 0.0
  %2881 = vmatpush.msra.mxu0 0.0
  %2882 = vmatpush.msra.mxu0 0.0
  %2883 = vmatpush.msra.mxu0 0.0
  %2884 = vmatpush.msra.mxu0 0.0
  %2885 = vmatpush.msra.mxu0 0.0
  %2886 = vmatpush.msra.mxu0 0.0
  %2887 = vmatpush.msra.mxu0 0.0
  %2888 = vmatpush.msra.mxu0 0.0
  %2889 = vmatpush.msra.mxu0 0.0
  %2890 = vmatpush.msra.mxu0 %v2871
  %2891 = vmatmul.f32.gmra.mxu0 %v2869
  %v2892 = vpop.f32.mrf.mxu0
  %v2893 = vadd.f32 0.0, %v2892
  %2894 = vdwg.mxu0
  %2895 = vmatpush.msra.mxu0 0.0
  %2896 = vmatpush.msra.mxu0 0.0
  %2897 = vmatpush.msra.mxu0 0.0
  %2898 = vmatpush.msra.mxu0 0.0
  %2899 = vmatpush.msra.mxu0 0.0
  %2900 = vmatpush.msra.mxu0 0.0
  %2901 = vmatpush.msra.mxu0 0.0
  %2902 = vmatpush.msra.mxu0 0.0
  %2903 = vmatpush.msra.mxu0 0.0
  %2904 = vmatpush.msra.mxu0 0.0
  %2905 = vmatpush.msra.mxu0 0.0
  %2906 = vmatpush.msra.mxu0 0.0
  %2907 = vmatpush.msra.mxu0 0.0
  %2908 = vmatpush.msra.mxu0 0.0
  %2909 = vmatpush.msra.mxu0 0.0
  %2910 = vmatpush.msra.mxu0 %v2873
  %2911 = vmatmul.f32.gmra.mxu0 %v2869
  %v2912 = vpop.f32.mrf.mxu0
  %v2913 = vadd.f32 0.0, %v2912
  %2914 = vdwg.mxu0
  %v2915 = vadd.f32 %v2857, %v2893
  %v2916 = vadd.f32 %v2858, %v2913
  %2917 = vrot.lane.b32.xlu0 %v1955, 60
  %v2918 = vpop.permute.xlu0 %2917
  %2919 = vrot.lane.b32.xlu0 %v1753, 90
  %v2920 = vpop.permute.xlu0 %2919
  %2921 = vrot.lane.b32.xlu0 %v1853, 90
  %v2922 = vpop.permute.xlu0 %2921
  %2923 = vrot.lane.b32.xlu0 %v1953, 90
  %v2924 = vpop.permute.xlu0 %2923
  %v2925 = vsel %vm1271, %v2920, %v2922
  %v2926 = vsel %vm1271, %v2922, %v2924
  %v2927 = vsel %vm124, %v2918, 0
  %v2929 = vsel %vm127, %v2925, 0
  %v2931 = vsel %vm127, %v2926, 0
  %2933 = vmatpush.msra.mxu0 0.0
  %2934 = vmatpush.msra.mxu0 0.0
  %2935 = vmatpush.msra.mxu0 0.0
  %2936 = vmatpush.msra.mxu0 0.0
  %2937 = vmatpush.msra.mxu0 0.0
  %2938 = vmatpush.msra.mxu0 0.0
  %2939 = vmatpush.msra.mxu0 0.0
  %2940 = vmatpush.msra.mxu0 0.0
  %2941 = vmatpush.msra.mxu0 0.0
  %2942 = vmatpush.msra.mxu0 0.0
  %2943 = vmatpush.msra.mxu0 0.0
  %2944 = vmatpush.msra.mxu0 0.0
  %2945 = vmatpush.msra.mxu0 0.0
  %2946 = vmatpush.msra.mxu0 0.0
  %2947 = vmatpush.msra.mxu0 0.0
  %2948 = vmatpush.msra.mxu0 %v2929
  %2949 = vmatmul.f32.gmra.mxu0 %v2927
  %v2950 = vpop.f32.mrf.mxu0
  %v2951 = vadd.f32 0.0, %v2950
  %2952 = vdwg.mxu0
  %2953 = vmatpush.msra.mxu0 0.0
  %2954 = vmatpush.msra.mxu0 0.0
  %2955 = vmatpush.msra.mxu0 0.0
  %2956 = vmatpush.msra.mxu0 0.0
  %2957 = vmatpush.msra.mxu0 0.0
  %2958 = vmatpush.msra.mxu0 0.0
  %2959 = vmatpush.msra.mxu0 0.0
  %2960 = vmatpush.msra.mxu0 0.0
  %2961 = vmatpush.msra.mxu0 0.0
  %2962 = vmatpush.msra.mxu0 0.0
  %2963 = vmatpush.msra.mxu0 0.0
  %2964 = vmatpush.msra.mxu0 0.0
  %2965 = vmatpush.msra.mxu0 0.0
  %2966 = vmatpush.msra.mxu0 0.0
  %2967 = vmatpush.msra.mxu0 0.0
  %2968 = vmatpush.msra.mxu0 %v2931
  %2969 = vmatmul.f32.gmra.mxu0 %v2927
  %v2970 = vpop.f32.mrf.mxu0
  %v2971 = vadd.f32 0.0, %v2970
  %2972 = vdwg.mxu0
  %v2973 = vadd.f32 %v2915, %v2951
  %v2974 = vadd.f32 %v2916, %v2971
  %2975 = vrot.lane.b32.xlu0 %v1955, 56
  %v2976 = vpop.permute.xlu0 %2975
  %2977 = vrot.lane.b32.xlu0 %v1753, 89
  %v2978 = vpop.permute.xlu0 %2977
  %2979 = vrot.lane.b32.xlu0 %v1853, 89
  %v2980 = vpop.permute.xlu0 %2979
  %2981 = vrot.lane.b32.xlu0 %v1953, 89
  %v2982 = vpop.permute.xlu0 %2981
  %vm2983 = vcmask 728064
  %v2984 = vsel %vm2983, %v2978, %v2980
  %v2985 = vsel %vm2983, %v2980, %v2982
  %v2986 = vsel %vm124, %v2976, 0
  %v2988 = vsel %vm127, %v2984, 0
  %v2990 = vsel %vm127, %v2985, 0
  %2992 = vmatpush.msra.mxu0 0.0
  %2993 = vmatpush.msra.mxu0 0.0
  %2994 = vmatpush.msra.mxu0 0.0
  %2995 = vmatpush.msra.mxu0 0.0
  %2996 = vmatpush.msra.mxu0 0.0
  %2997 = vmatpush.msra.mxu0 0.0
  %2998 = vmatpush.msra.mxu0 0.0
  %2999 = vmatpush.msra.mxu0 0.0
  %3000 = vmatpush.msra.mxu0 0.0
  %3001 = vmatpush.msra.mxu0 0.0
  %3002 = vmatpush.msra.mxu0 0.0
  %3003 = vmatpush.msra.mxu0 0.0
  %3004 = vmatpush.msra.mxu0 0.0
  %3005 = vmatpush.msra.mxu0 0.0
  %3006 = vmatpush.msra.mxu0 0.0
  %3007 = vmatpush.msra.mxu0 %v2988
  %3008 = vmatmul.f32.gmra.mxu0 %v2986
  %v3009 = vpop.f32.mrf.mxu0
  %v3010 = vadd.f32 0.0, %v3009
  %3011 = vdwg.mxu0
  %3012 = vmatpush.msra.mxu0 0.0
  %3013 = vmatpush.msra.mxu0 0.0
  %3014 = vmatpush.msra.mxu0 0.0
  %3015 = vmatpush.msra.mxu0 0.0
  %3016 = vmatpush.msra.mxu0 0.0
  %3017 = vmatpush.msra.mxu0 0.0
  %3018 = vmatpush.msra.mxu0 0.0
  %3019 = vmatpush.msra.mxu0 0.0
  %3020 = vmatpush.msra.mxu0 0.0
  %3021 = vmatpush.msra.mxu0 0.0
  %3022 = vmatpush.msra.mxu0 0.0
  %3023 = vmatpush.msra.mxu0 0.0
  %3024 = vmatpush.msra.mxu0 0.0
  %3025 = vmatpush.msra.mxu0 0.0
  %3026 = vmatpush.msra.mxu0 0.0
  %3027 = vmatpush.msra.mxu0 %v2990
  %3028 = vmatmul.f32.gmra.mxu0 %v2986
  %v3029 = vpop.f32.mrf.mxu0
  %v3030 = vadd.f32 0.0, %v3029
  %3031 = vdwg.mxu0
  %v3032 = vadd.f32 %v2973, %v3010
  %v3033 = vadd.f32 %v2974, %v3030
  %3034 = vrot.lane.b32.xlu0 %v1955, 52
  %v3035 = vpop.permute.xlu0 %3034
  %3036 = vrot.lane.b32.xlu0 %v1753, 88
  %v3037 = vpop.permute.xlu0 %3036
  %3038 = vrot.lane.b32.xlu0 %v1853, 88
  %v3039 = vpop.permute.xlu0 %3038
  %3040 = vrot.lane.b32.xlu0 %v1953, 88
  %v3041 = vpop.permute.xlu0 %3040
  %vm3042 = vcmask 719872
  %v3043 = vsel %vm3042, %v3037, %v3039
  %v3044 = vsel %vm3042, %v3039, %v3041
  %v3045 = vsel %vm124, %v3035, 0
  %v3047 = vsel %vm127, %v3043, 0
  %v3049 = vsel %vm127, %v3044, 0
  %3051 = vmatpush.msra.mxu0 0.0
  %3052 = vmatpush.msra.mxu0 0.0
  %3053 = vmatpush.msra.mxu0 0.0
  %3054 = vmatpush.msra.mxu0 0.0
  %3055 = vmatpush.msra.mxu0 0.0
  %3056 = vmatpush.msra.mxu0 0.0
  %3057 = vmatpush.msra.mxu0 0.0
  %3058 = vmatpush.msra.mxu0 0.0
  %3059 = vmatpush.msra.mxu0 0.0
  %3060 = vmatpush.msra.mxu0 0.0
  %3061 = vmatpush.msra.mxu0 0.0
  %3062 = vmatpush.msra.mxu0 0.0
  %3063 = vmatpush.msra.mxu0 0.0
  %3064 = vmatpush.msra.mxu0 0.0
  %3065 = vmatpush.msra.mxu0 0.0
  %3066 = vmatpush.msra.mxu0 %v3047
  %3067 = vmatmul.f32.gmra.mxu0 %v3045
  %v3068 = vpop.f32.mrf.mxu0
  %v3069 = vadd.f32 0.0, %v3068
  %3070 = vdwg.mxu0
  %3071 = vmatpush.msra.mxu0 0.0
  %3072 = vmatpush.msra.mxu0 0.0
  %3073 = vmatpush.msra.mxu0 0.0
  %3074 = vmatpush.msra.mxu0 0.0
  %3075 = vmatpush.msra.mxu0 0.0
  %3076 = vmatpush.msra.mxu0 0.0
  %3077 = vmatpush.msra.mxu0 0.0
  %3078 = vmatpush.msra.mxu0 0.0
  %3079 = vmatpush.msra.mxu0 0.0
  %3080 = vmatpush.msra.mxu0 0.0
  %3081 = vmatpush.msra.mxu0 0.0
  %3082 = vmatpush.msra.mxu0 0.0
  %3083 = vmatpush.msra.mxu0 0.0
  %3084 = vmatpush.msra.mxu0 0.0
  %3085 = vmatpush.msra.mxu0 0.0
  %3086 = vmatpush.msra.mxu0 %v3049
  %3087 = vmatmul.f32.gmra.mxu0 %v3045
  %v3088 = vpop.f32.mrf.mxu0
  %v3089 = vadd.f32 0.0, %v3088
  %3090 = vdwg.mxu0
  %v3091 = vadd.f32 %v3032, %v3069
  %v3092 = vadd.f32 %v3033, %v3089
  %3093 = vrot.lane.b32.xlu0 %v1955, 48
  %v3094 = vpop.permute.xlu0 %3093
  %3095 = vrot.lane.b32.xlu0 %v1753, 80
  %v3096 = vpop.permute.xlu0 %3095
  %3097 = vrot.lane.b32.xlu0 %v1853, 80
  %v3098 = vpop.permute.xlu0 %3097
  %3099 = vrot.lane.b32.xlu0 %v1953, 80
  %v3100 = vpop.permute.xlu0 %3099
  %vm3101 = vcmask 654336
  %v3102 = vsel %vm3101, %v3096, %v3098
  %v3103 = vsel %vm3101, %v3098, %v3100
  %v3104 = vsel %vm124, %v3094, 0
  %v3106 = vsel %vm127, %v3102, 0
  %v3108 = vsel %vm127, %v3103, 0
  %3110 = vmatpush.msra.mxu0 0.0
  %3111 = vmatpush.msra.mxu0 0.0
  %3112 = vmatpush.msra.mxu0 0.0
  %3113 = vmatpush.msra.mxu0 0.0
  %3114 = vmatpush.msra.mxu0 0.0
  %3115 = vmatpush.msra.mxu0 0.0
  %3116 = vmatpush.msra.mxu0 0.0
  %3117 = vmatpush.msra.mxu0 0.0
  %3118 = vmatpush.msra.mxu0 0.0
  %3119 = vmatpush.msra.mxu0 0.0
  %3120 = vmatpush.msra.mxu0 0.0
  %3121 = vmatpush.msra.mxu0 0.0
  %3122 = vmatpush.msra.mxu0 0.0
  %3123 = vmatpush.msra.mxu0 0.0
  %3124 = vmatpush.msra.mxu0 0.0
  %3125 = vmatpush.msra.mxu0 %v3106
  %3126 = vmatmul.f32.gmra.mxu0 %v3104
  %v3127 = vpop.f32.mrf.mxu0
  %v3128 = vadd.f32 0.0, %v3127
  %3129 = vdwg.mxu0
  %3130 = vmatpush.msra.mxu0 0.0
  %3131 = vmatpush.msra.mxu0 0.0
  %3132 = vmatpush.msra.mxu0 0.0
  %3133 = vmatpush.msra.mxu0 0.0
  %3134 = vmatpush.msra.mxu0 0.0
  %3135 = vmatpush.msra.mxu0 0.0
  %3136 = vmatpush.msra.mxu0 0.0
  %3137 = vmatpush.msra.mxu0 0.0
  %3138 = vmatpush.msra.mxu0 0.0
  %3139 = vmatpush.msra.mxu0 0.0
  %3140 = vmatpush.msra.mxu0 0.0
  %3141 = vmatpush.msra.mxu0 0.0
  %3142 = vmatpush.msra.mxu0 0.0
  %3143 = vmatpush.msra.mxu0 0.0
  %3144 = vmatpush.msra.mxu0 0.0
  %3145 = vmatpush.msra.mxu0 %v3108
  %3146 = vmatmul.f32.gmra.mxu0 %v3104
  %v3147 = vpop.f32.mrf.mxu0
  %v3148 = vadd.f32 0.0, %v3147
  %3149 = vdwg.mxu0
  %v3150 = vadd.f32 %v3091, %v3128
  %v3151 = vadd.f32 %v3092, %v3148
  %3152 = vrot.lane.b32.xlu0 %v1955, 44
  %v3153 = vpop.permute.xlu0 %3152
  %3154 = vrot.lane.b32.xlu0 %v1753, 79
  %v3155 = vpop.permute.xlu0 %3154
  %3156 = vrot.lane.b32.xlu0 %v1853, 79
  %v3157 = vpop.permute.xlu0 %3156
  %3158 = vrot.lane.b32.xlu0 %v1953, 79
  %v3159 = vpop.permute.xlu0 %3158
  %vm3160 = vcmask 646144
  %v3161 = vsel %vm3160, %v3155, %v3157
  %v3162 = vsel %vm3160, %v3157, %v3159
  %v3163 = vsel %vm124, %v3153, 0
  %v3165 = vsel %vm127, %v3161, 0
  %v3167 = vsel %vm127, %v3162, 0
  %3169 = vmatpush.msra.mxu0 0.0
  %3170 = vmatpush.msra.mxu0 0.0
  %3171 = vmatpush.msra.mxu0 0.0
  %3172 = vmatpush.msra.mxu0 0.0
  %3173 = vmatpush.msra.mxu0 0.0
  %3174 = vmatpush.msra.mxu0 0.0
  %3175 = vmatpush.msra.mxu0 0.0
  %3176 = vmatpush.msra.mxu0 0.0
  %3177 = vmatpush.msra.mxu0 0.0
  %3178 = vmatpush.msra.mxu0 0.0
  %3179 = vmatpush.msra.mxu0 0.0
  %3180 = vmatpush.msra.mxu0 0.0
  %3181 = vmatpush.msra.mxu0 0.0
  %3182 = vmatpush.msra.mxu0 0.0
  %3183 = vmatpush.msra.mxu0 0.0
  %3184 = vmatpush.msra.mxu0 %v3165
  %3185 = vmatmul.f32.gmra.mxu0 %v3163
  %v3186 = vpop.f32.mrf.mxu0
  %v3187 = vadd.f32 0.0, %v3186
  %3188 = vdwg.mxu0
  %3189 = vmatpush.msra.mxu0 0.0
  %3190 = vmatpush.msra.mxu0 0.0
  %3191 = vmatpush.msra.mxu0 0.0
  %3192 = vmatpush.msra.mxu0 0.0
  %3193 = vmatpush.msra.mxu0 0.0
  %3194 = vmatpush.msra.mxu0 0.0
  %3195 = vmatpush.msra.mxu0 0.0
  %3196 = vmatpush.msra.mxu0 0.0
  %3197 = vmatpush.msra.mxu0 0.0
  %3198 = vmatpush.msra.mxu0 0.0
  %3199 = vmatpush.msra.mxu0 0.0
  %3200 = vmatpush.msra.mxu0 0.0
  %3201 = vmatpush.msra.mxu0 0.0
  %3202 = vmatpush.msra.mxu0 0.0
  %3203 = vmatpush.msra.mxu0 0.0
  %3204 = vmatpush.msra.mxu0 %v3167
  %3205 = vmatmul.f32.gmra.mxu0 %v3163
  %v3206 = vpop.f32.mrf.mxu0
  %v3207 = vadd.f32 0.0, %v3206
  %3208 = vdwg.mxu0
  %v3209 = vadd.f32 %v3150, %v3187
  %v3210 = vadd.f32 %v3151, %v3207
  %3211 = vrot.lane.b32.xlu0 %v1955, 40
  %v3212 = vpop.permute.xlu0 %3211
  %3213 = vrot.lane.b32.xlu0 %v1753, 78
  %v3214 = vpop.permute.xlu0 %3213
  %3215 = vrot.lane.b32.xlu0 %v1853, 78
  %v3216 = vpop.permute.xlu0 %3215
  %3217 = vrot.lane.b32.xlu0 %v1953, 78
  %v3218 = vpop.permute.xlu0 %3217
  %vm3219 = vcmask 637952
  %v3220 = vsel %vm3219, %v3214, %v3216
  %v3221 = vsel %vm3219, %v3216, %v3218
  %v3222 = vsel %vm124, %v3212, 0
  %v3224 = vsel %vm127, %v3220, 0
  %v3226 = vsel %vm127, %v3221, 0
  %3228 = vmatpush.msra.mxu0 0.0
  %3229 = vmatpush.msra.mxu0 0.0
  %3230 = vmatpush.msra.mxu0 0.0
  %3231 = vmatpush.msra.mxu0 0.0
  %3232 = vmatpush.msra.mxu0 0.0
  %3233 = vmatpush.msra.mxu0 0.0
  %3234 = vmatpush.msra.mxu0 0.0
  %3235 = vmatpush.msra.mxu0 0.0
  %3236 = vmatpush.msra.mxu0 0.0
  %3237 = vmatpush.msra.mxu0 0.0
  %3238 = vmatpush.msra.mxu0 0.0
  %3239 = vmatpush.msra.mxu0 0.0
  %3240 = vmatpush.msra.mxu0 0.0
  %3241 = vmatpush.msra.mxu0 0.0
  %3242 = vmatpush.msra.mxu0 0.0
  %3243 = vmatpush.msra.mxu0 %v3224
  %3244 = vmatmul.f32.gmra.mxu0 %v3222
  %v3245 = vpop.f32.mrf.mxu0
  %v3246 = vadd.f32 0.0, %v3245
  %3247 = vdwg.mxu0
  %3248 = vmatpush.msra.mxu0 0.0
  %3249 = vmatpush.msra.mxu0 0.0
  %3250 = vmatpush.msra.mxu0 0.0
  %3251 = vmatpush.msra.mxu0 0.0
  %3252 = vmatpush.msra.mxu0 0.0
  %3253 = vmatpush.msra.mxu0 0.0
  %3254 = vmatpush.msra.mxu0 0.0
  %3255 = vmatpush.msra.mxu0 0.0
  %3256 = vmatpush.msra.mxu0 0.0
  %3257 = vmatpush.msra.mxu0 0.0
  %3258 = vmatpush.msra.mxu0 0.0
  %3259 = vmatpush.msra.mxu0 0.0
  %3260 = vmatpush.msra.mxu0 0.0
  %3261 = vmatpush.msra.mxu0 0.0
  %3262 = vmatpush.msra.mxu0 0.0
  %3263 = vmatpush.msra.mxu0 %v3226
  %3264 = vmatmul.f32.gmra.mxu0 %v3222
  %v3265 = vpop.f32.mrf.mxu0
  %v3266 = vadd.f32 0.0, %v3265
  %3267 = vdwg.mxu0
  %v3268 = vadd.f32 %v3209, %v3246
  %v3269 = vadd.f32 %v3210, %v3266
  %3270 = vrot.lane.b32.xlu0 %v1955, 36
  %v3271 = vpop.permute.xlu0 %3270
  %3272 = vrot.lane.b32.xlu0 %v1753, 77
  %v3273 = vpop.permute.xlu0 %3272
  %3274 = vrot.lane.b32.xlu0 %v1853, 77
  %v3275 = vpop.permute.xlu0 %3274
  %3276 = vrot.lane.b32.xlu0 %v1953, 77
  %v3277 = vpop.permute.xlu0 %3276
  %vm3278 = vcmask 629760
  %v3279 = vsel %vm3278, %v3273, %v3275
  %v3280 = vsel %vm3278, %v3275, %v3277
  %v3281 = vsel %vm124, %v3271, 0
  %v3283 = vsel %vm127, %v3279, 0
  %v3285 = vsel %vm127, %v3280, 0
  %3287 = vmatpush.msra.mxu0 0.0
  %3288 = vmatpush.msra.mxu0 0.0
  %3289 = vmatpush.msra.mxu0 0.0
  %3290 = vmatpush.msra.mxu0 0.0
  %3291 = vmatpush.msra.mxu0 0.0
  %3292 = vmatpush.msra.mxu0 0.0
  %3293 = vmatpush.msra.mxu0 0.0
  %3294 = vmatpush.msra.mxu0 0.0
  %3295 = vmatpush.msra.mxu0 0.0
  %3296 = vmatpush.msra.mxu0 0.0
  %3297 = vmatpush.msra.mxu0 0.0
  %3298 = vmatpush.msra.mxu0 0.0
  %3299 = vmatpush.msra.mxu0 0.0
  %3300 = vmatpush.msra.mxu0 0.0
  %3301 = vmatpush.msra.mxu0 0.0
  %3302 = vmatpush.msra.mxu0 %v3283
  %3303 = vmatmul.f32.gmra.mxu0 %v3281
  %v3304 = vpop.f32.mrf.mxu0
  %v3305 = vadd.f32 0.0, %v3304
  %3306 = vdwg.mxu0
  %3307 = vmatpush.msra.mxu0 0.0
  %3308 = vmatpush.msra.mxu0 0.0
  %3309 = vmatpush.msra.mxu0 0.0
  %3310 = vmatpush.msra.mxu0 0.0
  %3311 = vmatpush.msra.mxu0 0.0
  %3312 = vmatpush.msra.mxu0 0.0
  %3313 = vmatpush.msra.mxu0 0.0
  %3314 = vmatpush.msra.mxu0 0.0
  %3315 = vmatpush.msra.mxu0 0.0
  %3316 = vmatpush.msra.mxu0 0.0
  %3317 = vmatpush.msra.mxu0 0.0
  %3318 = vmatpush.msra.mxu0 0.0
  %3319 = vmatpush.msra.mxu0 0.0
  %3320 = vmatpush.msra.mxu0 0.0
  %3321 = vmatpush.msra.mxu0 0.0
  %3322 = vmatpush.msra.mxu0 %v3285
  %3323 = vmatmul.f32.gmra.mxu0 %v3281
  %v3324 = vpop.f32.mrf.mxu0
  %v3325 = vadd.f32 0.0, %v3324
  %3326 = vdwg.mxu0
  %v3327 = vadd.f32 %v3268, %v3305
  %v3328 = vadd.f32 %v3269, %v3325
  %3329 = vrot.lane.b32.xlu0 %v1955, 32
  %v3330 = vpop.permute.xlu0 %3329
  %3331 = vrot.lane.b32.xlu0 %v1753, 76
  %v3332 = vpop.permute.xlu0 %3331
  %3333 = vrot.lane.b32.xlu0 %v1853, 76
  %v3334 = vpop.permute.xlu0 %3333
  %3335 = vrot.lane.b32.xlu0 %v1953, 76
  %v3336 = vpop.permute.xlu0 %3335
  %vm3337 = vcmask 621568
  %v3338 = vsel %vm3337, %v3332, %v3334
  %v3339 = vsel %vm3337, %v3334, %v3336
  %v3340 = vsel %vm124, %v3330, 0
  %v3342 = vsel %vm127, %v3338, 0
  %v3344 = vsel %vm127, %v3339, 0
  %3346 = vmatpush.msra.mxu0 0.0
  %3347 = vmatpush.msra.mxu0 0.0
  %3348 = vmatpush.msra.mxu0 0.0
  %3349 = vmatpush.msra.mxu0 0.0
  %3350 = vmatpush.msra.mxu0 0.0
  %3351 = vmatpush.msra.mxu0 0.0
  %3352 = vmatpush.msra.mxu0 0.0
  %3353 = vmatpush.msra.mxu0 0.0
  %3354 = vmatpush.msra.mxu0 0.0
  %3355 = vmatpush.msra.mxu0 0.0
  %3356 = vmatpush.msra.mxu0 0.0
  %3357 = vmatpush.msra.mxu0 0.0
  %3358 = vmatpush.msra.mxu0 0.0
  %3359 = vmatpush.msra.mxu0 0.0
  %3360 = vmatpush.msra.mxu0 0.0
  %3361 = vmatpush.msra.mxu0 %v3342
  %3362 = vmatmul.f32.gmra.mxu0 %v3340
  %v3363 = vpop.f32.mrf.mxu0
  %v3364 = vadd.f32 0.0, %v3363
  %3365 = vdwg.mxu0
  %3366 = vmatpush.msra.mxu0 0.0
  %3367 = vmatpush.msra.mxu0 0.0
  %3368 = vmatpush.msra.mxu0 0.0
  %3369 = vmatpush.msra.mxu0 0.0
  %3370 = vmatpush.msra.mxu0 0.0
  %3371 = vmatpush.msra.mxu0 0.0
  %3372 = vmatpush.msra.mxu0 0.0
  %3373 = vmatpush.msra.mxu0 0.0
  %3374 = vmatpush.msra.mxu0 0.0
  %3375 = vmatpush.msra.mxu0 0.0
  %3376 = vmatpush.msra.mxu0 0.0
  %3377 = vmatpush.msra.mxu0 0.0
  %3378 = vmatpush.msra.mxu0 0.0
  %3379 = vmatpush.msra.mxu0 0.0
  %3380 = vmatpush.msra.mxu0 0.0
  %3381 = vmatpush.msra.mxu0 %v3344
  %3382 = vmatmul.f32.gmra.mxu0 %v3340
  %v3383 = vpop.f32.mrf.mxu0
  %v3384 = vadd.f32 0.0, %v3383
  %3385 = vdwg.mxu0
  %v3386 = vadd.f32 %v3327, %v3364
  %v3387 = vadd.f32 %v3328, %v3384
  %v3388 = vld [vmem:[%s5] sm:$0xff]
  %3390 = vset.pattern.permute.xlu0 0
  %3391 = vperm.xlu0 %3390, %v3388
  %v3392 = vpop.permute.xlu0 %3391
  %v3394 = vadd.f32 %v3386, %v3392
  %v3395 = vadd.f32 %v3387, %v3392
  %v3396 = vmax.f32 %v3394, 0.0
  %v3397 = vmax.f32 %v3395, 0.0
  %v3398 = vld [vmem:[%s6] sm:$0xff]
  %v3399 = vld [vmem:[%s6 + $0x8] sm:$0xff]
  %v3400 = vld [vmem:[%s6 + $0x10] sm:$0xff]
  %v3401 = vld [vmem:[%s6 + $0x18] sm:$0xff]
  %v3402 = vld [vmem:[%s6 + $0x20] sm:$0xff]
  %v3403 = vld [vmem:[%s6 + $0x28] sm:$0xff]
  %v3404 = vld [vmem:[%s6 + $0x30] sm:$0xff]
  %v3405 = vld [vmem:[%s6 + $0x38] sm:$0xff]
  %v3406 = vld [vmem:[%s6 + $0x40] sm:$0xff]
  %v3407 = vld [vmem:[%s6 + $0x48] sm:$0xff]
  %v3408 = vld [vmem:[%s6 + $0x50] sm:$0xff]
  %v3409 = vld [vmem:[%s6 + $0x58] sm:$0xff]
  %v3410 = vld [vmem:[%s6 + $0x60] sm:$0xff]
  %v3411 = vld [vmem:[%s6 + $0x68] sm:$0xff]
  %v3412 = vld [vmem:[%s6 + $0x70] sm:$0xff]
  %v3413 = vld [vmem:[%s6 + $0x78] sm:$0xff]
  %v3414 = vld [vmem:[%s6 + $0x80] sm:$0xff]
  %v3415 = vld [vmem:[%s6 + $0x88] sm:$0xff]
  %v3416 = vld [vmem:[%s6 + $0x90] sm:$0xff]
  %v3417 = vld [vmem:[%s6 + $0x98] sm:$0xff]
  %v3418 = vld [vmem:[%s6 + $0xa0] sm:$0xff]
  %v3419 = vld [vmem:[%s6 + $0xa8] sm:$0xff]
  %v3420 = vld [vmem:[%s6 + $0xb0] sm:$0xff]
  %v3421 = vld [vmem:[%s6 + $0xb8] sm:$0xff]
  %v3422 = vld [vmem:[%s6 + $0xc0] sm:$0xff]
  %v3423 = vld [vmem:[%s6 + $0xc8] sm:$0xff]
  %v3424 = vld [vmem:[%s6 + $0xd0] sm:$0xff]
  %v3425 = vld [vmem:[%s6 + $0xd8] sm:$0xff]
  %v3426 = vld [vmem:[%s6 + $0xe0] sm:$0xff]
  %v3427 = vld [vmem:[%s6 + $0xe8] sm:$0xf]
  %v3429 = vsel %vm822, %v3397, 0
  %v3432 = vsel %vm127, %v3427, 0
  %3434 = vmatpush.msra.mxu0 %v3413
  %3435 = vmatpush.msra.mxu0 %v3412
  %3436 = vmatpush.msra.mxu0 %v3411
  %3437 = vmatpush.msra.mxu0 %v3410
  %3438 = vmatpush.msra.mxu0 %v3409
  %3439 = vmatpush.msra.mxu0 %v3408
  %3440 = vmatpush.msra.mxu0 %v3407
  %3441 = vmatpush.msra.mxu0 %v3406
  %3442 = vmatpush.msra.mxu0 %v3405
  %3443 = vmatpush.msra.mxu0 %v3404
  %3444 = vmatpush.msra.mxu0 %v3403
  %3445 = vmatpush.msra.mxu0 %v3402
  %3446 = vmatpush.msra.mxu0 %v3401
  %3447 = vmatpush.msra.mxu0 %v3400
  %3448 = vmatpush.msra.mxu0 %v3399
  %3449 = vmatpush.msra.mxu0 %v3398
  %3450 = vmatmul.f32.gmra.mxu0 %v3396
  %v3451 = vpop.f32.mrf.mxu0
  %v3452 = vadd.f32 0.0, %v3451
  %3453 = vdwg.mxu0
  %3454 = vmatpush.msra.mxu0 0.0
  %3455 = vmatpush.msra.mxu0 0.0
  %3456 = vmatpush.msra.mxu0 %v3432
  %3457 = vmatpush.msra.mxu0 %v3426
  %3458 = vmatpush.msra.mxu0 %v3425
  %3459 = vmatpush.msra.mxu0 %v3424
  %3460 = vmatpush.msra.mxu0 %v3423
  %3461 = vmatpush.msra.mxu0 %v3422
  %3462 = vmatpush.msra.mxu0 %v3421
  %3463 = vmatpush.msra.mxu0 %v3420
  %3464 = vmatpush.msra.mxu0 %v3419
  %3465 = vmatpush.msra.mxu0 %v3418
  %3466 = vmatpush.msra.mxu0 %v3417
  %3467 = vmatpush.msra.mxu0 %v3416
  %3468 = vmatpush.msra.mxu0 %v3415
  %3469 = vmatpush.msra.mxu0 %v3414
  %3470 = vmatmul.f32.gmra.mxu0 %v3429
  %v3471 = vpop.f32.mrf.mxu0
  %v3472 = vadd.f32 %v3452, %v3471
  %3473 = vdwg.mxu0
  %v3474 = vld [vmem:[%s7] sm:$0xff]
  %v3475 = vld [vmem:[%s7 + $0x8] sm:$0xff]
  %3478 = vrot.lane.b32.xlu0 %v3474, 120
  %v3479 = vpop.permute.xlu0 %3478
  %3480 = vrot.lane.b32.xlu0 %v3475, 120
  %v3481 = vpop.permute.xlu0 %3480
  %3483 = vrot.lane.b32.xlu0 %v3472, 127
  %v3484 = vpop.permute.xlu0 %3483
  %vm3486 = vcmask 64512
  %v3487 = vsel %vm3486, %v3479, 0
  %v3489 = vsel %vm3486, %v3481, 0
  %3491 = vmatpush.msra.mxu0 0.0
  %3492 = vmatpush.msra.mxu0 0.0
  %3493 = vmatpush.msra.mxu0 0.0
  %3494 = vmatpush.msra.mxu0 0.0
  %3495 = vmatpush.msra.mxu0 0.0
  %3496 = vmatpush.msra.mxu0 0.0
  %3497 = vmatpush.msra.mxu0 0.0
  %3498 = vmatpush.msra.mxu0 0.0
  %3499 = vmatpush.msra.mxu0 0.0
  %3500 = vmatpush.msra.mxu0 0.0
  %3501 = vmatpush.msra.mxu0 0.0
  %3502 = vmatpush.msra.mxu0 0.0
  %3503 = vmatpush.msra.mxu0 0.0
  %3504 = vmatpush.msra.mxu0 0.0
  %3505 = vmatpush.msra.mxu0 0.0
  %3506 = vmatpush.msra.mxu0 %v3484
  %3507 = vmatmul.f32.gmra.mxu0 %v3487
  %v3508 = vpop.f32.mrf.mxu0
  %v3509 = vadd.f32 0.0, %v3508
  %3510 = vmatmul.f32.gmra.mxu0 %v3489
  %v3511 = vpop.f32.mrf.mxu0
  %v3512 = vadd.f32 0.0, %v3511
  %3513 = vdwg.mxu0
  %v3514 = vsel %vm3486, %v3474, 0
  %v3516 = vsel %vm3486, %v3475, 0
  %3518 = vmatpush.msra.mxu0 0.0
  %3519 = vmatpush.msra.mxu0 0.0
  %3520 = vmatpush.msra.mxu0 0.0
  %3521 = vmatpush.msra.mxu0 0.0
  %3522 = vmatpush.msra.mxu0 0.0
  %3523 = vmatpush.msra.mxu0 0.0
  %3524 = vmatpush.msra.mxu0 0.0
  %3525 = vmatpush.msra.mxu0 0.0
  %3526 = vmatpush.msra.mxu0 0.0
  %3527 = vmatpush.msra.mxu0 0.0
  %3528 = vmatpush.msra.mxu0 0.0
  %3529 = vmatpush.msra.mxu0 0.0
  %3530 = vmatpush.msra.mxu0 0.0
  %3531 = vmatpush.msra.mxu0 0.0
  %3532 = vmatpush.msra.mxu0 0.0
  %3533 = vmatpush.msra.mxu0 %v3472
  %3534 = vmatmul.f32.gmra.mxu0 %v3514
  %v3535 = vpop.f32.mrf.mxu0
  %v3536 = vadd.f32 %v3509, %v3535
  %3537 = vmatmul.f32.gmra.mxu0 %v3516
  %v3538 = vpop.f32.mrf.mxu0
  %v3539 = vadd.f32 %v3512, %v3538
  %3540 = vdwg.mxu0
  %3541 = vrot.lane.b32.xlu0 %v3474, 112
  %v3542 = vpop.permute.xlu0 %3541
  %3543 = vrot.lane.b32.xlu0 %v3475, 112
  %v3544 = vpop.permute.xlu0 %3543
  %3545 = vrot.lane.b32.xlu0 %v3472, 126
  %v3546 = vpop.permute.xlu0 %3545
  %v3548 = vsel %vm3486, %v3542, 0
  %v3550 = vsel %vm3486, %v3544, 0
  %3552 = vmatpush.msra.mxu0 0.0
  %3553 = vmatpush.msra.mxu0 0.0
  %3554 = vmatpush.msra.mxu0 0.0
  %3555 = vmatpush.msra.mxu0 0.0
  %3556 = vmatpush.msra.mxu0 0.0
  %3557 = vmatpush.msra.mxu0 0.0
  %3558 = vmatpush.msra.mxu0 0.0
  %3559 = vmatpush.msra.mxu0 0.0
  %3560 = vmatpush.msra.mxu0 0.0
  %3561 = vmatpush.msra.mxu0 0.0
  %3562 = vmatpush.msra.mxu0 0.0
  %3563 = vmatpush.msra.mxu0 0.0
  %3564 = vmatpush.msra.mxu0 0.0
  %3565 = vmatpush.msra.mxu0 0.0
  %3566 = vmatpush.msra.mxu0 0.0
  %3567 = vmatpush.msra.mxu0 %v3546
  %3568 = vmatmul.f32.gmra.mxu0 %v3548
  %v3569 = vpop.f32.mrf.mxu0
  %v3570 = vadd.f32 0.0, %v3569
  %3571 = vmatmul.f32.gmra.mxu0 %v3550
  %v3572 = vpop.f32.mrf.mxu0
  %v3573 = vadd.f32 0.0, %v3572
  %3574 = vdwg.mxu0
  %v3575 = vadd.f32 %v3536, %v3570
  %v3576 = vadd.f32 %v3539, %v3573
  %3577 = vrot.lane.b32.xlu0 %v3474, 104
  %v3578 = vpop.permute.xlu0 %3577
  %3579 = vrot.lane.b32.xlu0 %v3475, 104
  %v3580 = vpop.permute.xlu0 %3579
  %3581 = vrot.lane.b32.xlu0 %v3472, 122
  %v3582 = vpop.permute.xlu0 %3581
  %v3584 = vsel %vm3486, %v3578, 0
  %v3586 = vsel %vm3486, %v3580, 0
  %3588 = vmatpush.msra.mxu0 0.0
  %3589 = vmatpush.msra.mxu0 0.0
  %3590 = vmatpush.msra.mxu0 0.0
  %3591 = vmatpush.msra.mxu0 0.0
  %3592 = vmatpush.msra.mxu0 0.0
  %3593 = vmatpush.msra.mxu0 0.0
  %3594 = vmatpush.msra.mxu0 0.0
  %3595 = vmatpush.msra.mxu0 0.0
  %3596 = vmatpush.msra.mxu0 0.0
  %3597 = vmatpush.msra.mxu0 0.0
  %3598 = vmatpush.msra.mxu0 0.0
  %3599 = vmatpush.msra.mxu0 0.0
  %3600 = vmatpush.msra.mxu0 0.0
  %3601 = vmatpush.msra.mxu0 0.0
  %3602 = vmatpush.msra.mxu0 0.0
  %3603 = vmatpush.msra.mxu0 %v3582
  %3604 = vmatmul.f32.gmra.mxu0 %v3584
  %v3605 = vpop.f32.mrf.mxu0
  %v3606 = vadd.f32 0.0, %v3605
  %3607 = vmatmul.f32.gmra.mxu0 %v3586
  %v3608 = vpop.f32.mrf.mxu0
  %v3609 = vadd.f32 0.0, %v3608
  %3610 = vdwg.mxu0
  %v3611 = vadd.f32 %v3575, %v3606
  %v3612 = vadd.f32 %v3576, %v3609
  %3613 = vrot.lane.b32.xlu0 %v3474, 96
  %v3614 = vpop.permute.xlu0 %3613
  %3615 = vrot.lane.b32.xlu0 %v3475, 96
  %v3616 = vpop.permute.xlu0 %3615
  %3617 = vrot.lane.b32.xlu0 %v3472, 121
  %v3618 = vpop.permute.xlu0 %3617
  %v3620 = vsel %vm3486, %v3614, 0
  %v3622 = vsel %vm3486, %v3616, 0
  %3624 = vmatpush.msra.mxu0 0.0
  %3625 = vmatpush.msra.mxu0 0.0
  %3626 = vmatpush.msra.mxu0 0.0
  %3627 = vmatpush.msra.mxu0 0.0
  %3628 = vmatpush.msra.mxu0 0.0
  %3629 = vmatpush.msra.mxu0 0.0
  %3630 = vmatpush.msra.mxu0 0.0
  %3631 = vmatpush.msra.mxu0 0.0
  %3632 = vmatpush.msra.mxu0 0.0
  %3633 = vmatpush.msra.mxu0 0.0
  %3634 = vmatpush.msra.mxu0 0.0
  %3635 = vmatpush.msra.mxu0 0.0
  %3636 = vmatpush.msra.mxu0 0.0
  %3637 = vmatpush.msra.mxu0 0.0
  %3638 = vmatpush.msra.mxu0 0.0
  %3639 = vmatpush.msra.mxu0 %v3618
  %3640 = vmatmul.f32.gmra.mxu0 %v3620
  %v3641 = vpop.f32.mrf.mxu0
  %v3642 = vadd.f32 0.0, %v3641
  %3643 = vmatmul.f32.gmra.mxu0 %v3622
  %v3644 = vpop.f32.mrf.mxu0
  %v3645 = vadd.f32 0.0, %v3644
  %3646 = vdwg.mxu0
  %v3647 = vadd.f32 %v3611, %v3642
  %v3648 = vadd.f32 %v3612, %v3645
  %3649 = vrot.lane.b32.xlu0 %v3474, 88
  %v3650 = vpop.permute.xlu0 %3649
  %3651 = vrot.lane.b32.xlu0 %v3475, 88
  %v3652 = vpop.permute.xlu0 %3651
  %3653 = vrot.lane.b32.xlu0 %v3472, 120
  %v3654 = vpop.permute.xlu0 %3653
  %v3656 = vsel %vm3486, %v3650, 0
  %v3658 = vsel %vm3486, %v3652, 0
  %3660 = vmatpush.msra.mxu0 0.0
  %3661 = vmatpush.msra.mxu0 0.0
  %3662 = vmatpush.msra.mxu0 0.0
  %3663 = vmatpush.msra.mxu0 0.0
  %3664 = vmatpush.msra.mxu0 0.0
  %3665 = vmatpush.msra.mxu0 0.0
  %3666 = vmatpush.msra.mxu0 0.0
  %3667 = vmatpush.msra.mxu0 0.0
  %3668 = vmatpush.msra.mxu0 0.0
  %3669 = vmatpush.msra.mxu0 0.0
  %3670 = vmatpush.msra.mxu0 0.0
  %3671 = vmatpush.msra.mxu0 0.0
  %3672 = vmatpush.msra.mxu0 0.0
  %3673 = vmatpush.msra.mxu0 0.0
  %3674 = vmatpush.msra.mxu0 0.0
  %3675 = vmatpush.msra.mxu0 %v3654
  %3676 = vmatmul.f32.gmra.mxu0 %v3656
  %v3677 = vpop.f32.mrf.mxu0
  %v3678 = vadd.f32 0.0, %v3677
  %3679 = vmatmul.f32.gmra.mxu0 %v3658
  %v3680 = vpop.f32.mrf.mxu0
  %v3681 = vadd.f32 0.0, %v3680
  %3682 = vdwg.mxu0
  %v3683 = vadd.f32 %v3647, %v3678
  %v3684 = vadd.f32 %v3648, %v3681
  %3685 = vrot.lane.b32.xlu0 %v3474, 80
  %v3686 = vpop.permute.xlu0 %3685
  %3687 = vrot.lane.b32.xlu0 %v3475, 80
  %v3688 = vpop.permute.xlu0 %3687
  %3689 = vrot.lane.b32.xlu0 %v3472, 116
  %v3690 = vpop.permute.xlu0 %3689
  %v3692 = vsel %vm3486, %v3686, 0
  %v3694 = vsel %vm3486, %v3688, 0
  %3696 = vmatpush.msra.mxu0 0.0
  %3697 = vmatpush.msra.mxu0 0.0
  %3698 = vmatpush.msra.mxu0 0.0
  %3699 = vmatpush.msra.mxu0 0.0
  %3700 = vmatpush.msra.mxu0 0.0
  %3701 = vmatpush.msra.mxu0 0.0
  %3702 = vmatpush.msra.mxu0 0.0
  %3703 = vmatpush.msra.mxu0 0.0
  %3704 = vmatpush.msra.mxu0 0.0
  %3705 = vmatpush.msra.mxu0 0.0
  %3706 = vmatpush.msra.mxu0 0.0
  %3707 = vmatpush.msra.mxu0 0.0
  %3708 = vmatpush.msra.mxu0 0.0
  %3709 = vmatpush.msra.mxu0 0.0
  %3710 = vmatpush.msra.mxu0 0.0
  %3711 = vmatpush.msra.mxu0 %v3690
  %3712 = vmatmul.f32.gmra.mxu0 %v3692
  %v3713 = vpop.f32.mrf.mxu0
  %v3714 = vadd.f32 0.0, %v3713
  %3715 = vmatmul.f32.gmra.mxu0 %v3694
  %v3716 = vpop.f32.mrf.mxu0
  %v3717 = vadd.f32 0.0, %v3716
  %3718 = vdwg.mxu0
  %v3719 = vadd.f32 %v3683, %v3714
  %v3720 = vadd.f32 %v3684, %v3717
  %3721 = vrot.lane.b32.xlu0 %v3474, 72
  %v3722 = vpop.permute.xlu0 %3721
  %3723 = vrot.lane.b32.xlu0 %v3475, 72
  %v3724 = vpop.permute.xlu0 %3723
  %3725 = vrot.lane.b32.xlu0 %v3472, 115
  %v3726 = vpop.permute.xlu0 %3725
  %v3728 = vsel %vm3486, %v3722, 0
  %v3730 = vsel %vm3486, %v3724, 0
  %3732 = vmatpush.msra.mxu0 0.0
  %3733 = vmatpush.msra.mxu0 0.0
  %3734 = vmatpush.msra.mxu0 0.0
  %3735 = vmatpush.msra.mxu0 0.0
  %3736 = vmatpush.msra.mxu0 0.0
  %3737 = vmatpush.msra.mxu0 0.0
  %3738 = vmatpush.msra.mxu0 0.0
  %3739 = vmatpush.msra.mxu0 0.0
  %3740 = vmatpush.msra.mxu0 0.0
  %3741 = vmatpush.msra.mxu0 0.0
  %3742 = vmatpush.msra.mxu0 0.0
  %3743 = vmatpush.msra.mxu0 0.0
  %3744 = vmatpush.msra.mxu0 0.0
  %3745 = vmatpush.msra.mxu0 0.0
  %3746 = vmatpush.msra.mxu0 0.0
  %3747 = vmatpush.msra.mxu0 %v3726
  %3748 = vmatmul.f32.gmra.mxu0 %v3728
  %v3749 = vpop.f32.mrf.mxu0
  %v3750 = vadd.f32 0.0, %v3749
  %3751 = vmatmul.f32.gmra.mxu0 %v3730
  %v3752 = vpop.f32.mrf.mxu0
  %v3753 = vadd.f32 0.0, %v3752
  %3754 = vdwg.mxu0
  %v3755 = vadd.f32 %v3719, %v3750
  %v3756 = vadd.f32 %v3720, %v3753
  %3757 = vrot.lane.b32.xlu0 %v3474, 64
  %v3758 = vpop.permute.xlu0 %3757
  %3759 = vrot.lane.b32.xlu0 %v3475, 64
  %v3760 = vpop.permute.xlu0 %3759
  %3761 = vrot.lane.b32.xlu0 %v3472, 114
  %v3762 = vpop.permute.xlu0 %3761
  %v3764 = vsel %vm3486, %v3758, 0
  %v3766 = vsel %vm3486, %v3760, 0
  %3768 = vmatpush.msra.mxu0 0.0
  %3769 = vmatpush.msra.mxu0 0.0
  %3770 = vmatpush.msra.mxu0 0.0
  %3771 = vmatpush.msra.mxu0 0.0
  %3772 = vmatpush.msra.mxu0 0.0
  %3773 = vmatpush.msra.mxu0 0.0
  %3774 = vmatpush.msra.mxu0 0.0
  %3775 = vmatpush.msra.mxu0 0.0
  %3776 = vmatpush.msra.mxu0 0.0
  %3777 = vmatpush.msra.mxu0 0.0
  %3778 = vmatpush.msra.mxu0 0.0
  %3779 = vmatpush.msra.mxu0 0.0
  %3780 = vmatpush.msra.mxu0 0.0
  %3781 = vmatpush.msra.mxu0 0.0
  %3782 = vmatpush.msra.mxu0 0.0
  %3783 = vmatpush.msra.mxu0 %v3762
  %3784 = vmatmul.f32.gmra.mxu0 %v3764
  %v3785 = vpop.f32.mrf.mxu0
  %v3786 = vadd.f32 0.0, %v3785
  %3787 = vmatmul.f32.gmra.mxu0 %v3766
  %v3788 = vpop.f32.mrf.mxu0
  %v3789 = vadd.f32 0.0, %v3788
  %3790 = vdwg.mxu0
  %v3791 = vadd.f32 %v3755, %v3786
  %v3792 = vadd.f32 %v3756, %v3789
  %v3793 = vld [vmem:[%s8] sm:$0xff]
  %v3794 = vld [vmem:[%s8 + $0x8] sm:$0xff]
  %3796 = vset.pattern.permute.xlu0 0
  %3797 = vperm.xlu0 %3796, %v3793
  %v3798 = vpop.permute.xlu0 %3797
  %3801 = vset.pattern.permute.xlu0 0
  %3802 = vperm.xlu0 %3801, %v3794
  %v3803 = vpop.permute.xlu0 %3802
  %v3805 = vadd.f32 %v3791, %v3798
  %v3806 = vadd.f32 %v3792, %v3803
  %v3807 = vmax.f32 %v3805, 0.0
  %v3808 = vmax.f32 %v3806, 0.0
  %v3809 = vld [vmem:[%s9] sm:$0xff]
  %v3810 = vld [vmem:[%s9 + $0x8] sm:$0xff]
  %v3811 = vld [vmem:[%s9 + $0x10] sm:$0xff]
  %v3812 = vld [vmem:[%s9 + $0x18] sm:$0xff]
  %v3813 = vld [vmem:[%s9 + $0x20] sm:$0xff]
  %v3814 = vld [vmem:[%s9 + $0x28] sm:$0xff]
  %v3815 = vld [vmem:[%s9 + $0x30] sm:$0xff]
  %v3816 = vld [vmem:[%s9 + $0x38] sm:$0x3]
  %vm3817 = vcmask 474112
  %v3819 = vsel %vm3817, %v3807, 0
  %v3822 = vsel %vm3817, %v3808, 0
  %v3825 = vsel %vm1645, %v3816, 0
  %3827 = vmatpush.msra.mxu0 0.0
  %3828 = vmatpush.msra.mxu0 0.0
  %3829 = vmatpush.msra.mxu0 0.0
  %3830 = vmatpush.msra.mxu0 0.0
  %3831 = vmatpush.msra.mxu0 0.0
  %3832 = vmatpush.msra.mxu0 0.0
  %3833 = vmatpush.msra.mxu0 0.0
  %3834 = vmatpush.msra.mxu0 0.0
  %3835 = vmatpush.msra.mxu0 %v3825
  %3836 = vmatpush.msra.mxu0 %v3815
  %3837 = vmatpush.msra.mxu0 %v3814
  %3838 = vmatpush.msra.mxu0 %v3813
  %3839 = vmatpush.msra.mxu0 %v3812
  %3840 = vmatpush.msra.mxu0 %v3811
  %3841 = vmatpush.msra.mxu0 %v3810
  %3842 = vmatpush.msra.mxu0 %v3809
  %3843 = vmatmul.f32.gmra.mxu0 %v3819
  %v3844 = vpop.f32.mrf.mxu0
  %v3845 = vadd.f32 0.0, %v3844
  %3846 = vmatmul.f32.gmra.mxu0 %v3822
  %v3847 = vpop.f32.mrf.mxu0
  %v3848 = vadd.f32 0.0, %v3847
  %3849 = vdwg.mxu0
  %v3850 = vld [vmem:[%s10] sm:$0xff]
  %v3851 = vld [vmem:[%s10 + $0x8] sm:$0xff]
  %v3852 = vmul.f32 %v3845, %v3850
  %v3853 = vmul.f32 %v3848, %v3851
  %v3854 = vadd.f32 %v3852, %v3853
  %v3855 = vrot.slane %v3854, 4
  %v3856 = vadd.f32 %v3854, %v3855
  %v3857 = vrot.slane %v3856, 2
  %v3858 = vadd.f32 %v3856, %v3857
  %v3859 = vrot.slane %v3858, 1
  %v3860 = vadd.f32 %v3858, %v3859
  %v3861 = vld [vmem:[%s11] sm:$0xff]
  %v3862 = vld [vmem:[%s11 + $0x8] sm:$0xff]
  %v3863 = vld [vmem:[%s11 + $0x10] sm:$0xff]
  %v3864 = vld [vmem:[%s11 + $0x18] sm:$0xff]
  %v3865 = vld [vmem:[%s11 + $0x20] sm:$0xff]
  %v3866 = vld [vmem:[%s11 + $0x28] sm:$0xff]
  %v3867 = vld [vmem:[%s11 + $0x30] sm:$0xff]
  %v3868 = vld [vmem:[%s11 + $0x38] sm:$0xff]
  %v3869 = vld [vmem:[%s11 + $0x40] sm:$0xff]
  %v3870 = vld [vmem:[%s11 + $0x48] sm:$0xff]
  %v3871 = vld [vmem:[%s11 + $0x50] sm:$0xff]
  %v3872 = vld [vmem:[%s11 + $0x58] sm:$0xff]
  %v3873 = vld [vmem:[%s11 + $0x60] sm:$0xff]
  %v3874 = vld [vmem:[%s11 + $0x68] sm:$0xff]
  %v3875 = vld [vmem:[%s11 + $0x70] sm:$0xff]
  %v3876 = vld [vmem:[%s11 + $0x78] sm:$0xff]
  %v3877 = vld [vmem:[%s12] sm:$0x1]
  %3878 = vmatpush.msra.mxu0 %v3876
  %3879 = vmatpush.msra.mxu0 %v3875
  %3880 = vmatpush.msra.mxu0 %v3874
  %3881 = vmatpush.msra.mxu0 %v3873
  %3882 = vmatpush.msra.mxu0 %v3872
  %3883 = vmatpush.msra.mxu0 %v3871
  %3884 = vmatpush.msra.mxu0 %v3870
  %3885 = vmatpush.msra.mxu0 %v3869
  %3886 = vmatpush.msra.mxu0 %v3868
  %3887 = vmatpush.msra.mxu0 %v3867
  %3888 = vmatpush.msra.mxu0 %v3866
  %3889 = vmatpush.msra.mxu0 %v3865
  %3890 = vmatpush.msra.mxu0 %v3864
  %3891 = vmatpush.msra.mxu0 %v3863
  %3892 = vmatpush.msra.mxu0 %v3862
  %3893 = vmatpush.msra.mxu0 %v3861
  %3894 = vmatmul.f32.gmra.mxu0 %v3860
  %v3895 = vpop.f32.mrf.mxu0
  %v3896 = vadd.f32 %v3877, %v3895
  %3897 = vdwg.mxu0
  %v3898 = vmax.f32 %v3896, 0.0
  %v3899 = vld [vmem:[%s13] sm:$0xff]
  %v3900 = vld [vmem:[%s13 + $0x8] sm:$0xff]
  %v3901 = vld [vmem:[%s14] sm:$0x1]
  %vm3902 = vcmask 130048
  %v3904 = vsel %vm3902, %v3898, 0
  %3906 = vmatpush.msra.mxu0 0.0
  %3907 = vmatpush.msra.mxu0 0.0
  %3908 = vmatpush.msra.mxu0 0.0
  %3909 = vmatpush.msra.mxu0 0.0
  %3910 = vmatpush.msra.mxu0 0.0
  %3911 = vmatpush.msra.mxu0 0.0
  %3912 = vmatpush.msra.mxu0 0.0
  %3913 = vmatpush.msra.mxu0 0.0
  %3914 = vmatpush.msra.mxu0 0.0
  %3915 = vmatpush.msra.mxu0 0.0
  %3916 = vmatpush.msra.mxu0 0.0
  %3917 = vmatpush.msra.mxu0 0.0
  %3918 = vmatpush.msra.mxu0 0.0
  %3919 = vmatpush.msra.mxu0 0.0
  %3920 = vmatpush.msra.mxu0 %v3900
  %3921 = vmatpush.msra.mxu0 %v3899
  %3922 = vmatmul.f32.gmra.mxu0 %v3904
  %v3923 = vpop.f32.mrf.mxu0
  %v3924 = vadd.f32 %v3901, %v3923
  %3925 = vdwg.mxu0
  %v3926 = vmax.f32 %v3924, 0.0
  %v3927 = vld [vmem:[%s15] sm:$0xff]
  %v3928 = vld [vmem:[%s16] sm:$0x1]
  %v3930 = vsel %vm3486, %v3926, 0
  %3932 = vmatpush.msra.mxu0 0.0
  %3933 = vmatpush.msra.mxu0 0.0
  %3934 = vmatpush.msra.mxu0 0.0
  %3935 = vmatpush.msra.mxu0 0.0
  %3936 = vmatpush.msra.mxu0 0.0
  %3937 = vmatpush.msra.mxu0 0.0
  %3938 = vmatpush.msra.mxu0 0.0
  %3939 = vmatpush.msra.mxu0 0.0
  %3940 = vmatpush.msra.mxu0 0.0
  %3941 = vmatpush.msra.mxu0 0.0
  %3942 = vmatpush.msra.mxu0 0.0
  %3943 = vmatpush.msra.mxu0 0.0
  %3944 = vmatpush.msra.mxu0 0.0
  %3945 = vmatpush.msra.mxu0 0.0
  %3946 = vmatpush.msra.mxu0 0.0
  %3947 = vmatpush.msra.mxu0 %v3927
  %3948 = vmatmul.f32.gmra.mxu0 %v3930
  %v3949 = vpop.f32.mrf.mxu0
  %v3950 = vadd.f32 %v3928, %v3949
  %3951 = vdwg.mxu0
  %v3952 = vmax.f32 %v3950, 0.0
  %v3953 = vld [vmem:[%s17] sm:$0xff]
  %v3954 = vld [vmem:[%s17 + $0x8] sm:$0xff]
  %v3955 = vld [vmem:[%s18] sm:$0x1]
  %v3957 = vsel %vm3902, %v3952, 0
  %3959 = vmatpush.msra.mxu0 0.0
  %3960 = vmatpush.msra.mxu0 0.0
  %3961 = vmatpush.msra.mxu0 0.0
  %3962 = vmatpush.msra.mxu0 0.0
  %3963 = vmatpush.msra.mxu0 0.0
  %3964 = vmatpush.msra.mxu0 0.0
  %3965 = vmatpush.msra.mxu0 0.0
  %3966 = vmatpush.msra.mxu0 0.0
  %3967 = vmatpush.msra.mxu0 0.0
  %3968 = vmatpush.msra.mxu0 0.0
  %3969 = vmatpush.msra.mxu0 0.0
  %3970 = vmatpush.msra.mxu0 0.0
  %3971 = vmatpush.msra.mxu0 0.0
  %3972 = vmatpush.msra.mxu0 0.0
  %3973 = vmatpush.msra.mxu0 %v3954
  %3974 = vmatpush.msra.mxu0 %v3953
  %3975 = vmatmul.f32.gmra.mxu0 %v3957
  %v3976 = vpop.f32.mrf.mxu0
  %v3977 = vadd.f32 %v3955, %v3976
  %3978 = vdwg.mxu0
  %v3979 = vmax.f32 %v3977, 0.0
  %v3980 = vperm.slane %v3979, 0
  %v3981 = vmul.f32 %v3980, %v3850
  %v3982 = vmul.f32 %v3980, %v3851
  %v3983 = vld [vmem:[%s19] sm:$0xff]
  %v3984 = vld [vmem:[%s19 + $0x8] sm:$0xff]
  %v3985 = vld [vmem:[%s19 + $0x10] sm:$0xff]
  %v3986 = vld [vmem:[%s19 + $0x18] sm:$0xff]
  %v3987 = vld [vmem:[%s19 + $0x20] sm:$0xff]
  %v3988 = vld [vmem:[%s19 + $0x28] sm:$0xff]
  %v3989 = vld [vmem:[%s19 + $0x30] sm:$0xff]
  %v3990 = vld [vmem:[%s19 + $0x38] sm:$0xff]
  %v3991 = vld [vmem:[%s19 + $0x40] sm:$0xff]
  %v3992 = vld [vmem:[%s19 + $0x48] sm:$0xff]
  %v3993 = vld [vmem:[%s19 + $0x50] sm:$0xff]
  %v3994 = vld [vmem:[%s19 + $0x58] sm:$0xff]
  %v3995 = vld [vmem:[%s19 + $0x60] sm:$0xff]
  %v3996 = vld [vmem:[%s19 + $0x68] sm:$0xff]
  %v3997 = vld [vmem:[%s19 + $0x70] sm:$0xff]
  %v3998 = vld [vmem:[%s19 + $0x78] sm:$0xff]
  %3999 = vmatpush.msra.mxu0 %v3998
  %4000 = vmatpush.msra.mxu0 %v3997
  %4001 = vmatpush.msra.mxu0 %v3996
  %4002 = vmatpush.msra.mxu0 %v3995
  %4003 = vmatpush.msra.mxu0 %v3994
  %4004 = vmatpush.msra.mxu0 %v3993
  %4005 = vmatpush.msra.mxu0 %v3992
  %4006 = vmatpush.msra.mxu0 %v3991
  %4007 = vmatpush.msra.mxu0 %v3990
  %4008 = vmatpush.msra.mxu0 %v3989
  %4009 = vmatpush.msra.mxu0 %v3988
  %4010 = vmatpush.msra.mxu0 %v3987
  %4011 = vmatpush.msra.mxu0 %v3986
  %4012 = vmatpush.msra.mxu0 %v3985
  %4013 = vmatpush.msra.mxu0 %v3984
  %4014 = vmatpush.msra.mxu0 %v3983
  %4015 = vmatmul.f32.gmra.mxu0 %v3981
  %v4016 = vpop.f32.mrf.mxu0
  %v4017 = vadd.f32 0.0, %v4016
  %4018 = vmatmul.f32.gmra.mxu0 %v3982
  %v4019 = vpop.f32.mrf.mxu0
  %v4020 = vadd.f32 0.0, %v4019
  %4021 = vdwg.mxu0
  %v4022 = vld [vmem:[%s20] sm:$0xff]
  %4024 = vrot.lane.b32.xlu0 %v4022, 112
  %v4025 = vpop.permute.xlu0 %4024
  %4028 = vrot.lane.b32.xlu0 %v4017, 127
  %v4029 = vpop.permute.xlu0 %4028
  %4030 = vrot.lane.b32.xlu0 %v4020, 127
  %v4031 = vpop.permute.xlu0 %4030
  %v4034 = vsel %vm3902, %v4025, 0
  %4036 = vmatpush.msra.mxu0 0.0
  %4037 = vmatpush.msra.mxu0 0.0
  %4038 = vmatpush.msra.mxu0 0.0
  %4039 = vmatpush.msra.mxu0 0.0
  %4040 = vmatpush.msra.mxu0 0.0
  %4041 = vmatpush.msra.mxu0 0.0
  %4042 = vmatpush.msra.mxu0 0.0
  %4043 = vmatpush.msra.mxu0 0.0
  %4044 = vmatpush.msra.mxu0 0.0
  %4045 = vmatpush.msra.mxu0 0.0
  %4046 = vmatpush.msra.mxu0 0.0
  %4047 = vmatpush.msra.mxu0 0.0
  %4048 = vmatpush.msra.mxu0 0.0
  %4049 = vmatpush.msra.mxu0 0.0
  %4050 = vmatpush.msra.mxu0 %v4031
  %4051 = vmatpush.msra.mxu0 %v4029
  %4052 = vmatmul.f32.gmra.mxu0 %v4034
  %v4053 = vpop.f32.mrf.mxu0
  %v4054 = vadd.f32 0.0, %v4053
  %4055 = vdwg.mxu0
  %v4056 = vsel %vm3902, %v4022, 0
  %4058 = vmatpush.msra.mxu0 0.0
  %4059 = vmatpush.msra.mxu0 0.0
  %4060 = vmatpush.msra.mxu0 0.0
  %4061 = vmatpush.msra.mxu0 0.0
  %4062 = vmatpush.msra.mxu0 0.0
  %4063 = vmatpush.msra.mxu0 0.0
  %4064 = vmatpush.msra.mxu0 0.0
  %4065 = vmatpush.msra.mxu0 0.0
  %4066 = vmatpush.msra.mxu0 0.0
  %4067 = vmatpush.msra.mxu0 0.0
  %4068 = vmatpush.msra.mxu0 0.0
  %4069 = vmatpush.msra.mxu0 0.0
  %4070 = vmatpush.msra.mxu0 0.0
  %4071 = vmatpush.msra.mxu0 0.0
  %4072 = vmatpush.msra.mxu0 %v4020
  %4073 = vmatpush.msra.mxu0 %v4017
  %4074 = vmatmul.f32.gmra.mxu0 %v4056
  %v4075 = vpop.f32.mrf.mxu0
  %v4076 = vadd.f32 %v4054, %v4075
  %4077 = vdwg.mxu0
  %4078 = vrot.lane.b32.xlu0 %v4022, 96
  %v4079 = vpop.permute.xlu0 %4078
  %4080 = vrot.lane.b32.xlu0 %v4017, 126
  %v4081 = vpop.permute.xlu0 %4080
  %4082 = vrot.lane.b32.xlu0 %v4020, 126
  %v4083 = vpop.permute.xlu0 %4082
  %v4086 = vsel %vm3902, %v4079, 0
  %4088 = vmatpush.msra.mxu0 0.0
  %4089 = vmatpush.msra.mxu0 0.0
  %4090 = vmatpush.msra.mxu0 0.0
  %4091 = vmatpush.msra.mxu0 0.0
  %4092 = vmatpush.msra.mxu0 0.0
  %4093 = vmatpush.msra.mxu0 0.0
  %4094 = vmatpush.msra.mxu0 0.0
  %4095 = vmatpush.msra.mxu0 0.0
  %4096 = vmatpush.msra.mxu0 0.0
  %4097 = vmatpush.msra.mxu0 0.0
  %4098 = vmatpush.msra.mxu0 0.0
  %4099 = vmatpush.msra.mxu0 0.0
  %4100 = vmatpush.msra.mxu0 0.0
  %4101 = vmatpush.msra.mxu0 0.0
  %4102 = vmatpush.msra.mxu0 %v4083
  %4103 = vmatpush.msra.mxu0 %v4081
  %4104 = vmatmul.f32.gmra.mxu0 %v4086
  %v4105 = vpop.f32.mrf.mxu0
  %v4106 = vadd.f32 0.0, %v4105
  %4107 = vdwg.mxu0
  %v4108 = vadd.f32 %v4076, %v4106
  %4109 = vrot.lane.b32.xlu0 %v4022, 80
  %v4110 = vpop.permute.xlu0 %4109
  %4111 = vrot.lane.b32.xlu0 %v4017, 122
  %v4112 = vpop.permute.xlu0 %4111
  %4113 = vrot.lane.b32.xlu0 %v4020, 122
  %v4114 = vpop.permute.xlu0 %4113
  %v4117 = vsel %vm3902, %v4110, 0
  %4119 = vmatpush.msra.mxu0 0.0
  %4120 = vmatpush.msra.mxu0 0.0
  %4121 = vmatpush.msra.mxu0 0.0
  %4122 = vmatpush.msra.mxu0 0.0
  %4123 = vmatpush.msra.mxu0 0.0
  %4124 = vmatpush.msra.mxu0 0.0
  %4125 = vmatpush.msra.mxu0 0.0
  %4126 = vmatpush.msra.mxu0 0.0
  %4127 = vmatpush.msra.mxu0 0.0
  %4128 = vmatpush.msra.mxu0 0.0
  %4129 = vmatpush.msra.mxu0 0.0
  %4130 = vmatpush.msra.mxu0 0.0
  %4131 = vmatpush.msra.mxu0 0.0
  %4132 = vmatpush.msra.mxu0 0.0
  %4133 = vmatpush.msra.mxu0 %v4114
  %4134 = vmatpush.msra.mxu0 %v4112
  %4135 = vmatmul.f32.gmra.mxu0 %v4117
  %v4136 = vpop.f32.mrf.mxu0
  %v4137 = vadd.f32 0.0, %v4136
  %4138 = vdwg.mxu0
  %v4139 = vadd.f32 %v4108, %v4137
  %4140 = vrot.lane.b32.xlu0 %v4022, 64
  %v4141 = vpop.permute.xlu0 %4140
  %4142 = vrot.lane.b32.xlu0 %v4017, 121
  %v4143 = vpop.permute.xlu0 %4142
  %4144 = vrot.lane.b32.xlu0 %v4020, 121
  %v4145 = vpop.permute.xlu0 %4144
  %v4148 = vsel %vm3902, %v4141, 0
  %4150 = vmatpush.msra.mxu0 0.0
  %4151 = vmatpush.msra.mxu0 0.0
  %4152 = vmatpush.msra.mxu0 0.0
  %4153 = vmatpush.msra.mxu0 0.0
  %4154 = vmatpush.msra.mxu0 0.0
  %4155 = vmatpush.msra.mxu0 0.0
  %4156 = vmatpush.msra.mxu0 0.0
  %4157 = vmatpush.msra.mxu0 0.0
  %4158 = vmatpush.msra.mxu0 0.0
  %4159 = vmatpush.msra.mxu0 0.0
  %4160 = vmatpush.msra.mxu0 0.0
  %4161 = vmatpush.msra.mxu0 0.0
  %4162 = vmatpush.msra.mxu0 0.0
  %4163 = vmatpush.msra.mxu0 0.0
  %4164 = vmatpush.msra.mxu0 %v4145
  %4165 = vmatpush.msra.mxu0 %v4143
  %4166 = vmatmul.f32.gmra.mxu0 %v4148
  %v4167 = vpop.f32.mrf.mxu0
  %v4168 = vadd.f32 0.0, %v4167
  %4169 = vdwg.mxu0
  %v4170 = vadd.f32 %v4139, %v4168
  %4171 = vrot.lane.b32.xlu0 %v4022, 48
  %v4172 = vpop.permute.xlu0 %4171
  %4173 = vrot.lane.b32.xlu0 %v4017, 120
  %v4174 = vpop.permute.xlu0 %4173
  %4175 = vrot.lane.b32.xlu0 %v4020, 120
  %v4176 = vpop.permute.xlu0 %4175
  %v4179 = vsel %vm3902, %v4172, 0
  %4181 = vmatpush.msra.mxu0 0.0
  %4182 = vmatpush.msra.mxu0 0.0
  %4183 = vmatpush.msra.mxu0 0.0
  %4184 = vmatpush.msra.mxu0 0.0
  %4185 = vmatpush.msra.mxu0 0.0
  %4186 = vmatpush.msra.mxu0 0.0
  %4187 = vmatpush.msra.mxu0 0.0
  %4188 = vmatpush.msra.mxu0 0.0
  %4189 = vmatpush.msra.mxu0 0.0
  %4190 = vmatpush.msra.mxu0 0.0
  %4191 = vmatpush.msra.mxu0 0.0
  %4192 = vmatpush.msra.mxu0 0.0
  %4193 = vmatpush.msra.mxu0 0.0
  %4194 = vmatpush.msra.mxu0 0.0
  %4195 = vmatpush.msra.mxu0 %v4176
  %4196 = vmatpush.msra.mxu0 %v4174
  %4197 = vmatmul.f32.gmra.mxu0 %v4179
  %v4198 = vpop.f32.mrf.mxu0
  %v4199 = vadd.f32 0.0, %v4198
  %4200 = vdwg.mxu0
  %v4201 = vadd.f32 %v4170, %v4199
  %4202 = vrot.lane.b32.xlu0 %v4022, 32
  %v4203 = vpop.permute.xlu0 %4202
  %4204 = vrot.lane.b32.xlu0 %v4017, 116
  %v4205 = vpop.permute.xlu0 %4204
  %4206 = vrot.lane.b32.xlu0 %v4020, 116
  %v4207 = vpop.permute.xlu0 %4206
  %v4210 = vsel %vm3902, %v4203, 0
  %4212 = vmatpush.msra.mxu0 0.0
  %4213 = vmatpush.msra.mxu0 0.0
  %4214 = vmatpush.msra.mxu0 0.0
  %4215 = vmatpush.msra.mxu0 0.0
  %4216 = vmatpush.msra.mxu0 0.0
  %4217 = vmatpush.msra.mxu0 0.0
  %4218 = vmatpush.msra.mxu0 0.0
  %4219 = vmatpush.msra.mxu0 0.0
  %4220 = vmatpush.msra.mxu0 0.0
  %4221 = vmatpush.msra.mxu0 0.0
  %4222 = vmatpush.msra.mxu0 0.0
  %4223 = vmatpush.msra.mxu0 0.0
  %4224 = vmatpush.msra.mxu0 0.0
  %4225 = vmatpush.msra.mxu0 0.0
  %4226 = vmatpush.msra.mxu0 %v4207
  %4227 = vmatpush.msra.mxu0 %v4205
  %4228 = vmatmul.f32.gmra.mxu0 %v4210
  %v4229 = vpop.f32.mrf.mxu0
  %v4230 = vadd.f32 0.0, %v4229
  %4231 = vdwg.mxu0
  %v4232 = vadd.f32 %v4201, %v4230
  %4233 = vrot.lane.b32.xlu0 %v4022, 16
  %v4234 = vpop.permute.xlu0 %4233
  %4235 = vrot.lane.b32.xlu0 %v4017, 115
  %v4236 = vpop.permute.xlu0 %4235
  %4237 = vrot.lane.b32.xlu0 %v4020, 115
  %v4238 = vpop.permute.xlu0 %4237
  %v4241 = vsel %vm3902, %v4234, 0
  %4243 = vmatpush.msra.mxu0 0.0
  %4244 = vmatpush.msra.mxu0 0.0
  %4245 = vmatpush.msra.mxu0 0.0
  %4246 = vmatpush.msra.mxu0 0.0
  %4247 = vmatpush.msra.mxu0 0.0
  %4248 = vmatpush.msra.mxu0 0.0
  %4249 = vmatpush.msra.mxu0 0.0
  %4250 = vmatpush.msra.mxu0 0.0
  %4251 = vmatpush.msra.mxu0 0.0
  %4252 = vmatpush.msra.mxu0 0.0
  %4253 = vmatpush.msra.mxu0 0.0
  %4254 = vmatpush.msra.mxu0 0.0
  %4255 = vmatpush.msra.mxu0 0.0
  %4256 = vmatpush.msra.mxu0 0.0
  %4257 = vmatpush.msra.mxu0 %v4238
  %4258 = vmatpush.msra.mxu0 %v4236
  %4259 = vmatmul.f32.gmra.mxu0 %v4241
  %v4260 = vpop.f32.mrf.mxu0
  %v4261 = vadd.f32 0.0, %v4260
  %4262 = vdwg.mxu0
  %v4263 = vadd.f32 %v4232, %v4261
  %v4264 = vld [vmem:[%s20 + $0x8] sm:$0xff]
  %4265 = vrot.lane.b32.xlu0 %v4017, 114
  %v4266 = vpop.permute.xlu0 %4265
  %4267 = vrot.lane.b32.xlu0 %v4020, 114
  %v4268 = vpop.permute.xlu0 %4267
  %v4272 = vsel %vm3902, %v4264, 0
  %4274 = vmatpush.msra.mxu0 0.0
  %4275 = vmatpush.msra.mxu0 0.0
  %4276 = vmatpush.msra.mxu0 0.0
  %4277 = vmatpush.msra.mxu0 0.0
  %4278 = vmatpush.msra.mxu0 0.0
  %4279 = vmatpush.msra.mxu0 0.0
  %4280 = vmatpush.msra.mxu0 0.0
  %4281 = vmatpush.msra.mxu0 0.0
  %4282 = vmatpush.msra.mxu0 0.0
  %4283 = vmatpush.msra.mxu0 0.0
  %4284 = vmatpush.msra.mxu0 0.0
  %4285 = vmatpush.msra.mxu0 0.0
  %4286 = vmatpush.msra.mxu0 0.0
  %4287 = vmatpush.msra.mxu0 0.0
  %4288 = vmatpush.msra.mxu0 %v4268
  %4289 = vmatpush.msra.mxu0 %v4266
  %4290 = vmatmul.f32.gmra.mxu0 %v4272
  %v4291 = vpop.f32.mrf.mxu0
  %v4292 = vadd.f32 0.0, %v4291
  %4293 = vdwg.mxu0
  %v4294 = vadd.f32 %v4263, %v4292
  %v4295 = vld [vmem:[%s21] sm:$0xff]
  %4297 = vset.pattern.permute.xlu0 0
  %4298 = vperm.xlu0 %4297, %v4295
  %v4299 = vpop.permute.xlu0 %4298
  %v4301 = vadd.f32 %v4294, %v4299
  %v4302 = vmax.f32 %v4301, 0.0
  %v4303 = vld [vmem:[%s22] sm:$0xff]
  %v4304 = vld [vmem:[%s22 + $0x8] sm:$0xff]
  %v4305 = vld [vmem:[%s22 + $0x10] sm:$0xff]
  %v4306 = vld [vmem:[%s22 + $0x18] sm:$0xff]
  %v4307 = vld [vmem:[%s22 + $0x20] sm:$0xff]
  %v4308 = vld [vmem:[%s22 + $0x28] sm:$0xff]
  %v4309 = vld [vmem:[%s22 + $0x30] sm:$0xff]
  %v4310 = vld [vmem:[%s22 + $0x38] sm:$0xff]
  %v4311 = vld [vmem:[%s22 + $0x40] sm:$0xff]
  %v4312 = vld [vmem:[%s22 + $0x48] sm:$0xff]
  %v4313 = vld [vmem:[%s22 + $0x50] sm:$0xff]
  %v4314 = vld [vmem:[%s22 + $0x58] sm:$0xff]
  %v4315 = vld [vmem:[%s22 + $0x60] sm:$0xff]
  %v4316 = vld [vmem:[%s22 + $0x68] sm:$0xff]
  %v4317 = vld [vmem:[%s22 + $0x70] sm:$0xff]
  %v4318 = vld [vmem:[%s22 + $0x78] sm:$0xff]
  %v4319 = vld [vmem:[%s22 + $0x80] sm:$0xff]
  %v4320 = vld [vmem:[%s22 + $0x88] sm:$0xff]
  %v4321 = vld [vmem:[%s22 + $0x90] sm:$0xff]
  %v4322 = vld [vmem:[%s22 + $0x98] sm:$0xff]
  %v4323 = vld [vmem:[%s22 + $0xa0] sm:$0xff]
  %v4324 = vld [vmem:[%s22 + $0xa8] sm:$0x3]
  %v4325 = vld [vmem:[%s22 + $0xb0] sm:$0x3]
  %v4326 = vld [vmem:[%s22 + $0xb8] sm:$0x3]
  %v4328 = vsel %vm3817, %v4302, 0
  %v4331 = vsel %vm1645, %v4324, 0
  %v4334 = vsel %vm1645, %v4325, 0
  %v4337 = vsel %vm1645, %v4326, 0
  %4339 = vmatpush.msra.mxu0 0.0
  %4340 = vmatpush.msra.mxu0 0.0
  %4341 = vmatpush.msra.mxu0 0.0
  %4342 = vmatpush.msra.mxu0 0.0
  %4343 = vmatpush.msra.mxu0 0.0
  %4344 = vmatpush.msra.mxu0 0.0
  %4345 = vmatpush.msra.mxu0 0.0
  %4346 = vmatpush.msra.mxu0 0.0
  %4347 = vmatpush.msra.mxu0 %v4331
  %4348 = vmatpush.msra.mxu0 %v4321
  %4349 = vmatpush.msra.mxu0 %v4318
  %4350 = vmatpush.msra.mxu0 %v4315
  %4351 = vmatpush.msra.mxu0 %v4312
  %4352 = vmatpush.msra.mxu0 %v4309
  %4353 = vmatpush.msra.mxu0 %v4306
  %4354 = vmatpush.msra.mxu0 %v4303
  %4355 = vmatmul.f32.gmra.mxu0 %v4328
  %v4356 = vpop.f32.mrf.mxu0
  %v4357 = vadd.f32 0.0, %v4356
  %4358 = vdwg.mxu0
  %4359 = vmatpush.msra.mxu0 0.0
  %4360 = vmatpush.msra.mxu0 0.0
  %4361 = vmatpush.msra.mxu0 0.0
  %4362 = vmatpush.msra.mxu0 0.0
  %4363 = vmatpush.msra.mxu0 0.0
  %4364 = vmatpush.msra.mxu0 0.0
  %4365 = vmatpush.msra.mxu0 0.0
  %4366 = vmatpush.msra.mxu0 0.0
  %4367 = vmatpush.msra.mxu0 %v4334
  %4368 = vmatpush.msra.mxu0 %v4322
  %4369 = vmatpush.msra.mxu0 %v4319
  %4370 = vmatpush.msra.mxu0 %v4316
  %4371 = vmatpush.msra.mxu0 %v4313
  %4372 = vmatpush.msra.mxu0 %v4310
  %4373 = vmatpush.msra.mxu0 %v4307
  %4374 = vmatpush.msra.mxu0 %v4304
  %4375 = vmatmul.f32.gmra.mxu0 %v4328
  %v4376 = vpop.f32.mrf.mxu0
  %v4377 = vadd.f32 0.0, %v4376
  %4378 = vdwg.mxu0
  %4379 = vmatpush.msra.mxu0 0.0
  %4380 = vmatpush.msra.mxu0 0.0
  %4381 = vmatpush.msra.mxu0 0.0
  %4382 = vmatpush.msra.mxu0 0.0
  %4383 = vmatpush.msra.mxu0 0.0
  %4384 = vmatpush.msra.mxu0 0.0
  %4385 = vmatpush.msra.mxu0 0.0
  %4386 = vmatpush.msra.mxu0 0.0
  %4387 = vmatpush.msra.mxu0 %v4337
  %4388 = vmatpush.msra.mxu0 %v4323
  %4389 = vmatpush.msra.mxu0 %v4320
  %4390 = vmatpush.msra.mxu0 %v4317
  %4391 = vmatpush.msra.mxu0 %v4314
  %4392 = vmatpush.msra.mxu0 %v4311
  %4393 = vmatpush.msra.mxu0 %v4308
  %4394 = vmatpush.msra.mxu0 %v4305
  %4395 = vmatmul.f32.gmra.mxu0 %v4328
  %v4396 = vpop.f32.mrf.mxu0
  %v4397 = vadd.f32 0.0, %v4396
  %4398 = vdwg.mxu0
  %v4399 = vld [vmem:[%s23] sm:$0xf]
  %4401 = vst [vmem:[#allocation1] ss:$2 sm:$0xff] %v4399
  %v4402 = vld.sshfl [vmem:[#allocation1] sm:$0xff pattern:$0x75316420]
  %4403 = vrot.lane.b32.xlu0 %v4402, 120
  %v4404 = vpop.permute.xlu0 %4403
  %4407 = vrot.lane.b32.xlu0 %v4357, 127
  %v4408 = vpop.permute.xlu0 %4407
  %4409 = vrot.lane.b32.xlu0 %v4377, 127
  %v4410 = vpop.permute.xlu0 %4409
  %v4411 = vsel %vm119, %v4408, %v4410
  %v4414 = vsel %vm3486, %v4404, 0
  %4416 = vmatpush.msra.mxu0 0.0
  %4417 = vmatpush.msra.mxu0 0.0
  %4418 = vmatpush.msra.mxu0 0.0
  %4419 = vmatpush.msra.mxu0 0.0
  %4420 = vmatpush.msra.mxu0 0.0
  %4421 = vmatpush.msra.mxu0 0.0
  %4422 = vmatpush.msra.mxu0 0.0
  %4423 = vmatpush.msra.mxu0 0.0
  %4424 = vmatpush.msra.mxu0 0.0
  %4425 = vmatpush.msra.mxu0 0.0
  %4426 = vmatpush.msra.mxu0 0.0
  %4427 = vmatpush.msra.mxu0 0.0
  %4428 = vmatpush.msra.mxu0 0.0
  %4429 = vmatpush.msra.mxu0 0.0
  %4430 = vmatpush.msra.mxu0 0.0
  %4431 = vmatpush.msra.mxu0 %v4411
  %4432 = vmatmul.f32.gmra.mxu0 %v4414
  %v4433 = vpop.f32.mrf.mxu0
  %v4434 = vadd.f32 0.0, %v4433
  %4435 = vdwg.mxu0
  %4436 = vmatpush.msra.mxu0 0.0
  %4437 = vmatpush.msra.mxu0 0.0
  %4438 = vmatpush.msra.mxu0 0.0
  %4439 = vmatpush.msra.mxu0 0.0
  %4440 = vmatpush.msra.mxu0 0.0
  %4441 = vmatpush.msra.mxu0 0.0
  %4442 = vmatpush.msra.mxu0 0.0
  %4443 = vmatpush.msra.mxu0 0.0
  %4444 = vmatpush.msra.mxu0 0.0
  %4445 = vmatpush.msra.mxu0 0.0
  %4446 = vmatpush.msra.mxu0 0.0
  %4447 = vmatpush.msra.mxu0 0.0
  %4448 = vmatpush.msra.mxu0 0.0
  %4449 = vmatpush.msra.mxu0 0.0
  %4450 = vmatpush.msra.mxu0 0.0
  %4451 = vmatpush.msra.mxu0 %v4410
  %4452 = vmatmul.f32.gmra.mxu0 %v4414
  %v4453 = vpop.f32.mrf.mxu0
  %v4454 = vadd.f32 0.0, %v4453
  %4455 = vdwg.mxu0
  %v4456 = vsel %vm3486, %v4399, 0
  %4458 = vmatpush.msra.mxu0 0.0
  %4459 = vmatpush.msra.mxu0 0.0
  %4460 = vmatpush.msra.mxu0 0.0
  %4461 = vmatpush.msra.mxu0 0.0
  %4462 = vmatpush.msra.mxu0 0.0
  %4463 = vmatpush.msra.mxu0 0.0
  %4464 = vmatpush.msra.mxu0 0.0
  %4465 = vmatpush.msra.mxu0 0.0
  %4466 = vmatpush.msra.mxu0 0.0
  %4467 = vmatpush.msra.mxu0 0.0
  %4468 = vmatpush.msra.mxu0 0.0
  %4469 = vmatpush.msra.mxu0 0.0
  %4470 = vmatpush.msra.mxu0 0.0
  %4471 = vmatpush.msra.mxu0 0.0
  %4472 = vmatpush.msra.mxu0 0.0
  %4473 = vmatpush.msra.mxu0 %v4357
  %4474 = vmatmul.f32.gmra.mxu0 %v4456
  %v4475 = vpop.f32.mrf.mxu0
  %v4476 = vadd.f32 %v4434, %v4475
  %4477 = vdwg.mxu0
  %4478 = vmatpush.msra.mxu0 0.0
  %4479 = vmatpush.msra.mxu0 0.0
  %4480 = vmatpush.msra.mxu0 0.0
  %4481 = vmatpush.msra.mxu0 0.0
  %4482 = vmatpush.msra.mxu0 0.0
  %4483 = vmatpush.msra.mxu0 0.0
  %4484 = vmatpush.msra.mxu0 0.0
  %4485 = vmatpush.msra.mxu0 0.0
  %4486 = vmatpush.msra.mxu0 0.0
  %4487 = vmatpush.msra.mxu0 0.0
  %4488 = vmatpush.msra.mxu0 0.0
  %4489 = vmatpush.msra.mxu0 0.0
  %4490 = vmatpush.msra.mxu0 0.0
  %4491 = vmatpush.msra.mxu0 0.0
  %4492 = vmatpush.msra.mxu0 0.0
  %4493 = vmatpush.msra.mxu0 %v4377
  %4494 = vmatmul.f32.gmra.mxu0 %v4456
  %v4495 = vpop.f32.mrf.mxu0
  %v4496 = vadd.f32 %v4454, %v4495
  %4497 = vdwg.mxu0
  %v4498 = vld [vmem:[%s23] sm:$0xf]
  %4500 = vst [vmem:[#allocation1] ss:$2 sm:$0xff] %v4498
  %v4501 = vld.sshfl [vmem:[#allocation1] sm:$0xff pattern:$0x75316420]
  %4502 = vrot.lane.b32.xlu0 %v4501, 112
  %v4503 = vpop.permute.xlu0 %4502
  %4504 = vrot.lane.b32.xlu0 %v4357, 126
  %v4505 = vpop.permute.xlu0 %4504
  %4506 = vrot.lane.b32.xlu0 %v4377, 126
  %v4507 = vpop.permute.xlu0 %4506
  %v4508 = vsel %vm384, %v4505, %v4507
  %v4511 = vsel %vm3486, %v4503, 0
  %4513 = vmatpush.msra.mxu0 0.0
  %4514 = vmatpush.msra.mxu0 0.0
  %4515 = vmatpush.msra.mxu0 0.0
  %4516 = vmatpush.msra.mxu0 0.0
  %4517 = vmatpush.msra.mxu0 0.0
  %4518 = vmatpush.msra.mxu0 0.0
  %4519 = vmatpush.msra.mxu0 0.0
  %4520 = vmatpush.msra.mxu0 0.0
  %4521 = vmatpush.msra.mxu0 0.0
  %4522 = vmatpush.msra.mxu0 0.0
  %4523 = vmatpush.msra.mxu0 0.0
  %4524 = vmatpush.msra.mxu0 0.0
  %4525 = vmatpush.msra.mxu0 0.0
  %4526 = vmatpush.msra.mxu0 0.0
  %4527 = vmatpush.msra.mxu0 0.0
  %4528 = vmatpush.msra.mxu0 %v4508
  %4529 = vmatmul.f32.gmra.mxu0 %v4511
  %v4530 = vpop.f32.mrf.mxu0
  %v4531 = vadd.f32 0.0, %v4530
  %4532 = vdwg.mxu0
  %4533 = vmatpush.msra.mxu0 0.0
  %4534 = vmatpush.msra.mxu0 0.0
  %4535 = vmatpush.msra.mxu0 0.0
  %4536 = vmatpush.msra.mxu0 0.0
  %4537 = vmatpush.msra.mxu0 0.0
  %4538 = vmatpush.msra.mxu0 0.0
  %4539 = vmatpush.msra.mxu0 0.0
  %4540 = vmatpush.msra.mxu0 0.0
  %4541 = vmatpush.msra.mxu0 0.0
  %4542 = vmatpush.msra.mxu0 0.0
  %4543 = vmatpush.msra.mxu0 0.0
  %4544 = vmatpush.msra.mxu0 0.0
  %4545 = vmatpush.msra.mxu0 0.0
  %4546 = vmatpush.msra.mxu0 0.0
  %4547 = vmatpush.msra.mxu0 0.0
  %4548 = vmatpush.msra.mxu0 %v4507
  %4549 = vmatmul.f32.gmra.mxu0 %v4511
  %v4550 = vpop.f32.mrf.mxu0
  %v4551 = vadd.f32 0.0, %v4550
  %4552 = vdwg.mxu0
  %v4553 = vadd.f32 %v4476, %v4531
  %v4554 = vadd.f32 %v4496, %v4551
  %v4555 = vld [vmem:[%s23] sm:$0xf]
  %4557 = vst [vmem:[#allocation1] ss:$2 sm:$0xff] %v4555
  %v4558 = vld.sshfl [vmem:[#allocation1] sm:$0xff pattern:$0x75316420]
  %4559 = vrot.lane.b32.xlu0 %v4558, 104
  %v4560 = vpop.permute.xlu0 %4559
  %4561 = vrot.lane.b32.xlu0 %v4357, 125
  %v4562 = vpop.permute.xlu0 %4561
  %4563 = vrot.lane.b32.xlu0 %v4377, 125
  %v4564 = vpop.permute.xlu0 %4563
  %v4565 = vsel %vm2119, %v4562, %v4564
  %v4568 = vsel %vm3486, %v4560, 0
  %4570 = vmatpush.msra.mxu0 0.0
  %4571 = vmatpush.msra.mxu0 0.0
  %4572 = vmatpush.msra.mxu0 0.0
  %4573 = vmatpush.msra.mxu0 0.0
  %4574 = vmatpush.msra.mxu0 0.0
  %4575 = vmatpush.msra.mxu0 0.0
  %4576 = vmatpush.msra.mxu0 0.0
  %4577 = vmatpush.msra.mxu0 0.0
  %4578 = vmatpush.msra.mxu0 0.0
  %4579 = vmatpush.msra.mxu0 0.0
  %4580 = vmatpush.msra.mxu0 0.0
  %4581 = vmatpush.msra.mxu0 0.0
  %4582 = vmatpush.msra.mxu0 0.0
  %4583 = vmatpush.msra.mxu0 0.0
  %4584 = vmatpush.msra.mxu0 0.0
  %4585 = vmatpush.msra.mxu0 %v4565
  %4586 = vmatmul.f32.gmra.mxu0 %v4568
  %v4587 = vpop.f32.mrf.mxu0
  %v4588 = vadd.f32 0.0, %v4587
  %4589 = vdwg.mxu0
  %4590 = vmatpush.msra.mxu0 0.0
  %4591 = vmatpush.msra.mxu0 0.0
  %4592 = vmatpush.msra.mxu0 0.0
  %4593 = vmatpush.msra.mxu0 0.0
  %4594 = vmatpush.msra.mxu0 0.0
  %4595 = vmatpush.msra.mxu0 0.0
  %4596 = vmatpush.msra.mxu0 0.0
  %4597 = vmatpush.msra.mxu0 0.0
  %4598 = vmatpush.msra.mxu0 0.0
  %4599 = vmatpush.msra.mxu0 0.0
  %4600 = vmatpush.msra.mxu0 0.0
  %4601 = vmatpush.msra.mxu0 0.0
  %4602 = vmatpush.msra.mxu0 0.0
  %4603 = vmatpush.msra.mxu0 0.0
  %4604 = vmatpush.msra.mxu0 0.0
  %4605 = vmatpush.msra.mxu0 %v4564
  %4606 = vmatmul.f32.gmra.mxu0 %v4568
  %v4607 = vpop.f32.mrf.mxu0
  %v4608 = vadd.f32 0.0, %v4607
  %4609 = vdwg.mxu0
  %v4610 = vadd.f32 %v4553, %v4588
  %v4611 = vadd.f32 %v4554, %v4608
  %v4612 = vld [vmem:[%s23] sm:$0xf]
  %4614 = vst [vmem:[#allocation1] ss:$2 sm:$0xff] %v4612
  %v4615 = vld.sshfl [vmem:[#allocation1] sm:$0xff pattern:$0x75316420]
  %4616 = vrot.lane.b32.xlu0 %v4615, 96
  %v4617 = vpop.permute.xlu0 %4616
  %4618 = vrot.lane.b32.xlu0 %v4357, 124
  %v4619 = vpop.permute.xlu0 %4618
  %4620 = vrot.lane.b32.xlu0 %v4377, 124
  %v4621 = vpop.permute.xlu0 %4620
  %v4622 = vsel %vm2175, %v4619, %v4621
  %v4625 = vsel %vm3486, %v4617, 0
  %4627 = vmatpush.msra.mxu0 0.0
  %4628 = vmatpush.msra.mxu0 0.0
  %4629 = vmatpush.msra.mxu0 0.0
  %4630 = vmatpush.msra.mxu0 0.0
  %4631 = vmatpush.msra.mxu0 0.0
  %4632 = vmatpush.msra.mxu0 0.0
  %4633 = vmatpush.msra.mxu0 0.0
  %4634 = vmatpush.msra.mxu0 0.0
  %4635 = vmatpush.msra.mxu0 0.0
  %4636 = vmatpush.msra.mxu0 0.0
  %4637 = vmatpush.msra.mxu0 0.0
  %4638 = vmatpush.msra.mxu0 0.0
  %4639 = vmatpush.msra.mxu0 0.0
  %4640 = vmatpush.msra.mxu0 0.0
  %4641 = vmatpush.msra.mxu0 0.0
  %4642 = vmatpush.msra.mxu0 %v4622
  %4643 = vmatmul.f32.gmra.mxu0 %v4625
  %v4644 = vpop.f32.mrf.mxu0
  %v4645 = vadd.f32 0.0, %v4644
  %4646 = vdwg.mxu0
  %4647 = vmatpush.msra.mxu0 0.0
  %4648 = vmatpush.msra.mxu0 0.0
  %4649 = vmatpush.msra.mxu0 0.0
  %4650 = vmatpush.msra.mxu0 0.0
  %4651 = vmatpush.msra.mxu0 0.0
  %4652 = vmatpush.msra.mxu0 0.0
  %4653 = vmatpush.msra.mxu0 0.0
  %4654 = vmatpush.msra.mxu0 0.0
  %4655 = vmatpush.msra.mxu0 0.0
  %4656 = vmatpush.msra.mxu0 0.0
  %4657 = vmatpush.msra.mxu0 0.0
  %4658 = vmatpush.msra.mxu0 0.0
  %4659 = vmatpush.msra.mxu0 0.0
  %4660 = vmatpush.msra.mxu0 0.0
  %4661 = vmatpush.msra.mxu0 0.0
  %4662 = vmatpush.msra.mxu0 %v4621
  %4663 = vmatmul.f32.gmra.mxu0 %v4625
  %v4664 = vpop.f32.mrf.mxu0
  %v4665 = vadd.f32 0.0, %v4664
  %4666 = vdwg.mxu0
  %v4667 = vadd.f32 %v4610, %v4645
  %v4668 = vadd.f32 %v4611, %v4665
  %v4669 = vld [vmem:[%s23] sm:$0xf]
  %4671 = vst [vmem:[#allocation1] ss:$2 sm:$0xff] %v4669
  %v4672 = vld.sshfl [vmem:[#allocation1] sm:$0xff pattern:$0x75316420]
  %4673 = vrot.lane.b32.xlu0 %v4672, 88
  %v4674 = vpop.permute.xlu0 %4673
  %4675 = vrot.lane.b32.xlu0 %v4357, 116
  %v4676 = vpop.permute.xlu0 %4675
  %4677 = vrot.lane.b32.xlu0 %v4377, 116
  %v4678 = vpop.permute.xlu0 %4677
  %v4679 = vsel %vm2231, %v4676, %v4678
  %v4682 = vsel %vm3486, %v4674, 0
  %4684 = vmatpush.msra.mxu0 0.0
  %4685 = vmatpush.msra.mxu0 0.0
  %4686 = vmatpush.msra.mxu0 0.0
  %4687 = vmatpush.msra.mxu0 0.0
  %4688 = vmatpush.msra.mxu0 0.0
  %4689 = vmatpush.msra.mxu0 0.0
  %4690 = vmatpush.msra.mxu0 0.0
  %4691 = vmatpush.msra.mxu0 0.0
  %4692 = vmatpush.msra.mxu0 0.0
  %4693 = vmatpush.msra.mxu0 0.0
  %4694 = vmatpush.msra.mxu0 0.0
  %4695 = vmatpush.msra.mxu0 0.0
  %4696 = vmatpush.msra.mxu0 0.0
  %4697 = vmatpush.msra.mxu0 0.0
  %4698 = vmatpush.msra.mxu0 0.0
  %4699 = vmatpush.msra.mxu0 %v4679
  %4700 = vmatmul.f32.gmra.mxu0 %v4682
  %v4701 = vpop.f32.mrf.mxu0
  %v4702 = vadd.f32 0.0, %v4701
  %4703 = vdwg.mxu0
  %4704 = vmatpush.msra.mxu0 0.0
  %4705 = vmatpush.msra.mxu0 0.0
  %4706 = vmatpush.msra.mxu0 0.0
  %4707 = vmatpush.msra.mxu0 0.0
  %4708 = vmatpush.msra.mxu0 0.0
  %4709 = vmatpush.msra.mxu0 0.0
  %4710 = vmatpush.msra.mxu0 0.0
  %4711 = vmatpush.msra.mxu0 0.0
  %4712 = vmatpush.msra.mxu0 0.0
  %4713 = vmatpush.msra.mxu0 0.0
  %4714 = vmatpush.msra.mxu0 0.0
  %4715 = vmatpush.msra.mxu0 0.0
  %4716 = vmatpush.msra.mxu0 0.0
  %4717 = vmatpush.msra.mxu0 0.0
  %4718 = vmatpush.msra.mxu0 0.0
  %4719 = vmatpush.msra.mxu0 %v4678
  %4720 = vmatmul.f32.gmra.mxu0 %v4682
  %v4721 = vpop.f32.mrf.mxu0
  %v4722 = vadd.f32 0.0, %v4721
  %4723 = vdwg.mxu0
  %v4724 = vadd.f32 %v4667, %v4702
  %v4725 = vadd.f32 %v4668, %v4722
  %v4726 = vld [vmem:[%s23] sm:$0xf]
  %4728 = vst [vmem:[#allocation1] ss:$2 sm:$0xff] %v4726
  %v4729 = vld.sshfl [vmem:[#allocation1] sm:$0xff pattern:$0x75316420]
  %4730 = vrot.lane.b32.xlu0 %v4729, 80
  %v4731 = vpop.permute.xlu0 %4730
  %4732 = vrot.lane.b32.xlu0 %v4357, 115
  %v4733 = vpop.permute.xlu0 %4732
  %4734 = vrot.lane.b32.xlu0 %v4377, 115
  %v4735 = vpop.permute.xlu0 %4734
  %v4736 = vsel %vm2287, %v4733, %v4735
  %v4739 = vsel %vm3486, %v4731, 0
  %4741 = vmatpush.msra.mxu0 0.0
  %4742 = vmatpush.msra.mxu0 0.0
  %4743 = vmatpush.msra.mxu0 0.0
  %4744 = vmatpush.msra.mxu0 0.0
  %4745 = vmatpush.msra.mxu0 0.0
  %4746 = vmatpush.msra.mxu0 0.0
  %4747 = vmatpush.msra.mxu0 0.0
  %4748 = vmatpush.msra.mxu0 0.0
  %4749 = vmatpush.msra.mxu0 0.0
  %4750 = vmatpush.msra.mxu0 0.0
  %4751 = vmatpush.msra.mxu0 0.0
  %4752 = vmatpush.msra.mxu0 0.0
  %4753 = vmatpush.msra.mxu0 0.0
  %4754 = vmatpush.msra.mxu0 0.0
  %4755 = vmatpush.msra.mxu0 0.0
  %4756 = vmatpush.msra.mxu0 %v4736
  %4757 = vmatmul.f32.gmra.mxu0 %v4739
  %v4758 = vpop.f32.mrf.mxu0
  %v4759 = vadd.f32 0.0, %v4758
  %4760 = vdwg.mxu0
  %4761 = vmatpush.msra.mxu0 0.0
  %4762 = vmatpush.msra.mxu0 0.0
  %4763 = vmatpush.msra.mxu0 0.0
  %4764 = vmatpush.msra.mxu0 0.0
  %4765 = vmatpush.msra.mxu0 0.0
  %4766 = vmatpush.msra.mxu0 0.0
  %4767 = vmatpush.msra.mxu0 0.0
  %4768 = vmatpush.msra.mxu0 0.0
  %4769 = vmatpush.msra.mxu0 0.0
  %4770 = vmatpush.msra.mxu0 0.0
  %4771 = vmatpush.msra.mxu0 0.0
  %4772 = vmatpush.msra.mxu0 0.0
  %4773 = vmatpush.msra.mxu0 0.0
  %4774 = vmatpush.msra.mxu0 0.0
  %4775 = vmatpush.msra.mxu0 0.0
  %4776 = vmatpush.msra.mxu0 %v4735
  %4777 = vmatmul.f32.gmra.mxu0 %v4739
  %v4778 = vpop.f32.mrf.mxu0
  %v4779 = vadd.f32 0.0, %v4778
  %4780 = vdwg.mxu0
  %v4781 = vadd.f32 %v4724, %v4759
  %v4782 = vadd.f32 %v4725, %v4779
  %v4783 = vld [vmem:[%s23] sm:$0xf]
  %4785 = vst [vmem:[#allocation1] ss:$2 sm:$0xff] %v4783
  %v4786 = vld.sshfl [vmem:[#allocation1] sm:$0xff pattern:$0x75316420]
  %4787 = vrot.lane.b32.xlu0 %v4786, 72
  %v4788 = vpop.permute.xlu0 %4787
  %4789 = vrot.lane.b32.xlu0 %v4357, 114
  %v4790 = vpop.permute.xlu0 %4789
  %4791 = vrot.lane.b32.xlu0 %v4377, 114
  %v4792 = vpop.permute.xlu0 %4791
  %v4793 = vsel %vm2343, %v4790, %v4792
  %v4796 = vsel %vm3486, %v4788, 0
  %4798 = vmatpush.msra.mxu0 0.0
  %4799 = vmatpush.msra.mxu0 0.0
  %4800 = vmatpush.msra.mxu0 0.0
  %4801 = vmatpush.msra.mxu0 0.0
  %4802 = vmatpush.msra.mxu0 0.0
  %4803 = vmatpush.msra.mxu0 0.0
  %4804 = vmatpush.msra.mxu0 0.0
  %4805 = vmatpush.msra.mxu0 0.0
  %4806 = vmatpush.msra.mxu0 0.0
  %4807 = vmatpush.msra.mxu0 0.0
  %4808 = vmatpush.msra.mxu0 0.0
  %4809 = vmatpush.msra.mxu0 0.0
  %4810 = vmatpush.msra.mxu0 0.0
  %4811 = vmatpush.msra.mxu0 0.0
  %4812 = vmatpush.msra.mxu0 0.0
  %4813 = vmatpush.msra.mxu0 %v4793
  %4814 = vmatmul.f32.gmra.mxu0 %v4796
  %v4815 = vpop.f32.mrf.mxu0
  %v4816 = vadd.f32 0.0, %v4815
  %4817 = vdwg.mxu0
  %4818 = vmatpush.msra.mxu0 0.0
  %4819 = vmatpush.msra.mxu0 0.0
  %4820 = vmatpush.msra.mxu0 0.0
  %4821 = vmatpush.msra.mxu0 0.0
  %4822 = vmatpush.msra.mxu0 0.0
  %4823 = vmatpush.msra.mxu0 0.0
  %4824 = vmatpush.msra.mxu0 0.0
  %4825 = vmatpush.msra.mxu0 0.0
  %4826 = vmatpush.msra.mxu0 0.0
  %4827 = vmatpush.msra.mxu0 0.0
  %4828 = vmatpush.msra.mxu0 0.0
  %4829 = vmatpush.msra.mxu0 0.0
  %4830 = vmatpush.msra.mxu0 0.0
  %4831 = vmatpush.msra.mxu0 0.0
  %4832 = vmatpush.msra.mxu0 0.0
  %4833 = vmatpush.msra.mxu0 %v4792
  %4834 = vmatmul.f32.gmra.mxu0 %v4796
  %v4835 = vpop.f32.mrf.mxu0
  %v4836 = vadd.f32 0.0, %v4835
  %4837 = vdwg.mxu0
  %v4838 = vadd.f32 %v4781, %v4816
  %v4839 = vadd.f32 %v4782, %v4836
  %v4840 = vld [vmem:[%s23] sm:$0xf]
  %4842 = vst [vmem:[#allocation1] ss:$2 sm:$0xff] %v4840
  %v4843 = vld.sshfl [vmem:[#allocation1] sm:$0xff pattern:$0x75316420]
  %4844 = vrot.lane.b32.xlu0 %v4843, 64
  %v4845 = vpop.permute.xlu0 %4844
  %4846 = vrot.lane.b32.xlu0 %v4357, 113
  %v4847 = vpop.permute.xlu0 %4846
  %4848 = vrot.lane.b32.xlu0 %v4377, 113
  %v4849 = vpop.permute.xlu0 %4848
  %v4850 = vsel %vm2399, %v4847, %v4849
  %v4853 = vsel %vm3486, %v4845, 0
  %4855 = vmatpush.msra.mxu0 0.0
  %4856 = vmatpush.msra.mxu0 0.0
  %4857 = vmatpush.msra.mxu0 0.0
  %4858 = vmatpush.msra.mxu0 0.0
  %4859 = vmatpush.msra.mxu0 0.0
  %4860 = vmatpush.msra.mxu0 0.0
  %4861 = vmatpush.msra.mxu0 0.0
  %4862 = vmatpush.msra.mxu0 0.0
  %4863 = vmatpush.msra.mxu0 0.0
  %4864 = vmatpush.msra.mxu0 0.0
  %4865 = vmatpush.msra.mxu0 0.0
  %4866 = vmatpush.msra.mxu0 0.0
  %4867 = vmatpush.msra.mxu0 0.0
  %4868 = vmatpush.msra.mxu0 0.0
  %4869 = vmatpush.msra.mxu0 0.0
  %4870 = vmatpush.msra.mxu0 %v4850
  %4871 = vmatmul.f32.gmra.mxu0 %v4853
  %v4872 = vpop.f32.mrf.mxu0
  %v4873 = vadd.f32 0.0, %v4872
  %4874 = vdwg.mxu0
  %4875 = vmatpush.msra.mxu0 0.0
  %4876 = vmatpush.msra.mxu0 0.0
  %4877 = vmatpush.msra.mxu0 0.0
  %4878 = vmatpush.msra.mxu0 0.0
  %4879 = vmatpush.msra.mxu0 0.0
  %4880 = vmatpush.msra.mxu0 0.0
  %4881 = vmatpush.msra.mxu0 0.0
  %4882 = vmatpush.msra.mxu0 0.0
  %4883 = vmatpush.msra.mxu0 0.0
  %4884 = vmatpush.msra.mxu0 0.0
  %4885 = vmatpush.msra.mxu0 0.0
  %4886 = vmatpush.msra.mxu0 0.0
  %4887 = vmatpush.msra.mxu0 0.0
  %4888 = vmatpush.msra.mxu0 0.0
  %4889 = vmatpush.msra.mxu0 0.0
  %4890 = vmatpush.msra.mxu0 %v4849
  %4891 = vmatmul.f32.gmra.mxu0 %v4853
  %v4892 = vpop.f32.mrf.mxu0
  %v4893 = vadd.f32 0.0, %v4892
  %4894 = vdwg.mxu0
  %v4895 = vadd.f32 %v4838, %v4873
  %v4896 = vadd.f32 %v4839, %v4893
  %v4897 = vld [vmem:[%s23] sm:$0xf]
  %4899 = vst [vmem:[#allocation1] ss:$2 sm:$0xff] %v4897
  %v4900 = vld.sshfl [vmem:[#allocation1] sm:$0xff pattern:$0x75316420]
  %4901 = vrot.lane.b32.xlu0 %v4900, 56
  %v4902 = vpop.permute.xlu0 %4901
  %4903 = vrot.lane.b32.xlu0 %v4357, 112
  %v4904 = vpop.permute.xlu0 %4903
  %4905 = vrot.lane.b32.xlu0 %v4377, 112
  %v4906 = vpop.permute.xlu0 %4905
  %v4907 = vsel %vm2455, %v4904, %v4906
  %v4910 = vsel %vm3486, %v4902, 0
  %4912 = vmatpush.msra.mxu0 0.0
  %4913 = vmatpush.msra.mxu0 0.0
  %4914 = vmatpush.msra.mxu0 0.0
  %4915 = vmatpush.msra.mxu0 0.0
  %4916 = vmatpush.msra.mxu0 0.0
  %4917 = vmatpush.msra.mxu0 0.0
  %4918 = vmatpush.msra.mxu0 0.0
  %4919 = vmatpush.msra.mxu0 0.0
  %4920 = vmatpush.msra.mxu0 0.0
  %4921 = vmatpush.msra.mxu0 0.0
  %4922 = vmatpush.msra.mxu0 0.0
  %4923 = vmatpush.msra.mxu0 0.0
  %4924 = vmatpush.msra.mxu0 0.0
  %4925 = vmatpush.msra.mxu0 0.0
  %4926 = vmatpush.msra.mxu0 0.0
  %4927 = vmatpush.msra.mxu0 %v4907
  %4928 = vmatmul.f32.gmra.mxu0 %v4910
  %v4929 = vpop.f32.mrf.mxu0
  %v4930 = vadd.f32 0.0, %v4929
  %4931 = vdwg.mxu0
  %4932 = vmatpush.msra.mxu0 0.0
  %4933 = vmatpush.msra.mxu0 0.0
  %4934 = vmatpush.msra.mxu0 0.0
  %4935 = vmatpush.msra.mxu0 0.0
  %4936 = vmatpush.msra.mxu0 0.0
  %4937 = vmatpush.msra.mxu0 0.0
  %4938 = vmatpush.msra.mxu0 0.0
  %4939 = vmatpush.msra.mxu0 0.0
  %4940 = vmatpush.msra.mxu0 0.0
  %4941 = vmatpush.msra.mxu0 0.0
  %4942 = vmatpush.msra.mxu0 0.0
  %4943 = vmatpush.msra.mxu0 0.0
  %4944 = vmatpush.msra.mxu0 0.0
  %4945 = vmatpush.msra.mxu0 0.0
  %4946 = vmatpush.msra.mxu0 0.0
  %4947 = vmatpush.msra.mxu0 %v4906
  %4948 = vmatmul.f32.gmra.mxu0 %v4910
  %v4949 = vpop.f32.mrf.mxu0
  %v4950 = vadd.f32 0.0, %v4949
  %4951 = vdwg.mxu0
  %v4952 = vadd.f32 %v4895, %v4930
  %v4953 = vadd.f32 %v4896, %v4950
  %v4954 = vld [vmem:[%s23] sm:$0xf]
  %4956 = vst [vmem:[#allocation1] ss:$2 sm:$0xff] %v4954
  %v4957 = vld.sshfl [vmem:[#allocation1] sm:$0xff pattern:$0x75316420]
  %4958 = vrot.lane.b32.xlu0 %v4957, 48
  %v4959 = vpop.permute.xlu0 %4958
  %4961 = vrot.lane.b32.xlu0 %v4357, 104
  %v4962 = vpop.permute.xlu0 %4961
  %4963 = vrot.lane.b32.xlu0 %v4377, 104
  %v4964 = vpop.permute.xlu0 %4963
  %4965 = vrot.lane.b32.xlu0 %v4397, 104
  %v4966 = vpop.permute.xlu0 %4965
  %v4967 = vsel %vm2514, %v4962, %v4964
  %v4968 = vsel %vm2514, %v4964, %v4966
  %v4971 = vsel %vm3486, %v4959, 0
  %4973 = vmatpush.msra.mxu0 0.0
  %4974 = vmatpush.msra.mxu0 0.0
  %4975 = vmatpush.msra.mxu0 0.0
  %4976 = vmatpush.msra.mxu0 0.0
  %4977 = vmatpush.msra.mxu0 0.0
  %4978 = vmatpush.msra.mxu0 0.0
  %4979 = vmatpush.msra.mxu0 0.0
  %4980 = vmatpush.msra.mxu0 0.0
  %4981 = vmatpush.msra.mxu0 0.0
  %4982 = vmatpush.msra.mxu0 0.0
  %4983 = vmatpush.msra.mxu0 0.0
  %4984 = vmatpush.msra.mxu0 0.0
  %4985 = vmatpush.msra.mxu0 0.0
  %4986 = vmatpush.msra.mxu0 0.0
  %4987 = vmatpush.msra.mxu0 0.0
  %4988 = vmatpush.msra.mxu0 %v4967
  %4989 = vmatmul.f32.gmra.mxu0 %v4971
  %v4990 = vpop.f32.mrf.mxu0
  %v4991 = vadd.f32 0.0, %v4990
  %4992 = vdwg.mxu0
  %4993 = vmatpush.msra.mxu0 0.0
  %4994 = vmatpush.msra.mxu0 0.0
  %4995 = vmatpush.msra.mxu0 0.0
  %4996 = vmatpush.msra.mxu0 0.0
  %4997 = vmatpush.msra.mxu0 0.0
  %4998 = vmatpush.msra.mxu0 0.0
  %4999 = vmatpush.msra.mxu0 0.0
  %5000 = vmatpush.msra.mxu0 0.0
  %5001 = vmatpush.msra.mxu0 0.0
  %5002 = vmatpush.msra.mxu0 0.0
  %5003 = vmatpush.msra.mxu0 0.0
  %5004 = vmatpush.msra.mxu0 0.0
  %5005 = vmatpush.msra.mxu0 0.0
  %5006 = vmatpush.msra.mxu0 0.0
  %5007 = vmatpush.msra.mxu0 0.0
  %5008 = vmatpush.msra.mxu0 %v4968
  %5009 = vmatmul.f32.gmra.mxu0 %v4971
  %v5010 = vpop.f32.mrf.mxu0
  %v5011 = vadd.f32 0.0, %v5010
  %5012 = vdwg.mxu0
  %v5013 = vadd.f32 %v4952, %v4991
  %v5014 = vadd.f32 %v4953, %v5011
  %v5015 = vld [vmem:[%s23] sm:$0xf]
  %5017 = vst [vmem:[#allocation1] ss:$2 sm:$0xff] %v5015
  %v5018 = vld.sshfl [vmem:[#allocation1] sm:$0xff pattern:$0x75316420]
  %5019 = vrot.lane.b32.xlu0 %v5018, 40
  %v5020 = vpop.permute.xlu0 %5019
  %5021 = vrot.lane.b32.xlu0 %v4357, 103
  %v5022 = vpop.permute.xlu0 %5021
  %5023 = vrot.lane.b32.xlu0 %v4377, 103
  %v5024 = vpop.permute.xlu0 %5023
  %5025 = vrot.lane.b32.xlu0 %v4397, 103
  %v5026 = vpop.permute.xlu0 %5025
  %v5027 = vsel %vm2573, %v5022, %v5024
  %v5028 = vsel %vm2573, %v5024, %v5026
  %v5031 = vsel %vm3486, %v5020, 0
  %5033 = vmatpush.msra.mxu0 0.0
  %5034 = vmatpush.msra.mxu0 0.0
  %5035 = vmatpush.msra.mxu0 0.0
  %5036 = vmatpush.msra.mxu0 0.0
  %5037 = vmatpush.msra.mxu0 0.0
  %5038 = vmatpush.msra.mxu0 0.0
  %5039 = vmatpush.msra.mxu0 0.0
  %5040 = vmatpush.msra.mxu0 0.0
  %5041 = vmatpush.msra.mxu0 0.0
  %5042 = vmatpush.msra.mxu0 0.0
  %5043 = vmatpush.msra.mxu0 0.0
  %5044 = vmatpush.msra.mxu0 0.0
  %5045 = vmatpush.msra.mxu0 0.0
  %5046 = vmatpush.msra.mxu0 0.0
  %5047 = vmatpush.msra.mxu0 0.0
  %5048 = vmatpush.msra.mxu0 %v5027
  %5049 = vmatmul.f32.gmra.mxu0 %v5031
  %v5050 = vpop.f32.mrf.mxu0
  %v5051 = vadd.f32 0.0, %v5050
  %5052 = vdwg.mxu0
  %5053 = vmatpush.msra.mxu0 0.0
  %5054 = vmatpush.msra.mxu0 0.0
  %5055 = vmatpush.msra.mxu0 0.0
  %5056 = vmatpush.msra.mxu0 0.0
  %5057 = vmatpush.msra.mxu0 0.0
  %5058 = vmatpush.msra.mxu0 0.0
  %5059 = vmatpush.msra.mxu0 0.0
  %5060 = vmatpush.msra.mxu0 0.0
  %5061 = vmatpush.msra.mxu0 0.0
  %5062 = vmatpush.msra.mxu0 0.0
  %5063 = vmatpush.msra.mxu0 0.0
  %5064 = vmatpush.msra.mxu0 0.0
  %5065 = vmatpush.msra.mxu0 0.0
  %5066 = vmatpush.msra.mxu0 0.0
  %5067 = vmatpush.msra.mxu0 0.0
  %5068 = vmatpush.msra.mxu0 %v5028
  %5069 = vmatmul.f32.gmra.mxu0 %v5031
  %v5070 = vpop.f32.mrf.mxu0
  %v5071 = vadd.f32 0.0, %v5070
  %5072 = vdwg.mxu0
  %v5073 = vadd.f32 %v5013, %v5051
  %v5074 = vadd.f32 %v5014, %v5071
  %v5075 = vld [vmem:[%s23] sm:$0xf]
  %5077 = vst [vmem:[#allocation1] ss:$2 sm:$0xff] %v5075
  %v5078 = vld.sshfl [vmem:[#allocation1] sm:$0xff pattern:$0x75316420]
  %5079 = vrot.lane.b32.xlu0 %v5078, 32
  %v5080 = vpop.permute.xlu0 %5079
  %5081 = vrot.lane.b32.xlu0 %v4357, 102
  %v5082 = vpop.permute.xlu0 %5081
  %5083 = vrot.lane.b32.xlu0 %v4377, 102
  %v5084 = vpop.permute.xlu0 %5083
  %5085 = vrot.lane.b32.xlu0 %v4397, 102
  %v5086 = vpop.permute.xlu0 %5085
  %v5087 = vsel %vm2632, %v5082, %v5084
  %v5088 = vsel %vm2632, %v5084, %v5086
  %v5091 = vsel %vm3486, %v5080, 0
  %5093 = vmatpush.msra.mxu0 0.0
  %5094 = vmatpush.msra.mxu0 0.0
  %5095 = vmatpush.msra.mxu0 0.0
  %5096 = vmatpush.msra.mxu0 0.0
  %5097 = vmatpush.msra.mxu0 0.0
  %5098 = vmatpush.msra.mxu0 0.0
  %5099 = vmatpush.msra.mxu0 0.0
  %5100 = vmatpush.msra.mxu0 0.0
  %5101 = vmatpush.msra.mxu0 0.0
  %5102 = vmatpush.msra.mxu0 0.0
  %5103 = vmatpush.msra.mxu0 0.0
  %5104 = vmatpush.msra.mxu0 0.0
  %5105 = vmatpush.msra.mxu0 0.0
  %5106 = vmatpush.msra.mxu0 0.0
  %5107 = vmatpush.msra.mxu0 0.0
  %5108 = vmatpush.msra.mxu0 %v5087
  %5109 = vmatmul.f32.gmra.mxu0 %v5091
  %v5110 = vpop.f32.mrf.mxu0
  %v5111 = vadd.f32 0.0, %v5110
  %5112 = vdwg.mxu0
  %5113 = vmatpush.msra.mxu0 0.0
  %5114 = vmatpush.msra.mxu0 0.0
  %5115 = vmatpush.msra.mxu0 0.0
  %5116 = vmatpush.msra.mxu0 0.0
  %5117 = vmatpush.msra.mxu0 0.0
  %5118 = vmatpush.msra.mxu0 0.0
  %5119 = vmatpush.msra.mxu0 0.0
  %5120 = vmatpush.msra.mxu0 0.0
  %5121 = vmatpush.msra.mxu0 0.0
  %5122 = vmatpush.msra.mxu0 0.0
  %5123 = vmatpush.msra.mxu0 0.0
  %5124 = vmatpush.msra.mxu0 0.0
  %5125 = vmatpush.msra.mxu0 0.0
  %5126 = vmatpush.msra.mxu0 0.0
  %5127 = vmatpush.msra.mxu0 0.0
  %5128 = vmatpush.msra.mxu0 %v5088
  %5129 = vmatmul.f32.gmra.mxu0 %v5091
  %v5130 = vpop.f32.mrf.mxu0
  %v5131 = vadd.f32 0.0, %v5130
  %5132 = vdwg.mxu0
  %v5133 = vadd.f32 %v5073, %v5111
  %v5134 = vadd.f32 %v5074, %v5131
  %v5135 = vld [vmem:[%s23] sm:$0xf]
  %5137 = vst [vmem:[#allocation1] ss:$2 sm:$0xff] %v5135
  %v5138 = vld.sshfl [vmem:[#allocation1] sm:$0xff pattern:$0x75316420]
  %5139 = vrot.lane.b32.xlu0 %v5138, 24
  %v5140 = vpop.permute.xlu0 %5139
  %5141 = vrot.lane.b32.xlu0 %v4357, 101
  %v5142 = vpop.permute.xlu0 %5141
  %5143 = vrot.lane.b32.xlu0 %v4377, 101
  %v5144 = vpop.permute.xlu0 %5143
  %5145 = vrot.lane.b32.xlu0 %v4397, 101
  %v5146 = vpop.permute.xlu0 %5145
  %v5147 = vsel %vm2691, %v5142, %v5144
  %v5148 = vsel %vm2691, %v5144, %v5146
  %v5151 = vsel %vm3486, %v5140, 0
  %5153 = vmatpush.msra.mxu0 0.0
  %5154 = vmatpush.msra.mxu0 0.0
  %5155 = vmatpush.msra.mxu0 0.0
  %5156 = vmatpush.msra.mxu0 0.0
  %5157 = vmatpush.msra.mxu0 0.0
  %5158 = vmatpush.msra.mxu0 0.0
  %5159 = vmatpush.msra.mxu0 0.0
  %5160 = vmatpush.msra.mxu0 0.0
  %5161 = vmatpush.msra.mxu0 0.0
  %5162 = vmatpush.msra.mxu0 0.0
  %5163 = vmatpush.msra.mxu0 0.0
  %5164 = vmatpush.msra.mxu0 0.0
  %5165 = vmatpush.msra.mxu0 0.0
  %5166 = vmatpush.msra.mxu0 0.0
  %5167 = vmatpush.msra.mxu0 0.0
  %5168 = vmatpush.msra.mxu0 %v5147
  %5169 = vmatmul.f32.gmra.mxu0 %v5151
  %v5170 = vpop.f32.mrf.mxu0
  %v5171 = vadd.f32 0.0, %v5170
  %5172 = vdwg.mxu0
  %5173 = vmatpush.msra.mxu0 0.0
  %5174 = vmatpush.msra.mxu0 0.0
  %5175 = vmatpush.msra.mxu0 0.0
  %5176 = vmatpush.msra.mxu0 0.0
  %5177 = vmatpush.msra.mxu0 0.0
  %5178 = vmatpush.msra.mxu0 0.0
  %5179 = vmatpush.msra.mxu0 0.0
  %5180 = vmatpush.msra.mxu0 0.0
  %5181 = vmatpush.msra.mxu0 0.0
  %5182 = vmatpush.msra.mxu0 0.0
  %5183 = vmatpush.msra.mxu0 0.0
  %5184 = vmatpush.msra.mxu0 0.0
  %5185 = vmatpush.msra.mxu0 0.0
  %5186 = vmatpush.msra.mxu0 0.0
  %5187 = vmatpush.msra.mxu0 0.0
  %5188 = vmatpush.msra.mxu0 %v5148
  %5189 = vmatmul.f32.gmra.mxu0 %v5151
  %v5190 = vpop.f32.mrf.mxu0
  %v5191 = vadd.f32 0.0, %v5190
  %5192 = vdwg.mxu0
  %v5193 = vadd.f32 %v5133, %v5171
  %v5194 = vadd.f32 %v5134, %v5191
  %v5195 = vld [vmem:[%s23] sm:$0xf]
  %5197 = vst [vmem:[#allocation1] ss:$2 sm:$0xff] %v5195
  %v5198 = vld.sshfl [vmem:[#allocation1] sm:$0xff pattern:$0x75316420]
  %5199 = vrot.lane.b32.xlu0 %v5198, 16
  %v5200 = vpop.permute.xlu0 %5199
  %5201 = vrot.lane.b32.xlu0 %v4357, 100
  %v5202 = vpop.permute.xlu0 %5201
  %5203 = vrot.lane.b32.xlu0 %v4377, 100
  %v5204 = vpop.permute.xlu0 %5203
  %5205 = vrot.lane.b32.xlu0 %v4397, 100
  %v5206 = vpop.permute.xlu0 %5205
  %v5207 = vsel %vm2750, %v5202, %v5204
  %v5208 = vsel %vm2750, %v5204, %v5206
  %v5211 = vsel %vm3486, %v5200, 0
  %5213 = vmatpush.msra.mxu0 0.0
  %5214 = vmatpush.msra.mxu0 0.0
  %5215 = vmatpush.msra.mxu0 0.0
  %5216 = vmatpush.msra.mxu0 0.0
  %5217 = vmatpush.msra.mxu0 0.0
  %5218 = vmatpush.msra.mxu0 0.0
  %5219 = vmatpush.msra.mxu0 0.0
  %5220 = vmatpush.msra.mxu0 0.0
  %5221 = vmatpush.msra.mxu0 0.0
  %5222 = vmatpush.msra.mxu0 0.0
  %5223 = vmatpush.msra.mxu0 0.0
  %5224 = vmatpush.msra.mxu0 0.0
  %5225 = vmatpush.msra.mxu0 0.0
  %5226 = vmatpush.msra.mxu0 0.0
  %5227 = vmatpush.msra.mxu0 0.0
  %5228 = vmatpush.msra.mxu0 %v5207
  %5229 = vmatmul.f32.gmra.mxu0 %v5211
  %v5230 = vpop.f32.mrf.mxu0
  %v5231 = vadd.f32 0.0, %v5230
  %5232 = vdwg.mxu0
  %5233 = vmatpush.msra.mxu0 0.0
  %5234 = vmatpush.msra.mxu0 0.0
  %5235 = vmatpush.msra.mxu0 0.0
  %5236 = vmatpush.msra.mxu0 0.0
  %5237 = vmatpush.msra.mxu0 0.0
  %5238 = vmatpush.msra.mxu0 0.0
  %5239 = vmatpush.msra.mxu0 0.0
  %5240 = vmatpush.msra.mxu0 0.0
  %5241 = vmatpush.msra.mxu0 0.0
  %5242 = vmatpush.msra.mxu0 0.0
  %5243 = vmatpush.msra.mxu0 0.0
  %5244 = vmatpush.msra.mxu0 0.0
  %5245 = vmatpush.msra.mxu0 0.0
  %5246 = vmatpush.msra.mxu0 0.0
  %5247 = vmatpush.msra.mxu0 0.0
  %5248 = vmatpush.msra.mxu0 %v5208
  %5249 = vmatmul.f32.gmra.mxu0 %v5211
  %v5250 = vpop.f32.mrf.mxu0
  %v5251 = vadd.f32 0.0, %v5250
  %5252 = vdwg.mxu0
  %v5253 = vadd.f32 %v5193, %v5231
  %v5254 = vadd.f32 %v5194, %v5251
  %v5255 = vld [vmem:[%s23] sm:$0xf]
  %5257 = vst [vmem:[#allocation1] ss:$2 sm:$0xff] %v5255
  %v5258 = vld.sshfl [vmem:[#allocation1] sm:$0xff pattern:$0x75316420]
  %5259 = vrot.lane.b32.xlu0 %v5258, 8
  %v5260 = vpop.permute.xlu0 %5259
  %5261 = vrot.lane.b32.xlu0 %v4357, 92
  %v5262 = vpop.permute.xlu0 %5261
  %5263 = vrot.lane.b32.xlu0 %v4377, 92
  %v5264 = vpop.permute.xlu0 %5263
  %5265 = vrot.lane.b32.xlu0 %v4397, 92
  %v5266 = vpop.permute.xlu0 %5265
  %v5267 = vsel %vm971, %v5262, %v5264
  %v5268 = vsel %vm971, %v5264, %v5266
  %v5271 = vsel %vm3486, %v5260, 0
  %5273 = vmatpush.msra.mxu0 0.0
  %5274 = vmatpush.msra.mxu0 0.0
  %5275 = vmatpush.msra.mxu0 0.0
  %5276 = vmatpush.msra.mxu0 0.0
  %5277 = vmatpush.msra.mxu0 0.0
  %5278 = vmatpush.msra.mxu0 0.0
  %5279 = vmatpush.msra.mxu0 0.0
  %5280 = vmatpush.msra.mxu0 0.0
  %5281 = vmatpush.msra.mxu0 0.0
  %5282 = vmatpush.msra.mxu0 0.0
  %5283 = vmatpush.msra.mxu0 0.0
  %5284 = vmatpush.msra.mxu0 0.0
  %5285 = vmatpush.msra.mxu0 0.0
  %5286 = vmatpush.msra.mxu0 0.0
  %5287 = vmatpush.msra.mxu0 0.0
  %5288 = vmatpush.msra.mxu0 %v5267
  %5289 = vmatmul.f32.gmra.mxu0 %v5271
  %v5290 = vpop.f32.mrf.mxu0
  %v5291 = vadd.f32 0.0, %v5290
  %5292 = vdwg.mxu0
  %5293 = vmatpush.msra.mxu0 0.0
  %5294 = vmatpush.msra.mxu0 0.0
  %5295 = vmatpush.msra.mxu0 0.0
  %5296 = vmatpush.msra.mxu0 0.0
  %5297 = vmatpush.msra.mxu0 0.0
  %5298 = vmatpush.msra.mxu0 0.0
  %5299 = vmatpush.msra.mxu0 0.0
  %5300 = vmatpush.msra.mxu0 0.0
  %5301 = vmatpush.msra.mxu0 0.0
  %5302 = vmatpush.msra.mxu0 0.0
  %5303 = vmatpush.msra.mxu0 0.0
  %5304 = vmatpush.msra.mxu0 0.0
  %5305 = vmatpush.msra.mxu0 0.0
  %5306 = vmatpush.msra.mxu0 0.0
  %5307 = vmatpush.msra.mxu0 0.0
  %5308 = vmatpush.msra.mxu0 %v5268
  %5309 = vmatmul.f32.gmra.mxu0 %v5271
  %v5310 = vpop.f32.mrf.mxu0
  %v5311 = vadd.f32 0.0, %v5310
  %5312 = vdwg.mxu0
  %v5313 = vadd.f32 %v5253, %v5291
  %v5314 = vadd.f32 %v5254, %v5311
  %v5315 = vld [vmem:[%s23 + $0x4] sm:$0xf]
  %5316 = vrot.lane.b32.xlu0 %v4357, 91
  %v5317 = vpop.permute.xlu0 %5316
  %5318 = vrot.lane.b32.xlu0 %v4377, 91
  %v5319 = vpop.permute.xlu0 %5318
  %5320 = vrot.lane.b32.xlu0 %v4397, 91
  %v5321 = vpop.permute.xlu0 %5320
  %v5322 = vsel %vm1121, %v5317, %v5319
  %v5323 = vsel %vm1121, %v5319, %v5321
  %v5327 = vsel %vm3486, %v5315, 0
  %5329 = vmatpush.msra.mxu0 0.0
  %5330 = vmatpush.msra.mxu0 0.0
  %5331 = vmatpush.msra.mxu0 0.0
  %5332 = vmatpush.msra.mxu0 0.0
  %5333 = vmatpush.msra.mxu0 0.0
  %5334 = vmatpush.msra.mxu0 0.0
  %5335 = vmatpush.msra.mxu0 0.0
  %5336 = vmatpush.msra.mxu0 0.0
  %5337 = vmatpush.msra.mxu0 0.0
  %5338 = vmatpush.msra.mxu0 0.0
  %5339 = vmatpush.msra.mxu0 0.0
  %5340 = vmatpush.msra.mxu0 0.0
  %5341 = vmatpush.msra.mxu0 0.0
  %5342 = vmatpush.msra.mxu0 0.0
  %5343 = vmatpush.msra.mxu0 0.0
  %5344 = vmatpush.msra.mxu0 %v5322
  %5345 = vmatmul.f32.gmra.mxu0 %v5327
  %v5346 = vpop.f32.mrf.mxu0
  %v5347 = vadd.f32 0.0, %v5346
  %5348 = vdwg.mxu0
  %5349 = vmatpush.msra.mxu0 0.0
  %5350 = vmatpush.msra.mxu0 0.0
  %5351 = vmatpush.msra.mxu0 0.0
  %5352 = vmatpush.msra.mxu0 0.0
  %5353 = vmatpush.msra.mxu0 0.0
  %5354 = vmatpush.msra.mxu0 0.0
  %5355 = vmatpush.msra.mxu0 0.0
  %5356 = vmatpush.msra.mxu0 0.0
  %5357 = vmatpush.msra.mxu0 0.0
  %5358 = vmatpush.msra.mxu0 0.0
  %5359 = vmatpush.msra.mxu0 0.0
  %5360 = vmatpush.msra.mxu0 0.0
  %5361 = vmatpush.msra.mxu0 0.0
  %5362 = vmatpush.msra.mxu0 0.0
  %5363 = vmatpush.msra.mxu0 0.0
  %5364 = vmatpush.msra.mxu0 %v5323
  %5365 = vmatmul.f32.gmra.mxu0 %v5327
  %v5366 = vpop.f32.mrf.mxu0
  %v5367 = vadd.f32 0.0, %v5366
  %5368 = vdwg.mxu0
  %v5369 = vadd.f32 %v5313, %v5347
  %v5370 = vadd.f32 %v5314, %v5367
  %5371 = vst [vmem:[#allocation1] ss:$2 sm:$0xff] %v5315
  %v5372 = vld.sshfl [vmem:[#allocation1] sm:$0xff pattern:$0x75316420]
  %5373 = vrot.lane.b32.xlu0 %v5372, 120
  %v5374 = vpop.permute.xlu0 %5373
  %5375 = vrot.lane.b32.xlu0 %v4357, 90
  %v5376 = vpop.permute.xlu0 %5375
  %5377 = vrot.lane.b32.xlu0 %v4377, 90
  %v5378 = vpop.permute.xlu0 %5377
  %5379 = vrot.lane.b32.xlu0 %v4397, 90
  %v5380 = vpop.permute.xlu0 %5379
  %v5381 = vsel %vm1271, %v5376, %v5378
  %v5382 = vsel %vm1271, %v5378, %v5380
  %v5385 = vsel %vm3486, %v5374, 0
  %5387 = vmatpush.msra.mxu0 0.0
  %5388 = vmatpush.msra.mxu0 0.0
  %5389 = vmatpush.msra.mxu0 0.0
  %5390 = vmatpush.msra.mxu0 0.0
  %5391 = vmatpush.msra.mxu0 0.0
  %5392 = vmatpush.msra.mxu0 0.0
  %5393 = vmatpush.msra.mxu0 0.0
  %5394 = vmatpush.msra.mxu0 0.0
  %5395 = vmatpush.msra.mxu0 0.0
  %5396 = vmatpush.msra.mxu0 0.0
  %5397 = vmatpush.msra.mxu0 0.0
  %5398 = vmatpush.msra.mxu0 0.0
  %5399 = vmatpush.msra.mxu0 0.0
  %5400 = vmatpush.msra.mxu0 0.0
  %5401 = vmatpush.msra.mxu0 0.0
  %5402 = vmatpush.msra.mxu0 %v5381
  %5403 = vmatmul.f32.gmra.mxu0 %v5385
  %v5404 = vpop.f32.mrf.mxu0
  %v5405 = vadd.f32 0.0, %v5404
  %5406 = vdwg.mxu0
  %5407 = vmatpush.msra.mxu0 0.0
  %5408 = vmatpush.msra.mxu0 0.0
  %5409 = vmatpush.msra.mxu0 0.0
  %5410 = vmatpush.msra.mxu0 0.0
  %5411 = vmatpush.msra.mxu0 0.0
  %5412 = vmatpush.msra.mxu0 0.0
  %5413 = vmatpush.msra.mxu0 0.0
  %5414 = vmatpush.msra.mxu0 0.0
  %5415 = vmatpush.msra.mxu0 0.0
  %5416 = vmatpush.msra.mxu0 0.0
  %5417 = vmatpush.msra.mxu0 0.0
  %5418 = vmatpush.msra.mxu0 0.0
  %5419 = vmatpush.msra.mxu0 0.0
  %5420 = vmatpush.msra.mxu0 0.0
  %5421 = vmatpush.msra.mxu0 0.0
  %5422 = vmatpush.msra.mxu0 %v5382
  %5423 = vmatmul.f32.gmra.mxu0 %v5385
  %v5424 = vpop.f32.mrf.mxu0
  %v5425 = vadd.f32 0.0, %v5424
  %5426 = vdwg.mxu0
  %v5427 = vadd.f32 %v5369, %v5405
  %v5428 = vadd.f32 %v5370, %v5425
  %v5429 = vld [vmem:[%s23 + $0x4] sm:$0xf]
  %5431 = vst [vmem:[#allocation1] ss:$2 sm:$0xff] %v5429
  %v5432 = vld.sshfl [vmem:[#allocation1] sm:$0xff pattern:$0x75316420]
  %5433 = vrot.lane.b32.xlu0 %v5432, 112
  %v5434 = vpop.permute.xlu0 %5433
  %5435 = vrot.lane.b32.xlu0 %v4357, 89
  %v5436 = vpop.permute.xlu0 %5435
  %5437 = vrot.lane.b32.xlu0 %v4377, 89
  %v5438 = vpop.permute.xlu0 %5437
  %5439 = vrot.lane.b32.xlu0 %v4397, 89
  %v5440 = vpop.permute.xlu0 %5439
  %v5441 = vsel %vm2983, %v5436, %v5438
  %v5442 = vsel %vm2983, %v5438, %v5440
  %v5445 = vsel %vm3486, %v5434, 0
  %5447 = vmatpush.msra.mxu0 0.0
  %5448 = vmatpush.msra.mxu0 0.0
  %5449 = vmatpush.msra.mxu0 0.0
  %5450 = vmatpush.msra.mxu0 0.0
  %5451 = vmatpush.msra.mxu0 0.0
  %5452 = vmatpush.msra.mxu0 0.0
  %5453 = vmatpush.msra.mxu0 0.0
  %5454 = vmatpush.msra.mxu0 0.0
  %5455 = vmatpush.msra.mxu0 0.0
  %5456 = vmatpush.msra.mxu0 0.0
  %5457 = vmatpush.msra.mxu0 0.0
  %5458 = vmatpush.msra.mxu0 0.0
  %5459 = vmatpush.msra.mxu0 0.0
  %5460 = vmatpush.msra.mxu0 0.0
  %5461 = vmatpush.msra.mxu0 0.0
  %5462 = vmatpush.msra.mxu0 %v5441
  %5463 = vmatmul.f32.gmra.mxu0 %v5445
  %v5464 = vpop.f32.mrf.mxu0
  %v5465 = vadd.f32 0.0, %v5464
  %5466 = vdwg.mxu0
  %5467 = vmatpush.msra.mxu0 0.0
  %5468 = vmatpush.msra.mxu0 0.0
  %5469 = vmatpush.msra.mxu0 0.0
  %5470 = vmatpush.msra.mxu0 0.0
  %5471 = vmatpush.msra.mxu0 0.0
  %5472 = vmatpush.msra.mxu0 0.0
  %5473 = vmatpush.msra.mxu0 0.0
  %5474 = vmatpush.msra.mxu0 0.0
  %5475 = vmatpush.msra.mxu0 0.0
  %5476 = vmatpush.msra.mxu0 0.0
  %5477 = vmatpush.msra.mxu0 0.0
  %5478 = vmatpush.msra.mxu0 0.0
  %5479 = vmatpush.msra.mxu0 0.0
  %5480 = vmatpush.msra.mxu0 0.0
  %5481 = vmatpush.msra.mxu0 0.0
  %5482 = vmatpush.msra.mxu0 %v5442
  %5483 = vmatmul.f32.gmra.mxu0 %v5445
  %v5484 = vpop.f32.mrf.mxu0
  %v5485 = vadd.f32 0.0, %v5484
  %5486 = vdwg.mxu0
  %v5487 = vadd.f32 %v5427, %v5465
  %v5488 = vadd.f32 %v5428, %v5485
  %v5489 = vld [vmem:[%s23 + $0x4] sm:$0xf]
  %5491 = vst [vmem:[#allocation1] ss:$2 sm:$0xff] %v5489
  %v5492 = vld.sshfl [vmem:[#allocation1] sm:$0xff pattern:$0x75316420]
  %5493 = vrot.lane.b32.xlu0 %v5492, 104
  %v5494 = vpop.permute.xlu0 %5493
  %5495 = vrot.lane.b32.xlu0 %v4357, 88
  %v5496 = vpop.permute.xlu0 %5495
  %5497 = vrot.lane.b32.xlu0 %v4377, 88
  %v5498 = vpop.permute.xlu0 %5497
  %5499 = vrot.lane.b32.xlu0 %v4397, 88
  %v5500 = vpop.permute.xlu0 %5499
  %v5501 = vsel %vm3042, %v5496, %v5498
  %v5502 = vsel %vm3042, %v5498, %v5500
  %v5505 = vsel %vm3486, %v5494, 0
  %5507 = vmatpush.msra.mxu0 0.0
  %5508 = vmatpush.msra.mxu0 0.0
  %5509 = vmatpush.msra.mxu0 0.0
  %5510 = vmatpush.msra.mxu0 0.0
  %5511 = vmatpush.msra.mxu0 0.0
  %5512 = vmatpush.msra.mxu0 0.0
  %5513 = vmatpush.msra.mxu0 0.0
  %5514 = vmatpush.msra.mxu0 0.0
  %5515 = vmatpush.msra.mxu0 0.0
  %5516 = vmatpush.msra.mxu0 0.0
  %5517 = vmatpush.msra.mxu0 0.0
  %5518 = vmatpush.msra.mxu0 0.0
  %5519 = vmatpush.msra.mxu0 0.0
  %5520 = vmatpush.msra.mxu0 0.0
  %5521 = vmatpush.msra.mxu0 0.0
  %5522 = vmatpush.msra.mxu0 %v5501
  %5523 = vmatmul.f32.gmra.mxu0 %v5505
  %v5524 = vpop.f32.mrf.mxu0
  %v5525 = vadd.f32 0.0, %v5524
  %5526 = vdwg.mxu0
  %5527 = vmatpush.msra.mxu0 0.0
  %5528 = vmatpush.msra.mxu0 0.0
  %5529 = vmatpush.msra.mxu0 0.0
  %5530 = vmatpush.msra.mxu0 0.0
  %5531 = vmatpush.msra.mxu0 0.0
  %5532 = vmatpush.msra.mxu0 0.0
  %5533 = vmatpush.msra.mxu0 0.0
  %5534 = vmatpush.msra.mxu0 0.0
  %5535 = vmatpush.msra.mxu0 0.0
  %5536 = vmatpush.msra.mxu0 0.0
  %5537 = vmatpush.msra.mxu0 0.0
  %5538 = vmatpush.msra.mxu0 0.0
  %5539 = vmatpush.msra.mxu0 0.0
  %5540 = vmatpush.msra.mxu0 0.0
  %5541 = vmatpush.msra.mxu0 0.0
  %5542 = vmatpush.msra.mxu0 %v5502
  %5543 = vmatmul.f32.gmra.mxu0 %v5505
  %v5544 = vpop.f32.mrf.mxu0
  %v5545 = vadd.f32 0.0, %v5544
  %5546 = vdwg.mxu0
  %v5547 = vadd.f32 %v5487, %v5525
  %v5548 = vadd.f32 %v5488, %v5545
  %v5549 = vld [vmem:[%s23 + $0x4] sm:$0xf]
  %5551 = vst [vmem:[#allocation1] ss:$2 sm:$0xff] %v5549
  %v5552 = vld.sshfl [vmem:[#allocation1] sm:$0xff pattern:$0x75316420]
  %5553 = vrot.lane.b32.xlu0 %v5552, 96
  %v5554 = vpop.permute.xlu0 %5553
  %5555 = vrot.lane.b32.xlu0 %v4357, 80
  %v5556 = vpop.permute.xlu0 %5555
  %5557 = vrot.lane.b32.xlu0 %v4377, 80
  %v5558 = vpop.permute.xlu0 %5557
  %5559 = vrot.lane.b32.xlu0 %v4397, 80
  %v5560 = vpop.permute.xlu0 %5559
  %v5561 = vsel %vm3101, %v5556, %v5558
  %v5562 = vsel %vm3101, %v5558, %v5560
  %v5565 = vsel %vm3486, %v5554, 0
  %5567 = vmatpush.msra.mxu0 0.0
  %5568 = vmatpush.msra.mxu0 0.0
  %5569 = vmatpush.msra.mxu0 0.0
  %5570 = vmatpush.msra.mxu0 0.0
  %5571 = vmatpush.msra.mxu0 0.0
  %5572 = vmatpush.msra.mxu0 0.0
  %5573 = vmatpush.msra.mxu0 0.0
  %5574 = vmatpush.msra.mxu0 0.0
  %5575 = vmatpush.msra.mxu0 0.0
  %5576 = vmatpush.msra.mxu0 0.0
  %5577 = vmatpush.msra.mxu0 0.0
  %5578 = vmatpush.msra.mxu0 0.0
  %5579 = vmatpush.msra.mxu0 0.0
  %5580 = vmatpush.msra.mxu0 0.0
  %5581 = vmatpush.msra.mxu0 0.0
  %5582 = vmatpush.msra.mxu0 %v5561
  %5583 = vmatmul.f32.gmra.mxu0 %v5565
  %v5584 = vpop.f32.mrf.mxu0
  %v5585 = vadd.f32 0.0, %v5584
  %5586 = vdwg.mxu0
  %5587 = vmatpush.msra.mxu0 0.0
  %5588 = vmatpush.msra.mxu0 0.0
  %5589 = vmatpush.msra.mxu0 0.0
  %5590 = vmatpush.msra.mxu0 0.0
  %5591 = vmatpush.msra.mxu0 0.0
  %5592 = vmatpush.msra.mxu0 0.0
  %5593 = vmatpush.msra.mxu0 0.0
  %5594 = vmatpush.msra.mxu0 0.0
  %5595 = vmatpush.msra.mxu0 0.0
  %5596 = vmatpush.msra.mxu0 0.0
  %5597 = vmatpush.msra.mxu0 0.0
  %5598 = vmatpush.msra.mxu0 0.0
  %5599 = vmatpush.msra.mxu0 0.0
  %5600 = vmatpush.msra.mxu0 0.0
  %5601 = vmatpush.msra.mxu0 0.0
  %5602 = vmatpush.msra.mxu0 %v5562
  %5603 = vmatmul.f32.gmra.mxu0 %v5565
  %v5604 = vpop.f32.mrf.mxu0
  %v5605 = vadd.f32 0.0, %v5604
  %5606 = vdwg.mxu0
  %v5607 = vadd.f32 %v5547, %v5585
  %v5608 = vadd.f32 %v5548, %v5605
  %v5609 = vld [vmem:[%s23 + $0x4] sm:$0xf]
  %5611 = vst [vmem:[#allocation1] ss:$2 sm:$0xff] %v5609
  %v5612 = vld.sshfl [vmem:[#allocation1] sm:$0xff pattern:$0x75316420]
  %5613 = vrot.lane.b32.xlu0 %v5612, 88
  %v5614 = vpop.permute.xlu0 %5613
  %5615 = vrot.lane.b32.xlu0 %v4357, 79
  %v5616 = vpop.permute.xlu0 %5615
  %5617 = vrot.lane.b32.xlu0 %v4377, 79
  %v5618 = vpop.permute.xlu0 %5617
  %5619 = vrot.lane.b32.xlu0 %v4397, 79
  %v5620 = vpop.permute.xlu0 %5619
  %v5621 = vsel %vm3160, %v5616, %v5618
  %v5622 = vsel %vm3160, %v5618, %v5620
  %v5625 = vsel %vm3486, %v5614, 0
  %5627 = vmatpush.msra.mxu0 0.0
  %5628 = vmatpush.msra.mxu0 0.0
  %5629 = vmatpush.msra.mxu0 0.0
  %5630 = vmatpush.msra.mxu0 0.0
  %5631 = vmatpush.msra.mxu0 0.0
  %5632 = vmatpush.msra.mxu0 0.0
  %5633 = vmatpush.msra.mxu0 0.0
  %5634 = vmatpush.msra.mxu0 0.0
  %5635 = vmatpush.msra.mxu0 0.0
  %5636 = vmatpush.msra.mxu0 0.0
  %5637 = vmatpush.msra.mxu0 0.0
  %5638 = vmatpush.msra.mxu0 0.0
  %5639 = vmatpush.msra.mxu0 0.0
  %5640 = vmatpush.msra.mxu0 0.0
  %5641 = vmatpush.msra.mxu0 0.0
  %5642 = vmatpush.msra.mxu0 %v5621
  %5643 = vmatmul.f32.gmra.mxu0 %v5625
  %v5644 = vpop.f32.mrf.mxu0
  %v5645 = vadd.f32 0.0, %v5644
  %5646 = vdwg.mxu0
  %5647 = vmatpush.msra.mxu0 0.0
  %5648 = vmatpush.msra.mxu0 0.0
  %5649 = vmatpush.msra.mxu0 0.0
  %5650 = vmatpush.msra.mxu0 0.0
  %5651 = vmatpush.msra.mxu0 0.0
  %5652 = vmatpush.msra.mxu0 0.0
  %5653 = vmatpush.msra.mxu0 0.0
  %5654 = vmatpush.msra.mxu0 0.0
  %5655 = vmatpush.msra.mxu0 0.0
  %5656 = vmatpush.msra.mxu0 0.0
  %5657 = vmatpush.msra.mxu0 0.0
  %5658 = vmatpush.msra.mxu0 0.0
  %5659 = vmatpush.msra.mxu0 0.0
  %5660 = vmatpush.msra.mxu0 0.0
  %5661 = vmatpush.msra.mxu0 0.0
  %5662 = vmatpush.msra.mxu0 %v5622
  %5663 = vmatmul.f32.gmra.mxu0 %v5625
  %v5664 = vpop.f32.mrf.mxu0
  %v5665 = vadd.f32 0.0, %v5664
  %5666 = vdwg.mxu0
  %v5667 = vadd.f32 %v5607, %v5645
  %v5668 = vadd.f32 %v5608, %v5665
  %v5669 = vld [vmem:[%s23 + $0x4] sm:$0xf]
  %5671 = vst [vmem:[#allocation1] ss:$2 sm:$0xff] %v5669
  %v5672 = vld.sshfl [vmem:[#allocation1] sm:$0xff pattern:$0x75316420]
  %5673 = vrot.lane.b32.xlu0 %v5672, 80
  %v5674 = vpop.permute.xlu0 %5673
  %5675 = vrot.lane.b32.xlu0 %v4357, 78
  %v5676 = vpop.permute.xlu0 %5675
  %5677 = vrot.lane.b32.xlu0 %v4377, 78
  %v5678 = vpop.permute.xlu0 %5677
  %5679 = vrot.lane.b32.xlu0 %v4397, 78
  %v5680 = vpop.permute.xlu0 %5679
  %v5681 = vsel %vm3219, %v5676, %v5678
  %v5682 = vsel %vm3219, %v5678, %v5680
  %v5685 = vsel %vm3486, %v5674, 0
  %5687 = vmatpush.msra.mxu0 0.0
  %5688 = vmatpush.msra.mxu0 0.0
  %5689 = vmatpush.msra.mxu0 0.0
  %5690 = vmatpush.msra.mxu0 0.0
  %5691 = vmatpush.msra.mxu0 0.0
  %5692 = vmatpush.msra.mxu0 0.0
  %5693 = vmatpush.msra.mxu0 0.0
  %5694 = vmatpush.msra.mxu0 0.0
  %5695 = vmatpush.msra.mxu0 0.0
  %5696 = vmatpush.msra.mxu0 0.0
  %5697 = vmatpush.msra.mxu0 0.0
  %5698 = vmatpush.msra.mxu0 0.0
  %5699 = vmatpush.msra.mxu0 0.0
  %5700 = vmatpush.msra.mxu0 0.0
  %5701 = vmatpush.msra.mxu0 0.0
  %5702 = vmatpush.msra.mxu0 %v5681
  %5703 = vmatmul.f32.gmra.mxu0 %v5685
  %v5704 = vpop.f32.mrf.mxu0
  %v5705 = vadd.f32 0.0, %v5704
  %5706 = vdwg.mxu0
  %5707 = vmatpush.msra.mxu0 0.0
  %5708 = vmatpush.msra.mxu0 0.0
  %5709 = vmatpush.msra.mxu0 0.0
  %5710 = vmatpush.msra.mxu0 0.0
  %5711 = vmatpush.msra.mxu0 0.0
  %5712 = vmatpush.msra.mxu0 0.0
  %5713 = vmatpush.msra.mxu0 0.0
  %5714 = vmatpush.msra.mxu0 0.0
  %5715 = vmatpush.msra.mxu0 0.0
  %5716 = vmatpush.msra.mxu0 0.0
  %5717 = vmatpush.msra.mxu0 0.0
  %5718 = vmatpush.msra.mxu0 0.0
  %5719 = vmatpush.msra.mxu0 0.0
  %5720 = vmatpush.msra.mxu0 0.0
  %5721 = vmatpush.msra.mxu0 0.0
  %5722 = vmatpush.msra.mxu0 %v5682
  %5723 = vmatmul.f32.gmra.mxu0 %v5685
  %v5724 = vpop.f32.mrf.mxu0
  %v5725 = vadd.f32 0.0, %v5724
  %5726 = vdwg.mxu0
  %v5727 = vadd.f32 %v5667, %v5705
  %v5728 = vadd.f32 %v5668, %v5725
  %v5729 = vld [vmem:[%s23 + $0x4] sm:$0xf]
  %5731 = vst [vmem:[#allocation1] ss:$2 sm:$0xff] %v5729
  %v5732 = vld.sshfl [vmem:[#allocation1] sm:$0xff pattern:$0x75316420]
  %5733 = vrot.lane.b32.xlu0 %v5732, 72
  %v5734 = vpop.permute.xlu0 %5733
  %5735 = vrot.lane.b32.xlu0 %v4357, 77
  %v5736 = vpop.permute.xlu0 %5735
  %5737 = vrot.lane.b32.xlu0 %v4377, 77
  %v5738 = vpop.permute.xlu0 %5737
  %5739 = vrot.lane.b32.xlu0 %v4397, 77
  %v5740 = vpop.permute.xlu0 %5739
  %v5741 = vsel %vm3278, %v5736, %v5738
  %v5742 = vsel %vm3278, %v5738, %v5740
  %v5745 = vsel %vm3486, %v5734, 0
  %5747 = vmatpush.msra.mxu0 0.0
  %5748 = vmatpush.msra.mxu0 0.0
  %5749 = vmatpush.msra.mxu0 0.0
  %5750 = vmatpush.msra.mxu0 0.0
  %5751 = vmatpush.msra.mxu0 0.0
  %5752 = vmatpush.msra.mxu0 0.0
  %5753 = vmatpush.msra.mxu0 0.0
  %5754 = vmatpush.msra.mxu0 0.0
  %5755 = vmatpush.msra.mxu0 0.0
  %5756 = vmatpush.msra.mxu0 0.0
  %5757 = vmatpush.msra.mxu0 0.0
  %5758 = vmatpush.msra.mxu0 0.0
  %5759 = vmatpush.msra.mxu0 0.0
  %5760 = vmatpush.msra.mxu0 0.0
  %5761 = vmatpush.msra.mxu0 0.0
  %5762 = vmatpush.msra.mxu0 %v5741
  %5763 = vmatmul.f32.gmra.mxu0 %v5745
  %v5764 = vpop.f32.mrf.mxu0
  %v5765 = vadd.f32 0.0, %v5764
  %5766 = vdwg.mxu0
  %5767 = vmatpush.msra.mxu0 0.0
  %5768 = vmatpush.msra.mxu0 0.0
  %5769 = vmatpush.msra.mxu0 0.0
  %5770 = vmatpush.msra.mxu0 0.0
  %5771 = vmatpush.msra.mxu0 0.0
  %5772 = vmatpush.msra.mxu0 0.0
  %5773 = vmatpush.msra.mxu0 0.0
  %5774 = vmatpush.msra.mxu0 0.0
  %5775 = vmatpush.msra.mxu0 0.0
  %5776 = vmatpush.msra.mxu0 0.0
  %5777 = vmatpush.msra.mxu0 0.0
  %5778 = vmatpush.msra.mxu0 0.0
  %5779 = vmatpush.msra.mxu0 0.0
  %5780 = vmatpush.msra.mxu0 0.0
  %5781 = vmatpush.msra.mxu0 0.0
  %5782 = vmatpush.msra.mxu0 %v5742
  %5783 = vmatmul.f32.gmra.mxu0 %v5745
  %v5784 = vpop.f32.mrf.mxu0
  %v5785 = vadd.f32 0.0, %v5784
  %5786 = vdwg.mxu0
  %v5787 = vadd.f32 %v5727, %v5765
  %v5788 = vadd.f32 %v5728, %v5785
  %v5789 = vld [vmem:[%s23 + $0x4] sm:$0xf]
  %5791 = vst [vmem:[#allocation1] ss:$2 sm:$0xff] %v5789
  %v5792 = vld.sshfl [vmem:[#allocation1] sm:$0xff pattern:$0x75316420]
  %5793 = vrot.lane.b32.xlu0 %v5792, 64
  %v5794 = vpop.permute.xlu0 %5793
  %5795 = vrot.lane.b32.xlu0 %v4357, 76
  %v5796 = vpop.permute.xlu0 %5795
  %5797 = vrot.lane.b32.xlu0 %v4377, 76
  %v5798 = vpop.permute.xlu0 %5797
  %5799 = vrot.lane.b32.xlu0 %v4397, 76
  %v5800 = vpop.permute.xlu0 %5799
  %v5801 = vsel %vm3337, %v5796, %v5798
  %v5802 = vsel %vm3337, %v5798, %v5800
  %v5805 = vsel %vm3486, %v5794, 0
  %5807 = vmatpush.msra.mxu0 0.0
  %5808 = vmatpush.msra.mxu0 0.0
  %5809 = vmatpush.msra.mxu0 0.0
  %5810 = vmatpush.msra.mxu0 0.0
  %5811 = vmatpush.msra.mxu0 0.0
  %5812 = vmatpush.msra.mxu0 0.0
  %5813 = vmatpush.msra.mxu0 0.0
  %5814 = vmatpush.msra.mxu0 0.0
  %5815 = vmatpush.msra.mxu0 0.0
  %5816 = vmatpush.msra.mxu0 0.0
  %5817 = vmatpush.msra.mxu0 0.0
  %5818 = vmatpush.msra.mxu0 0.0
  %5819 = vmatpush.msra.mxu0 0.0
  %5820 = vmatpush.msra.mxu0 0.0
  %5821 = vmatpush.msra.mxu0 0.0
  %5822 = vmatpush.msra.mxu0 %v5801
  %5823 = vmatmul.f32.gmra.mxu0 %v5805
  %v5824 = vpop.f32.mrf.mxu0
  %v5825 = vadd.f32 0.0, %v5824
  %5826 = vdwg.mxu0
  %5827 = vmatpush.msra.mxu0 0.0
  %5828 = vmatpush.msra.mxu0 0.0
  %5829 = vmatpush.msra.mxu0 0.0
  %5830 = vmatpush.msra.mxu0 0.0
  %5831 = vmatpush.msra.mxu0 0.0
  %5832 = vmatpush.msra.mxu0 0.0
  %5833 = vmatpush.msra.mxu0 0.0
  %5834 = vmatpush.msra.mxu0 0.0
  %5835 = vmatpush.msra.mxu0 0.0
  %5836 = vmatpush.msra.mxu0 0.0
  %5837 = vmatpush.msra.mxu0 0.0
  %5838 = vmatpush.msra.mxu0 0.0
  %5839 = vmatpush.msra.mxu0 0.0
  %5840 = vmatpush.msra.mxu0 0.0
  %5841 = vmatpush.msra.mxu0 0.0
  %5842 = vmatpush.msra.mxu0 %v5802
  %5843 = vmatmul.f32.gmra.mxu0 %v5805
  %v5844 = vpop.f32.mrf.mxu0
  %v5845 = vadd.f32 0.0, %v5844
  %5846 = vdwg.mxu0
  %v5847 = vadd.f32 %v5787, %v5825
  %v5848 = vadd.f32 %v5788, %v5845
  %v5849 = vld [vmem:[%s24] sm:$0xf]
  %5851 = vset.pattern.permute.xlu0 0
  %5852 = vperm.xlu0 %5851, %v5849
  %v5853 = vpop.permute.xlu0 %5852
  %v5855 = vadd.f32 %v5847, %v5853
  %v5856 = vadd.f32 %v5848, %v5853
  %v5857 = vmax.f32 %v5855, 0.0
  %v5858 = vmax.f32 %v5856, 0.0
  %v5859 = vld [vmem:[%s25] sm:$0xff]
  %v5860 = vld [vmem:[%s25 + $0x8] sm:$0xff]
  %v5861 = vld [vmem:[%s25 + $0x10] sm:$0xff]
  %v5862 = vld [vmem:[%s25 + $0x18] sm:$0xff]
  %v5863 = vld [vmem:[%s25 + $0x20] sm:$0xff]
  %v5864 = vld [vmem:[%s25 + $0x28] sm:$0xff]
  %v5865 = vld [vmem:[%s25 + $0x30] sm:$0xff]
  %v5866 = vld [vmem:[%s25 + $0x38] sm:$0xff]
  %v5867 = vld [vmem:[%s25 + $0x40] sm:$0xff]
  %v5868 = vld [vmem:[%s25 + $0x48] sm:$0xff]
  %v5869 = vld [vmem:[%s25 + $0x50] sm:$0xff]
  %v5870 = vld [vmem:[%s25 + $0x58] sm:$0xff]
  %v5871 = vld [vmem:[%s25 + $0x60] sm:$0xff]
  %v5872 = vld [vmem:[%s25 + $0x68] sm:$0xff]
  %v5873 = vld [vmem:[%s25 + $0x70] sm:$0xff]
  %v5874 = vld [vmem:[%s25 + $0x78] sm:$0xff]
  %v5875 = vld [vmem:[%s25 + $0x80] sm:$0xff]
  %v5876 = vld [vmem:[%s25 + $0x88] sm:$0xff]
  %v5877 = vld [vmem:[%s25 + $0x90] sm:$0xff]
  %v5878 = vld [vmem:[%s25 + $0x98] sm:$0xff]
  %v5879 = vld [vmem:[%s25 + $0xa0] sm:$0xff]
  %v5880 = vld [vmem:[%s25 + $0xa8] sm:$0xff]
  %v5881 = vld [vmem:[%s25 + $0xb0] sm:$0xff]
  %v5882 = vld [vmem:[%s25 + $0xb8] sm:$0xff]
  %v5883 = vld [vmem:[%s25 + $0xc0] sm:$0xff]
  %v5884 = vld [vmem:[%s25 + $0xc8] sm:$0xff]
  %v5885 = vld [vmem:[%s25 + $0xd0] sm:$0xff]
  %v5886 = vld [vmem:[%s25 + $0xd8] sm:$0xff]
  %v5887 = vld [vmem:[%s25 + $0xe0] sm:$0xff]
  %v5888 = vld [vmem:[%s25 + $0xe8] sm:$0xff]
  %v5889 = vld [vmem:[%s25 + $0xf0] sm:$0xff]
  %v5890 = vld [vmem:[%s25 + $0xf8] sm:$0xff]
  %v5891 = vld [vmem:[%s25 + $0x100] sm:$0xff]
  %v5892 = vld [vmem:[%s25 + $0x108] sm:$0xff]
  %v5893 = vld [vmem:[%s25 + $0x110] sm:$0xff]
  %v5894 = vld [vmem:[%s25 + $0x118] sm:$0xff]
  %v5895 = vld [vmem:[%s25 + $0x120] sm:$0xff]
  %v5896 = vld [vmem:[%s25 + $0x128] sm:$0xff]
  %v5897 = vld [vmem:[%s25 + $0x130] sm:$0xff]
  %v5898 = vld [vmem:[%s25 + $0x138] sm:$0xff]
  %v5899 = vld [vmem:[%s25 + $0x140] sm:$0xff]
  %v5900 = vld [vmem:[%s25 + $0x148] sm:$0xff]
  %v5901 = vld [vmem:[%s25 + $0x150] sm:$0xff]
  %v5902 = vld [vmem:[%s25 + $0x158] sm:$0xff]
  %v5903 = vld [vmem:[%s25 + $0x160] sm:$0xff]
  %v5904 = vld [vmem:[%s25 + $0x168] sm:$0xff]
  %v5905 = vld [vmem:[%s25 + $0x170] sm:$0xff]
  %v5906 = vld [vmem:[%s25 + $0x178] sm:$0xff]
  %v5907 = vld [vmem:[%s25 + $0x180] sm:$0xff]
  %v5908 = vld [vmem:[%s25 + $0x188] sm:$0xff]
  %v5909 = vld [vmem:[%s25 + $0x190] sm:$0xff]
  %v5910 = vld [vmem:[%s25 + $0x198] sm:$0xff]
  %v5911 = vld [vmem:[%s25 + $0x1a0] sm:$0xff]
  %v5912 = vld [vmem:[%s25 + $0x1a8] sm:$0xff]
  %v5913 = vld [vmem:[%s25 + $0x1b0] sm:$0xff]
  %v5914 = vld [vmem:[%s25 + $0x1b8] sm:$0xff]
  %v5915 = vld [vmem:[%s25 + $0x1c0] sm:$0xff]
  %v5916 = vld [vmem:[%s25 + $0x1c8] sm:$0xff]
  %v5917 = vld [vmem:[%s25 + $0x1d0] sm:$0xff]
  %v5918 = vld [vmem:[%s25 + $0x1d8] sm:$0xff]
  %v5919 = vld [vmem:[%s25 + $0x1e0] sm:$0xff]
  %v5920 = vld [vmem:[%s25 + $0x1e8] sm:$0xff]
  %v5921 = vld [vmem:[%s25 + $0x1f0] sm:$0xff]
  %v5922 = vld [vmem:[%s25 + $0x1f8] sm:$0xff]
  %v5923 = vld [vmem:[%s25 + $0x200] sm:$0xff]
  %v5924 = vld [vmem:[%s25 + $0x208] sm:$0xff]
  %v5925 = vld [vmem:[%s25 + $0x210] sm:$0xff]
  %v5926 = vld [vmem:[%s25 + $0x218] sm:$0xff]
  %v5927 = vld [vmem:[%s25 + $0x220] sm:$0xff]
  %v5928 = vld [vmem:[%s25 + $0x228] sm:$0xff]
  %v5929 = vld [vmem:[%s25 + $0x230] sm:$0xff]
  %v5930 = vld [vmem:[%s25 + $0x238] sm:$0xff]
  %v5931 = vld [vmem:[%s25 + $0x240] sm:$0xff]
  %v5932 = vld [vmem:[%s25 + $0x248] sm:$0xff]
  %v5933 = vld [vmem:[%s25 + $0x250] sm:$0xff]
  %v5934 = vld [vmem:[%s25 + $0x258] sm:$0xff]
  %v5935 = vld [vmem:[%s25 + $0x260] sm:$0xff]
  %v5936 = vld [vmem:[%s25 + $0x268] sm:$0xff]
  %v5937 = vld [vmem:[%s25 + $0x270] sm:$0xff]
  %v5938 = vld [vmem:[%s25 + $0x278] sm:$0xff]
  %v5939 = vld [vmem:[%s25 + $0x280] sm:$0xff]
  %v5940 = vld [vmem:[%s25 + $0x288] sm:$0xff]
  %v5941 = vld [vmem:[%s25 + $0x290] sm:$0xff]
  %v5942 = vld [vmem:[%s25 + $0x298] sm:$0xff]
  %v5943 = vld [vmem:[%s25 + $0x2a0] sm:$0xff]
  %v5944 = vld [vmem:[%s25 + $0x2a8] sm:$0xff]
  %v5945 = vld [vmem:[%s25 + $0x2b0] sm:$0xff]
  %v5946 = vld [vmem:[%s25 + $0x2b8] sm:$0xff]
  %v5947 = vld [vmem:[%s25 + $0x2c0] sm:$0xff]
  %v5948 = vld [vmem:[%s25 + $0x2c8] sm:$0xff]
  %v5949 = vld [vmem:[%s25 + $0x2d0] sm:$0xff]
  %v5950 = vld [vmem:[%s25 + $0x2d8] sm:$0xff]
  %v5951 = vld [vmem:[%s25 + $0x2e0] sm:$0xff]
  %v5952 = vld [vmem:[%s25 + $0x2e8] sm:$0xff]
  %v5953 = vld [vmem:[%s25 + $0x2f0] sm:$0xff]
  %v5954 = vld [vmem:[%s25 + $0x2f8] sm:$0xff]
  %v5955 = vld [vmem:[%s25 + $0x300] sm:$0xff]
  %v5956 = vld [vmem:[%s25 + $0x308] sm:$0xff]
  %v5957 = vld [vmem:[%s25 + $0x310] sm:$0xff]
  %v5958 = vld [vmem:[%s25 + $0x318] sm:$0xff]
  %v5959 = vld [vmem:[%s25 + $0x320] sm:$0xff]
  %v5960 = vld [vmem:[%s25 + $0x328] sm:$0xff]
  %v5961 = vld [vmem:[%s25 + $0x330] sm:$0xff]
  %v5962 = vld [vmem:[%s25 + $0x338] sm:$0xff]
  %v5963 = vld [vmem:[%s25 + $0x340] sm:$0xff]
  %v5964 = vld [vmem:[%s25 + $0x348] sm:$0xff]
  %v5965 = vld [vmem:[%s25 + $0x350] sm:$0xff]
  %v5966 = vld [vmem:[%s25 + $0x358] sm:$0xff]
  %v5967 = vld [vmem:[%s25 + $0x360] sm:$0xff]
  %v5968 = vld [vmem:[%s25 + $0x368] sm:$0xff]
  %v5969 = vld [vmem:[%s25 + $0x370] sm:$0xff]
  %v5970 = vld [vmem:[%s25 + $0x378] sm:$0xff]
  %v5971 = vld [vmem:[%s25 + $0x380] sm:$0xff]
  %v5972 = vld [vmem:[%s25 + $0x388] sm:$0xff]
  %v5973 = vld [vmem:[%s25 + $0x390] sm:$0xff]
  %v5974 = vld [vmem:[%s25 + $0x398] sm:$0xff]
  %v5975 = vld [vmem:[%s25 + $0x3a0] sm:$0xff]
  %v5976 = vld [vmem:[%s25 + $0x3a8] sm:$0xff]
  %v5977 = vld [vmem:[%s25 + $0x3b0] sm:$0xff]
  %v5978 = vld [vmem:[%s25 + $0x3b8] sm:$0xff]
  %v5979 = vld [vmem:[%s25 + $0x3c0] sm:$0xff]
  %v5980 = vld [vmem:[%s25 + $0x3c8] sm:$0xff]
  %v5981 = vld [vmem:[%s25 + $0x3d0] sm:$0xff]
  %v5982 = vld [vmem:[%s25 + $0x3d8] sm:$0xff]
  %v5983 = vld [vmem:[%s25 + $0x3e0] sm:$0xff]
  %v5984 = vld [vmem:[%s25 + $0x3e8] sm:$0xff]
  %v5985 = vld [vmem:[%s25 + $0x3f0] sm:$0xff]
  %v5986 = vld [vmem:[%s25 + $0x3f8] sm:$0xff]
  %v5987 = vld [vmem:[%s25 + $0x400] sm:$0xff]
  %v5988 = vld [vmem:[%s25 + $0x408] sm:$0xff]
  %v5989 = vld [vmem:[%s25 + $0x410] sm:$0xff]
  %v5990 = vld [vmem:[%s25 + $0x418] sm:$0xff]
  %v5991 = vld [vmem:[%s25 + $0x420] sm:$0xff]
  %v5992 = vld [vmem:[%s25 + $0x428] sm:$0xff]
  %v5993 = vld [vmem:[%s25 + $0x430] sm:$0xff]
  %v5994 = vld [vmem:[%s25 + $0x438] sm:$0xff]
  %v5995 = vld [vmem:[%s25 + $0x440] sm:$0xff]
  %v5996 = vld [vmem:[%s25 + $0x448] sm:$0xff]
  %v5997 = vld [vmem:[%s25 + $0x450] sm:$0xff]
  %v5998 = vld [vmem:[%s25 + $0x458] sm:$0xff]
  %v5999 = vld [vmem:[%s25 + $0x460] sm:$0xff]
  %v6000 = vld [vmem:[%s25 + $0x468] sm:$0xff]
  %v6001 = vld [vmem:[%s25 + $0x470] sm:$0xff]
  %v6002 = vld [vmem:[%s25 + $0x478] sm:$0xff]
  %v6003 = vld [vmem:[%s25 + $0x480] sm:$0xff]
  %v6004 = vld [vmem:[%s25 + $0x488] sm:$0xff]
  %v6005 = vld [vmem:[%s25 + $0x490] sm:$0xff]
  %v6006 = vld [vmem:[%s25 + $0x498] sm:$0xff]
  %v6007 = vld [vmem:[%s25 + $0x4a0] sm:$0xff]
  %v6008 = vld [vmem:[%s25 + $0x4a8] sm:$0xff]
  %v6009 = vld [vmem:[%s25 + $0x4b0] sm:$0xff]
  %v6010 = vld [vmem:[%s25 + $0x4b8] sm:$0xff]
  %v6011 = vld [vmem:[%s25 + $0x4c0] sm:$0xff]
  %v6012 = vld [vmem:[%s25 + $0x4c8] sm:$0xff]
  %v6013 = vld [vmem:[%s25 + $0x4d0] sm:$0xff]
  %v6014 = vld [vmem:[%s25 + $0x4d8] sm:$0xff]
  %v6015 = vld [vmem:[%s25 + $0x4e0] sm:$0xff]
  %v6016 = vld [vmem:[%s25 + $0x4e8] sm:$0xff]
  %v6017 = vld [vmem:[%s25 + $0x4f0] sm:$0xff]
  %v6018 = vld [vmem:[%s25 + $0x4f8] sm:$0xff]
  %v6019 = vld [vmem:[%s25 + $0x500] sm:$0xff]
  %v6020 = vld [vmem:[%s25 + $0x508] sm:$0xff]
  %v6021 = vld [vmem:[%s25 + $0x510] sm:$0xff]
  %v6022 = vld [vmem:[%s25 + $0x518] sm:$0xff]
  %v6023 = vld [vmem:[%s25 + $0x520] sm:$0xff]
  %v6024 = vld [vmem:[%s25 + $0x528] sm:$0xff]
  %v6025 = vld [vmem:[%s25 + $0x530] sm:$0xff]
  %v6026 = vld [vmem:[%s25 + $0x538] sm:$0xff]
  %v6027 = vld [vmem:[%s25 + $0x540] sm:$0xff]
  %v6028 = vld [vmem:[%s25 + $0x548] sm:$0xff]
  %v6029 = vld [vmem:[%s25 + $0x550] sm:$0xff]
  %v6030 = vld [vmem:[%s25 + $0x558] sm:$0xff]
  %v6031 = vld [vmem:[%s25 + $0x560] sm:$0xff]
  %v6032 = vld [vmem:[%s25 + $0x568] sm:$0xff]
  %v6033 = vld [vmem:[%s25 + $0x570] sm:$0xf]
  %v6034 = vld [vmem:[%s25 + $0x578] sm:$0xf]
  %v6035 = vld [vmem:[%s25 + $0x580] sm:$0xf]
  %v6036 = vld [vmem:[%s25 + $0x588] sm:$0xf]
  %v6037 = vld [vmem:[%s25 + $0x590] sm:$0xf]
  %v6038 = vld [vmem:[%s25 + $0x598] sm:$0xf]
  %v6040 = vsel %vm822, %v5858, 0
  %v6043 = vsel %vm127, %v6033, 0
  %v6046 = vsel %vm127, %v6034, 0
  %v6049 = vsel %vm127, %v6035, 0
  %v6052 = vsel %vm127, %v6036, 0
  %v6055 = vsel %vm127, %v6037, 0
  %v6058 = vsel %vm127, %v6038, 0
  %6060 = vmatpush.msra.mxu0 %v5949
  %6061 = vmatpush.msra.mxu0 %v5943
  %6062 = vmatpush.msra.mxu0 %v5937
  %6063 = vmatpush.msra.mxu0 %v5931
  %6064 = vmatpush.msra.mxu0 %v5925
  %6065 = vmatpush.msra.mxu0 %v5919
  %6066 = vmatpush.msra.mxu0 %v5913
  %6067 = vmatpush.msra.mxu0 %v5907
  %6068 = vmatpush.msra.mxu0 %v5901
  %6069 = vmatpush.msra.mxu0 %v5895
  %6070 = vmatpush.msra.mxu0 %v5889
  %6071 = vmatpush.msra.mxu0 %v5883
  %6072 = vmatpush.msra.mxu0 %v5877
  %6073 = vmatpush.msra.mxu0 %v5871
  %6074 = vmatpush.msra.mxu0 %v5865
  %6075 = vmatpush.msra.mxu0 %v5859
  %6076 = vmatmul.f32.gmra.mxu0 %v5857
  %v6077 = vpop.f32.mrf.mxu0
  %v6078 = vadd.f32 0.0, %v6077
  %6079 = vdwg.mxu0
  %6080 = vmatpush.msra.mxu0 0.0
  %6081 = vmatpush.msra.mxu0 0.0
  %6082 = vmatpush.msra.mxu0 %v6043
  %6083 = vmatpush.msra.mxu0 %v6027
  %6084 = vmatpush.msra.mxu0 %v6021
  %6085 = vmatpush.msra.mxu0 %v6015
  %6086 = vmatpush.msra.mxu0 %v6009
  %6087 = vmatpush.msra.mxu0 %v6003
  %6088 = vmatpush.msra.mxu0 %v5997
  %6089 = vmatpush.msra.mxu0 %v5991
  %6090 = vmatpush.msra.mxu0 %v5985
  %6091 = vmatpush.msra.mxu0 %v5979
  %6092 = vmatpush.msra.mxu0 %v5973
  %6093 = vmatpush.msra.mxu0 %v5967
  %6094 = vmatpush.msra.mxu0 %v5961
  %6095 = vmatpush.msra.mxu0 %v5955
  %6096 = vmatmul.f32.gmra.mxu0 %v6040
  %v6097 = vpop.f32.mrf.mxu0
  %v6098 = vadd.f32 %v6078, %v6097
  %6099 = vdwg.mxu0
  %6100 = vmatpush.msra.mxu0 %v5950
  %6101 = vmatpush.msra.mxu0 %v5944
  %6102 = vmatpush.msra.mxu0 %v5938
  %6103 = vmatpush.msra.mxu0 %v5932
  %6104 = vmatpush.msra.mxu0 %v5926
  %6105 = vmatpush.msra.mxu0 %v5920
  %6106 = vmatpush.msra.mxu0 %v5914
  %6107 = vmatpush.msra.mxu0 %v5908
  %6108 = vmatpush.msra.mxu0 %v5902
  %6109 = vmatpush.msra.mxu0 %v5896
  %6110 = vmatpush.msra.mxu0 %v5890
  %6111 = vmatpush.msra.mxu0 %v5884
  %6112 = vmatpush.msra.mxu0 %v5878
  %6113 = vmatpush.msra.mxu0 %v5872
  %6114 = vmatpush.msra.mxu0 %v5866
  %6115 = vmatpush.msra.mxu0 %v5860
  %6116 = vmatmul.f32.gmra.mxu0 %v5857
  %v6117 = vpop.f32.mrf.mxu0
  %v6118 = vadd.f32 0.0, %v6117
  %6119 = vdwg.mxu0
  %6120 = vmatpush.msra.mxu0 0.0
  %6121 = vmatpush.msra.mxu0 0.0
  %6122 = vmatpush.msra.mxu0 %v6046
  %6123 = vmatpush.msra.mxu0 %v6028
  %6124 = vmatpush.msra.mxu0 %v6022
  %6125 = vmatpush.msra.mxu0 %v6016
  %6126 = vmatpush.msra.mxu0 %v6010
  %6127 = vmatpush.msra.mxu0 %v6004
  %6128 = vmatpush.msra.mxu0 %v5998
  %6129 = vmatpush.msra.mxu0 %v5992
  %6130 = vmatpush.msra.mxu0 %v5986
  %6131 = vmatpush.msra.mxu0 %v5980
  %6132 = vmatpush.msra.mxu0 %v5974
  %6133 = vmatpush.msra.mxu0 %v5968
  %6134 = vmatpush.msra.mxu0 %v5962
  %6135 = vmatpush.msra.mxu0 %v5956
  %6136 = vmatmul.f32.gmra.mxu0 %v6040
  %v6137 = vpop.f32.mrf.mxu0
  %v6138 = vadd.f32 %v6118, %v6137
  %6139 = vdwg.mxu0
  %6140 = vmatpush.msra.mxu0 %v5951
  %6141 = vmatpush.msra.mxu0 %v5945
  %6142 = vmatpush.msra.mxu0 %v5939
  %6143 = vmatpush.msra.mxu0 %v5933
  %6144 = vmatpush.msra.mxu0 %v5927
  %6145 = vmatpush.msra.mxu0 %v5921
  %6146 = vmatpush.msra.mxu0 %v5915
  %6147 = vmatpush.msra.mxu0 %v5909
  %6148 = vmatpush.msra.mxu0 %v5903
  %6149 = vmatpush.msra.mxu0 %v5897
  %6150 = vmatpush.msra.mxu0 %v5891
  %6151 = vmatpush.msra.mxu0 %v5885
  %6152 = vmatpush.msra.mxu0 %v5879
  %6153 = vmatpush.msra.mxu0 %v5873
  %6154 = vmatpush.msra.mxu0 %v5867
  %6155 = vmatpush.msra.mxu0 %v5861
  %6156 = vmatmul.f32.gmra.mxu0 %v5857
  %v6157 = vpop.f32.mrf.mxu0
  %v6158 = vadd.f32 0.0, %v6157
  %6159 = vdwg.mxu0
  %6160 = vmatpush.msra.mxu0 0.0
  %6161 = vmatpush.msra.mxu0 0.0
  %6162 = vmatpush.msra.mxu0 %v6049
  %6163 = vmatpush.msra.mxu0 %v6029
  %6164 = vmatpush.msra.mxu0 %v6023
  %6165 = vmatpush.msra.mxu0 %v6017
  %6166 = vmatpush.msra.mxu0 %v6011
  %6167 = vmatpush.msra.mxu0 %v6005
  %6168 = vmatpush.msra.mxu0 %v5999
  %6169 = vmatpush.msra.mxu0 %v5993
  %6170 = vmatpush.msra.mxu0 %v5987
  %6171 = vmatpush.msra.mxu0 %v5981
  %6172 = vmatpush.msra.mxu0 %v5975
  %6173 = vmatpush.msra.mxu0 %v5969
  %6174 = vmatpush.msra.mxu0 %v5963
  %6175 = vmatpush.msra.mxu0 %v5957
  %6176 = vmatmul.f32.gmra.mxu0 %v6040
  %v6177 = vpop.f32.mrf.mxu0
  %v6178 = vadd.f32 %v6158, %v6177
  %6179 = vdwg.mxu0
  %6180 = vmatpush.msra.mxu0 %v5952
  %6181 = vmatpush.msra.mxu0 %v5946
  %6182 = vmatpush.msra.mxu0 %v5940
  %6183 = vmatpush.msra.mxu0 %v5934
  %6184 = vmatpush.msra.mxu0 %v5928
  %6185 = vmatpush.msra.mxu0 %v5922
  %6186 = vmatpush.msra.mxu0 %v5916
  %6187 = vmatpush.msra.mxu0 %v5910
  %6188 = vmatpush.msra.mxu0 %v5904
  %6189 = vmatpush.msra.mxu0 %v5898
  %6190 = vmatpush.msra.mxu0 %v5892
  %6191 = vmatpush.msra.mxu0 %v5886
  %6192 = vmatpush.msra.mxu0 %v5880
  %6193 = vmatpush.msra.mxu0 %v5874
  %6194 = vmatpush.msra.mxu0 %v5868
  %6195 = vmatpush.msra.mxu0 %v5862
  %6196 = vmatmul.f32.gmra.mxu0 %v5857
  %v6197 = vpop.f32.mrf.mxu0
  %v6198 = vadd.f32 0.0, %v6197
  %6199 = vdwg.mxu0
  %6200 = vmatpush.msra.mxu0 0.0
  %6201 = vmatpush.msra.mxu0 0.0
  %6202 = vmatpush.msra.mxu0 %v6052
  %6203 = vmatpush.msra.mxu0 %v6030
  %6204 = vmatpush.msra.mxu0 %v6024
  %6205 = vmatpush.msra.mxu0 %v6018
  %6206 = vmatpush.msra.mxu0 %v6012
  %6207 = vmatpush.msra.mxu0 %v6006
  %6208 = vmatpush.msra.mxu0 %v6000
  %6209 = vmatpush.msra.mxu0 %v5994
  %6210 = vmatpush.msra.mxu0 %v5988
  %6211 = vmatpush.msra.mxu0 %v5982
  %6212 = vmatpush.msra.mxu0 %v5976
  %6213 = vmatpush.msra.mxu0 %v5970
  %6214 = vmatpush.msra.mxu0 %v5964
  %6215 = vmatpush.msra.mxu0 %v5958
  %6216 = vmatmul.f32.gmra.mxu0 %v6040
  %v6217 = vpop.f32.mrf.mxu0
  %v6218 = vadd.f32 %v6198, %v6217
  %6219 = vdwg.mxu0
  %6220 = vmatpush.msra.mxu0 %v5953
  %6221 = vmatpush.msra.mxu0 %v5947
  %6222 = vmatpush.msra.mxu0 %v5941
  %6223 = vmatpush.msra.mxu0 %v5935
  %6224 = vmatpush.msra.mxu0 %v5929
  %6225 = vmatpush.msra.mxu0 %v5923
  %6226 = vmatpush.msra.mxu0 %v5917
  %6227 = vmatpush.msra.mxu0 %v5911
  %6228 = vmatpush.msra.mxu0 %v5905
  %6229 = vmatpush.msra.mxu0 %v5899
  %6230 = vmatpush.msra.mxu0 %v5893
  %6231 = vmatpush.msra.mxu0 %v5887
  %6232 = vmatpush.msra.mxu0 %v5881
  %6233 = vmatpush.msra.mxu0 %v5875
  %6234 = vmatpush.msra.mxu0 %v5869
  %6235 = vmatpush.msra.mxu0 %v5863
  %6236 = vmatmul.f32.gmra.mxu0 %v5857
  %v6237 = vpop.f32.mrf.mxu0
  %v6238 = vadd.f32 0.0, %v6237
  %6239 = vdwg.mxu0
  %6240 = vmatpush.msra.mxu0 0.0
  %6241 = vmatpush.msra.mxu0 0.0
  %6242 = vmatpush.msra.mxu0 %v6055
  %6243 = vmatpush.msra.mxu0 %v6031
  %6244 = vmatpush.msra.mxu0 %v6025
  %6245 = vmatpush.msra.mxu0 %v6019
  %6246 = vmatpush.msra.mxu0 %v6013
  %6247 = vmatpush.msra.mxu0 %v6007
  %6248 = vmatpush.msra.mxu0 %v6001
  %6249 = vmatpush.msra.mxu0 %v5995
  %6250 = vmatpush.msra.mxu0 %v5989
  %6251 = vmatpush.msra.mxu0 %v5983
  %6252 = vmatpush.msra.mxu0 %v5977
  %6253 = vmatpush.msra.mxu0 %v5971
  %6254 = vmatpush.msra.mxu0 %v5965
  %6255 = vmatpush.msra.mxu0 %v5959
  %6256 = vmatmul.f32.gmra.mxu0 %v6040
  %v6257 = vpop.f32.mrf.mxu0
  %v6258 = vadd.f32 %v6238, %v6257
  %6259 = vdwg.mxu0
  %6260 = vmatpush.msra.mxu0 %v5954
  %6261 = vmatpush.msra.mxu0 %v5948
  %6262 = vmatpush.msra.mxu0 %v5942
  %6263 = vmatpush.msra.mxu0 %v5936
  %6264 = vmatpush.msra.mxu0 %v5930
  %6265 = vmatpush.msra.mxu0 %v5924
  %6266 = vmatpush.msra.mxu0 %v5918
  %6267 = vmatpush.msra.mxu0 %v5912
  %6268 = vmatpush.msra.mxu0 %v5906
  %6269 = vmatpush.msra.mxu0 %v5900
  %6270 = vmatpush.msra.mxu0 %v5894
  %6271 = vmatpush.msra.mxu0 %v5888
  %6272 = vmatpush.msra.mxu0 %v5882
  %6273 = vmatpush.msra.mxu0 %v5876
  %6274 = vmatpush.msra.mxu0 %v5870
  %6275 = vmatpush.msra.mxu0 %v5864
  %6276 = vmatmul.f32.gmra.mxu0 %v5857
  %v6277 = vpop.f32.mrf.mxu0
  %v6278 = vadd.f32 0.0, %v6277
  %6279 = vdwg.mxu0
  %6280 = vmatpush.msra.mxu0 0.0
  %6281 = vmatpush.msra.mxu0 0.0
  %6282 = vmatpush.msra.mxu0 %v6058
  %6283 = vmatpush.msra.mxu0 %v6032
  %6284 = vmatpush.msra.mxu0 %v6026
  %6285 = vmatpush.msra.mxu0 %v6020
  %6286 = vmatpush.msra.mxu0 %v6014
  %6287 = vmatpush.msra.mxu0 %v6008
  %6288 = vmatpush.msra.mxu0 %v6002
  %6289 = vmatpush.msra.mxu0 %v5996
  %6290 = vmatpush.msra.mxu0 %v5990
  %6291 = vmatpush.msra.mxu0 %v5984
  %6292 = vmatpush.msra.mxu0 %v5978
  %6293 = vmatpush.msra.mxu0 %v5972
  %6294 = vmatpush.msra.mxu0 %v5966
  %6295 = vmatpush.msra.mxu0 %v5960
  %6296 = vmatmul.f32.gmra.mxu0 %v6040
  %v6297 = vpop.f32.mrf.mxu0
  %v6298 = vadd.f32 %v6278, %v6297
  %6299 = vdwg.mxu0
  %v6300 = vld [vmem:[%s26] sm:$0xf]
  %6302 = vrot.lane.b32.xlu0 %v6300, 124
  %v6303 = vpop.permute.xlu0 %6302
  %6310 = vrot.lane.b32.xlu0 %v6098, 127
  %v6311 = vpop.permute.xlu0 %6310
  %6312 = vrot.lane.b32.xlu0 %v6138, 127
  %v6313 = vpop.permute.xlu0 %6312
  %6314 = vrot.lane.b32.xlu0 %v6178, 127
  %v6315 = vpop.permute.xlu0 %6314
  %6316 = vrot.lane.b32.xlu0 %v6218, 127
  %v6317 = vpop.permute.xlu0 %6316
  %6318 = vrot.lane.b32.xlu0 %v6258, 127
  %v6319 = vpop.permute.xlu0 %6318
  %6320 = vrot.lane.b32.xlu0 %v6298, 127
  %v6321 = vpop.permute.xlu0 %6320
  %v6322 = vsel %vm119, %v6311, %v6313
  %v6323 = vsel %vm119, %v6313, %v6315
  %v6324 = vsel %vm119, %v6315, %v6317
  %v6325 = vsel %vm119, %v6317, %v6319
  %v6326 = vsel %vm119, %v6319, %v6321
  %v6327 = vsel %vm124, %v6303, 0
  %v6329 = vsel %vm127, %v6322, 0
  %v6331 = vsel %vm127, %v6323, 0
  %v6333 = vsel %vm127, %v6324, 0
  %v6335 = vsel %vm127, %v6325, 0
  %v6337 = vsel %vm127, %v6326, 0
  %v6339 = vsel %vm127, %v6321, 0
  %6341 = vmatpush.msra.mxu0 0.0
  %6342 = vmatpush.msra.mxu0 0.0
  %6343 = vmatpush.msra.mxu0 0.0
  %6344 = vmatpush.msra.mxu0 0.0
  %6345 = vmatpush.msra.mxu0 0.0
  %6346 = vmatpush.msra.mxu0 0.0
  %6347 = vmatpush.msra.mxu0 0.0
  %6348 = vmatpush.msra.mxu0 0.0
  %6349 = vmatpush.msra.mxu0 0.0
  %6350 = vmatpush.msra.mxu0 0.0
  %6351 = vmatpush.msra.mxu0 0.0
  %6352 = vmatpush.msra.mxu0 0.0
  %6353 = vmatpush.msra.mxu0 0.0
  %6354 = vmatpush.msra.mxu0 0.0
  %6355 = vmatpush.msra.mxu0 0.0
  %6356 = vmatpush.msra.mxu0 %v6329
  %6357 = vmatmul.f32.gmra.mxu0 %v6327
  %v6358 = vpop.f32.mrf.mxu0
  %v6359 = vadd.f32 0.0, %v6358
  %6360 = vdwg.mxu0
  %6361 = vmatpush.msra.mxu0 0.0
  %6362 = vmatpush.msra.mxu0 0.0
  %6363 = vmatpush.msra.mxu0 0.0
  %6364 = vmatpush.msra.mxu0 0.0
  %6365 = vmatpush.msra.mxu0 0.0
  %6366 = vmatpush.msra.mxu0 0.0
  %6367 = vmatpush.msra.mxu0 0.0
  %6368 = vmatpush.msra.mxu0 0.0
  %6369 = vmatpush.msra.mxu0 0.0
  %6370 = vmatpush.msra.mxu0 0.0
  %6371 = vmatpush.msra.mxu0 0.0
  %6372 = vmatpush.msra.mxu0 0.0
  %6373 = vmatpush.msra.mxu0 0.0
  %6374 = vmatpush.msra.mxu0 0.0
  %6375 = vmatpush.msra.mxu0 0.0
  %6376 = vmatpush.msra.mxu0 %v6331
  %6377 = vmatmul.f32.gmra.mxu0 %v6327
  %v6378 = vpop.f32.mrf.mxu0
  %v6379 = vadd.f32 0.0, %v6378
  %6380 = vdwg.mxu0
  %6381 = vmatpush.msra.mxu0 0.0
  %6382 = vmatpush.msra.mxu0 0.0
  %6383 = vmatpush.msra.mxu0 0.0
  %6384 = vmatpush.msra.mxu0 0.0
  %6385 = vmatpush.msra.mxu0 0.0
  %6386 = vmatpush.msra.mxu0 0.0
  %6387 = vmatpush.msra.mxu0 0.0
  %6388 = vmatpush.msra.mxu0 0.0
  %6389 = vmatpush.msra.mxu0 0.0
  %6390 = vmatpush.msra.mxu0 0.0
  %6391 = vmatpush.msra.mxu0 0.0
  %6392 = vmatpush.msra.mxu0 0.0
  %6393 = vmatpush.msra.mxu0 0.0
  %6394 = vmatpush.msra.mxu0 0.0
  %6395 = vmatpush.msra.mxu0 0.0
  %6396 = vmatpush.msra.mxu0 %v6333
  %6397 = vmatmul.f32.gmra.mxu0 %v6327
  %v6398 = vpop.f32.mrf.mxu0
  %v6399 = vadd.f32 0.0, %v6398
  %6400 = vdwg.mxu0
  %6401 = vmatpush.msra.mxu0 0.0
  %6402 = vmatpush.msra.mxu0 0.0
  %6403 = vmatpush.msra.mxu0 0.0
  %6404 = vmatpush.msra.mxu0 0.0
  %6405 = vmatpush.msra.mxu0 0.0
  %6406 = vmatpush.msra.mxu0 0.0
  %6407 = vmatpush.msra.mxu0 0.0
  %6408 = vmatpush.msra.mxu0 0.0
  %6409 = vmatpush.msra.mxu0 0.0
  %6410 = vmatpush.msra.mxu0 0.0
  %6411 = vmatpush.msra.mxu0 0.0
  %6412 = vmatpush.msra.mxu0 0.0
  %6413 = vmatpush.msra.mxu0 0.0
  %6414 = vmatpush.msra.mxu0 0.0
  %6415 = vmatpush.msra.mxu0 0.0
  %6416 = vmatpush.msra.mxu0 %v6335
  %6417 = vmatmul.f32.gmra.mxu0 %v6327
  %v6418 = vpop.f32.mrf.mxu0
  %v6419 = vadd.f32 0.0, %v6418
  %6420 = vdwg.mxu0
  %6421 = vmatpush.msra.mxu0 0.0
  %6422 = vmatpush.msra.mxu0 0.0
  %6423 = vmatpush.msra.mxu0 0.0
  %6424 = vmatpush.msra.mxu0 0.0
  %6425 = vmatpush.msra.mxu0 0.0
  %6426 = vmatpush.msra.mxu0 0.0
  %6427 = vmatpush.msra.mxu0 0.0
  %6428 = vmatpush.msra.mxu0 0.0
  %6429 = vmatpush.msra.mxu0 0.0
  %6430 = vmatpush.msra.mxu0 0.0
  %6431 = vmatpush.msra.mxu0 0.0
  %6432 = vmatpush.msra.mxu0 0.0
  %6433 = vmatpush.msra.mxu0 0.0
  %6434 = vmatpush.msra.mxu0 0.0
  %6435 = vmatpush.msra.mxu0 0.0
  %6436 = vmatpush.msra.mxu0 %v6337
  %6437 = vmatmul.f32.gmra.mxu0 %v6327
  %v6438 = vpop.f32.mrf.mxu0
  %v6439 = vadd.f32 0.0, %v6438
  %6440 = vdwg.mxu0
  %6441 = vmatpush.msra.mxu0 0.0
  %6442 = vmatpush.msra.mxu0 0.0
  %6443 = vmatpush.msra.mxu0 0.0
  %6444 = vmatpush.msra.mxu0 0.0
  %6445 = vmatpush.msra.mxu0 0.0
  %6446 = vmatpush.msra.mxu0 0.0
  %6447 = vmatpush.msra.mxu0 0.0
  %6448 = vmatpush.msra.mxu0 0.0
  %6449 = vmatpush.msra.mxu0 0.0
  %6450 = vmatpush.msra.mxu0 0.0
  %6451 = vmatpush.msra.mxu0 0.0
  %6452 = vmatpush.msra.mxu0 0.0
  %6453 = vmatpush.msra.mxu0 0.0
  %6454 = vmatpush.msra.mxu0 0.0
  %6455 = vmatpush.msra.mxu0 0.0
  %6456 = vmatpush.msra.mxu0 %v6339
  %6457 = vmatmul.f32.gmra.mxu0 %v6327
  %v6458 = vpop.f32.mrf.mxu0
  %v6459 = vadd.f32 0.0, %v6458
  %6460 = vdwg.mxu0
  %v6461 = vsel %vm124, %v6300, 0
  %v6463 = vsel %vm127, %v6098, 0
  %v6465 = vsel %vm127, %v6138, 0
  %v6467 = vsel %vm127, %v6178, 0
  %v6469 = vsel %vm127, %v6218, 0
  %v6471 = vsel %vm127, %v6258, 0
  %v6473 = vsel %vm127, %v6298, 0
  %6475 = vmatpush.msra.mxu0 0.0
  %6476 = vmatpush.msra.mxu0 0.0
  %6477 = vmatpush.msra.mxu0 0.0
  %6478 = vmatpush.msra.mxu0 0.0
  %6479 = vmatpush.msra.mxu0 0.0
  %6480 = vmatpush.msra.mxu0 0.0
  %6481 = vmatpush.msra.mxu0 0.0
  %6482 = vmatpush.msra.mxu0 0.0
  %6483 = vmatpush.msra.mxu0 0.0
  %6484 = vmatpush.msra.mxu0 0.0
  %6485 = vmatpush.msra.mxu0 0.0
  %6486 = vmatpush.msra.mxu0 0.0
  %6487 = vmatpush.msra.mxu0 0.0
  %6488 = vmatpush.msra.mxu0 0.0
  %6489 = vmatpush.msra.mxu0 0.0
  %6490 = vmatpush.msra.mxu0 %v6463
  %6491 = vmatmul.f32.gmra.mxu0 %v6461
  %v6492 = vpop.f32.mrf.mxu0
  %v6493 = vadd.f32 %v6359, %v6492
  %6494 = vdwg.mxu0
  %6495 = vmatpush.msra.mxu0 0.0
  %6496 = vmatpush.msra.mxu0 0.0
  %6497 = vmatpush.msra.mxu0 0.0
  %6498 = vmatpush.msra.mxu0 0.0
  %6499 = vmatpush.msra.mxu0 0.0
  %6500 = vmatpush.msra.mxu0 0.0
  %6501 = vmatpush.msra.mxu0 0.0
  %6502 = vmatpush.msra.mxu0 0.0
  %6503 = vmatpush.msra.mxu0 0.0
  %6504 = vmatpush.msra.mxu0 0.0
  %6505 = vmatpush.msra.mxu0 0.0
  %6506 = vmatpush.msra.mxu0 0.0
  %6507 = vmatpush.msra.mxu0 0.0
  %6508 = vmatpush.msra.mxu0 0.0
  %6509 = vmatpush.msra.mxu0 0.0
  %6510 = vmatpush.msra.mxu0 %v6465
  %6511 = vmatmul.f32.gmra.mxu0 %v6461
  %v6512 = vpop.f32.mrf.mxu0
  %v6513 = vadd.f32 %v6379, %v6512
  %6514 = vdwg.mxu0
  %6515 = vmatpush.msra.mxu0 0.0
  %6516 = vmatpush.msra.mxu0 0.0
  %6517 = vmatpush.msra.mxu0 0.0
  %6518 = vmatpush.msra.mxu0 0.0
  %6519 = vmatpush.msra.mxu0 0.0
  %6520 = vmatpush.msra.mxu0 0.0
  %6521 = vmatpush.msra.mxu0 0.0
  %6522 = vmatpush.msra.mxu0 0.0
  %6523 = vmatpush.msra.mxu0 0.0
  %6524 = vmatpush.msra.mxu0 0.0
  %6525 = vmatpush.msra.mxu0 0.0
  %6526 = vmatpush.msra.mxu0 0.0
  %6527 = vmatpush.msra.mxu0 0.0
  %6528 = vmatpush.msra.mxu0 0.0
  %6529 = vmatpush.msra.mxu0 0.0
  %6530 = vmatpush.msra.mxu0 %v6467
  %6531 = vmatmul.f32.gmra.mxu0 %v6461
  %v6532 = vpop.f32.mrf.mxu0
  %v6533 = vadd.f32 %v6399, %v6532
  %6534 = vdwg.mxu0
  %6535 = vmatpush.msra.mxu0 0.0
  %6536 = vmatpush.msra.mxu0 0.0
  %6537 = vmatpush.msra.mxu0 0.0
  %6538 = vmatpush.msra.mxu0 0.0
  %6539 = vmatpush.msra.mxu0 0.0
  %6540 = vmatpush.msra.mxu0 0.0
  %6541 = vmatpush.msra.mxu0 0.0
  %6542 = vmatpush.msra.mxu0 0.0
  %6543 = vmatpush.msra.mxu0 0.0
  %6544 = vmatpush.msra.mxu0 0.0
  %6545 = vmatpush.msra.mxu0 0.0
  %6546 = vmatpush.msra.mxu0 0.0
  %6547 = vmatpush.msra.mxu0 0.0
  %6548 = vmatpush.msra.mxu0 0.0
  %6549 = vmatpush.msra.mxu0 0.0
  %6550 = vmatpush.msra.mxu0 %v6469
  %6551 = vmatmul.f32.gmra.mxu0 %v6461
  %v6552 = vpop.f32.mrf.mxu0
  %v6553 = vadd.f32 %v6419, %v6552
  %6554 = vdwg.mxu0
  %6555 = vmatpush.msra.mxu0 0.0
  %6556 = vmatpush.msra.mxu0 0.0
  %6557 = vmatpush.msra.mxu0 0.0
  %6558 = vmatpush.msra.mxu0 0.0
  %6559 = vmatpush.msra.mxu0 0.0
  %6560 = vmatpush.msra.mxu0 0.0
  %6561 = vmatpush.msra.mxu0 0.0
  %6562 = vmatpush.msra.mxu0 0.0
  %6563 = vmatpush.msra.mxu0 0.0
  %6564 = vmatpush.msra.mxu0 0.0
  %6565 = vmatpush.msra.mxu0 0.0
  %6566 = vmatpush.msra.mxu0 0.0
  %6567 = vmatpush.msra.mxu0 0.0
  %6568 = vmatpush.msra.mxu0 0.0
  %6569 = vmatpush.msra.mxu0 0.0
  %6570 = vmatpush.msra.mxu0 %v6471
  %6571 = vmatmul.f32.gmra.mxu0 %v6461
  %v6572 = vpop.f32.mrf.mxu0
  %v6573 = vadd.f32 %v6439, %v6572
  %6574 = vdwg.mxu0
  %6575 = vmatpush.msra.mxu0 0.0
  %6576 = vmatpush.msra.mxu0 0.0
  %6577 = vmatpush.msra.mxu0 0.0
  %6578 = vmatpush.msra.mxu0 0.0
  %6579 = vmatpush.msra.mxu0 0.0
  %6580 = vmatpush.msra.mxu0 0.0
  %6581 = vmatpush.msra.mxu0 0.0
  %6582 = vmatpush.msra.mxu0 0.0
  %6583 = vmatpush.msra.mxu0 0.0
  %6584 = vmatpush.msra.mxu0 0.0
  %6585 = vmatpush.msra.mxu0 0.0
  %6586 = vmatpush.msra.mxu0 0.0
  %6587 = vmatpush.msra.mxu0 0.0
  %6588 = vmatpush.msra.mxu0 0.0
  %6589 = vmatpush.msra.mxu0 0.0
  %6590 = vmatpush.msra.mxu0 %v6473
  %6591 = vmatmul.f32.gmra.mxu0 %v6461
  %v6592 = vpop.f32.mrf.mxu0
  %v6593 = vadd.f32 %v6459, %v6592
  %6594 = vdwg.mxu0
  %6595 = vrot.lane.b32.xlu0 %v6300, 120
  %v6596 = vpop.permute.xlu0 %6595
  %6597 = vrot.lane.b32.xlu0 %v6098, 126
  %v6598 = vpop.permute.xlu0 %6597
  %6599 = vrot.lane.b32.xlu0 %v6138, 126
  %v6600 = vpop.permute.xlu0 %6599
  %6601 = vrot.lane.b32.xlu0 %v6178, 126
  %v6602 = vpop.permute.xlu0 %6601
  %6603 = vrot.lane.b32.xlu0 %v6218, 126
  %v6604 = vpop.permute.xlu0 %6603
  %6605 = vrot.lane.b32.xlu0 %v6258, 126
  %v6606 = vpop.permute.xlu0 %6605
  %6607 = vrot.lane.b32.xlu0 %v6298, 126
  %v6608 = vpop.permute.xlu0 %6607
  %v6609 = vsel %vm384, %v6598, %v6600
  %v6610 = vsel %vm384, %v6600, %v6602
  %v6611 = vsel %vm384, %v6602, %v6604
  %v6612 = vsel %vm384, %v6604, %v6606
  %v6613 = vsel %vm384, %v6606, %v6608
  %v6614 = vsel %vm124, %v6596, 0
  %v6616 = vsel %vm127, %v6609, 0
  %v6618 = vsel %vm127, %v6610, 0
  %v6620 = vsel %vm127, %v6611, 0
  %v6622 = vsel %vm127, %v6612, 0
  %v6624 = vsel %vm127, %v6613, 0
  %v6626 = vsel %vm127, %v6608, 0
  %6628 = vmatpush.msra.mxu0 0.0
  %6629 = vmatpush.msra.mxu0 0.0
  %6630 = vmatpush.msra.mxu0 0.0
  %6631 = vmatpush.msra.mxu0 0.0
  %6632 = vmatpush.msra.mxu0 0.0
  %6633 = vmatpush.msra.mxu0 0.0
  %6634 = vmatpush.msra.mxu0 0.0
  %6635 = vmatpush.msra.mxu0 0.0
  %6636 = vmatpush.msra.mxu0 0.0
  %6637 = vmatpush.msra.mxu0 0.0
  %6638 = vmatpush.msra.mxu0 0.0
  %6639 = vmatpush.msra.mxu0 0.0
  %6640 = vmatpush.msra.mxu0 0.0
  %6641 = vmatpush.msra.mxu0 0.0
  %6642 = vmatpush.msra.mxu0 0.0
  %6643 = vmatpush.msra.mxu0 %v6616
  %6644 = vmatmul.f32.gmra.mxu0 %v6614
  %v6645 = vpop.f32.mrf.mxu0
  %v6646 = vadd.f32 0.0, %v6645
  %6647 = vdwg.mxu0
  %6648 = vmatpush.msra.mxu0 0.0
  %6649 = vmatpush.msra.mxu0 0.0
  %6650 = vmatpush.msra.mxu0 0.0
  %6651 = vmatpush.msra.mxu0 0.0
  %6652 = vmatpush.msra.mxu0 0.0
  %6653 = vmatpush.msra.mxu0 0.0
  %6654 = vmatpush.msra.mxu0 0.0
  %6655 = vmatpush.msra.mxu0 0.0
  %6656 = vmatpush.msra.mxu0 0.0
  %6657 = vmatpush.msra.mxu0 0.0
  %6658 = vmatpush.msra.mxu0 0.0
  %6659 = vmatpush.msra.mxu0 0.0
  %6660 = vmatpush.msra.mxu0 0.0
  %6661 = vmatpush.msra.mxu0 0.0
  %6662 = vmatpush.msra.mxu0 0.0
  %6663 = vmatpush.msra.mxu0 %v6618
  %6664 = vmatmul.f32.gmra.mxu0 %v6614
  %v6665 = vpop.f32.mrf.mxu0
  %v6666 = vadd.f32 0.0, %v6665
  %6667 = vdwg.mxu0
  %6668 = vmatpush.msra.mxu0 0.0
  %6669 = vmatpush.msra.mxu0 0.0
  %6670 = vmatpush.msra.mxu0 0.0
  %6671 = vmatpush.msra.mxu0 0.0
  %6672 = vmatpush.msra.mxu0 0.0
  %6673 = vmatpush.msra.mxu0 0.0
  %6674 = vmatpush.msra.mxu0 0.0
  %6675 = vmatpush.msra.mxu0 0.0
  %6676 = vmatpush.msra.mxu0 0.0
  %6677 = vmatpush.msra.mxu0 0.0
  %6678 = vmatpush.msra.mxu0 0.0
  %6679 = vmatpush.msra.mxu0 0.0
  %6680 = vmatpush.msra.mxu0 0.0
  %6681 = vmatpush.msra.mxu0 0.0
  %6682 = vmatpush.msra.mxu0 0.0
  %6683 = vmatpush.msra.mxu0 %v6620
  %6684 = vmatmul.f32.gmra.mxu0 %v6614
  %v6685 = vpop.f32.mrf.mxu0
  %v6686 = vadd.f32 0.0, %v6685
  %6687 = vdwg.mxu0
  %6688 = vmatpush.msra.mxu0 0.0
  %6689 = vmatpush.msra.mxu0 0.0
  %6690 = vmatpush.msra.mxu0 0.0
  %6691 = vmatpush.msra.mxu0 0.0
  %6692 = vmatpush.msra.mxu0 0.0
  %6693 = vmatpush.msra.mxu0 0.0
  %6694 = vmatpush.msra.mxu0 0.0
  %6695 = vmatpush.msra.mxu0 0.0
  %6696 = vmatpush.msra.mxu0 0.0
  %6697 = vmatpush.msra.mxu0 0.0
  %6698 = vmatpush.msra.mxu0 0.0
  %6699 = vmatpush.msra.mxu0 0.0
  %6700 = vmatpush.msra.mxu0 0.0
  %6701 = vmatpush.msra.mxu0 0.0
  %6702 = vmatpush.msra.mxu0 0.0
  %6703 = vmatpush.msra.mxu0 %v6622
  %6704 = vmatmul.f32.gmra.mxu0 %v6614
  %v6705 = vpop.f32.mrf.mxu0
  %v6706 = vadd.f32 0.0, %v6705
  %6707 = vdwg.mxu0
  %6708 = vmatpush.msra.mxu0 0.0
  %6709 = vmatpush.msra.mxu0 0.0
  %6710 = vmatpush.msra.mxu0 0.0
  %6711 = vmatpush.msra.mxu0 0.0
  %6712 = vmatpush.msra.mxu0 0.0
  %6713 = vmatpush.msra.mxu0 0.0
  %6714 = vmatpush.msra.mxu0 0.0
  %6715 = vmatpush.msra.mxu0 0.0
  %6716 = vmatpush.msra.mxu0 0.0
  %6717 = vmatpush.msra.mxu0 0.0
  %6718 = vmatpush.msra.mxu0 0.0
  %6719 = vmatpush.msra.mxu0 0.0
  %6720 = vmatpush.msra.mxu0 0.0
  %6721 = vmatpush.msra.mxu0 0.0
  %6722 = vmatpush.msra.mxu0 0.0
  %6723 = vmatpush.msra.mxu0 %v6624
  %6724 = vmatmul.f32.gmra.mxu0 %v6614
  %v6725 = vpop.f32.mrf.mxu0
  %v6726 = vadd.f32 0.0, %v6725
  %6727 = vdwg.mxu0
  %6728 = vmatpush.msra.mxu0 0.0
  %6729 = vmatpush.msra.mxu0 0.0
  %6730 = vmatpush.msra.mxu0 0.0
  %6731 = vmatpush.msra.mxu0 0.0
  %6732 = vmatpush.msra.mxu0 0.0
  %6733 = vmatpush.msra.mxu0 0.0
  %6734 = vmatpush.msra.mxu0 0.0
  %6735 = vmatpush.msra.mxu0 0.0
  %6736 = vmatpush.msra.mxu0 0.0
  %6737 = vmatpush.msra.mxu0 0.0
  %6738 = vmatpush.msra.mxu0 0.0
  %6739 = vmatpush.msra.mxu0 0.0
  %6740 = vmatpush.msra.mxu0 0.0
  %6741 = vmatpush.msra.mxu0 0.0
  %6742 = vmatpush.msra.mxu0 0.0
  %6743 = vmatpush.msra.mxu0 %v6626
  %6744 = vmatmul.f32.gmra.mxu0 %v6614
  %v6745 = vpop.f32.mrf.mxu0
  %v6746 = vadd.f32 0.0, %v6745
  %6747 = vdwg.mxu0
  %v6748 = vadd.f32 %v6493, %v6646
  %v6749 = vadd.f32 %v6513, %v6666
  %v6750 = vadd.f32 %v6533, %v6686
  %v6751 = vadd.f32 %v6553, %v6706
  %v6752 = vadd.f32 %v6573, %v6726
  %v6753 = vadd.f32 %v6593, %v6746
  %6754 = vrot.lane.b32.xlu0 %v6300, 116
  %v6755 = vpop.permute.xlu0 %6754
  %6756 = vrot.lane.b32.xlu0 %v6098, 110
  %v6757 = vpop.permute.xlu0 %6756
  %6758 = vrot.lane.b32.xlu0 %v6138, 110
  %v6759 = vpop.permute.xlu0 %6758
  %6760 = vrot.lane.b32.xlu0 %v6178, 110
  %v6761 = vpop.permute.xlu0 %6760
  %6762 = vrot.lane.b32.xlu0 %v6218, 110
  %v6763 = vpop.permute.xlu0 %6762
  %6764 = vrot.lane.b32.xlu0 %v6258, 110
  %v6765 = vpop.permute.xlu0 %6764
  %6766 = vrot.lane.b32.xlu0 %v6298, 110
  %v6767 = vpop.permute.xlu0 %6766
  %v6768 = vsel %vm530, %v6757, %v6759
  %v6769 = vsel %vm530, %v6759, %v6761
  %v6770 = vsel %vm530, %v6761, %v6763
  %v6771 = vsel %vm530, %v6763, %v6765
  %v6772 = vsel %vm530, %v6765, %v6767
  %v6773 = vsel %vm124, %v6755, 0
  %v6775 = vsel %vm127, %v6768, 0
  %v6777 = vsel %vm127, %v6769, 0
  %v6779 = vsel %vm127, %v6770, 0
  %v6781 = vsel %vm127, %v6771, 0
  %v6783 = vsel %vm127, %v6772, 0
  %v6785 = vsel %vm127, %v6767, 0
  %6787 = vmatpush.msra.mxu0 0.0
  %6788 = vmatpush.msra.mxu0 0.0
  %6789 = vmatpush.msra.mxu0 0.0
  %6790 = vmatpush.msra.mxu0 0.0
  %6791 = vmatpush.msra.mxu0 0.0
  %6792 = vmatpush.msra.mxu0 0.0
  %6793 = vmatpush.msra.mxu0 0.0
  %6794 = vmatpush.msra.mxu0 0.0
  %6795 = vmatpush.msra.mxu0 0.0
  %6796 = vmatpush.msra.mxu0 0.0
  %6797 = vmatpush.msra.mxu0 0.0
  %6798 = vmatpush.msra.mxu0 0.0
  %6799 = vmatpush.msra.mxu0 0.0
  %6800 = vmatpush.msra.mxu0 0.0
  %6801 = vmatpush.msra.mxu0 0.0
  %6802 = vmatpush.msra.mxu0 %v6775
  %6803 = vmatmul.f32.gmra.mxu0 %v6773
  %v6804 = vpop.f32.mrf.mxu0
  %v6805 = vadd.f32 0.0, %v6804
  %6806 = vdwg.mxu0
  %6807 = vmatpush.msra.mxu0 0.0
  %6808 = vmatpush.msra.mxu0 0.0
  %6809 = vmatpush.msra.mxu0 0.0
  %6810 = vmatpush.msra.mxu0 0.0
  %6811 = vmatpush.msra.mxu0 0.0
  %6812 = vmatpush.msra.mxu0 0.0
  %6813 = vmatpush.msra.mxu0 0.0
  %6814 = vmatpush.msra.mxu0 0.0
  %6815 = vmatpush.msra.mxu0 0.0
  %6816 = vmatpush.msra.mxu0 0.0
  %6817 = vmatpush.msra.mxu0 0.0
  %6818 = vmatpush.msra.mxu0 0.0
  %6819 = vmatpush.msra.mxu0 0.0
  %6820 = vmatpush.msra.mxu0 0.0
  %6821 = vmatpush.msra.mxu0 0.0
  %6822 = vmatpush.msra.mxu0 %v6777
  %6823 = vmatmul.f32.gmra.mxu0 %v6773
  %v6824 = vpop.f32.mrf.mxu0
  %v6825 = vadd.f32 0.0, %v6824
  %6826 = vdwg.mxu0
  %6827 = vmatpush.msra.mxu0 0.0
  %6828 = vmatpush.msra.mxu0 0.0
  %6829 = vmatpush.msra.mxu0 0.0
  %6830 = vmatpush.msra.mxu0 0.0
  %6831 = vmatpush.msra.mxu0 0.0
  %6832 = vmatpush.msra.mxu0 0.0
  %6833 = vmatpush.msra.mxu0 0.0
  %6834 = vmatpush.msra.mxu0 0.0
  %6835 = vmatpush.msra.mxu0 0.0
  %6836 = vmatpush.msra.mxu0 0.0
  %6837 = vmatpush.msra.mxu0 0.0
  %6838 = vmatpush.msra.mxu0 0.0
  %6839 = vmatpush.msra.mxu0 0.0
  %6840 = vmatpush.msra.mxu0 0.0
  %6841 = vmatpush.msra.mxu0 0.0
  %6842 = vmatpush.msra.mxu0 %v6779
  %6843 = vmatmul.f32.gmra.mxu0 %v6773
  %v6844 = vpop.f32.mrf.mxu0
  %v6845 = vadd.f32 0.0, %v6844
  %6846 = vdwg.mxu0
  %6847 = vmatpush.msra.mxu0 0.0
  %6848 = vmatpush.msra.mxu0 0.0
  %6849 = vmatpush.msra.mxu0 0.0
  %6850 = vmatpush.msra.mxu0 0.0
  %6851 = vmatpush.msra.mxu0 0.0
  %6852 = vmatpush.msra.mxu0 0.0
  %6853 = vmatpush.msra.mxu0 0.0
  %6854 = vmatpush.msra.mxu0 0.0
  %6855 = vmatpush.msra.mxu0 0.0
  %6856 = vmatpush.msra.mxu0 0.0
  %6857 = vmatpush.msra.mxu0 0.0
  %6858 = vmatpush.msra.mxu0 0.0
  %6859 = vmatpush.msra.mxu0 0.0
  %6860 = vmatpush.msra.mxu0 0.0
  %6861 = vmatpush.msra.mxu0 0.0
  %6862 = vmatpush.msra.mxu0 %v6781
  %6863 = vmatmul.f32.gmra.mxu0 %v6773
  %v6864 = vpop.f32.mrf.mxu0
  %v6865 = vadd.f32 0.0, %v6864
  %6866 = vdwg.mxu0
  %6867 = vmatpush.msra.mxu0 0.0
  %6868 = vmatpush.msra.mxu0 0.0
  %6869 = vmatpush.msra.mxu0 0.0
  %6870 = vmatpush.msra.mxu0 0.0
  %6871 = vmatpush.msra.mxu0 0.0
  %6872 = vmatpush.msra.mxu0 0.0
  %6873 = vmatpush.msra.mxu0 0.0
  %6874 = vmatpush.msra.mxu0 0.0
  %6875 = vmatpush.msra.mxu0 0.0
  %6876 = vmatpush.msra.mxu0 0.0
  %6877 = vmatpush.msra.mxu0 0.0
  %6878 = vmatpush.msra.mxu0 0.0
  %6879 = vmatpush.msra.mxu0 0.0
  %6880 = vmatpush.msra.mxu0 0.0
  %6881 = vmatpush.msra.mxu0 0.0
  %6882 = vmatpush.msra.mxu0 %v6783
  %6883 = vmatmul.f32.gmra.mxu0 %v6773
  %v6884 = vpop.f32.mrf.mxu0
  %v6885 = vadd.f32 0.0, %v6884
  %6886 = vdwg.mxu0
  %6887 = vmatpush.msra.mxu0 0.0
  %6888 = vmatpush.msra.mxu0 0.0
  %6889 = vmatpush.msra.mxu0 0.0
  %6890 = vmatpush.msra.mxu0 0.0
  %6891 = vmatpush.msra.mxu0 0.0
  %6892 = vmatpush.msra.mxu0 0.0
  %6893 = vmatpush.msra.mxu0 0.0
  %6894 = vmatpush.msra.mxu0 0.0
  %6895 = vmatpush.msra.mxu0 0.0
  %6896 = vmatpush.msra.mxu0 0.0
  %6897 = vmatpush.msra.mxu0 0.0
  %6898 = vmatpush.msra.mxu0 0.0
  %6899 = vmatpush.msra.mxu0 0.0
  %6900 = vmatpush.msra.mxu0 0.0
  %6901 = vmatpush.msra.mxu0 0.0
  %6902 = vmatpush.msra.mxu0 %v6785
  %6903 = vmatmul.f32.gmra.mxu0 %v6773
  %v6904 = vpop.f32.mrf.mxu0
  %v6905 = vadd.f32 0.0, %v6904
  %6906 = vdwg.mxu0
  %v6907 = vadd.f32 %v6748, %v6805
  %v6908 = vadd.f32 %v6749, %v6825
  %v6909 = vadd.f32 %v6750, %v6845
  %v6910 = vadd.f32 %v6751, %v6865
  %v6911 = vadd.f32 %v6752, %v6885
  %v6912 = vadd.f32 %v6753, %v6905
  %6913 = vrot.lane.b32.xlu0 %v6300, 112
  %v6914 = vpop.permute.xlu0 %6913
  %6915 = vrot.lane.b32.xlu0 %v6098, 109
  %v6916 = vpop.permute.xlu0 %6915
  %6917 = vrot.lane.b32.xlu0 %v6138, 109
  %v6918 = vpop.permute.xlu0 %6917
  %6919 = vrot.lane.b32.xlu0 %v6178, 109
  %v6920 = vpop.permute.xlu0 %6919
  %6921 = vrot.lane.b32.xlu0 %v6218, 109
  %v6922 = vpop.permute.xlu0 %6921
  %6923 = vrot.lane.b32.xlu0 %v6258, 109
  %v6924 = vpop.permute.xlu0 %6923
  %6925 = vrot.lane.b32.xlu0 %v6298, 109
  %v6926 = vpop.permute.xlu0 %6925
  %v6927 = vsel %vm676, %v6916, %v6918
  %v6928 = vsel %vm676, %v6918, %v6920
  %v6929 = vsel %vm676, %v6920, %v6922
  %v6930 = vsel %vm676, %v6922, %v6924
  %v6931 = vsel %vm676, %v6924, %v6926
  %v6932 = vsel %vm124, %v6914, 0
  %v6934 = vsel %vm127, %v6927, 0
  %v6936 = vsel %vm127, %v6928, 0
  %v6938 = vsel %vm127, %v6929, 0
  %v6940 = vsel %vm127, %v6930, 0
  %v6942 = vsel %vm127, %v6931, 0
  %v6944 = vsel %vm127, %v6926, 0
  %6946 = vmatpush.msra.mxu0 0.0
  %6947 = vmatpush.msra.mxu0 0.0
  %6948 = vmatpush.msra.mxu0 0.0
  %6949 = vmatpush.msra.mxu0 0.0
  %6950 = vmatpush.msra.mxu0 0.0
  %6951 = vmatpush.msra.mxu0 0.0
  %6952 = vmatpush.msra.mxu0 0.0
  %6953 = vmatpush.msra.mxu0 0.0
  %6954 = vmatpush.msra.mxu0 0.0
  %6955 = vmatpush.msra.mxu0 0.0
  %6956 = vmatpush.msra.mxu0 0.0
  %6957 = vmatpush.msra.mxu0 0.0
  %6958 = vmatpush.msra.mxu0 0.0
  %6959 = vmatpush.msra.mxu0 0.0
  %6960 = vmatpush.msra.mxu0 0.0
  %6961 = vmatpush.msra.mxu0 %v6934
  %6962 = vmatmul.f32.gmra.mxu0 %v6932
  %v6963 = vpop.f32.mrf.mxu0
  %v6964 = vadd.f32 0.0, %v6963
  %6965 = vdwg.mxu0
  %6966 = vmatpush.msra.mxu0 0.0
  %6967 = vmatpush.msra.mxu0 0.0
  %6968 = vmatpush.msra.mxu0 0.0
  %6969 = vmatpush.msra.mxu0 0.0
  %6970 = vmatpush.msra.mxu0 0.0
  %6971 = vmatpush.msra.mxu0 0.0
  %6972 = vmatpush.msra.mxu0 0.0
  %6973 = vmatpush.msra.mxu0 0.0
  %6974 = vmatpush.msra.mxu0 0.0
  %6975 = vmatpush.msra.mxu0 0.0
  %6976 = vmatpush.msra.mxu0 0.0
  %6977 = vmatpush.msra.mxu0 0.0
  %6978 = vmatpush.msra.mxu0 0.0
  %6979 = vmatpush.msra.mxu0 0.0
  %6980 = vmatpush.msra.mxu0 0.0
  %6981 = vmatpush.msra.mxu0 %v6936
  %6982 = vmatmul.f32.gmra.mxu0 %v6932
  %v6983 = vpop.f32.mrf.mxu0
  %v6984 = vadd.f32 0.0, %v6983
  %6985 = vdwg.mxu0
  %6986 = vmatpush.msra.mxu0 0.0
  %6987 = vmatpush.msra.mxu0 0.0
  %6988 = vmatpush.msra.mxu0 0.0
  %6989 = vmatpush.msra.mxu0 0.0
  %6990 = vmatpush.msra.mxu0 0.0
  %6991 = vmatpush.msra.mxu0 0.0
  %6992 = vmatpush.msra.mxu0 0.0
  %6993 = vmatpush.msra.mxu0 0.0
  %6994 = vmatpush.msra.mxu0 0.0
  %6995 = vmatpush.msra.mxu0 0.0
  %6996 = vmatpush.msra.mxu0 0.0
  %6997 = vmatpush.msra.mxu0 0.0
  %6998 = vmatpush.msra.mxu0 0.0
  %6999 = vmatpush.msra.mxu0 0.0
  %7000 = vmatpush.msra.mxu0 0.0
  %7001 = vmatpush.msra.mxu0 %v6938
  %7002 = vmatmul.f32.gmra.mxu0 %v6932
  %v7003 = vpop.f32.mrf.mxu0
  %v7004 = vadd.f32 0.0, %v7003
  %7005 = vdwg.mxu0
  %7006 = vmatpush.msra.mxu0 0.0
  %7007 = vmatpush.msra.mxu0 0.0
  %7008 = vmatpush.msra.mxu0 0.0
  %7009 = vmatpush.msra.mxu0 0.0
  %7010 = vmatpush.msra.mxu0 0.0
  %7011 = vmatpush.msra.mxu0 0.0
  %7012 = vmatpush.msra.mxu0 0.0
  %7013 = vmatpush.msra.mxu0 0.0
  %7014 = vmatpush.msra.mxu0 0.0
  %7015 = vmatpush.msra.mxu0 0.0
  %7016 = vmatpush.msra.mxu0 0.0
  %7017 = vmatpush.msra.mxu0 0.0
  %7018 = vmatpush.msra.mxu0 0.0
  %7019 = vmatpush.msra.mxu0 0.0
  %7020 = vmatpush.msra.mxu0 0.0
  %7021 = vmatpush.msra.mxu0 %v6940
  %7022 = vmatmul.f32.gmra.mxu0 %v6932
  %v7023 = vpop.f32.mrf.mxu0
  %v7024 = vadd.f32 0.0, %v7023
  %7025 = vdwg.mxu0
  %7026 = vmatpush.msra.mxu0 0.0
  %7027 = vmatpush.msra.mxu0 0.0
  %7028 = vmatpush.msra.mxu0 0.0
  %7029 = vmatpush.msra.mxu0 0.0
  %7030 = vmatpush.msra.mxu0 0.0
  %7031 = vmatpush.msra.mxu0 0.0
  %7032 = vmatpush.msra.mxu0 0.0
  %7033 = vmatpush.msra.mxu0 0.0
  %7034 = vmatpush.msra.mxu0 0.0
  %7035 = vmatpush.msra.mxu0 0.0
  %7036 = vmatpush.msra.mxu0 0.0
  %7037 = vmatpush.msra.mxu0 0.0
  %7038 = vmatpush.msra.mxu0 0.0
  %7039 = vmatpush.msra.mxu0 0.0
  %7040 = vmatpush.msra.mxu0 0.0
  %7041 = vmatpush.msra.mxu0 %v6942
  %7042 = vmatmul.f32.gmra.mxu0 %v6932
  %v7043 = vpop.f32.mrf.mxu0
  %v7044 = vadd.f32 0.0, %v7043
  %7045 = vdwg.mxu0
  %7046 = vmatpush.msra.mxu0 0.0
  %7047 = vmatpush.msra.mxu0 0.0
  %7048 = vmatpush.msra.mxu0 0.0
  %7049 = vmatpush.msra.mxu0 0.0
  %7050 = vmatpush.msra.mxu0 0.0
  %7051 = vmatpush.msra.mxu0 0.0
  %7052 = vmatpush.msra.mxu0 0.0
  %7053 = vmatpush.msra.mxu0 0.0
  %7054 = vmatpush.msra.mxu0 0.0
  %7055 = vmatpush.msra.mxu0 0.0
  %7056 = vmatpush.msra.mxu0 0.0
  %7057 = vmatpush.msra.mxu0 0.0
  %7058 = vmatpush.msra.mxu0 0.0
  %7059 = vmatpush.msra.mxu0 0.0
  %7060 = vmatpush.msra.mxu0 0.0
  %7061 = vmatpush.msra.mxu0 %v6944
  %7062 = vmatmul.f32.gmra.mxu0 %v6932
  %v7063 = vpop.f32.mrf.mxu0
  %v7064 = vadd.f32 0.0, %v7063
  %7065 = vdwg.mxu0
  %v7066 = vadd.f32 %v6907, %v6964
  %v7067 = vadd.f32 %v6908, %v6984
  %v7068 = vadd.f32 %v6909, %v7004
  %v7069 = vadd.f32 %v6910, %v7024
  %v7070 = vadd.f32 %v6911, %v7044
  %v7071 = vadd.f32 %v6912, %v7064
  %7072 = vrot.lane.b32.xlu0 %v6300, 108
  %v7073 = vpop.permute.xlu0 %7072
  %7074 = vrot.lane.b32.xlu0 %v6098, 108
  %v7075 = vpop.permute.xlu0 %7074
  %7076 = vrot.lane.b32.xlu0 %v6138, 108
  %v7077 = vpop.permute.xlu0 %7076
  %7078 = vrot.lane.b32.xlu0 %v6178, 108
  %v7079 = vpop.permute.xlu0 %7078
  %7080 = vrot.lane.b32.xlu0 %v6218, 108
  %v7081 = vpop.permute.xlu0 %7080
  %7082 = vrot.lane.b32.xlu0 %v6258, 108
  %v7083 = vpop.permute.xlu0 %7082
  %7084 = vrot.lane.b32.xlu0 %v6298, 108
  %v7085 = vpop.permute.xlu0 %7084
  %v7086 = vsel %vm822, %v7075, %v7077
  %v7087 = vsel %vm822, %v7077, %v7079
  %v7088 = vsel %vm822, %v7079, %v7081
  %v7089 = vsel %vm822, %v7081, %v7083
  %v7090 = vsel %vm822, %v7083, %v7085
  %v7091 = vsel %vm124, %v7073, 0
  %v7093 = vsel %vm127, %v7086, 0
  %v7095 = vsel %vm127, %v7087, 0
  %v7097 = vsel %vm127, %v7088, 0
  %v7099 = vsel %vm127, %v7089, 0
  %v7101 = vsel %vm127, %v7090, 0
  %v7103 = vsel %vm127, %v7085, 0
  %7105 = vmatpush.msra.mxu0 0.0
  %7106 = vmatpush.msra.mxu0 0.0
  %7107 = vmatpush.msra.mxu0 0.0
  %7108 = vmatpush.msra.mxu0 0.0
  %7109 = vmatpush.msra.mxu0 0.0
  %7110 = vmatpush.msra.mxu0 0.0
  %7111 = vmatpush.msra.mxu0 0.0
  %7112 = vmatpush.msra.mxu0 0.0
  %7113 = vmatpush.msra.mxu0 0.0
  %7114 = vmatpush.msra.mxu0 0.0
  %7115 = vmatpush.msra.mxu0 0.0
  %7116 = vmatpush.msra.mxu0 0.0
  %7117 = vmatpush.msra.mxu0 0.0
  %7118 = vmatpush.msra.mxu0 0.0
  %7119 = vmatpush.msra.mxu0 0.0
  %7120 = vmatpush.msra.mxu0 %v7093
  %7121 = vmatmul.f32.gmra.mxu0 %v7091
  %v7122 = vpop.f32.mrf.mxu0
  %v7123 = vadd.f32 0.0, %v7122
  %7124 = vdwg.mxu0
  %7125 = vmatpush.msra.mxu0 0.0
  %7126 = vmatpush.msra.mxu0 0.0
  %7127 = vmatpush.msra.mxu0 0.0
  %7128 = vmatpush.msra.mxu0 0.0
  %7129 = vmatpush.msra.mxu0 0.0
  %7130 = vmatpush.msra.mxu0 0.0
  %7131 = vmatpush.msra.mxu0 0.0
  %7132 = vmatpush.msra.mxu0 0.0
  %7133 = vmatpush.msra.mxu0 0.0
  %7134 = vmatpush.msra.mxu0 0.0
  %7135 = vmatpush.msra.mxu0 0.0
  %7136 = vmatpush.msra.mxu0 0.0
  %7137 = vmatpush.msra.mxu0 0.0
  %7138 = vmatpush.msra.mxu0 0.0
  %7139 = vmatpush.msra.mxu0 0.0
  %7140 = vmatpush.msra.mxu0 %v7095
  %7141 = vmatmul.f32.gmra.mxu0 %v7091
  %v7142 = vpop.f32.mrf.mxu0
  %v7143 = vadd.f32 0.0, %v7142
  %7144 = vdwg.mxu0
  %7145 = vmatpush.msra.mxu0 0.0
  %7146 = vmatpush.msra.mxu0 0.0
  %7147 = vmatpush.msra.mxu0 0.0
  %7148 = vmatpush.msra.mxu0 0.0
  %7149 = vmatpush.msra.mxu0 0.0
  %7150 = vmatpush.msra.mxu0 0.0
  %7151 = vmatpush.msra.mxu0 0.0
  %7152 = vmatpush.msra.mxu0 0.0
  %7153 = vmatpush.msra.mxu0 0.0
  %7154 = vmatpush.msra.mxu0 0.0
  %7155 = vmatpush.msra.mxu0 0.0
  %7156 = vmatpush.msra.mxu0 0.0
  %7157 = vmatpush.msra.mxu0 0.0
  %7158 = vmatpush.msra.mxu0 0.0
  %7159 = vmatpush.msra.mxu0 0.0
  %7160 = vmatpush.msra.mxu0 %v7097
  %7161 = vmatmul.f32.gmra.mxu0 %v7091
  %v7162 = vpop.f32.mrf.mxu0
  %v7163 = vadd.f32 0.0, %v7162
  %7164 = vdwg.mxu0
  %7165 = vmatpush.msra.mxu0 0.0
  %7166 = vmatpush.msra.mxu0 0.0
  %7167 = vmatpush.msra.mxu0 0.0
  %7168 = vmatpush.msra.mxu0 0.0
  %7169 = vmatpush.msra.mxu0 0.0
  %7170 = vmatpush.msra.mxu0 0.0
  %7171 = vmatpush.msra.mxu0 0.0
  %7172 = vmatpush.msra.mxu0 0.0
  %7173 = vmatpush.msra.mxu0 0.0
  %7174 = vmatpush.msra.mxu0 0.0
  %7175 = vmatpush.msra.mxu0 0.0
  %7176 = vmatpush.msra.mxu0 0.0
  %7177 = vmatpush.msra.mxu0 0.0
  %7178 = vmatpush.msra.mxu0 0.0
  %7179 = vmatpush.msra.mxu0 0.0
  %7180 = vmatpush.msra.mxu0 %v7099
  %7181 = vmatmul.f32.gmra.mxu0 %v7091
  %v7182 = vpop.f32.mrf.mxu0
  %v7183 = vadd.f32 0.0, %v7182
  %7184 = vdwg.mxu0
  %7185 = vmatpush.msra.mxu0 0.0
  %7186 = vmatpush.msra.mxu0 0.0
  %7187 = vmatpush.msra.mxu0 0.0
  %7188 = vmatpush.msra.mxu0 0.0
  %7189 = vmatpush.msra.mxu0 0.0
  %7190 = vmatpush.msra.mxu0 0.0
  %7191 = vmatpush.msra.mxu0 0.0
  %7192 = vmatpush.msra.mxu0 0.0
  %7193 = vmatpush.msra.mxu0 0.0
  %7194 = vmatpush.msra.mxu0 0.0
  %7195 = vmatpush.msra.mxu0 0.0
  %7196 = vmatpush.msra.mxu0 0.0
  %7197 = vmatpush.msra.mxu0 0.0
  %7198 = vmatpush.msra.mxu0 0.0
  %7199 = vmatpush.msra.mxu0 0.0
  %7200 = vmatpush.msra.mxu0 %v7101
  %7201 = vmatmul.f32.gmra.mxu0 %v7091
  %v7202 = vpop.f32.mrf.mxu0
  %v7203 = vadd.f32 0.0, %v7202
  %7204 = vdwg.mxu0
  %7205 = vmatpush.msra.mxu0 0.0
  %7206 = vmatpush.msra.mxu0 0.0
  %7207 = vmatpush.msra.mxu0 0.0
  %7208 = vmatpush.msra.mxu0 0.0
  %7209 = vmatpush.msra.mxu0 0.0
  %7210 = vmatpush.msra.mxu0 0.0
  %7211 = vmatpush.msra.mxu0 0.0
  %7212 = vmatpush.msra.mxu0 0.0
  %7213 = vmatpush.msra.mxu0 0.0
  %7214 = vmatpush.msra.mxu0 0.0
  %7215 = vmatpush.msra.mxu0 0.0
  %7216 = vmatpush.msra.mxu0 0.0
  %7217 = vmatpush.msra.mxu0 0.0
  %7218 = vmatpush.msra.mxu0 0.0
  %7219 = vmatpush.msra.mxu0 0.0
  %7220 = vmatpush.msra.mxu0 %v7103
  %7221 = vmatmul.f32.gmra.mxu0 %v7091
  %v7222 = vpop.f32.mrf.mxu0
  %v7223 = vadd.f32 0.0, %v7222
  %7224 = vdwg.mxu0
  %v7225 = vadd.f32 %v7066, %v7123
  %v7226 = vadd.f32 %v7067, %v7143
  %v7227 = vadd.f32 %v7068, %v7163
  %v7228 = vadd.f32 %v7069, %v7183
  %v7229 = vadd.f32 %v7070, %v7203
  %v7230 = vadd.f32 %v7071, %v7223
  %7231 = vrot.lane.b32.xlu0 %v6300, 104
  %v7232 = vpop.permute.xlu0 %7231
  %7233 = vrot.lane.b32.xlu0 %v6098, 92
  %v7234 = vpop.permute.xlu0 %7233
  %7235 = vrot.lane.b32.xlu0 %v6138, 92
  %v7236 = vpop.permute.xlu0 %7235
  %7237 = vrot.lane.b32.xlu0 %v6178, 92
  %v7238 = vpop.permute.xlu0 %7237
  %7239 = vrot.lane.b32.xlu0 %v6218, 92
  %v7240 = vpop.permute.xlu0 %7239
  %7241 = vrot.lane.b32.xlu0 %v6258, 92
  %v7242 = vpop.permute.xlu0 %7241
  %7243 = vrot.lane.b32.xlu0 %v6298, 92
  %v7244 = vpop.permute.xlu0 %7243
  %v7245 = vsel %vm971, %v7234, %v7236
  %v7246 = vsel %vm971, %v7236, %v7238
  %v7247 = vsel %vm971, %v7238, %v7240
  %v7248 = vsel %vm971, %v7240, %v7242
  %v7249 = vsel %vm971, %v7242, %v7244
  %v7250 = vsel %vm124, %v7232, 0
  %v7252 = vsel %vm127, %v7245, 0
  %v7254 = vsel %vm127, %v7246, 0
  %v7256 = vsel %vm127, %v7247, 0
  %v7258 = vsel %vm127, %v7248, 0
  %v7260 = vsel %vm127, %v7249, 0
  %v7262 = vsel %vm127, %v7244, 0
  %7264 = vmatpush.msra.mxu0 0.0
  %7265 = vmatpush.msra.mxu0 0.0
  %7266 = vmatpush.msra.mxu0 0.0
  %7267 = vmatpush.msra.mxu0 0.0
  %7268 = vmatpush.msra.mxu0 0.0
  %7269 = vmatpush.msra.mxu0 0.0
  %7270 = vmatpush.msra.mxu0 0.0
  %7271 = vmatpush.msra.mxu0 0.0
  %7272 = vmatpush.msra.mxu0 0.0
  %7273 = vmatpush.msra.mxu0 0.0
  %7274 = vmatpush.msra.mxu0 0.0
  %7275 = vmatpush.msra.mxu0 0.0
  %7276 = vmatpush.msra.mxu0 0.0
  %7277 = vmatpush.msra.mxu0 0.0
  %7278 = vmatpush.msra.mxu0 0.0
  %7279 = vmatpush.msra.mxu0 %v7252
  %7280 = vmatmul.f32.gmra.mxu0 %v7250
  %v7281 = vpop.f32.mrf.mxu0
  %v7282 = vadd.f32 0.0, %v7281
  %7283 = vdwg.mxu0
  %7284 = vmatpush.msra.mxu0 0.0
  %7285 = vmatpush.msra.mxu0 0.0
  %7286 = vmatpush.msra.mxu0 0.0
  %7287 = vmatpush.msra.mxu0 0.0
  %7288 = vmatpush.msra.mxu0 0.0
  %7289 = vmatpush.msra.mxu0 0.0
  %7290 = vmatpush.msra.mxu0 0.0
  %7291 = vmatpush.msra.mxu0 0.0
  %7292 = vmatpush.msra.mxu0 0.0
  %7293 = vmatpush.msra.mxu0 0.0
  %7294 = vmatpush.msra.mxu0 0.0
  %7295 = vmatpush.msra.mxu0 0.0
  %7296 = vmatpush.msra.mxu0 0.0
  %7297 = vmatpush.msra.mxu0 0.0
  %7298 = vmatpush.msra.mxu0 0.0
  %7299 = vmatpush.msra.mxu0 %v7254
  %7300 = vmatmul.f32.gmra.mxu0 %v7250
  %v7301 = vpop.f32.mrf.mxu0
  %v7302 = vadd.f32 0.0, %v7301
  %7303 = vdwg.mxu0
  %7304 = vmatpush.msra.mxu0 0.0
  %7305 = vmatpush.msra.mxu0 0.0
  %7306 = vmatpush.msra.mxu0 0.0
  %7307 = vmatpush.msra.mxu0 0.0
  %7308 = vmatpush.msra.mxu0 0.0
  %7309 = vmatpush.msra.mxu0 0.0
  %7310 = vmatpush.msra.mxu0 0.0
  %7311 = vmatpush.msra.mxu0 0.0
  %7312 = vmatpush.msra.mxu0 0.0
  %7313 = vmatpush.msra.mxu0 0.0
  %7314 = vmatpush.msra.mxu0 0.0
  %7315 = vmatpush.msra.mxu0 0.0
  %7316 = vmatpush.msra.mxu0 0.0
  %7317 = vmatpush.msra.mxu0 0.0
  %7318 = vmatpush.msra.mxu0 0.0
  %7319 = vmatpush.msra.mxu0 %v7256
  %7320 = vmatmul.f32.gmra.mxu0 %v7250
  %v7321 = vpop.f32.mrf.mxu0
  %v7322 = vadd.f32 0.0, %v7321
  %7323 = vdwg.mxu0
  %7324 = vmatpush.msra.mxu0 0.0
  %7325 = vmatpush.msra.mxu0 0.0
  %7326 = vmatpush.msra.mxu0 0.0
  %7327 = vmatpush.msra.mxu0 0.0
  %7328 = vmatpush.msra.mxu0 0.0
  %7329 = vmatpush.msra.mxu0 0.0
  %7330 = vmatpush.msra.mxu0 0.0
  %7331 = vmatpush.msra.mxu0 0.0
  %7332 = vmatpush.msra.mxu0 0.0
  %7333 = vmatpush.msra.mxu0 0.0
  %7334 = vmatpush.msra.mxu0 0.0
  %7335 = vmatpush.msra.mxu0 0.0
  %7336 = vmatpush.msra.mxu0 0.0
  %7337 = vmatpush.msra.mxu0 0.0
  %7338 = vmatpush.msra.mxu0 0.0
  %7339 = vmatpush.msra.mxu0 %v7258
  %7340 = vmatmul.f32.gmra.mxu0 %v7250
  %v7341 = vpop.f32.mrf.mxu0
  %v7342 = vadd.f32 0.0, %v7341
  %7343 = vdwg.mxu0
  %7344 = vmatpush.msra.mxu0 0.0
  %7345 = vmatpush.msra.mxu0 0.0
  %7346 = vmatpush.msra.mxu0 0.0
  %7347 = vmatpush.msra.mxu0 0.0
  %7348 = vmatpush.msra.mxu0 0.0
  %7349 = vmatpush.msra.mxu0 0.0
  %7350 = vmatpush.msra.mxu0 0.0
  %7351 = vmatpush.msra.mxu0 0.0
  %7352 = vmatpush.msra.mxu0 0.0
  %7353 = vmatpush.msra.mxu0 0.0
  %7354 = vmatpush.msra.mxu0 0.0
  %7355 = vmatpush.msra.mxu0 0.0
  %7356 = vmatpush.msra.mxu0 0.0
  %7357 = vmatpush.msra.mxu0 0.0
  %7358 = vmatpush.msra.mxu0 0.0
  %7359 = vmatpush.msra.mxu0 %v7260
  %7360 = vmatmul.f32.gmra.mxu0 %v7250
  %v7361 = vpop.f32.mrf.mxu0
  %v7362 = vadd.f32 0.0, %v7361
  %7363 = vdwg.mxu0
  %7364 = vmatpush.msra.mxu0 0.0
  %7365 = vmatpush.msra.mxu0 0.0
  %7366 = vmatpush.msra.mxu0 0.0
  %7367 = vmatpush.msra.mxu0 0.0
  %7368 = vmatpush.msra.mxu0 0.0
  %7369 = vmatpush.msra.mxu0 0.0
  %7370 = vmatpush.msra.mxu0 0.0
  %7371 = vmatpush.msra.mxu0 0.0
  %7372 = vmatpush.msra.mxu0 0.0
  %7373 = vmatpush.msra.mxu0 0.0
  %7374 = vmatpush.msra.mxu0 0.0
  %7375 = vmatpush.msra.mxu0 0.0
  %7376 = vmatpush.msra.mxu0 0.0
  %7377 = vmatpush.msra.mxu0 0.0
  %7378 = vmatpush.msra.mxu0 0.0
  %7379 = vmatpush.msra.mxu0 %v7262
  %7380 = vmatmul.f32.gmra.mxu0 %v7250
  %v7381 = vpop.f32.mrf.mxu0
  %v7382 = vadd.f32 0.0, %v7381
  %7383 = vdwg.mxu0
  %v7384 = vadd.f32 %v7225, %v7282
  %v7385 = vadd.f32 %v7226, %v7302
  %v7386 = vadd.f32 %v7227, %v7322
  %v7387 = vadd.f32 %v7228, %v7342
  %v7388 = vadd.f32 %v7229, %v7362
  %v7389 = vadd.f32 %v7230, %v7382
  %7390 = vrot.lane.b32.xlu0 %v6300, 100
  %v7391 = vpop.permute.xlu0 %7390
  %7392 = vrot.lane.b32.xlu0 %v6098, 91
  %v7393 = vpop.permute.xlu0 %7392
  %7394 = vrot.lane.b32.xlu0 %v6138, 91
  %v7395 = vpop.permute.xlu0 %7394
  %7396 = vrot.lane.b32.xlu0 %v6178, 91
  %v7397 = vpop.permute.xlu0 %7396
  %7398 = vrot.lane.b32.xlu0 %v6218, 91
  %v7399 = vpop.permute.xlu0 %7398
  %7400 = vrot.lane.b32.xlu0 %v6258, 91
  %v7401 = vpop.permute.xlu0 %7400
  %7402 = vrot.lane.b32.xlu0 %v6298, 91
  %v7403 = vpop.permute.xlu0 %7402
  %v7404 = vsel %vm1121, %v7393, %v7395
  %v7405 = vsel %vm1121, %v7395, %v7397
  %v7406 = vsel %vm1121, %v7397, %v7399
  %v7407 = vsel %vm1121, %v7399, %v7401
  %v7408 = vsel %vm1121, %v7401, %v7403
  %v7409 = vsel %vm124, %v7391, 0
  %v7411 = vsel %vm127, %v7404, 0
  %v7413 = vsel %vm127, %v7405, 0
  %v7415 = vsel %vm127, %v7406, 0
  %v7417 = vsel %vm127, %v7407, 0
  %v7419 = vsel %vm127, %v7408, 0
  %v7421 = vsel %vm127, %v7403, 0
  %7423 = vmatpush.msra.mxu0 0.0
  %7424 = vmatpush.msra.mxu0 0.0
  %7425 = vmatpush.msra.mxu0 0.0
  %7426 = vmatpush.msra.mxu0 0.0
  %7427 = vmatpush.msra.mxu0 0.0
  %7428 = vmatpush.msra.mxu0 0.0
  %7429 = vmatpush.msra.mxu0 0.0
  %7430 = vmatpush.msra.mxu0 0.0
  %7431 = vmatpush.msra.mxu0 0.0
  %7432 = vmatpush.msra.mxu0 0.0
  %7433 = vmatpush.msra.mxu0 0.0
  %7434 = vmatpush.msra.mxu0 0.0
  %7435 = vmatpush.msra.mxu0 0.0
  %7436 = vmatpush.msra.mxu0 0.0
  %7437 = vmatpush.msra.mxu0 0.0
  %7438 = vmatpush.msra.mxu0 %v7411
  %7439 = vmatmul.f32.gmra.mxu0 %v7409
  %v7440 = vpop.f32.mrf.mxu0
  %v7441 = vadd.f32 0.0, %v7440
  %7442 = vdwg.mxu0
  %7443 = vmatpush.msra.mxu0 0.0
  %7444 = vmatpush.msra.mxu0 0.0
  %7445 = vmatpush.msra.mxu0 0.0
  %7446 = vmatpush.msra.mxu0 0.0
  %7447 = vmatpush.msra.mxu0 0.0
  %7448 = vmatpush.msra.mxu0 0.0
  %7449 = vmatpush.msra.mxu0 0.0
  %7450 = vmatpush.msra.mxu0 0.0
  %7451 = vmatpush.msra.mxu0 0.0
  %7452 = vmatpush.msra.mxu0 0.0
  %7453 = vmatpush.msra.mxu0 0.0
  %7454 = vmatpush.msra.mxu0 0.0
  %7455 = vmatpush.msra.mxu0 0.0
  %7456 = vmatpush.msra.mxu0 0.0
  %7457 = vmatpush.msra.mxu0 0.0
  %7458 = vmatpush.msra.mxu0 %v7413
  %7459 = vmatmul.f32.gmra.mxu0 %v7409
  %v7460 = vpop.f32.mrf.mxu0
  %v7461 = vadd.f32 0.0, %v7460
  %7462 = vdwg.mxu0
  %7463 = vmatpush.msra.mxu0 0.0
  %7464 = vmatpush.msra.mxu0 0.0
  %7465 = vmatpush.msra.mxu0 0.0
  %7466 = vmatpush.msra.mxu0 0.0
  %7467 = vmatpush.msra.mxu0 0.0
  %7468 = vmatpush.msra.mxu0 0.0
  %7469 = vmatpush.msra.mxu0 0.0
  %7470 = vmatpush.msra.mxu0 0.0
  %7471 = vmatpush.msra.mxu0 0.0
  %7472 = vmatpush.msra.mxu0 0.0
  %7473 = vmatpush.msra.mxu0 0.0
  %7474 = vmatpush.msra.mxu0 0.0
  %7475 = vmatpush.msra.mxu0 0.0
  %7476 = vmatpush.msra.mxu0 0.0
  %7477 = vmatpush.msra.mxu0 0.0
  %7478 = vmatpush.msra.mxu0 %v7415
  %7479 = vmatmul.f32.gmra.mxu0 %v7409
  %v7480 = vpop.f32.mrf.mxu0
  %v7481 = vadd.f32 0.0, %v7480
  %7482 = vdwg.mxu0
  %7483 = vmatpush.msra.mxu0 0.0
  %7484 = vmatpush.msra.mxu0 0.0
  %7485 = vmatpush.msra.mxu0 0.0
  %7486 = vmatpush.msra.mxu0 0.0
  %7487 = vmatpush.msra.mxu0 0.0
  %7488 = vmatpush.msra.mxu0 0.0
  %7489 = vmatpush.msra.mxu0 0.0
  %7490 = vmatpush.msra.mxu0 0.0
  %7491 = vmatpush.msra.mxu0 0.0
  %7492 = vmatpush.msra.mxu0 0.0
  %7493 = vmatpush.msra.mxu0 0.0
  %7494 = vmatpush.msra.mxu0 0.0
  %7495 = vmatpush.msra.mxu0 0.0
  %7496 = vmatpush.msra.mxu0 0.0
  %7497 = vmatpush.msra.mxu0 0.0
  %7498 = vmatpush.msra.mxu0 %v7417
  %7499 = vmatmul.f32.gmra.mxu0 %v7409
  %v7500 = vpop.f32.mrf.mxu0
  %v7501 = vadd.f32 0.0, %v7500
  %7502 = vdwg.mxu0
  %7503 = vmatpush.msra.mxu0 0.0
  %7504 = vmatpush.msra.mxu0 0.0
  %7505 = vmatpush.msra.mxu0 0.0
  %7506 = vmatpush.msra.mxu0 0.0
  %7507 = vmatpush.msra.mxu0 0.0
  %7508 = vmatpush.msra.mxu0 0.0
  %7509 = vmatpush.msra.mxu0 0.0
  %7510 = vmatpush.msra.mxu0 0.0
  %7511 = vmatpush.msra.mxu0 0.0
  %7512 = vmatpush.msra.mxu0 0.0
  %7513 = vmatpush.msra.mxu0 0.0
  %7514 = vmatpush.msra.mxu0 0.0
  %7515 = vmatpush.msra.mxu0 0.0
  %7516 = vmatpush.msra.mxu0 0.0
  %7517 = vmatpush.msra.mxu0 0.0
  %7518 = vmatpush.msra.mxu0 %v7419
  %7519 = vmatmul.f32.gmra.mxu0 %v7409
  %v7520 = vpop.f32.mrf.mxu0
  %v7521 = vadd.f32 0.0, %v7520
  %7522 = vdwg.mxu0
  %7523 = vmatpush.msra.mxu0 0.0
  %7524 = vmatpush.msra.mxu0 0.0
  %7525 = vmatpush.msra.mxu0 0.0
  %7526 = vmatpush.msra.mxu0 0.0
  %7527 = vmatpush.msra.mxu0 0.0
  %7528 = vmatpush.msra.mxu0 0.0
  %7529 = vmatpush.msra.mxu0 0.0
  %7530 = vmatpush.msra.mxu0 0.0
  %7531 = vmatpush.msra.mxu0 0.0
  %7532 = vmatpush.msra.mxu0 0.0
  %7533 = vmatpush.msra.mxu0 0.0
  %7534 = vmatpush.msra.mxu0 0.0
  %7535 = vmatpush.msra.mxu0 0.0
  %7536 = vmatpush.msra.mxu0 0.0
  %7537 = vmatpush.msra.mxu0 0.0
  %7538 = vmatpush.msra.mxu0 %v7421
  %7539 = vmatmul.f32.gmra.mxu0 %v7409
  %v7540 = vpop.f32.mrf.mxu0
  %v7541 = vadd.f32 0.0, %v7540
  %7542 = vdwg.mxu0
  %v7543 = vadd.f32 %v7384, %v7441
  %v7544 = vadd.f32 %v7385, %v7461
  %v7545 = vadd.f32 %v7386, %v7481
  %v7546 = vadd.f32 %v7387, %v7501
  %v7547 = vadd.f32 %v7388, %v7521
  %v7548 = vadd.f32 %v7389, %v7541
  %7549 = vrot.lane.b32.xlu0 %v6300, 96
  %v7550 = vpop.permute.xlu0 %7549
  %7551 = vrot.lane.b32.xlu0 %v6098, 90
  %v7552 = vpop.permute.xlu0 %7551
  %7553 = vrot.lane.b32.xlu0 %v6138, 90
  %v7554 = vpop.permute.xlu0 %7553
  %7555 = vrot.lane.b32.xlu0 %v6178, 90
  %v7556 = vpop.permute.xlu0 %7555
  %7557 = vrot.lane.b32.xlu0 %v6218, 90
  %v7558 = vpop.permute.xlu0 %7557
  %7559 = vrot.lane.b32.xlu0 %v6258, 90
  %v7560 = vpop.permute.xlu0 %7559
  %7561 = vrot.lane.b32.xlu0 %v6298, 90
  %v7562 = vpop.permute.xlu0 %7561
  %v7563 = vsel %vm1271, %v7552, %v7554
  %v7564 = vsel %vm1271, %v7554, %v7556
  %v7565 = vsel %vm1271, %v7556, %v7558
  %v7566 = vsel %vm1271, %v7558, %v7560
  %v7567 = vsel %vm1271, %v7560, %v7562
  %v7568 = vsel %vm124, %v7550, 0
  %v7570 = vsel %vm127, %v7563, 0
  %v7572 = vsel %vm127, %v7564, 0
  %v7574 = vsel %vm127, %v7565, 0
  %v7576 = vsel %vm127, %v7566, 0
  %v7578 = vsel %vm127, %v7567, 0
  %v7580 = vsel %vm127, %v7562, 0
  %7582 = vmatpush.msra.mxu0 0.0
  %7583 = vmatpush.msra.mxu0 0.0
  %7584 = vmatpush.msra.mxu0 0.0
  %7585 = vmatpush.msra.mxu0 0.0
  %7586 = vmatpush.msra.mxu0 0.0
  %7587 = vmatpush.msra.mxu0 0.0
  %7588 = vmatpush.msra.mxu0 0.0
  %7589 = vmatpush.msra.mxu0 0.0
  %7590 = vmatpush.msra.mxu0 0.0
  %7591 = vmatpush.msra.mxu0 0.0
  %7592 = vmatpush.msra.mxu0 0.0
  %7593 = vmatpush.msra.mxu0 0.0
  %7594 = vmatpush.msra.mxu0 0.0
  %7595 = vmatpush.msra.mxu0 0.0
  %7596 = vmatpush.msra.mxu0 0.0
  %7597 = vmatpush.msra.mxu0 %v7570
  %7598 = vmatmul.f32.gmra.mxu0 %v7568
  %v7599 = vpop.f32.mrf.mxu0
  %v7600 = vadd.f32 0.0, %v7599
  %7601 = vdwg.mxu0
  %7602 = vmatpush.msra.mxu0 0.0
  %7603 = vmatpush.msra.mxu0 0.0
  %7604 = vmatpush.msra.mxu0 0.0
  %7605 = vmatpush.msra.mxu0 0.0
  %7606 = vmatpush.msra.mxu0 0.0
  %7607 = vmatpush.msra.mxu0 0.0
  %7608 = vmatpush.msra.mxu0 0.0
  %7609 = vmatpush.msra.mxu0 0.0
  %7610 = vmatpush.msra.mxu0 0.0
  %7611 = vmatpush.msra.mxu0 0.0
  %7612 = vmatpush.msra.mxu0 0.0
  %7613 = vmatpush.msra.mxu0 0.0
  %7614 = vmatpush.msra.mxu0 0.0
  %7615 = vmatpush.msra.mxu0 0.0
  %7616 = vmatpush.msra.mxu0 0.0
  %7617 = vmatpush.msra.mxu0 %v7572
  %7618 = vmatmul.f32.gmra.mxu0 %v7568
  %v7619 = vpop.f32.mrf.mxu0
  %v7620 = vadd.f32 0.0, %v7619
  %7621 = vdwg.mxu0
  %7622 = vmatpush.msra.mxu0 0.0
  %7623 = vmatpush.msra.mxu0 0.0
  %7624 = vmatpush.msra.mxu0 0.0
  %7625 = vmatpush.msra.mxu0 0.0
  %7626 = vmatpush.msra.mxu0 0.0
  %7627 = vmatpush.msra.mxu0 0.0
  %7628 = vmatpush.msra.mxu0 0.0
  %7629 = vmatpush.msra.mxu0 0.0
  %7630 = vmatpush.msra.mxu0 0.0
  %7631 = vmatpush.msra.mxu0 0.0
  %7632 = vmatpush.msra.mxu0 0.0
  %7633 = vmatpush.msra.mxu0 0.0
  %7634 = vmatpush.msra.mxu0 0.0
  %7635 = vmatpush.msra.mxu0 0.0
  %7636 = vmatpush.msra.mxu0 0.0
  %7637 = vmatpush.msra.mxu0 %v7574
  %7638 = vmatmul.f32.gmra.mxu0 %v7568
  %v7639 = vpop.f32.mrf.mxu0
  %v7640 = vadd.f32 0.0, %v7639
  %7641 = vdwg.mxu0
  %7642 = vmatpush.msra.mxu0 0.0
  %7643 = vmatpush.msra.mxu0 0.0
  %7644 = vmatpush.msra.mxu0 0.0
  %7645 = vmatpush.msra.mxu0 0.0
  %7646 = vmatpush.msra.mxu0 0.0
  %7647 = vmatpush.msra.mxu0 0.0
  %7648 = vmatpush.msra.mxu0 0.0
  %7649 = vmatpush.msra.mxu0 0.0
  %7650 = vmatpush.msra.mxu0 0.0
  %7651 = vmatpush.msra.mxu0 0.0
  %7652 = vmatpush.msra.mxu0 0.0
  %7653 = vmatpush.msra.mxu0 0.0
  %7654 = vmatpush.msra.mxu0 0.0
  %7655 = vmatpush.msra.mxu0 0.0
  %7656 = vmatpush.msra.mxu0 0.0
  %7657 = vmatpush.msra.mxu0 %v7576
  %7658 = vmatmul.f32.gmra.mxu0 %v7568
  %v7659 = vpop.f32.mrf.mxu0
  %v7660 = vadd.f32 0.0, %v7659
  %7661 = vdwg.mxu0
  %7662 = vmatpush.msra.mxu0 0.0
  %7663 = vmatpush.msra.mxu0 0.0
  %7664 = vmatpush.msra.mxu0 0.0
  %7665 = vmatpush.msra.mxu0 0.0
  %7666 = vmatpush.msra.mxu0 0.0
  %7667 = vmatpush.msra.mxu0 0.0
  %7668 = vmatpush.msra.mxu0 0.0
  %7669 = vmatpush.msra.mxu0 0.0
  %7670 = vmatpush.msra.mxu0 0.0
  %7671 = vmatpush.msra.mxu0 0.0
  %7672 = vmatpush.msra.mxu0 0.0
  %7673 = vmatpush.msra.mxu0 0.0
  %7674 = vmatpush.msra.mxu0 0.0
  %7675 = vmatpush.msra.mxu0 0.0
  %7676 = vmatpush.msra.mxu0 0.0
  %7677 = vmatpush.msra.mxu0 %v7578
  %7678 = vmatmul.f32.gmra.mxu0 %v7568
  %v7679 = vpop.f32.mrf.mxu0
  %v7680 = vadd.f32 0.0, %v7679
  %7681 = vdwg.mxu0
  %7682 = vmatpush.msra.mxu0 0.0
  %7683 = vmatpush.msra.mxu0 0.0
  %7684 = vmatpush.msra.mxu0 0.0
  %7685 = vmatpush.msra.mxu0 0.0
  %7686 = vmatpush.msra.mxu0 0.0
  %7687 = vmatpush.msra.mxu0 0.0
  %7688 = vmatpush.msra.mxu0 0.0
  %7689 = vmatpush.msra.mxu0 0.0
  %7690 = vmatpush.msra.mxu0 0.0
  %7691 = vmatpush.msra.mxu0 0.0
  %7692 = vmatpush.msra.mxu0 0.0
  %7693 = vmatpush.msra.mxu0 0.0
  %7694 = vmatpush.msra.mxu0 0.0
  %7695 = vmatpush.msra.mxu0 0.0
  %7696 = vmatpush.msra.mxu0 0.0
  %7697 = vmatpush.msra.mxu0 %v7580
  %7698 = vmatmul.f32.gmra.mxu0 %v7568
  %v7699 = vpop.f32.mrf.mxu0
  %v7700 = vadd.f32 0.0, %v7699
  %7701 = vdwg.mxu0
  %v7702 = vadd.f32 %v7543, %v7600
  %v7703 = vadd.f32 %v7544, %v7620
  %v7704 = vadd.f32 %v7545, %v7640
  %v7705 = vadd.f32 %v7546, %v7660
  %v7706 = vadd.f32 %v7547, %v7680
  %v7707 = vadd.f32 %v7548, %v7700
  %v7708 = vld [vmem:[%s27] sm:$0xf]
  %7710 = vset.pattern.permute.xlu0 0
  %7711 = vperm.xlu0 %7710, %v7708
  %v7712 = vpop.permute.xlu0 %7711
  %v7714 = vadd.f32 %v7702, %v7712
  %v7715 = vadd.f32 %v7703, %v7712
  %v7716 = vadd.f32 %v7704, %v7712
  %v7717 = vadd.f32 %v7705, %v7712
  %v7718 = vadd.f32 %v7706, %v7712
  %v7719 = vadd.f32 %v7707, %v7712
  %v7720 = vmax.f32 %v7714, 0.0
  %v7721 = vmax.f32 %v7715, 0.0
  %v7722 = vmax.f32 %v7716, 0.0
  %v7723 = vmax.f32 %v7717, 0.0
  %v7724 = vmax.f32 %v7718, 0.0
  %v7725 = vmax.f32 %v7719, 0.0
  %v7732 = vrot.slane %v7721, 4
  %v7733 = vrot.slane %v7723, 4
  %v7734 = vrot.slane %v7725, 4
  %v7735 = vsel %vm127, %v7720, %v7732
  %v7736 = vsel %vm127, %v7722, %v7733
  %v7737 = vsel %vm127, %v7724, %v7734
  %7741 = vst [vmem:[%s28] sm:$0xff] %v7735
  %7742 = vst [vmem:[%s28 + $0x8] sm:$0xff] %v7736
  %vm7743 = vcmask 64516
  %vm7744 = vmor %vm7743, %vm127
  %7745 = vst.msk [vmem:[%s28 + $0x10] sm:$0xff] %vm7744, %v7737
  // Predicated region
  $region114: #{forward.1} parent=0 // pred_check
    _
  $region115: #{forward.1} parent=0 // pred_check_branch
    %7747 = sbr.rel (0) target = $region117
  $region116: #{forward.1} parent=0 // pred_region
    _
  $region117: #{forward.1} parent=0 // pred_fallthru
    _
  // Predicated region
  $region118: #{forward.1} parent=0 // pred_check
    _
  $region119: #{forward.1} parent=0 // pred_check_branch
    %7749 = sbr.rel (0) target = $region121
  $region120: #{forward.1} parent=0 // pred_region
    _
  $region121: #{forward.1} parent=0 // pred_fallthru
    _

</llo_original>
